<compile_context>
chip_gen: v5e
topology: v5e:2x2
jax: 0.10.0
libtpu: 0.0.40
codegen_flags: <defaults>
</compile_context>

<pallas_src>
import functools
import math
import numpy as np
import jax
import jax.numpy as jnp
from jax import lax
from jax.experimental import pallas as pl
from jax.experimental.pallas import tpu as pltpu

E = 32              # embedding_dims
H = 64              # hidden_size
K = 4               # fixed number of in-neighbors per endpoint
L = 3               # populated feature-history slots (<= window_size)
KE = K * E          # 128  -> lane-dense neighbor block
L2E = L * 2 * E     # 192  -> lane-dense history block
HP = 128            # padded output lanes (H=64 zero-padded -> unmasked stores)
PCK = 16            # packed per-row scalar lanes (13 used, 3 zero pad)
_EULER = math.e


def model_kernel(packed_ref, hist_feat_ref,
                 sel_ke_ref, sel_h_ref, pvec_ref,
                 s_blk_ref, a_node_fused_ref, w_agg_ref, w_hist_ref,
                 out_ref):
    f32 = jnp.float32
    bf16 = jnp.bfloat16

    # ---- in-kernel lane expansion of the packed per-row scalars (MXU, nearly idle) ----
    packed = packed_ref[...]                                             # [R, 16] f32
    exp = jnp.dot(packed, sel_ke_ref[...], preferred_element_type=f32)   # [R, 4*KE]
    dt_node = exp[:, 0:KE]            # dt_node broadcast to all K*E lanes
    gc_node = exp[:, KE:2 * KE]
    dt_neigh = exp[:, 2 * KE:3 * KE]  # each of K values repeated E times
    gc_neigh = exp[:, 3 * KE:4 * KE]
    hist_dt = jnp.dot(packed, sel_h_ref[...], preferred_element_type=f32)  # [R, L2E]

    pvec = pvec_ref[...]              # [8, KE]: rows 0..3 = t2v_w, t2v_b, wn, bn (K-tiled)
    t2v_w = pvec[0:1, :]
    t2v_b = pvec[1:2, :]
    wn = pvec[2:3, :]
    bn = pvec[3:4, :]
    s_blk = s_blk_ref[...]            # [KE, KE] block-sum = kron(I_K, ones(E,E)), bf16 (0/1 exact)

    # Time2Vec: lane 0 of each E-block is the linear term, rest are cos.  E is a power
    # of two so the mask is a bitwise-and of a lane iota.
    lane = lax.broadcasted_iota(jnp.int32, (1, KE), 1)
    lin_mask = jnp.bitwise_and(lane, E - 1) == 0

    def encode(dt, gc):
        # node_encoding: Time2Vec('cos') + Linear(1,E) + relu + L2-normalize, vectorized
        # over [rows, K*E] with the per-E-block norm reduction done on the MXU.
        dt = jnp.abs(dt)
        phase = dt * t2v_w + t2v_b
        t2v = jnp.where(lin_mask, phase, jnp.cos(phase))
        f = jnp.maximum(gc * wn + bn + t2v, 0.0)
        nsq = jnp.dot((f * f).astype(bf16), s_blk,
                      preferred_element_type=f32)                 # per-block ||f||^2, bcast
        # Keep the 1e-24 clamp: padded all-zero rows rely on rsqrt(1e-24)*0 == 0 (no NaN).
        return f * lax.rsqrt(jnp.maximum(nsq, 1e-24))             # F.normalize (eps=1e-12)

    node_t = encode(dt_node, gc_node)                             # [R, KE], E-blocks identical
    neigh = encode(dt_neigh, gc_neigh)                            # [R, KE]

    # Fused [A_blockdiag | W_node] matmul: one MXU weight push produces both the bilinear
    # attention intermediate and node_t's output projection.
    node_bf = node_t.astype(bf16)
    fused = jnp.dot(node_bf, a_node_fused_ref[...],
                    preferred_element_type=f32)                   # [R, KE + HP]
    nA = fused[:, :KE]                                            # node_feat @ A per block
    out = fused[:, KE:]                                           # node_feat @ W_node.T (see /K note)

    # Bilinear attention score per neighbor; the reduction stays on the MXU.
    att = jnp.dot((nA * neigh).astype(bf16), s_blk,
                  preferred_element_type=f32)                     # [R, KE] per-block score

    time_score = pl.reciprocal(jnp.log(2.0 * dt_neigh + _EULER), approx=True)  # Decayer(2,'log')
    s = time_score + att
    score = jnp.where(s >= 0.0, s, 0.01 * s)                      # F.leaky_relu
    weighted_neigh = score * neigh                                # [R, KE]

    hw = pl.reciprocal(2.0 * hist_dt + 1.0, approx=True)          # Decayer(2,'rev')  [R, L2E]
    weighted_hist = hw * hist_feat_ref[...].astype(f32)

    # combined_all.mm(weight.t()) with W split column-wise; concat -> MXU accumulation.
    out = out + jnp.dot(weighted_neigh.astype(bf16), w_agg_ref[...],
                        preferred_element_type=f32)
    out = out + jnp.dot(weighted_hist.astype(bf16), w_hist_ref[...],
                        preferred_element_type=f32)
    out_ref[...] = jnp.maximum(out, 0.0).astype(out_ref.dtype)    # torch.relu


def prepare_params(params):
    """One-off parameter prep (tile/kron/pad/transpose). Hoist out of the per-call path."""
    t2v_w, t2v_b, wn, bn, A, W = params
    f32 = jnp.float32
    bf16 = jnp.bfloat16

    tile_k = lambda v: jnp.tile(v.reshape(1, E).astype(f32), (1, K))
    pvec = jnp.concatenate(
        [tile_k(t2v_w), tile_k(t2v_b), tile_k(wn), tile_k(bn),
         jnp.zeros((4, KE), f32)], axis=0)                          # [8, KE]

    # One-hot lane-expansion selectors (exact 0/1; MXU does broadcast/repeat in-kernel).
    sel_ke = np.zeros((PCK, 4 * KE), np.float32)
    sel_ke[0, 0:KE] = 1.0                                           # dt_node -> KE lanes
    sel_ke[1, KE:2 * KE] = 1.0                                      # gc_node -> KE lanes
    for k in range(K):
        sel_ke[2 + k, 2 * KE + k * E: 2 * KE + (k + 1) * E] = 1.0   # dt_neigh[k] -> E lanes
        sel_ke[2 + K + k, 3 * KE + k * E: 3 * KE + (k + 1) * E] = 1.0   # gc_neigh[k]
    sel_h = np.zeros((PCK, L2E), np.float32)
    for l in range(L):
        sel_h[2 + 2 * K + l, l * 2 * E:(l + 1) * 2 * E] = 1.0       # hist_dt[l] -> 2E lanes
    sel_ke = jnp.asarray(sel_ke)
    sel_h = jnp.asarray(sel_h)

    a_blk = jnp.kron(jnp.eye(K, dtype=f32), A.astype(f32))                     # [KE, KE]
    s_blk = jnp.kron(jnp.eye(K, dtype=f32), jnp.ones((E, E), f32)).astype(bf16)  # 0/1: exact bf16

    W = W.astype(f32)
    W_hist, W_node, W_agg = W[:, :2 * E], W[:, 2 * E:3 * E], W[:, 3 * E:]      # fear layout
    pad_h = lambda m: jnp.pad(m, ((0, 0), (0, HP - H)))
    # NOTE: the /K tiling is only correct because the K node E-blocks of node_t are exact
    # copies of the same node_feat (dt_node/gc_node are broadcast to every block).
    w_node_p = pad_h(jnp.tile(W_node.T / K, (K, 1)))                            # [KE, HP]
    a_node_fused = jnp.concatenate([a_blk, w_node_p], axis=1).astype(bf16)      # [KE, KE+HP]
    w_agg_p = pad_h(jnp.tile(W_agg.T, (K, 1))).astype(bf16)                     # [KE, HP]
    w_hist_p = pad_h(jnp.tile(W_hist.T, (L, 1))).astype(bf16)                   # [L2E, HP]

    return (sel_ke, sel_h, pvec, s_blk, a_node_fused, w_agg_p, w_hist_p)


def pick_block_rows(n):
    # Aim for >=4 grid blocks (both v7x TensorCores busy) while keeping blocks large
    # enough (128..512 rows) to amortize the ~0.35us per-grid-step overhead.
    target = -(-n // 4)
    target = ((target + 127) // 128) * 128
    return max(128, min(512, target))


@functools.partial(jax.jit, static_argnames=("block_rows",))
def _forward(dt_node, gc_node, dt_neigh, gc_neigh, hist_dt, hist_feat, prepped,
             block_rows):
    sel_ke, sel_h, pvec, s_blk, a_node_fused, w_agg_p, w_hist_p = prepped
    f32 = jnp.float32
    n = dt_node.shape[0]
    n_pad = -(-n // block_rows) * block_rows
    pad = n_pad - n

    # Narrow per-row scalar pack: 13 values/row, zero-padded to 16 lanes (one DMA stream).
    packed = jnp.concatenate(
        [dt_node.astype(f32), gc_node.astype(f32), dt_neigh.astype(f32),
         gc_neigh.astype(f32), hist_dt.astype(f32),
         jnp.zeros((n, PCK - (2 + 2 * K + L)), f32)], axis=1)          # [n, 16]
    hist_flat = hist_feat.astype(jnp.bfloat16).reshape(n, L2E)         # bf16 halves DMA bytes

    if pad:
        packed = jnp.pad(packed, ((0, pad), (0, 0)))
        hist_flat = jnp.pad(hist_flat, ((0, pad), (0, 0)))

    nblk = n_pad // block_rows
    row = lambda i: (i, 0)
    cst = lambda i: (0, 0)

    out = pl.pallas_call(
        model_kernel,
        out_shape=jax.ShapeDtypeStruct((n_pad, HP), jnp.bfloat16),
        grid_spec=pltpu.PrefetchScalarGridSpec(
            num_scalar_prefetch=0,
            grid=(nblk,),
            in_specs=[
                pl.BlockSpec((block_rows, PCK), row),    # packed per-row scalars (f32)
                pl.BlockSpec((block_rows, L2E), row),    # hist_feat (bf16, flattened)
                pl.BlockSpec((PCK, 4 * KE), cst),        # lane-expansion selector (KE blocks)
                pl.BlockSpec((PCK, L2E), cst),           # lane-expansion selector (history)
                pl.BlockSpec((8, KE), cst),              # t2v_w / t2v_b / wn / bn packed
                pl.BlockSpec((KE, KE), cst),             # block-sum matrix (bf16)
                pl.BlockSpec((KE, KE + HP), cst),        # [A block-diag | W_node/K] fused (bf16)
                pl.BlockSpec((KE, HP), cst),             # W_agg (tiled, bf16)
                pl.BlockSpec((L2E, HP), cst),            # W_hist (tiled, bf16)
            ],
            out_specs=pl.BlockSpec((block_rows, HP), row),
        ),
        compiler_params=pltpu.CompilerParams(
            dimension_semantics=("parallel",)),
    )(packed, hist_flat, sel_ke, sel_h, pvec, s_blk, a_node_fused, w_agg_p, w_hist_p)
    return out[:n, :H].astype(f32)


def run_model(dt_node, gc_node, dt_neigh, gc_neigh, hist_dt, hist_feat, prepped,
              block_rows=None):
    if block_rows is None:
        block_rows = pick_block_rows(dt_node.shape[0])
    return _forward(dt_node, gc_node, dt_neigh, gc_neigh, hist_dt, hist_feat,
                    prepped, block_rows=block_rows)


def reference(dt_node, gc_node, dt_neigh, gc_neigh, hist_dt, hist_feat, params):
    """Pure-JAX f32 reference mirroring the PyTorch forward semantics."""
    t2v_w, t2v_b, wn, bn, A, W = params

    def enc(dt, gc):
        dt = jnp.abs(dt)
        phase = dt * t2v_w + t2v_b
        idx = jnp.arange(phase.shape[-1])
        t2v = jnp.where(idx == 0, phase, jnp.cos(phase))
        f = jnp.maximum(gc * wn + bn + t2v, 0.0)
        nrm = jnp.sqrt(jnp.sum(f * f, axis=-1, keepdims=True))
        return f / jnp.maximum(nrm, 1e-12)

    node_feat = enc(dt_node, gc_node)                                  # [N, E]
    neigh_feat = enc(dt_neigh[..., None], gc_neigh[..., None])         # [N, K, E]
    att = jnp.einsum('ne,ef,nkf->nk', node_feat, A, neigh_feat)
    ts = 1.0 / jnp.log(2.0 * dt_neigh + _EULER)
    s = ts + att
    score = jnp.where(s >= 0.0, s, 0.01 * s)
    neigh_agg = jnp.sum(score[..., None] * neigh_feat, axis=1)
    hw = 1.0 / (2.0 * hist_dt + 1.0)
    feat = jnp.sum(hw[..., None] * hist_feat, axis=1)
    fear = jnp.concatenate([feat, node_feat, neigh_agg], axis=-1)
    return jnp.maximum(fear @ W.T, 0.0)


if __name__ == "__main__":
    key = jax.random.PRNGKey(0)
    ks = jax.random.split(key, 12)

    B = 256          # edges per call
    N = 2 * B        # rows = edge endpoints

    # Synthetic "graph state" extracted for a batch of edges at the current time.
    dt_node = jax.random.uniform(ks[0], (N, 1), jnp.float32, 0.1, 5.0)    # |t - adj_time[edge[i]]|
    gc_node = jax.random.uniform(ks[1], (N, 1), jnp.float32, -1.0, 1.0)   # dict_gc[edge[i]]
    dt_neigh = jax.random.uniform(ks[2], (N, K), jnp.float32, 0.1, 5.0)   # t - adj_time[neigh]
    gc_neigh = jax.random.uniform(ks[3], (N, K), jnp.float32, -1.0, 1.0)
    hist_dt = jax.random.uniform(ks[4], (N, L), jnp.float32, 0.1, 5.0)    # t - hist_time
    hist_feat = jax.random.normal(ks[5], (N, L, 2 * E), jnp.float32)      # deque'd features

    t2v_w = jax.random.normal(ks[6], (1, E), jnp.float32)
    t2v_b = jax.random.normal(ks[7], (1, E), jnp.float32)
    wn = jax.random.normal(ks[8], (1, E), jnp.float32)        # linear_node weight [E,1] flattened
    bn = jax.random.normal(ks[9], (1, E), jnp.float32)        # linear_node bias
    lim_a = math.sqrt(6.0 / (E + E))
    A = jax.random.uniform(ks[10], (E, E), jnp.float32, -lim_a, lim_a)        # attention bilinear
    lim_w = math.sqrt(6.0 / (H + 4 * E))
    W = jax.random.uniform(ks[11], (H, 4 * E), jnp.float32, -lim_w, lim_w)    # self.weight

    params = (t2v_w, t2v_b, wn, bn, A, W)
    prepped = prepare_params(params)           # one-off; hoisted out of the per-call path

    out = run_model(dt_node, gc_node, dt_neigh, gc_neigh, hist_dt, hist_feat, prepped)
    out = jax.block_until_ready(out)
    ref = reference(dt_node, gc_node, dt_neigh, gc_neigh, hist_dt, hist_feat, params)

    assert out.shape == (N, H)
    np.testing.assert_allclose(np.asarray(out), np.asarray(ref), rtol=2e-2, atol=2e-2)
    print("KERNEL_OK")
</pallas_src>

<mosaic_0001>
module attributes {stable_mosaic.version = 11 : i64} {
  func.func @model_kernel(%arg0: i32, %arg1: memref<128x16xf32, #tpu.memory_space<vmem>>, %arg2: memref<128x192xbf16, #tpu.memory_space<vmem>>, %arg3: memref<16x512xf32, #tpu.memory_space<vmem>>, %arg4: memref<16x192xf32, #tpu.memory_space<vmem>>, %arg5: memref<8x128xf32, #tpu.memory_space<vmem>>, %arg6: memref<128x128xbf16, #tpu.memory_space<vmem>>, %arg7: memref<128x256xbf16, #tpu.memory_space<vmem>>, %arg8: memref<128x128xbf16, #tpu.memory_space<vmem>>, %arg9: memref<192x128xbf16, #tpu.memory_space<vmem>>, %arg10: memref<128x128xbf16, #tpu.memory_space<vmem>>) attributes {dimension_semantics = [#tpu.dimension_semantics<parallel>], iteration_bounds = array<i64: 4>, scalar_prefetch = 0 : i64, scratch_operands = 0 : i64, tpu.core_type = #tpu.core_type<tc>, window_params = [{transform_indices = @transform_0, window_bounds = array<i64: 128, 16>}, {transform_indices = @transform_1, window_bounds = array<i64: 128, 192>}, {pipeline_mode = #tpu.pipeline_mode<synchronous>, transform_indices = @transform_2, window_bounds = array<i64: 16, 512>}, {pipeline_mode = #tpu.pipeline_mode<synchronous>, transform_indices = @transform_3, window_bounds = array<i64: 16, 192>}, {pipeline_mode = #tpu.pipeline_mode<synchronous>, transform_indices = @transform_4, window_bounds = array<i64: 8, 128>}, {pipeline_mode = #tpu.pipeline_mode<synchronous>, transform_indices = @transform_5, window_bounds = array<i64: 128, 128>}, {pipeline_mode = #tpu.pipeline_mode<synchronous>, transform_indices = @transform_6, window_bounds = array<i64: 128, 256>}, {pipeline_mode = #tpu.pipeline_mode<synchronous>, transform_indices = @transform_7, window_bounds = array<i64: 128, 128>}, {pipeline_mode = #tpu.pipeline_mode<synchronous>, transform_indices = @transform_8, window_bounds = array<i64: 192, 128>}, {transform_indices = @transform_9, window_bounds = array<i64: 128, 128>}]} {
    %c0 = arith.constant 0 : index
    %c0_0 = arith.constant 0 : index
    %0 = vector.load %arg1[%c0, %c0_0] : memref<128x16xf32, #tpu.memory_space<vmem>>, vector<128x16xf32>
    %c0_1 = arith.constant 0 : index
    %c0_2 = arith.constant 0 : index
    %1 = vector.load %arg3[%c0_1, %c0_2] : memref<16x512xf32, #tpu.memory_space<vmem>>, vector<16x512xf32>
    %cst = arith.constant dense<0.000000e+00> : vector<128x512xf32>
    %2 = tpu.matmul %0, %1, %cst {dimension_numbers = #tpu.dot_dimension_numbers<[1], [0], [0], [1], [0, 0, 1, 1], [], []>} : vector<128x16xf32>, vector<16x512xf32>, vector<128x512xf32> -> vector<128x512xf32>
    %3 = vector.extract_strided_slice %2 {offsets = [0, 0], sizes = [128, 128], strides = [1, 1]} : vector<128x512xf32> to vector<128x128xf32>
    %4 = vector.extract_strided_slice %2 {offsets = [0, 128], sizes = [128, 128], strides = [1, 1]} : vector<128x512xf32> to vector<128x128xf32>
    %5 = vector.extract_strided_slice %2 {offsets = [0, 256], sizes = [128, 128], strides = [1, 1]} : vector<128x512xf32> to vector<128x128xf32>
    %6 = vector.extract_strided_slice %2 {offsets = [0, 384], sizes = [128, 128], strides = [1, 1]} : vector<128x512xf32> to vector<128x128xf32>
    %c0_3 = arith.constant 0 : index
    %c0_4 = arith.constant 0 : index
    %7 = vector.load %arg4[%c0_3, %c0_4] : memref<16x192xf32, #tpu.memory_space<vmem>>, vector<16x192xf32>
    %cst_5 = arith.constant dense<0.000000e+00> : vector<128x192xf32>
    %8 = tpu.matmul %0, %7, %cst_5 {dimension_numbers = #tpu.dot_dimension_numbers<[1], [0], [0], [1], [0, 0, 1, 1], [], []>} : vector<128x16xf32>, vector<16x192xf32>, vector<128x192xf32> -> vector<128x192xf32>
    %c0_6 = arith.constant 0 : index
    %c0_7 = arith.constant 0 : index
    %9 = vector.load %arg5[%c0_6, %c0_7] : memref<8x128xf32, #tpu.memory_space<vmem>>, vector<8x128xf32>
    %10 = vector.extract_strided_slice %9 {offsets = [0, 0], sizes = [1, 128], strides = [1, 1]} : vector<8x128xf32> to vector<1x128xf32>
    %11 = vector.extract_strided_slice %9 {offsets = [1, 0], sizes = [1, 128], strides = [1, 1]} : vector<8x128xf32> to vector<1x128xf32>
    %12 = vector.extract_strided_slice %9 {offsets = [2, 0], sizes = [1, 128], strides = [1, 1]} : vector<8x128xf32> to vector<1x128xf32>
    %13 = vector.extract_strided_slice %9 {offsets = [3, 0], sizes = [1, 128], strides = [1, 1]} : vector<8x128xf32> to vector<1x128xf32>
    %c0_8 = arith.constant 0 : index
    %c0_9 = arith.constant 0 : index
    %14 = vector.load %arg6[%c0_8, %c0_9] : memref<128x128xbf16, #tpu.memory_space<vmem>>, vector<128x128xbf16>
    %15 = tpu.iota {dimensions = array<i32: 1>} : vector<1x128xi32>
    %c31_i32 = arith.constant 31 : i32
    %16 = vector.broadcast %c31_i32 : i32 to vector<1x128xi32>
    %17 = arith.andi %15, %16 : vector<1x128xi32>
    %c0_i32 = arith.constant 0 : i32
    %18 = vector.broadcast %c0_i32 : i32 to vector<1x128xi32>
    %19 = arith.cmpi eq, %17, %18 : vector<1x128xi32>
    %20 = math.absf %3 : vector<128x128xf32>
    %21 = vector.broadcast %10 : vector<1x128xf32> to vector<128x128xf32>
    %22 = arith.mulf %20, %21 : vector<128x128xf32>
    %23 = vector.broadcast %11 : vector<1x128xf32> to vector<128x128xf32>
    %24 = arith.addf %22, %23 : vector<128x128xf32>
    %25 = math.cos %24 : vector<128x128xf32>
    %26 = vector.shape_cast %19 : vector<1x128xi1> to vector<1x128xi1>
    %27 = vector.broadcast %26 : vector<1x128xi1> to vector<128x128xi1>
    %28 = arith.select %27, %24, %25 : vector<128x128xi1>, vector<128x128xf32>
    %29 = vector.broadcast %12 : vector<1x128xf32> to vector<128x128xf32>
    %30 = arith.mulf %4, %29 : vector<128x128xf32>
    %31 = vector.broadcast %13 : vector<1x128xf32> to vector<128x128xf32>
    %32 = arith.addf %30, %31 : vector<128x128xf32>
    %33 = arith.addf %32, %28 : vector<128x128xf32>
    %cst_10 = arith.constant 0.000000e+00 : f32
    %34 = vector.broadcast %cst_10 : f32 to vector<128x128xf32>
    %35 = arith.maximumf %33, %34 : vector<128x128xf32>
    %36 = arith.mulf %35, %35 : vector<128x128xf32>
    %37 = arith.truncf %36 : vector<128x128xf32> to vector<128x128xbf16>
    %cst_11 = arith.constant dense<0.000000e+00> : vector<128x128xf32>
    %38 = tpu.matmul %37, %14, %cst_11 {dimension_numbers = #tpu.dot_dimension_numbers<[1], [0], [0], [1], [0, 0, 1, 1], [], []>} : vector<128x128xbf16>, vector<128x128xbf16>, vector<128x128xf32> -> vector<128x128xf32>
    %cst_12 = arith.constant 1.000000e-24 : f32
    %39 = vector.broadcast %cst_12 : f32 to vector<128x128xf32>
    %40 = arith.maximumf %38, %39 : vector<128x128xf32>
    %41 = math.rsqrt %40 : vector<128x128xf32>
    %42 = arith.mulf %35, %41 : vector<128x128xf32>
    %43 = math.absf %5 : vector<128x128xf32>
    %44 = vector.broadcast %10 : vector<1x128xf32> to vector<128x128xf32>
    %45 = arith.mulf %43, %44 : vector<128x128xf32>
    %46 = vector.broadcast %11 : vector<1x128xf32> to vector<128x128xf32>
    %47 = arith.addf %45, %46 : vector<128x128xf32>
    %48 = math.cos %47 : vector<128x128xf32>
    %49 = vector.shape_cast %19 : vector<1x128xi1> to vector<1x128xi1>
    %50 = vector.broadcast %49 : vector<1x128xi1> to vector<128x128xi1>
    %51 = arith.select %50, %47, %48 : vector<128x128xi1>, vector<128x128xf32>
    %52 = vector.broadcast %12 : vector<1x128xf32> to vector<128x128xf32>
    %53 = arith.mulf %6, %52 : vector<128x128xf32>
    %54 = vector.broadcast %13 : vector<1x128xf32> to vector<128x128xf32>
    %55 = arith.addf %53, %54 : vector<128x128xf32>
    %56 = arith.addf %55, %51 : vector<128x128xf32>
    %cst_13 = arith.constant 0.000000e+00 : f32
    %57 = vector.broadcast %cst_13 : f32 to vector<128x128xf32>
    %58 = arith.maximumf %56, %57 : vector<128x128xf32>
    %59 = arith.mulf %58, %58 : vector<128x128xf32>
    %60 = arith.truncf %59 : vector<128x128xf32> to vector<128x128xbf16>
    %cst_14 = arith.constant dense<0.000000e+00> : vector<128x128xf32>
    %61 = tpu.matmul %60, %14, %cst_14 {dimension_numbers = #tpu.dot_dimension_numbers<[1], [0], [0], [1], [0, 0, 1, 1], [], []>} : vector<128x128xbf16>, vector<128x128xbf16>, vector<128x128xf32> -> vector<128x128xf32>
    %cst_15 = arith.constant 1.000000e-24 : f32
    %62 = vector.broadcast %cst_15 : f32 to vector<128x128xf32>
    %63 = arith.maximumf %61, %62 : vector<128x128xf32>
    %64 = math.rsqrt %63 : vector<128x128xf32>
    %65 = arith.mulf %58, %64 : vector<128x128xf32>
    %66 = arith.truncf %42 : vector<128x128xf32> to vector<128x128xbf16>
    %c0_16 = arith.constant 0 : index
    %c0_17 = arith.constant 0 : index
    %67 = vector.load %arg7[%c0_16, %c0_17] : memref<128x256xbf16, #tpu.memory_space<vmem>>, vector<128x256xbf16>
    %cst_18 = arith.constant dense<0.000000e+00> : vector<128x256xf32>
    %68 = tpu.matmul %66, %67, %cst_18 {dimension_numbers = #tpu.dot_dimension_numbers<[1], [0], [0], [1], [0, 0, 1, 1], [], []>} : vector<128x128xbf16>, vector<128x256xbf16>, vector<128x256xf32> -> vector<128x256xf32>
    %69 = vector.extract_strided_slice %68 {offsets = [0, 0], sizes = [128, 128], strides = [1, 1]} : vector<128x256xf32> to vector<128x128xf32>
    %70 = vector.extract_strided_slice %68 {offsets = [0, 128], sizes = [128, 128], strides = [1, 1]} : vector<128x256xf32> to vector<128x128xf32>
    %71 = arith.mulf %69, %65 : vector<128x128xf32>
    %72 = arith.truncf %71 : vector<128x128xf32> to vector<128x128xbf16>
    %cst_19 = arith.constant dense<0.000000e+00> : vector<128x128xf32>
    %73 = tpu.matmul %72, %14, %cst_19 {dimension_numbers = #tpu.dot_dimension_numbers<[1], [0], [0], [1], [0, 0, 1, 1], [], []>} : vector<128x128xbf16>, vector<128x128xbf16>, vector<128x128xf32> -> vector<128x128xf32>
    %cst_20 = arith.constant 2.000000e+00 : f32
    %74 = vector.broadcast %cst_20 : f32 to vector<128x128xf32>
    %75 = arith.mulf %74, %5 : vector<128x128xf32>
    %cst_21 = arith.constant 2.71828175 : f32
    %76 = vector.broadcast %cst_21 : f32 to vector<128x128xf32>
    %77 = arith.addf %75, %76 : vector<128x128xf32>
    %78 = math.log %77 : vector<128x128xf32>
    %79 = tpu.reciprocal %78 {approx = true} : vector<128x128xf32> -> vector<128x128xf32>
    %80 = arith.addf %79, %73 : vector<128x128xf32>
    %cst_22 = arith.constant 0.000000e+00 : f32
    %81 = vector.broadcast %cst_22 : f32 to vector<128x128xf32>
    %82 = arith.cmpf oge, %80, %81 : vector<128x128xf32>
    %cst_23 = arith.constant 0.00999999977 : f32
    %83 = vector.broadcast %cst_23 : f32 to vector<128x128xf32>
    %84 = arith.mulf %83, %80 : vector<128x128xf32>
    %85 = arith.select %82, %80, %84 : vector<128x128xi1>, vector<128x128xf32>
    %86 = arith.mulf %85, %65 : vector<128x128xf32>
    %cst_24 = arith.constant 2.000000e+00 : f32
    %87 = vector.broadcast %cst_24 : f32 to vector<128x192xf32>
    %88 = arith.mulf %87, %8 : vector<128x192xf32>
    %cst_25 = arith.constant 1.000000e+00 : f32
    %89 = vector.broadcast %cst_25 : f32 to vector<128x192xf32>
    %90 = arith.addf %88, %89 : vector<128x192xf32>
    %91 = tpu.reciprocal %90 {approx = true} : vector<128x192xf32> -> vector<128x192xf32>
    %c0_26 = arith.constant 0 : index
    %c0_27 = arith.constant 0 : index
    %92 = vector.load %arg2[%c0_26, %c0_27] : memref<128x192xbf16, #tpu.memory_space<vmem>>, vector<128x192xbf16>
    %93 = arith.extf %92 : vector<128x192xbf16> to vector<128x192xf32>
    %94 = arith.mulf %91, %93 : vector<128x192xf32>
    %95 = arith.truncf %86 : vector<128x128xf32> to vector<128x128xbf16>
    %c0_28 = arith.constant 0 : index
    %c0_29 = arith.constant 0 : index
    %96 = vector.load %arg8[%c0_28, %c0_29] : memref<128x128xbf16, #tpu.memory_space<vmem>>, vector<128x128xbf16>
    %cst_30 = arith.constant dense<0.000000e+00> : vector<128x128xf32>
    %97 = tpu.matmul %95, %96, %cst_30 {dimension_numbers = #tpu.dot_dimension_numbers<[1], [0], [0], [1], [0, 0, 1, 1], [], []>} : vector<128x128xbf16>, vector<128x128xbf16>, vector<128x128xf32> -> vector<128x128xf32>
    %98 = arith.addf %70, %97 : vector<128x128xf32>
    %99 = arith.truncf %94 : vector<128x192xf32> to vector<128x192xbf16>
    %c0_31 = arith.constant 0 : index
    %c0_32 = arith.constant 0 : index
    %100 = vector.load %arg9[%c0_31, %c0_32] : memref<192x128xbf16, #tpu.memory_space<vmem>>, vector<192x128xbf16>
    %cst_33 = arith.constant dense<0.000000e+00> : vector<128x128xf32>
    %101 = tpu.matmul %99, %100, %cst_33 {dimension_numbers = #tpu.dot_dimension_numbers<[1], [0], [0], [1], [0, 0, 1, 1], [], []>} : vector<128x192xbf16>, vector<192x128xbf16>, vector<128x128xf32> -> vector<128x128xf32>
    %102 = arith.addf %98, %101 : vector<128x128xf32>
    %cst_34 = arith.constant 0.000000e+00 : f32
    %103 = vector.broadcast %cst_34 : f32 to vector<128x128xf32>
    %104 = arith.maximumf %102, %103 : vector<128x128xf32>
    %105 = arith.truncf %104 : vector<128x128xf32> to vector<128x128xbf16>
    %c0_35 = arith.constant 0 : index
    %c0_36 = arith.constant 0 : index
    %106 = vector.load %arg10[%c0_35, %c0_36] : memref<128x128xbf16, #tpu.memory_space<vmem>>, vector<128x128xbf16>
    tpu.vector_store %arg10[%c0_35, %c0_36], %105 {strides = array<i32>} : memref<128x128xbf16, #tpu.memory_space<vmem>>, vector<128x128xbf16>,
    return
  }
  func.func @transform_0(%arg0: i32) -> (i32, i32) {
    %c0_i32 = arith.constant 0 : i32
    %c0_i32_0 = arith.constant 0 : i32
    return %arg0, %c0_i32 : i32, i32
  }
  func.func @transform_1(%arg0: i32) -> (i32, i32) {
    %c0_i32 = arith.constant 0 : i32
    %c0_i32_0 = arith.constant 0 : i32
    return %arg0, %c0_i32 : i32, i32
  }
  func.func @transform_2(%arg0: i32) -> (i32, i32) {
    %c0_i32 = arith.constant 0 : i32
    %c0_i32_0 = arith.constant 0 : i32
    %c0_i32_1 = arith.constant 0 : i32
    return %c0_i32, %c0_i32_0 : i32, i32
  }
  func.func @transform_3(%arg0: i32) -> (i32, i32) {
    %c0_i32 = arith.constant 0 : i32
    %c0_i32_0 = arith.constant 0 : i32
    %c0_i32_1 = arith.constant 0 : i32
    return %c0_i32, %c0_i32_0 : i32, i32
  }
  func.func @transform_4(%arg0: i32) -> (i32, i32) {
    %c0_i32 = arith.constant 0 : i32
    %c0_i32_0 = arith.constant 0 : i32
    %c0_i32_1 = arith.constant 0 : i32
    return %c0_i32, %c0_i32_0 : i32, i32
  }
  func.func @transform_5(%arg0: i32) -> (i32, i32) {
    %c0_i32 = arith.constant 0 : i32
    %c0_i32_0 = arith.constant 0 : i32
    %c0_i32_1 = arith.constant 0 : i32
    return %c0_i32, %c0_i32_0 : i32, i32
  }
  func.func @transform_6(%arg0: i32) -> (i32, i32) {
    %c0_i32 = arith.constant 0 : i32
    %c0_i32_0 = arith.constant 0 : i32
    %c0_i32_1 = arith.constant 0 : i32
    return %c0_i32, %c0_i32_0 : i32, i32
  }
  func.func @transform_7(%arg0: i32) -> (i32, i32) {
    %c0_i32 = arith.constant 0 : i32
    %c0_i32_0 = arith.constant 0 : i32
    %c0_i32_1 = arith.constant 0 : i32
    return %c0_i32, %c0_i32_0 : i32, i32
  }
  func.func @transform_8(%arg0: i32) -> (i32, i32) {
    %c0_i32 = arith.constant 0 : i32
    %c0_i32_0 = arith.constant 0 : i32
    %c0_i32_1 = arith.constant 0 : i32
    return %c0_i32, %c0_i32_0 : i32, i32
  }
  func.func @transform_9(%arg0: i32) -> (i32, i32) {
    %c0_i32 = arith.constant 0 : i32
    %c0_i32_0 = arith.constant 0 : i32
    return %arg0, %c0_i32 : i32, i32
  }
}

</mosaic_0001>

<llo_original>
// kernel: _forward.1
$region0: #{_forward.1}
  #allocation0 [shape = 'u32[]', space=smem, size = 0x4, offset = 0x4, fixed_abs, tag = 'smem constant byte address 0x4 - core index']
  #allocation1 [shape = 'u32[72,128]{1,0:T(1,128)}', space=vmem, size = 0x9000, scoped, tag = 'internal scratch']
  %s0 = inlined_call_operand.vmem [shape: f32[512,16], index: 0, kind: input, shape index: {}]
  %s1 = inlined_call_operand.vmem [shape: bf16[512,192], index: 1, kind: input, shape index: {}]
  %s2 = inlined_call_operand.vmem [shape: f32[16,512], index: 2, kind: input, shape index: {}]
  %s3 = inlined_call_operand.vmem [shape: f32[16,192], index: 3, kind: input, shape index: {}]
  %s4 = inlined_call_operand.vmem [shape: f32[8,128], index: 4, kind: input, shape index: {}]
  %s5 = inlined_call_operand.vmem [shape: bf16[128,128], index: 5, kind: input, shape index: {}]
  %s6 = inlined_call_operand.vmem [shape: bf16[128,256], index: 6, kind: input, shape index: {}]
  %s7 = inlined_call_operand.vmem [shape: bf16[128,128], index: 7, kind: input, shape index: {}]
  %s8 = inlined_call_operand.vmem [shape: bf16[192,128], index: 8, kind: input, shape index: {}]
  %s9 = inlined_call_operand.vmem [shape: bf16[512,128], index: 9, kind: output, shape index: {}]
  %s10 = sld [smem:[#allocation0]]
  $region69: #{_forward.1} parent=0
    _
  %s12 = ssub.s32 1, %s10
  %s13 = scalar_select 0, %s12, %s10
  loop: start=0, step=1, limit=6
  $region2: #{_forward.1} parent=0 // loop_pre_header
    _
  $region3: #{_forward.1} parent=0 // loop_header
    %s15 = sphi 0, %s19
    %p16 = scmp.ge.s32.totalorder %s15, 6
    %s25 = sphi 0, %s27
    %s28 = sphi 0, %s25
    %s29 = sphi 0, %s28
    %s45 = sphi 0, %s29
    %s51 = sphi 0, %s53
    %s54 = sphi 0, %s51
    %s55 = sphi 0, %s54
    %s71 = sphi 0, %s55
    %s75 = sphi 0, %s75
    %s77 = sphi 0, %s75
    %s78 = sphi 0, %s77
    %s92 = sphi 0, %s78
    %s96 = sphi 0, %s96
    %s98 = sphi 0, %s96
    %s99 = sphi 0, %s98
    %s113 = sphi 0, %s99
    %s117 = sphi 0, %s117
    %s119 = sphi 0, %s117
    %s120 = sphi 0, %s119
    %s134 = sphi 0, %s120
    %s138 = sphi 0, %s138
    %s140 = sphi 0, %s138
    %s141 = sphi 0, %s140
    %s155 = sphi 0, %s141
    %s159 = sphi 0, %s159
    %s161 = sphi 0, %s159
    %s162 = sphi 0, %s161
    %s176 = sphi 0, %s162
    %s180 = sphi 0, %s180
    %s182 = sphi 0, %s180
    %s183 = sphi 0, %s182
    %s197 = sphi 0, %s183
    %s201 = sphi 0, %s201
    %s203 = sphi 0, %s201
    %s204 = sphi 0, %s203
    %s218 = sphi 0, %s204
    %s224 = sphi 0, %s226
    %s227 = sphi 0, %s224
    %s228 = sphi 0, %s227
    %s244 = sphi 0, %s228
  $region4: #{_forward.1} parent=0 // loop_header_branch
    %18 = sbr.rel (%p16) target = $region8
  $region5: #{_forward.1} parent=0 // loop_body
    %s20 = ssub.s32 %s15, 1
    %s21 = ssub.s32 %s15, 2
    %s22 = sadd.s32 %s15, 1
    %s23 = ssub.s32 %s15, %s22
    %p24 = scmp.eq.s32.totalorder %s23, 0
    %s26 = sadd.s32 %s25, 1
    %s27 = scalar_select %p24, %s25, %s26
    %p30 = pneg %p24
    %p31 = scmp.eq.s32.totalorder %s15, 3
    %p32 = por %p30, %p31
    %p33 = scmp.ne.s32.totalorder %s25, %s28
    %p34 = scmp.eq.s32.totalorder %s15, 0
    %p35 = por %p33, %p34
    %p36 = scmp.ne.s32.totalorder %s25, %s28
    %p37 = scmp.eq.s32.totalorder %s20, 3
    %p38 = por %p36, %p37
    %p39 = scmp.ne.s32.totalorder %s28, %s29
    %p40 = scmp.eq.s32.totalorder %s20, 0
    %p41 = por %p39, %p40
    %p42 = scmp.ne.s32.totalorder %s28, %s29
    %p43 = scmp.eq.s32.totalorder %s21, 3
    %p44 = por %p42, %p43
    %p46 = scmp.ne.s32.totalorder %s29, %s45
    %p47 = scmp.eq.s32.totalorder %s21, 0
    %p48 = por %p46, %p47
    %s49 = ssub.s32 %s15, %s22
    %p50 = scmp.eq.s32.totalorder %s49, 0
    %s52 = sadd.s32 %s51, 1
    %s53 = scalar_select %p50, %s51, %s52
    %p56 = pneg %p50
    %p57 = scmp.eq.s32.totalorder %s15, 3
    %p58 = por %p56, %p57
    %p59 = scmp.ne.s32.totalorder %s51, %s54
    %p60 = scmp.eq.s32.totalorder %s15, 0
    %p61 = por %p59, %p60
    %p62 = scmp.ne.s32.totalorder %s51, %s54
    %p63 = scmp.eq.s32.totalorder %s20, 3
    %p64 = por %p62, %p63
    %p65 = scmp.ne.s32.totalorder %s54, %s55
    %p66 = scmp.eq.s32.totalorder %s20, 0
    %p67 = por %p65, %p66
    %p68 = scmp.ne.s32.totalorder %s54, %s55
    %p69 = scmp.eq.s32.totalorder %s21, 3
    %p70 = por %p68, %p69
    %p72 = scmp.ne.s32.totalorder %s55, %s71
    %p73 = scmp.eq.s32.totalorder %s21, 0
    %p74 = por %p72, %p73
    %s76 = sadd.s32 %s75, 1
    %p79 = scmp.eq.s32.totalorder %s15, 3
    %p80 = scmp.ne.s32.totalorder %s75, %s77
    %p81 = scmp.eq.s32.totalorder %s15, 0
    %p82 = por %p80, %p81
    %p83 = scmp.ne.s32.totalorder %s75, %s77
    %p84 = scmp.eq.s32.totalorder %s20, 3
    %p85 = por %p83, %p84
    %p86 = scmp.ne.s32.totalorder %s77, %s78
    %p87 = scmp.eq.s32.totalorder %s20, 0
    %p88 = por %p86, %p87
    %p89 = scmp.ne.s32.totalorder %s77, %s78
    %p90 = scmp.eq.s32.totalorder %s21, 3
    %p91 = por %p89, %p90
    %p93 = scmp.ne.s32.totalorder %s78, %s92
    %p94 = scmp.eq.s32.totalorder %s21, 0
    %p95 = por %p93, %p94
    %s97 = sadd.s32 %s96, 1
    %p100 = scmp.eq.s32.totalorder %s15, 3
    %p101 = scmp.ne.s32.totalorder %s96, %s98
    %p102 = scmp.eq.s32.totalorder %s15, 0
    %p103 = por %p101, %p102
    %p104 = scmp.ne.s32.totalorder %s96, %s98
    %p105 = scmp.eq.s32.totalorder %s20, 3
    %p106 = por %p104, %p105
    %p107 = scmp.ne.s32.totalorder %s98, %s99
    %p108 = scmp.eq.s32.totalorder %s20, 0
    %p109 = por %p107, %p108
    %p110 = scmp.ne.s32.totalorder %s98, %s99
    %p111 = scmp.eq.s32.totalorder %s21, 3
    %p112 = por %p110, %p111
    %p114 = scmp.ne.s32.totalorder %s99, %s113
    %p115 = scmp.eq.s32.totalorder %s21, 0
    %p116 = por %p114, %p115
    %s118 = sadd.s32 %s117, 1
    %p121 = scmp.eq.s32.totalorder %s15, 3
    %p122 = scmp.ne.s32.totalorder %s117, %s119
    %p123 = scmp.eq.s32.totalorder %s15, 0
    %p124 = por %p122, %p123
    %p125 = scmp.ne.s32.totalorder %s117, %s119
    %p126 = scmp.eq.s32.totalorder %s20, 3
    %p127 = por %p125, %p126
    %p128 = scmp.ne.s32.totalorder %s119, %s120
    %p129 = scmp.eq.s32.totalorder %s20, 0
    %p130 = por %p128, %p129
    %p131 = scmp.ne.s32.totalorder %s119, %s120
    %p132 = scmp.eq.s32.totalorder %s21, 3
    %p133 = por %p131, %p132
    %p135 = scmp.ne.s32.totalorder %s120, %s134
    %p136 = scmp.eq.s32.totalorder %s21, 0
    %p137 = por %p135, %p136
    %s139 = sadd.s32 %s138, 1
    %p142 = scmp.eq.s32.totalorder %s15, 3
    %p143 = scmp.ne.s32.totalorder %s138, %s140
    %p144 = scmp.eq.s32.totalorder %s15, 0
    %p145 = por %p143, %p144
    %p146 = scmp.ne.s32.totalorder %s138, %s140
    %p147 = scmp.eq.s32.totalorder %s20, 3
    %p148 = por %p146, %p147
    %p149 = scmp.ne.s32.totalorder %s140, %s141
    %p150 = scmp.eq.s32.totalorder %s20, 0
    %p151 = por %p149, %p150
    %p152 = scmp.ne.s32.totalorder %s140, %s141
    %p153 = scmp.eq.s32.totalorder %s21, 3
    %p154 = por %p152, %p153
    %p156 = scmp.ne.s32.totalorder %s141, %s155
    %p157 = scmp.eq.s32.totalorder %s21, 0
    %p158 = por %p156, %p157
    %s160 = sadd.s32 %s159, 1
    %p163 = scmp.eq.s32.totalorder %s15, 3
    %p164 = scmp.ne.s32.totalorder %s159, %s161
    %p165 = scmp.eq.s32.totalorder %s15, 0
    %p166 = por %p164, %p165
    %p167 = scmp.ne.s32.totalorder %s159, %s161
    %p168 = scmp.eq.s32.totalorder %s20, 3
    %p169 = por %p167, %p168
    %p170 = scmp.ne.s32.totalorder %s161, %s162
    %p171 = scmp.eq.s32.totalorder %s20, 0
    %p172 = por %p170, %p171
    %p173 = scmp.ne.s32.totalorder %s161, %s162
    %p174 = scmp.eq.s32.totalorder %s21, 3
    %p175 = por %p173, %p174
    %p177 = scmp.ne.s32.totalorder %s162, %s176
    %p178 = scmp.eq.s32.totalorder %s21, 0
    %p179 = por %p177, %p178
    %s181 = sadd.s32 %s180, 1
    %p184 = scmp.eq.s32.totalorder %s15, 3
    %p185 = scmp.ne.s32.totalorder %s180, %s182
    %p186 = scmp.eq.s32.totalorder %s15, 0
    %p187 = por %p185, %p186
    %p188 = scmp.ne.s32.totalorder %s180, %s182
    %p189 = scmp.eq.s32.totalorder %s20, 3
    %p190 = por %p188, %p189
    %p191 = scmp.ne.s32.totalorder %s182, %s183
    %p192 = scmp.eq.s32.totalorder %s20, 0
    %p193 = por %p191, %p192
    %p194 = scmp.ne.s32.totalorder %s182, %s183
    %p195 = scmp.eq.s32.totalorder %s21, 3
    %p196 = por %p194, %p195
    %p198 = scmp.ne.s32.totalorder %s183, %s197
    %p199 = scmp.eq.s32.totalorder %s21, 0
    %p200 = por %p198, %p199
    %s202 = sadd.s32 %s201, 1
    %p205 = scmp.eq.s32.totalorder %s15, 3
    %p206 = scmp.ne.s32.totalorder %s201, %s203
    %p207 = scmp.eq.s32.totalorder %s15, 0
    %p208 = por %p206, %p207
    %p209 = scmp.ne.s32.totalorder %s201, %s203
    %p210 = scmp.eq.s32.totalorder %s20, 3
    %p211 = por %p209, %p210
    %p212 = scmp.ne.s32.totalorder %s203, %s204
    %p213 = scmp.eq.s32.totalorder %s20, 0
    %p214 = por %p212, %p213
    %p215 = scmp.ne.s32.totalorder %s203, %s204
    %p216 = scmp.eq.s32.totalorder %s21, 3
    %p217 = por %p215, %p216
    %p219 = scmp.ne.s32.totalorder %s204, %s218
    %p220 = scmp.eq.s32.totalorder %s21, 0
    %p221 = por %p219, %p220
    %s222 = ssub.s32 %s15, %s22
    %p223 = scmp.eq.s32.totalorder %s222, 0
    %s225 = sadd.s32 %s224, 1
    %s226 = scalar_select %p223, %s224, %s225
    %p229 = pneg %p223
    %p230 = scmp.eq.s32.totalorder %s15, 3
    %p231 = por %p229, %p230
    %p232 = scmp.ne.s32.totalorder %s224, %s227
    %p233 = scmp.eq.s32.totalorder %s15, 0
    %p234 = por %p232, %p233
    %p235 = scmp.ne.s32.totalorder %s224, %s227
    %p236 = scmp.eq.s32.totalorder %s20, 3
    %p237 = por %p235, %p236
    %p238 = scmp.ne.s32.totalorder %s227, %s228
    %p239 = scmp.eq.s32.totalorder %s20, 0
    %p240 = por %p238, %p239
    %p241 = scmp.ne.s32.totalorder %s227, %s228
    %p242 = scmp.eq.s32.totalorder %s21, 3
    %p243 = por %p241, %p242
    %p245 = scmp.ne.s32.totalorder %s228, %s244
    %p246 = scmp.eq.s32.totalorder %s21, 0
    %p247 = por %p245, %p246
    %p248 = scmp.le.s32.totalorder 1, %s15
    %p249 = scmp.lt.s32.totalorder %s15, 5
    %p250 = pnand %p248, %p249
    %p251 = pneg %p250
    // Predicated region
    $region9: #{_forward.1} parent=5 // pred_check
      _
    $region10: #{_forward.1} parent=5 // pred_check_branch
      %253 = sbr.rel (%p250) target = $region12
    $region11: #{_forward.1} parent=5 // pred_region
      %s254 = ssub.s32 %s15, 1
      // Predicated region
      $region13: #{_forward.1} parent=11 // pred_check
        %p255 = pneg %p88
      $region14: #{_forward.1} parent=11 // pred_check_branch
        %257 = sbr.rel (%p255) target = $region16
      $region15: #{_forward.1} parent=11 // pred_region
        _
      $region16: #{_forward.1} parent=11 // pred_fallthru
        _
      // Predicated region
      $region17: #{_forward.1} parent=11 // pred_check
        %p258 = pneg %p109
      $region18: #{_forward.1} parent=11 // pred_check_branch
        %260 = sbr.rel (%p258) target = $region20
      $region19: #{_forward.1} parent=11 // pred_region
        _
      $region20: #{_forward.1} parent=11 // pred_fallthru
        _
      // Predicated region
      $region21: #{_forward.1} parent=11 // pred_check
        %p261 = pneg %p130
      $region22: #{_forward.1} parent=11 // pred_check_branch
        %263 = sbr.rel (%p261) target = $region24
      $region23: #{_forward.1} parent=11 // pred_region
        _
      $region24: #{_forward.1} parent=11 // pred_fallthru
        _
      // Predicated region
      $region25: #{_forward.1} parent=11 // pred_check
        %p264 = pneg %p151
      $region26: #{_forward.1} parent=11 // pred_check_branch
        %266 = sbr.rel (%p264) target = $region28
      $region27: #{_forward.1} parent=11 // pred_region
        _
      $region28: #{_forward.1} parent=11 // pred_fallthru
        _
      // Predicated region
      $region29: #{_forward.1} parent=11 // pred_check
        %p267 = pneg %p172
      $region30: #{_forward.1} parent=11 // pred_check_branch
        %269 = sbr.rel (%p267) target = $region32
      $region31: #{_forward.1} parent=11 // pred_region
        _
      $region32: #{_forward.1} parent=11 // pred_fallthru
        _
      // Predicated region
      $region33: #{_forward.1} parent=11 // pred_check
        %p270 = pneg %p193
      $region34: #{_forward.1} parent=11 // pred_check_branch
        %272 = sbr.rel (%p270) target = $region36
      $region35: #{_forward.1} parent=11 // pred_region
        _
      $region36: #{_forward.1} parent=11 // pred_fallthru
        _
      // Predicated region
      $region37: #{_forward.1} parent=11 // pred_check
        %p273 = pneg %p214
      $region38: #{_forward.1} parent=11 // pred_check_branch
        %275 = sbr.rel (%p273) target = $region40
      $region39: #{_forward.1} parent=11 // pred_region
        _
      $region40: #{_forward.1} parent=11 // pred_fallthru
        _
    $region12: #{_forward.1} parent=5 // pred_fallthru
      _
    %p276 = scmp.lt.s32.totalorder %s15, 4
    // Predicated region
    $region41: #{_forward.1} parent=5 // pred_check
      %p277 = pneg %p276
    $region42: #{_forward.1} parent=5 // pred_check_branch
      %279 = sbr.rel (%p277) target = $region44
    $region43: #{_forward.1} parent=5 // pred_region
      // Predicated region
      $region45: #{_forward.1} parent=43 // pred_check
        %p280 = pneg %p35
      $region46: #{_forward.1} parent=43 // pred_check_branch
        %282 = sbr.rel (%p280) target = $region48
      $region47: #{_forward.1} parent=43 // pred_region
        %s283 = smul.u32 16, %s15
        %p284 = scmp.lt.s32.totalorder %s283, 63
        %s285 = scalar_select %p284, %s283, 63
        %s286 = smul.addr %s285, 8
        %s287 = scalar_lea.vmem %s0, %s286
        %s288 = smul.u32 16, %s15
      $region48: #{_forward.1} parent=43 // pred_fallthru
        _
      // Predicated region
      $region49: #{_forward.1} parent=43 // pred_check
        %p289 = pneg %p61
      $region50: #{_forward.1} parent=43 // pred_check_branch
        %291 = sbr.rel (%p289) target = $region52
      $region51: #{_forward.1} parent=43 // pred_region
        %s292 = smul.u32 16, %s15
        %p293 = scmp.lt.s32.totalorder %s292, 63
        %s294 = scalar_select %p293, %s292, 63
        %s295 = smul.addr %s294, 2
        %s296 = smul.addr %s295, 4
        %s297 = scalar_lea.vmem %s1, %s296
        %s298 = smul.u32 16, %s15
      $region52: #{_forward.1} parent=43 // pred_fallthru
        _
    $region44: #{_forward.1} parent=5 // pred_fallthru
      _
    %p299 = scmp.le.s32.totalorder 1, %s15
    %p300 = scmp.lt.s32.totalorder %s15, 5
    %p301 = pnand %p299, %p300
    %p302 = pneg %p301
    // Predicated region
    $region53: #{_forward.1} parent=5 // pred_check
      _
    $region54: #{_forward.1} parent=5 // pred_check_branch
      %304 = sbr.rel (%p301) target = $region56
    $region55: #{_forward.1} parent=5 // pred_region
      %s305 = ssub.s32 %s15, 1
      %s306 = smul.u32 16, %s20
      %p307 = scmp.lt.s32.totalorder %s306, 63
      %s308 = scalar_select %p307, %s306, 63
      %s309 = smul.addr %s308, 8
      %s310 = scalar_lea.vmem %s0, %s309
      %p311 = pneg %p41
      %p312 = pneg %p38
      %s313 = smul.u32 16, %s20
      %p314 = scmp.lt.s32.totalorder %s313, 63
      %s315 = scalar_select %p314, %s313, 63
      %s316 = smul.addr %s315, 2
      %s317 = smul.addr %s316, 4
      %s318 = scalar_lea.vmem %s1, %s317
      %p319 = pneg %p67
      %p320 = pneg %p64
      %p321 = pneg %p88
      %p322 = pneg %p85
      %p323 = pneg %p109
      %p324 = pneg %p106
      %p325 = pneg %p130
      %p326 = pneg %p127
      %p327 = pneg %p151
      %p328 = pneg %p148
      %p329 = pneg %p172
      %p330 = pneg %p169
      %p331 = pneg %p193
      %p332 = pneg %p190
      %p333 = pneg %p214
      %p334 = pneg %p211
      %p335 = pneg %p240
      %p336 = pneg %p237
      %s337 = smul.u32 16, %s20
      %p338 = scmp.lt.s32.totalorder %s337, 63
      %s339 = scalar_select %p338, %s337, 63
      %s340 = smul.addr %s339, 4
      %s341 = scalar_lea.vmem %s9, %s340
      %s342 = smul.u32 16, %s20
      %p343 = scmp.lt.s32.totalorder %s342, 63
      %s344 = scalar_select %p343, %s342, 63
      %s345 = smul.addr %s344, 8
      %s346 = scalar_lea.vmem %s0, %s345
      %s347 = smul.u32 16, %s20
      %s348 = smul.u32 16, %s20
      %p349 = scmp.lt.s32.totalorder %s348, 63
      %s350 = scalar_select %p349, %s348, 63
      %s351 = smul.addr %s350, 2
      %s352 = smul.addr %s351, 4
      %s353 = scalar_lea.vmem %s1, %s352
      %s354 = smul.u32 16, %s20
      %s355 = smul.u32 16, %s20
      %p356 = scmp.lt.s32.totalorder %s355, 63
      %s357 = scalar_select %p356, %s355, 63
      %s358 = smul.addr %s357, 4
      %s359 = scalar_lea.vmem %s9, %s358
      %s360 = smul.u32 16, %s20
      %v362 = vld [vmem:[%s346] sm:$0xff]
      %v363 = vld [vmem:[%s346 + $0x8] sm:$0xff]
      %v364 = vld [vmem:[%s346 + $0x10] sm:$0xff]
      %v365 = vld [vmem:[%s346 + $0x18] sm:$0xff]
      %v366 = vld [vmem:[%s346 + $0x20] sm:$0xff]
      %v367 = vld [vmem:[%s346 + $0x28] sm:$0xff]
      %v368 = vld [vmem:[%s346 + $0x30] sm:$0xff]
      %v369 = vld [vmem:[%s346 + $0x38] sm:$0xff]
      %v370 = vld [vmem:[%s346 + $0x40] sm:$0xff]
      %v371 = vld [vmem:[%s346 + $0x48] sm:$0xff]
      %v372 = vld [vmem:[%s346 + $0x50] sm:$0xff]
      %v373 = vld [vmem:[%s346 + $0x58] sm:$0xff]
      %v374 = vld [vmem:[%s346 + $0x60] sm:$0xff]
      %v375 = vld [vmem:[%s346 + $0x68] sm:$0xff]
      %v376 = vld [vmem:[%s346 + $0x70] sm:$0xff]
      %v377 = vld [vmem:[%s346 + $0x78] sm:$0xff]
      %v378 = vld [vmem:[%s2] sm:$0xff]
      %v379 = vld [vmem:[%s2 + $0x8] sm:$0xff]
      %v380 = vld [vmem:[%s2 + $0x10] sm:$0xff]
      %v381 = vld [vmem:[%s2 + $0x18] sm:$0xff]
      %v382 = vld [vmem:[%s2 + $0x20] sm:$0xff]
      %v383 = vld [vmem:[%s2 + $0x28] sm:$0xff]
      %v384 = vld [vmem:[%s2 + $0x30] sm:$0xff]
      %v385 = vld [vmem:[%s2 + $0x38] sm:$0xff]
      %vm386 = vcmask 130048
      %v388 = vsel %vm386, %v362, 0
      %v391 = vsel %vm386, %v363, 0
      %v394 = vsel %vm386, %v364, 0
      %v397 = vsel %vm386, %v365, 0
      %v400 = vsel %vm386, %v366, 0
      %v403 = vsel %vm386, %v367, 0
      %v406 = vsel %vm386, %v368, 0
      %v409 = vsel %vm386, %v369, 0
      %v412 = vsel %vm386, %v370, 0
      %v415 = vsel %vm386, %v371, 0
      %v418 = vsel %vm386, %v372, 0
      %v421 = vsel %vm386, %v373, 0
      %v424 = vsel %vm386, %v374, 0
      %v427 = vsel %vm386, %v375, 0
      %v430 = vsel %vm386, %v376, 0
      %v433 = vsel %vm386, %v377, 0
      %435 = vmatpush.msra.mxu0 0.0
      %436 = vmatpush.msra.mxu0 0.0
      %437 = vmatpush.msra.mxu0 0.0
      %438 = vmatpush.msra.mxu0 0.0
      %439 = vmatpush.msra.mxu0 0.0
      %440 = vmatpush.msra.mxu0 0.0
      %441 = vmatpush.msra.mxu0 0.0
      %442 = vmatpush.msra.mxu0 0.0
      %443 = vmatpush.msra.mxu0 0.0
      %444 = vmatpush.msra.mxu0 0.0
      %445 = vmatpush.msra.mxu0 0.0
      %446 = vmatpush.msra.mxu0 0.0
      %447 = vmatpush.msra.mxu0 0.0
      %448 = vmatpush.msra.mxu0 0.0
      %449 = vmatpush.msra.mxu0 %v382
      %450 = vmatpush.msra.mxu0 %v378
      %451 = vmatmul.f32.gmra.mxu0 %v388
      %v452 = vpop.f32.mrf.mxu0
      %v453 = vadd.f32 0.0, %v452
      %454 = vmatmul.f32.gmra.mxu0 %v391
      %v455 = vpop.f32.mrf.mxu0
      %v456 = vadd.f32 0.0, %v455
      %457 = vmatmul.f32.gmra.mxu0 %v394
      %v458 = vpop.f32.mrf.mxu0
      %v459 = vadd.f32 0.0, %v458
      %460 = vmatmul.f32.gmra.mxu0 %v397
      %v461 = vpop.f32.mrf.mxu0
      %v462 = vadd.f32 0.0, %v461
      %463 = vmatmul.f32.gmra.mxu0 %v400
      %v464 = vpop.f32.mrf.mxu0
      %v465 = vadd.f32 0.0, %v464
      %466 = vmatmul.f32.gmra.mxu0 %v403
      %v467 = vpop.f32.mrf.mxu0
      %v468 = vadd.f32 0.0, %v467
      %469 = vmatmul.f32.gmra.mxu0 %v406
      %v470 = vpop.f32.mrf.mxu0
      %v471 = vadd.f32 0.0, %v470
      %472 = vmatmul.f32.gmra.mxu0 %v409
      %v473 = vpop.f32.mrf.mxu0
      %v474 = vadd.f32 0.0, %v473
      %475 = vmatmul.f32.gmra.mxu0 %v412
      %v476 = vpop.f32.mrf.mxu0
      %v477 = vadd.f32 0.0, %v476
      %478 = vmatmul.f32.gmra.mxu0 %v415
      %v479 = vpop.f32.mrf.mxu0
      %v480 = vadd.f32 0.0, %v479
      %481 = vmatmul.f32.gmra.mxu0 %v418
      %v482 = vpop.f32.mrf.mxu0
      %v483 = vadd.f32 0.0, %v482
      %484 = vmatmul.f32.gmra.mxu0 %v421
      %v485 = vpop.f32.mrf.mxu0
      %v486 = vadd.f32 0.0, %v485
      %487 = vmatmul.f32.gmra.mxu0 %v424
      %v488 = vpop.f32.mrf.mxu0
      %v489 = vadd.f32 0.0, %v488
      %490 = vmatmul.f32.gmra.mxu0 %v427
      %v491 = vpop.f32.mrf.mxu0
      %v492 = vadd.f32 0.0, %v491
      %493 = vmatmul.f32.gmra.mxu0 %v430
      %v494 = vpop.f32.mrf.mxu0
      %v495 = vadd.f32 0.0, %v494
      %496 = vmatmul.f32.gmra.mxu0 %v433
      %v497 = vpop.f32.mrf.mxu0
      %v498 = vadd.f32 0.0, %v497
      %499 = vdwg.mxu0
      %500 = vmatpush.msra.mxu0 0.0
      %501 = vmatpush.msra.mxu0 0.0
      %502 = vmatpush.msra.mxu0 0.0
      %503 = vmatpush.msra.mxu0 0.0
      %504 = vmatpush.msra.mxu0 0.0
      %505 = vmatpush.msra.mxu0 0.0
      %506 = vmatpush.msra.mxu0 0.0
      %507 = vmatpush.msra.mxu0 0.0
      %508 = vmatpush.msra.mxu0 0.0
      %509 = vmatpush.msra.mxu0 0.0
      %510 = vmatpush.msra.mxu0 0.0
      %511 = vmatpush.msra.mxu0 0.0
      %512 = vmatpush.msra.mxu0 0.0
      %513 = vmatpush.msra.mxu0 0.0
      %514 = vmatpush.msra.mxu0 %v383
      %515 = vmatpush.msra.mxu0 %v379
      %516 = vmatmul.f32.gmra.mxu0 %v388
      %v517 = vpop.f32.mrf.mxu0
      %v518 = vadd.f32 0.0, %v517
      %519 = vmatmul.f32.gmra.mxu0 %v391
      %v520 = vpop.f32.mrf.mxu0
      %v521 = vadd.f32 0.0, %v520
      %522 = vmatmul.f32.gmra.mxu0 %v394
      %v523 = vpop.f32.mrf.mxu0
      %v524 = vadd.f32 0.0, %v523
      %525 = vmatmul.f32.gmra.mxu0 %v397
      %v526 = vpop.f32.mrf.mxu0
      %v527 = vadd.f32 0.0, %v526
      %528 = vmatmul.f32.gmra.mxu0 %v400
      %v529 = vpop.f32.mrf.mxu0
      %v530 = vadd.f32 0.0, %v529
      %531 = vmatmul.f32.gmra.mxu0 %v403
      %v532 = vpop.f32.mrf.mxu0
      %v533 = vadd.f32 0.0, %v532
      %534 = vmatmul.f32.gmra.mxu0 %v406
      %v535 = vpop.f32.mrf.mxu0
      %v536 = vadd.f32 0.0, %v535
      %537 = vmatmul.f32.gmra.mxu0 %v409
      %v538 = vpop.f32.mrf.mxu0
      %v539 = vadd.f32 0.0, %v538
      %540 = vmatmul.f32.gmra.mxu0 %v412
      %v541 = vpop.f32.mrf.mxu0
      %v542 = vadd.f32 0.0, %v541
      %543 = vmatmul.f32.gmra.mxu0 %v415
      %v544 = vpop.f32.mrf.mxu0
      %v545 = vadd.f32 0.0, %v544
      %546 = vmatmul.f32.gmra.mxu0 %v418
      %v547 = vpop.f32.mrf.mxu0
      %v548 = vadd.f32 0.0, %v547
      %549 = vmatmul.f32.gmra.mxu0 %v421
      %v550 = vpop.f32.mrf.mxu0
      %v551 = vadd.f32 0.0, %v550
      %552 = vmatmul.f32.gmra.mxu0 %v424
      %v553 = vpop.f32.mrf.mxu0
      %v554 = vadd.f32 0.0, %v553
      %555 = vmatmul.f32.gmra.mxu0 %v427
      %v556 = vpop.f32.mrf.mxu0
      %v557 = vadd.f32 0.0, %v556
      %558 = vmatmul.f32.gmra.mxu0 %v430
      %v559 = vpop.f32.mrf.mxu0
      %v560 = vadd.f32 0.0, %v559
      %561 = vmatmul.f32.gmra.mxu0 %v433
      %v562 = vpop.f32.mrf.mxu0
      %v563 = vadd.f32 0.0, %v562
      %564 = vdwg.mxu0
      %565 = vmatpush.msra.mxu0 0.0
      %566 = vmatpush.msra.mxu0 0.0
      %567 = vmatpush.msra.mxu0 0.0
      %568 = vmatpush.msra.mxu0 0.0
      %569 = vmatpush.msra.mxu0 0.0
      %570 = vmatpush.msra.mxu0 0.0
      %571 = vmatpush.msra.mxu0 0.0
      %572 = vmatpush.msra.mxu0 0.0
      %573 = vmatpush.msra.mxu0 0.0
      %574 = vmatpush.msra.mxu0 0.0
      %575 = vmatpush.msra.mxu0 0.0
      %576 = vmatpush.msra.mxu0 0.0
      %577 = vmatpush.msra.mxu0 0.0
      %578 = vmatpush.msra.mxu0 0.0
      %579 = vmatpush.msra.mxu0 %v384
      %580 = vmatpush.msra.mxu0 %v380
      %581 = vmatmul.f32.gmra.mxu0 %v388
      %v582 = vpop.f32.mrf.mxu0
      %v583 = vadd.f32 0.0, %v582
      %584 = vmatmul.f32.gmra.mxu0 %v391
      %v585 = vpop.f32.mrf.mxu0
      %v586 = vadd.f32 0.0, %v585
      %587 = vmatmul.f32.gmra.mxu0 %v394
      %v588 = vpop.f32.mrf.mxu0
      %v589 = vadd.f32 0.0, %v588
      %590 = vmatmul.f32.gmra.mxu0 %v397
      %v591 = vpop.f32.mrf.mxu0
      %v592 = vadd.f32 0.0, %v591
      %593 = vmatmul.f32.gmra.mxu0 %v400
      %v594 = vpop.f32.mrf.mxu0
      %v595 = vadd.f32 0.0, %v594
      %596 = vmatmul.f32.gmra.mxu0 %v403
      %v597 = vpop.f32.mrf.mxu0
      %v598 = vadd.f32 0.0, %v597
      %599 = vmatmul.f32.gmra.mxu0 %v406
      %v600 = vpop.f32.mrf.mxu0
      %v601 = vadd.f32 0.0, %v600
      %602 = vmatmul.f32.gmra.mxu0 %v409
      %v603 = vpop.f32.mrf.mxu0
      %v604 = vadd.f32 0.0, %v603
      %605 = vmatmul.f32.gmra.mxu0 %v412
      %v606 = vpop.f32.mrf.mxu0
      %v607 = vadd.f32 0.0, %v606
      %608 = vmatmul.f32.gmra.mxu0 %v415
      %v609 = vpop.f32.mrf.mxu0
      %v610 = vadd.f32 0.0, %v609
      %611 = vmatmul.f32.gmra.mxu0 %v418
      %v612 = vpop.f32.mrf.mxu0
      %v613 = vadd.f32 0.0, %v612
      %614 = vmatmul.f32.gmra.mxu0 %v421
      %v615 = vpop.f32.mrf.mxu0
      %v616 = vadd.f32 0.0, %v615
      %617 = vmatmul.f32.gmra.mxu0 %v424
      %v618 = vpop.f32.mrf.mxu0
      %v619 = vadd.f32 0.0, %v618
      %620 = vmatmul.f32.gmra.mxu0 %v427
      %v621 = vpop.f32.mrf.mxu0
      %v622 = vadd.f32 0.0, %v621
      %623 = vmatmul.f32.gmra.mxu0 %v430
      %v624 = vpop.f32.mrf.mxu0
      %v625 = vadd.f32 0.0, %v624
      %626 = vmatmul.f32.gmra.mxu0 %v433
      %v627 = vpop.f32.mrf.mxu0
      %v628 = vadd.f32 0.0, %v627
      %629 = vdwg.mxu0
      %630 = vmatpush.msra.mxu0 0.0
      %631 = vmatpush.msra.mxu0 0.0
      %632 = vmatpush.msra.mxu0 0.0
      %633 = vmatpush.msra.mxu0 0.0
      %634 = vmatpush.msra.mxu0 0.0
      %635 = vmatpush.msra.mxu0 0.0
      %636 = vmatpush.msra.mxu0 0.0
      %637 = vmatpush.msra.mxu0 0.0
      %638 = vmatpush.msra.mxu0 0.0
      %639 = vmatpush.msra.mxu0 0.0
      %640 = vmatpush.msra.mxu0 0.0
      %641 = vmatpush.msra.mxu0 0.0
      %642 = vmatpush.msra.mxu0 0.0
      %643 = vmatpush.msra.mxu0 0.0
      %644 = vmatpush.msra.mxu0 %v385
      %645 = vmatpush.msra.mxu0 %v381
      %646 = vmatmul.f32.gmra.mxu0 %v388
      %v647 = vpop.f32.mrf.mxu0
      %v648 = vadd.f32 0.0, %v647
      %649 = vmatmul.f32.gmra.mxu0 %v391
      %v650 = vpop.f32.mrf.mxu0
      %v651 = vadd.f32 0.0, %v650
      %652 = vmatmul.f32.gmra.mxu0 %v394
      %v653 = vpop.f32.mrf.mxu0
      %v654 = vadd.f32 0.0, %v653
      %655 = vmatmul.f32.gmra.mxu0 %v397
      %v656 = vpop.f32.mrf.mxu0
      %v657 = vadd.f32 0.0, %v656
      %658 = vmatmul.f32.gmra.mxu0 %v400
      %v659 = vpop.f32.mrf.mxu0
      %v660 = vadd.f32 0.0, %v659
      %661 = vmatmul.f32.gmra.mxu0 %v403
      %v662 = vpop.f32.mrf.mxu0
      %v663 = vadd.f32 0.0, %v662
      %664 = vmatmul.f32.gmra.mxu0 %v406
      %v665 = vpop.f32.mrf.mxu0
      %v666 = vadd.f32 0.0, %v665
      %667 = vmatmul.f32.gmra.mxu0 %v409
      %v668 = vpop.f32.mrf.mxu0
      %v669 = vadd.f32 0.0, %v668
      %670 = vmatmul.f32.gmra.mxu0 %v412
      %v671 = vpop.f32.mrf.mxu0
      %v672 = vadd.f32 0.0, %v671
      %673 = vmatmul.f32.gmra.mxu0 %v415
      %v674 = vpop.f32.mrf.mxu0
      %v675 = vadd.f32 0.0, %v674
      %676 = vmatmul.f32.gmra.mxu0 %v418
      %v677 = vpop.f32.mrf.mxu0
      %v678 = vadd.f32 0.0, %v677
      %679 = vmatmul.f32.gmra.mxu0 %v421
      %v680 = vpop.f32.mrf.mxu0
      %v681 = vadd.f32 0.0, %v680
      %682 = vmatmul.f32.gmra.mxu0 %v424
      %v683 = vpop.f32.mrf.mxu0
      %v684 = vadd.f32 0.0, %v683
      %685 = vmatmul.f32.gmra.mxu0 %v427
      %v686 = vpop.f32.mrf.mxu0
      %v687 = vadd.f32 0.0, %v686
      %688 = vmatmul.f32.gmra.mxu0 %v430
      %v689 = vpop.f32.mrf.mxu0
      %v690 = vadd.f32 0.0, %v689
      %691 = vmatmul.f32.gmra.mxu0 %v433
      %v692 = vpop.f32.mrf.mxu0
      %v693 = vadd.f32 0.0, %v692
      %694 = vdwg.mxu0
      %v695 = vld [vmem:[%s3] sm:$0xff]
      %v696 = vld [vmem:[%s3 + $0x8] sm:$0xff]
      %v697 = vld [vmem:[%s3 + $0x10] sm:$0xff]
      %v698 = vld [vmem:[%s3 + $0x18] sm:$0xff]
      %699 = vmatpush.msra.mxu0 0.0
      %700 = vmatpush.msra.mxu0 0.0
      %701 = vmatpush.msra.mxu0 0.0
      %702 = vmatpush.msra.mxu0 0.0
      %703 = vmatpush.msra.mxu0 0.0
      %704 = vmatpush.msra.mxu0 0.0
      %705 = vmatpush.msra.mxu0 0.0
      %706 = vmatpush.msra.mxu0 0.0
      %707 = vmatpush.msra.mxu0 0.0
      %708 = vmatpush.msra.mxu0 0.0
      %709 = vmatpush.msra.mxu0 0.0
      %710 = vmatpush.msra.mxu0 0.0
      %711 = vmatpush.msra.mxu0 0.0
      %712 = vmatpush.msra.mxu0 0.0
      %713 = vmatpush.msra.mxu0 %v697
      %714 = vmatpush.msra.mxu0 %v695
      %715 = vmatmul.f32.gmra.mxu0 %v388
      %v716 = vpop.f32.mrf.mxu0
      %v717 = vadd.f32 0.0, %v716
      %718 = vmatmul.f32.gmra.mxu0 %v391
      %v719 = vpop.f32.mrf.mxu0
      %v720 = vadd.f32 0.0, %v719
      %721 = vmatmul.f32.gmra.mxu0 %v394
      %v722 = vpop.f32.mrf.mxu0
      %v723 = vadd.f32 0.0, %v722
      %724 = vmatmul.f32.gmra.mxu0 %v397
      %v725 = vpop.f32.mrf.mxu0
      %v726 = vadd.f32 0.0, %v725
      %727 = vmatmul.f32.gmra.mxu0 %v400
      %v728 = vpop.f32.mrf.mxu0
      %v729 = vadd.f32 0.0, %v728
      %730 = vmatmul.f32.gmra.mxu0 %v403
      %v731 = vpop.f32.mrf.mxu0
      %v732 = vadd.f32 0.0, %v731
      %733 = vmatmul.f32.gmra.mxu0 %v406
      %v734 = vpop.f32.mrf.mxu0
      %v735 = vadd.f32 0.0, %v734
      %736 = vmatmul.f32.gmra.mxu0 %v409
      %v737 = vpop.f32.mrf.mxu0
      %v738 = vadd.f32 0.0, %v737
      %739 = vmatmul.f32.gmra.mxu0 %v412
      %v740 = vpop.f32.mrf.mxu0
      %v741 = vadd.f32 0.0, %v740
      %742 = vmatmul.f32.gmra.mxu0 %v415
      %v743 = vpop.f32.mrf.mxu0
      %v744 = vadd.f32 0.0, %v743
      %745 = vmatmul.f32.gmra.mxu0 %v418
      %v746 = vpop.f32.mrf.mxu0
      %v747 = vadd.f32 0.0, %v746
      %748 = vmatmul.f32.gmra.mxu0 %v421
      %v749 = vpop.f32.mrf.mxu0
      %v750 = vadd.f32 0.0, %v749
      %751 = vmatmul.f32.gmra.mxu0 %v424
      %v752 = vpop.f32.mrf.mxu0
      %v753 = vadd.f32 0.0, %v752
      %754 = vmatmul.f32.gmra.mxu0 %v427
      %v755 = vpop.f32.mrf.mxu0
      %v756 = vadd.f32 0.0, %v755
      %757 = vmatmul.f32.gmra.mxu0 %v430
      %v758 = vpop.f32.mrf.mxu0
      %v759 = vadd.f32 0.0, %v758
      %760 = vmatmul.f32.gmra.mxu0 %v433
      %v761 = vpop.f32.mrf.mxu0
      %v762 = vadd.f32 0.0, %v761
      %763 = vdwg.mxu0
      %764 = vmatpush.msra.mxu0 0.0
      %765 = vmatpush.msra.mxu0 0.0
      %766 = vmatpush.msra.mxu0 0.0
      %767 = vmatpush.msra.mxu0 0.0
      %768 = vmatpush.msra.mxu0 0.0
      %769 = vmatpush.msra.mxu0 0.0
      %770 = vmatpush.msra.mxu0 0.0
      %771 = vmatpush.msra.mxu0 0.0
      %772 = vmatpush.msra.mxu0 0.0
      %773 = vmatpush.msra.mxu0 0.0
      %774 = vmatpush.msra.mxu0 0.0
      %775 = vmatpush.msra.mxu0 0.0
      %776 = vmatpush.msra.mxu0 0.0
      %777 = vmatpush.msra.mxu0 0.0
      %778 = vmatpush.msra.mxu0 %v698
      %779 = vmatpush.msra.mxu0 %v696
      %780 = vmatmul.f32.gmra.mxu0 %v388
      %v781 = vpop.f32.mrf.mxu0
      %v782 = vadd.f32 0.0, %v781
      %783 = vmatmul.f32.gmra.mxu0 %v391
      %v784 = vpop.f32.mrf.mxu0
      %v785 = vadd.f32 0.0, %v784
      %786 = vmatmul.f32.gmra.mxu0 %v394
      %v787 = vpop.f32.mrf.mxu0
      %v788 = vadd.f32 0.0, %v787
      %789 = vmatmul.f32.gmra.mxu0 %v397
      %v790 = vpop.f32.mrf.mxu0
      %v791 = vadd.f32 0.0, %v790
      %792 = vmatmul.f32.gmra.mxu0 %v400
      %v793 = vpop.f32.mrf.mxu0
      %v794 = vadd.f32 0.0, %v793
      %795 = vmatmul.f32.gmra.mxu0 %v403
      %v796 = vpop.f32.mrf.mxu0
      %v797 = vadd.f32 0.0, %v796
      %798 = vmatmul.f32.gmra.mxu0 %v406
      %v799 = vpop.f32.mrf.mxu0
      %v800 = vadd.f32 0.0, %v799
      %801 = vmatmul.f32.gmra.mxu0 %v409
      %v802 = vpop.f32.mrf.mxu0
      %v803 = vadd.f32 0.0, %v802
      %804 = vmatmul.f32.gmra.mxu0 %v412
      %v805 = vpop.f32.mrf.mxu0
      %v806 = vadd.f32 0.0, %v805
      %807 = vmatmul.f32.gmra.mxu0 %v415
      %v808 = vpop.f32.mrf.mxu0
      %v809 = vadd.f32 0.0, %v808
      %810 = vmatmul.f32.gmra.mxu0 %v418
      %v811 = vpop.f32.mrf.mxu0
      %v812 = vadd.f32 0.0, %v811
      %813 = vmatmul.f32.gmra.mxu0 %v421
      %v814 = vpop.f32.mrf.mxu0
      %v815 = vadd.f32 0.0, %v814
      %816 = vmatmul.f32.gmra.mxu0 %v424
      %v817 = vpop.f32.mrf.mxu0
      %v818 = vadd.f32 0.0, %v817
      %819 = vmatmul.f32.gmra.mxu0 %v427
      %v820 = vpop.f32.mrf.mxu0
      %v821 = vadd.f32 0.0, %v820
      %822 = vmatmul.f32.gmra.mxu0 %v430
      %v823 = vpop.f32.mrf.mxu0
      %v824 = vadd.f32 0.0, %v823
      %825 = vmatmul.f32.gmra.mxu0 %v433
      %v826 = vpop.f32.mrf.mxu0
      %v827 = vadd.f32 0.0, %v826
      %828 = vdwg.mxu0
      %v829 = vld [vmem:[%s4] sm:$0xff]
      %v830 = vld [vmem:[%s5] sm:$0xf]
      %v831 = vld [vmem:[%s5 + $0x4] sm:$0xf]
      %v832 = vld [vmem:[%s5 + $0x8] sm:$0xf]
      %v833 = vld [vmem:[%s5 + $0xc] sm:$0xf]
      %v834 = vld [vmem:[%s5 + $0x10] sm:$0xf]
      %v835 = vld [vmem:[%s5 + $0x14] sm:$0xf]
      %v836 = vld [vmem:[%s5 + $0x18] sm:$0xf]
      %v837 = vld [vmem:[%s5 + $0x1c] sm:$0xf]
      %v838 = vld [vmem:[%s5 + $0x20] sm:$0xf]
      %v839 = vld [vmem:[%s5 + $0x24] sm:$0xf]
      %v840 = vld [vmem:[%s5 + $0x28] sm:$0xf]
      %v841 = vld [vmem:[%s5 + $0x2c] sm:$0xf]
      %v842 = vld [vmem:[%s5 + $0x30] sm:$0xf]
      %v843 = vld [vmem:[%s5 + $0x34] sm:$0xf]
      %v844 = vld [vmem:[%s5 + $0x38] sm:$0xf]
      %v845 = vld [vmem:[%s5 + $0x3c] sm:$0xf]
      %v846 = vlaneseq
      %v847 = vand.u32 %v846, 127
      %v848 = vand.u32 %v847, 31
      %vm849 = vcmp.eq.s32.totalorder %v848, 0
      %v850 = vand.u32 2147483647, %v453
      %v851 = vand.u32 2147483647, %v456
      %v852 = vand.u32 2147483647, %v459
      %v853 = vand.u32 2147483647, %v462
      %v854 = vand.u32 2147483647, %v465
      %v855 = vand.u32 2147483647, %v468
      %v856 = vand.u32 2147483647, %v471
      %v857 = vand.u32 2147483647, %v474
      %v858 = vand.u32 2147483647, %v477
      %v859 = vand.u32 2147483647, %v480
      %v860 = vand.u32 2147483647, %v483
      %v861 = vand.u32 2147483647, %v486
      %v862 = vand.u32 2147483647, %v489
      %v863 = vand.u32 2147483647, %v492
      %v864 = vand.u32 2147483647, %v495
      %v865 = vand.u32 2147483647, %v498
      %v866 = vperm.slane %v829, 0
      %v867 = vmul.f32 %v850, %v866
      %v868 = vmul.f32 %v851, %v866
      %v869 = vmul.f32 %v852, %v866
      %v870 = vmul.f32 %v853, %v866
      %v871 = vmul.f32 %v854, %v866
      %v872 = vmul.f32 %v855, %v866
      %v873 = vmul.f32 %v856, %v866
      %v874 = vmul.f32 %v857, %v866
      %v875 = vmul.f32 %v858, %v866
      %v876 = vmul.f32 %v859, %v866
      %v877 = vmul.f32 %v860, %v866
      %v878 = vmul.f32 %v861, %v866
      %v879 = vmul.f32 %v862, %v866
      %v880 = vmul.f32 %v863, %v866
      %v881 = vmul.f32 %v864, %v866
      %v882 = vmul.f32 %v865, %v866
      %v883 = vperm.slane %v829, 1
      %v884 = vadd.f32 %v867, %v883
      %v885 = vadd.f32 %v868, %v883
      %v886 = vadd.f32 %v869, %v883
      %v887 = vadd.f32 %v870, %v883
      %v888 = vadd.f32 %v871, %v883
      %v889 = vadd.f32 %v872, %v883
      %v890 = vadd.f32 %v873, %v883
      %v891 = vadd.f32 %v874, %v883
      %v892 = vadd.f32 %v875, %v883
      %v893 = vadd.f32 %v876, %v883
      %v894 = vadd.f32 %v877, %v883
      %v895 = vadd.f32 %v878, %v883
      %v896 = vadd.f32 %v879, %v883
      %v897 = vadd.f32 %v880, %v883
      %v898 = vadd.f32 %v881, %v883
      %v899 = vadd.f32 %v882, %v883
      %v900 = vand.u32 2147483647, %v884
      %vm901 = vcmp.le.f32.partialorder %v900, 0.7853982
      %vm902 = vcmp.lt.s32.totalorder %v884, 0
      %v903 = vand.u32 %v884, 2139095040
      %v904 = vshrl.u32 %v903, 23
      %v905 = vsub.s32 %v904, 127
      %v906 = vand.u32 2147483647, %v884
      %v907 = vand.u32 %v906, 8388607
      %v908 = vor.u32 %v907, 8388608
      %v909 = vsub.s32 0, %v908
      %v910 = vadd.s32 %v905, 1
      %vm911 = vcmp.gt.s32.totalorder %v910, 0
      %v912 = vsel %vm911, %v910, 0
      %v913 = vshrl.u32 %v912, 5
      %v914 = vand.u32 %v912, 31
      %v915 = vsub.s32 32, %v914
      %v916 = vshrl.u32 683565275, %v915
      %v917 = vshll.u32 683565275, %v914
      %v918 = vshrl.u32 2475754826, %v915
      %v919 = vor.u32 %v917, %v918
      %v920 = vshll.u32 2475754826, %v914
      %v921 = vshrl.u32 2131351028, %v915
      %v922 = vor.u32 %v920, %v921
      %v923 = vshll.u32 2131351028, %v914
      %v924 = vshrl.u32 2102212464, %v915
      %v925 = vor.u32 %v923, %v924
      %v926 = vshll.u32 2102212464, %v914
      %v927 = vshrl.u32 920167782, %v915
      %v928 = vor.u32 %v926, %v927
      %v929 = vshll.u32 920167782, %v914
      %v930 = vshrl.u32 1326507024, %v915
      %v931 = vor.u32 %v929, %v930
      %vm932 = vcmp.lt.s32.totalorder %v913, 1
      %vm933 = vcmp.lt.s32.totalorder %v913, 2
      %vm934 = vcmp.lt.s32.totalorder %v913, 3
      %vm935 = vcmp.lt.s32.totalorder %v913, 4
      %v936 = vsel %vm932, %v916, %v919
      %v937 = vsel %vm935, %v925, 2102212464
      %v938 = vsel %vm934, %v922, %v937
      %v939 = vsel %vm933, %v936, %v938
      %v940 = vsel %vm932, %v919, %v922
      %v941 = vsel %vm935, %v928, 920167782
      %v942 = vsel %vm934, %v925, %v941
      %v943 = vsel %vm933, %v940, %v942
      %v944 = vsel %vm932, %v922, %v925
      %v945 = vsel %vm935, %v931, 1326507024
      %v946 = vsel %vm934, %v928, %v945
      %v947 = vsel %vm933, %v944, %v946
      %v948 = vshll.u32 %v908, 8
      %v949 = vand.u32 %v948, 65535
      %v950 = vshrl.u32 %v948, 16
      %v951 = vand.u32 %v947, 65535
      %v952 = vshrl.u32 %v947, 16
      %v953 = vmul.u32 %v949, %v951
      %v954 = vmul.u32 %v949, %v952
      %v955 = vmul.u32 %v950, %v951
      %v956 = vmul.u32 %v950, %v952
      %v957 = vshll.u32 %v954, 16
      %v958 = vshrl.u32 %v954, 16
      %v959 = vshll.u32 %v955, 16
      %v960 = vshrl.u32 %v955, 16
      %vm961 = vc.u32 %v953, %v957
      %v962 = vsel %vm961, 1, 0
      %v963 = vadd.s32 %v953, %v957
      %v964 = vadd.s32 %v956, %v962
      %vm965 = vc.u32 %v963, %v959
      %v966 = vsel %vm965, 1, 0
      %v967 = vadd.s32 %v963, %v959
      %v968 = vadd.s32 %v964, %v966
      %v969 = vadd.s32 %v968, %v958
      %v970 = vadd.s32 %v969, %v960
      %v971 = vand.u32 %v948, 65535
      %v972 = vshrl.u32 %v948, 16
      %v973 = vand.u32 %v943, 65535
      %v974 = vshrl.u32 %v943, 16
      %v975 = vmul.u32 %v971, %v973
      %v976 = vmul.u32 %v971, %v974
      %v977 = vmul.u32 %v972, %v973
      %v978 = vmul.u32 %v972, %v974
      %v979 = vshll.u32 %v976, 16
      %v980 = vshrl.u32 %v976, 16
      %v981 = vshll.u32 %v977, 16
      %v982 = vshrl.u32 %v977, 16
      %vm983 = vc.u32 %v975, %v979
      %v984 = vsel %vm983, 1, 0
      %v985 = vadd.s32 %v975, %v979
      %v986 = vadd.s32 %v978, %v984
      %vm987 = vc.u32 %v985, %v981
      %v988 = vsel %vm987, 1, 0
      %v989 = vadd.s32 %v985, %v981
      %v990 = vadd.s32 %v986, %v988
      %v991 = vadd.s32 %v990, %v980
      %v992 = vadd.s32 %v991, %v982
      %v993 = vmul.u32 %v948, %v939
      %v994 = vadd.s32 %v970, %v989
      %vm995 = vc.u32 %v970, %v989
      %v996 = vadd.s32 %v992, 1
      %v997 = vsel %vm995, %v996, %v992
      %v998 = vadd.s32 %v993, %v997
      %v999 = vadd.s32 %v998, 536870912
      %v1000 = vshrl.u32 %v999, 30
      %v1001 = vshll.u32 %v1000, 30
      %v1002 = vsub.s32 %v998, %v1001
      %vm1003 = vcmp.lt.s32.totalorder %v1002, 0
      %v1004 = vsub.s32 0, %v1002
      %v1005 = vsel %vm1003, %v1004, %v1002
      %v1006 = vclz %v1005
      %v1007 = vsub.s32 %v1006, 2
      %vm1008 = vcmp.gt.s32.totalorder 0, %v1007
      %v1009 = vsel %vm1008, 0, %v1007
      %v1010 = vsub.s32 32, %v1009
      %v1011 = vshll.u32 %v1002, %v1009
      %v1012 = vshrl.u32 %v994, %v1010
      %v1013 = vor.u32 %v1011, %v1012
      %v1014 = vsub.s32 4294967266, %v1009
      %v1015 = vadd.s32 %v1014, 127
      %v1016 = vshll.u32 %v1015, 23
      %v1017 = vor.u32 4788187, %v1016
      %v1018 = vand.u32 2147483647, %v1017
      %v1020 = vcvt.s32.f32 %v1013
      %v1021 = vmul.f32 %v1020, %v1018
      %v1022 = vxor.u32 %v1021, 2147483648
      %v1023 = vsel %vm902, %v1022, %v1021
      %v1024 = vsub.s32 4, %v1000
      %v1025 = vsel %vm902, %v1024, %v1000
      %v1026 = vsel %vm901, %v884, %v1023
      %v1027 = vsel %vm901, 0, %v1025
      %v1028 = vmul.f32 %v1026, %v1026
      %v1029 = vmul.f32 %v1028, -0.001358992
      %v1030 = vadd.f32 %v1029, 0.041655596
      %v1031 = vmul.f32 %v1028, %v1030
      %v1032 = vadd.f32 %v1031, -0.4999988
      %v1033 = vmul.f32 %v1028, %v1032
      %v1034 = vadd.f32 1.0, %v1033
      %v1035 = vmul.f32 %v1026, %v1026
      %v1036 = vmul.f32 %v1035, -0.00019511016
      %v1037 = vadd.f32 %v1036, 0.008332121
      %v1038 = vmul.f32 %v1035, %v1037
      %v1039 = vadd.f32 %v1038, -0.16666654
      %v1040 = vmul.f32 %v1035, %v1039
      %v1041 = vadd.f32 %v1040, 1.0
      %v1042 = vmul.f32 %v1041, %v1026
      %vm1043 = vweird.f32 %v884
      %v1044 = vand.u32 %v1027, 3
      %vm1045 = vcmp.lt.s32.totalorder %v1044, 2
      %vm1046 = vcmp.eq.s32.totalorder %v1044, 0
      %v1047 = vxor.u32 %v1042, 2147483648
      %v1048 = vsel %vm1046, %v1034, %v1047
      %vm1049 = vcmp.eq.s32.totalorder %v1044, 2
      %v1050 = vxor.u32 %v1034, 2147483648
      %v1051 = vsel %vm1049, %v1050, %v1042
      %v1052 = vsel %vm1045, %v1048, %v1051
      %v1053 = vsel %vm1043, nan, %v1052
      %v1054 = vand.u32 2147483647, %v885
      %vm1055 = vcmp.le.f32.partialorder %v1054, 0.7853982
      %vm1056 = vcmp.lt.s32.totalorder %v885, 0
      %v1057 = vand.u32 %v885, 2139095040
      %v1058 = vshrl.u32 %v1057, 23
      %v1059 = vsub.s32 %v1058, 127
      %v1060 = vand.u32 2147483647, %v885
      %v1061 = vand.u32 %v1060, 8388607
      %v1062 = vor.u32 %v1061, 8388608
      %v1063 = vsub.s32 0, %v1062
      %v1064 = vadd.s32 %v1059, 1
      %vm1065 = vcmp.gt.s32.totalorder %v1064, 0
      %v1066 = vsel %vm1065, %v1064, 0
      %v1067 = vshrl.u32 %v1066, 5
      %v1068 = vand.u32 %v1066, 31
      %v1069 = vsub.s32 32, %v1068
      %v1070 = vshrl.u32 683565275, %v1069
      %v1071 = vshll.u32 683565275, %v1068
      %v1072 = vshrl.u32 2475754826, %v1069
      %v1073 = vor.u32 %v1071, %v1072
      %v1074 = vshll.u32 2475754826, %v1068
      %v1075 = vshrl.u32 2131351028, %v1069
      %v1076 = vor.u32 %v1074, %v1075
      %v1077 = vshll.u32 2131351028, %v1068
      %v1078 = vshrl.u32 2102212464, %v1069
      %v1079 = vor.u32 %v1077, %v1078
      %v1080 = vshll.u32 2102212464, %v1068
      %v1081 = vshrl.u32 920167782, %v1069
      %v1082 = vor.u32 %v1080, %v1081
      %v1083 = vshll.u32 920167782, %v1068
      %v1084 = vshrl.u32 1326507024, %v1069
      %v1085 = vor.u32 %v1083, %v1084
      %vm1086 = vcmp.lt.s32.totalorder %v1067, 1
      %vm1087 = vcmp.lt.s32.totalorder %v1067, 2
      %vm1088 = vcmp.lt.s32.totalorder %v1067, 3
      %vm1089 = vcmp.lt.s32.totalorder %v1067, 4
      %v1090 = vsel %vm1086, %v1070, %v1073
      %v1091 = vsel %vm1089, %v1079, 2102212464
      %v1092 = vsel %vm1088, %v1076, %v1091
      %v1093 = vsel %vm1087, %v1090, %v1092
      %v1094 = vsel %vm1086, %v1073, %v1076
      %v1095 = vsel %vm1089, %v1082, 920167782
      %v1096 = vsel %vm1088, %v1079, %v1095
      %v1097 = vsel %vm1087, %v1094, %v1096
      %v1098 = vsel %vm1086, %v1076, %v1079
      %v1099 = vsel %vm1089, %v1085, 1326507024
      %v1100 = vsel %vm1088, %v1082, %v1099
      %v1101 = vsel %vm1087, %v1098, %v1100
      %v1102 = vshll.u32 %v1062, 8
      %v1103 = vand.u32 %v1102, 65535
      %v1104 = vshrl.u32 %v1102, 16
      %v1105 = vand.u32 %v1101, 65535
      %v1106 = vshrl.u32 %v1101, 16
      %v1107 = vmul.u32 %v1103, %v1105
      %v1108 = vmul.u32 %v1103, %v1106
      %v1109 = vmul.u32 %v1104, %v1105
      %v1110 = vmul.u32 %v1104, %v1106
      %v1111 = vshll.u32 %v1108, 16
      %v1112 = vshrl.u32 %v1108, 16
      %v1113 = vshll.u32 %v1109, 16
      %v1114 = vshrl.u32 %v1109, 16
      %vm1115 = vc.u32 %v1107, %v1111
      %v1116 = vsel %vm1115, 1, 0
      %v1117 = vadd.s32 %v1107, %v1111
      %v1118 = vadd.s32 %v1110, %v1116
      %vm1119 = vc.u32 %v1117, %v1113
      %v1120 = vsel %vm1119, 1, 0
      %v1121 = vadd.s32 %v1117, %v1113
      %v1122 = vadd.s32 %v1118, %v1120
      %v1123 = vadd.s32 %v1122, %v1112
      %v1124 = vadd.s32 %v1123, %v1114
      %v1125 = vand.u32 %v1102, 65535
      %v1126 = vshrl.u32 %v1102, 16
      %v1127 = vand.u32 %v1097, 65535
      %v1128 = vshrl.u32 %v1097, 16
      %v1129 = vmul.u32 %v1125, %v1127
      %v1130 = vmul.u32 %v1125, %v1128
      %v1131 = vmul.u32 %v1126, %v1127
      %v1132 = vmul.u32 %v1126, %v1128
      %v1133 = vshll.u32 %v1130, 16
      %v1134 = vshrl.u32 %v1130, 16
      %v1135 = vshll.u32 %v1131, 16
      %v1136 = vshrl.u32 %v1131, 16
      %vm1137 = vc.u32 %v1129, %v1133
      %v1138 = vsel %vm1137, 1, 0
      %v1139 = vadd.s32 %v1129, %v1133
      %v1140 = vadd.s32 %v1132, %v1138
      %vm1141 = vc.u32 %v1139, %v1135
      %v1142 = vsel %vm1141, 1, 0
      %v1143 = vadd.s32 %v1139, %v1135
      %v1144 = vadd.s32 %v1140, %v1142
      %v1145 = vadd.s32 %v1144, %v1134
      %v1146 = vadd.s32 %v1145, %v1136
      %v1147 = vmul.u32 %v1102, %v1093
      %v1148 = vadd.s32 %v1124, %v1143
      %vm1149 = vc.u32 %v1124, %v1143
      %v1150 = vadd.s32 %v1146, 1
      %v1151 = vsel %vm1149, %v1150, %v1146
      %v1152 = vadd.s32 %v1147, %v1151
      %v1153 = vadd.s32 %v1152, 536870912
      %v1154 = vshrl.u32 %v1153, 30
      %v1155 = vshll.u32 %v1154, 30
      %v1156 = vsub.s32 %v1152, %v1155
      %vm1157 = vcmp.lt.s32.totalorder %v1156, 0
      %v1158 = vsub.s32 0, %v1156
      %v1159 = vsel %vm1157, %v1158, %v1156
      %v1160 = vclz %v1159
      %v1161 = vsub.s32 %v1160, 2
      %vm1162 = vcmp.gt.s32.totalorder 0, %v1161
      %v1163 = vsel %vm1162, 0, %v1161
      %v1164 = vsub.s32 32, %v1163
      %v1165 = vshll.u32 %v1156, %v1163
      %v1166 = vshrl.u32 %v1148, %v1164
      %v1167 = vor.u32 %v1165, %v1166
      %v1168 = vsub.s32 4294967266, %v1163
      %v1169 = vadd.s32 %v1168, 127
      %v1170 = vshll.u32 %v1169, 23
      %v1171 = vor.u32 4788187, %v1170
      %v1172 = vand.u32 2147483647, %v1171
      %v1174 = vcvt.s32.f32 %v1167
      %v1175 = vmul.f32 %v1174, %v1172
      %v1176 = vxor.u32 %v1175, 2147483648
      %v1177 = vsel %vm1056, %v1176, %v1175
      %v1178 = vsub.s32 4, %v1154
      %v1179 = vsel %vm1056, %v1178, %v1154
      %v1180 = vsel %vm1055, %v885, %v1177
      %v1181 = vsel %vm1055, 0, %v1179
      %v1182 = vmul.f32 %v1180, %v1180
      %v1183 = vmul.f32 %v1182, -0.001358992
      %v1184 = vadd.f32 %v1183, 0.041655596
      %v1185 = vmul.f32 %v1182, %v1184
      %v1186 = vadd.f32 %v1185, -0.4999988
      %v1187 = vmul.f32 %v1182, %v1186
      %v1188 = vadd.f32 1.0, %v1187
      %v1189 = vmul.f32 %v1180, %v1180
      %v1190 = vmul.f32 %v1189, -0.00019511016
      %v1191 = vadd.f32 %v1190, 0.008332121
      %v1192 = vmul.f32 %v1189, %v1191
      %v1193 = vadd.f32 %v1192, -0.16666654
      %v1194 = vmul.f32 %v1189, %v1193
      %v1195 = vadd.f32 %v1194, 1.0
      %v1196 = vmul.f32 %v1195, %v1180
      %vm1197 = vweird.f32 %v885
      %v1198 = vand.u32 %v1181, 3
      %vm1199 = vcmp.lt.s32.totalorder %v1198, 2
      %vm1200 = vcmp.eq.s32.totalorder %v1198, 0
      %v1201 = vxor.u32 %v1196, 2147483648
      %v1202 = vsel %vm1200, %v1188, %v1201
      %vm1203 = vcmp.eq.s32.totalorder %v1198, 2
      %v1204 = vxor.u32 %v1188, 2147483648
      %v1205 = vsel %vm1203, %v1204, %v1196
      %v1206 = vsel %vm1199, %v1202, %v1205
      %v1207 = vsel %vm1197, nan, %v1206
      %v1208 = vand.u32 2147483647, %v886
      %vm1209 = vcmp.le.f32.partialorder %v1208, 0.7853982
      %vm1210 = vcmp.lt.s32.totalorder %v886, 0
      %v1211 = vand.u32 %v886, 2139095040
      %v1212 = vshrl.u32 %v1211, 23
      %v1213 = vsub.s32 %v1212, 127
      %v1214 = vand.u32 2147483647, %v886
      %v1215 = vand.u32 %v1214, 8388607
      %v1216 = vor.u32 %v1215, 8388608
      %v1217 = vsub.s32 0, %v1216
      %v1218 = vadd.s32 %v1213, 1
      %vm1219 = vcmp.gt.s32.totalorder %v1218, 0
      %v1220 = vsel %vm1219, %v1218, 0
      %v1221 = vshrl.u32 %v1220, 5
      %v1222 = vand.u32 %v1220, 31
      %v1223 = vsub.s32 32, %v1222
      %v1224 = vshrl.u32 683565275, %v1223
      %v1225 = vshll.u32 683565275, %v1222
      %v1226 = vshrl.u32 2475754826, %v1223
      %v1227 = vor.u32 %v1225, %v1226
      %v1228 = vshll.u32 2475754826, %v1222
      %v1229 = vshrl.u32 2131351028, %v1223
      %v1230 = vor.u32 %v1228, %v1229
      %v1231 = vshll.u32 2131351028, %v1222
      %v1232 = vshrl.u32 2102212464, %v1223
      %v1233 = vor.u32 %v1231, %v1232
      %v1234 = vshll.u32 2102212464, %v1222
      %v1235 = vshrl.u32 920167782, %v1223
      %v1236 = vor.u32 %v1234, %v1235
      %v1237 = vshll.u32 920167782, %v1222
      %v1238 = vshrl.u32 1326507024, %v1223
      %v1239 = vor.u32 %v1237, %v1238
      %vm1240 = vcmp.lt.s32.totalorder %v1221, 1
      %vm1241 = vcmp.lt.s32.totalorder %v1221, 2
      %vm1242 = vcmp.lt.s32.totalorder %v1221, 3
      %vm1243 = vcmp.lt.s32.totalorder %v1221, 4
      %v1244 = vsel %vm1240, %v1224, %v1227
      %v1245 = vsel %vm1243, %v1233, 2102212464
      %v1246 = vsel %vm1242, %v1230, %v1245
      %v1247 = vsel %vm1241, %v1244, %v1246
      %v1248 = vsel %vm1240, %v1227, %v1230
      %v1249 = vsel %vm1243, %v1236, 920167782
      %v1250 = vsel %vm1242, %v1233, %v1249
      %v1251 = vsel %vm1241, %v1248, %v1250
      %v1252 = vsel %vm1240, %v1230, %v1233
      %v1253 = vsel %vm1243, %v1239, 1326507024
      %v1254 = vsel %vm1242, %v1236, %v1253
      %v1255 = vsel %vm1241, %v1252, %v1254
      %v1256 = vshll.u32 %v1216, 8
      %v1257 = vand.u32 %v1256, 65535
      %v1258 = vshrl.u32 %v1256, 16
      %v1259 = vand.u32 %v1255, 65535
      %v1260 = vshrl.u32 %v1255, 16
      %v1261 = vmul.u32 %v1257, %v1259
      %v1262 = vmul.u32 %v1257, %v1260
      %v1263 = vmul.u32 %v1258, %v1259
      %v1264 = vmul.u32 %v1258, %v1260
      %v1265 = vshll.u32 %v1262, 16
      %v1266 = vshrl.u32 %v1262, 16
      %v1267 = vshll.u32 %v1263, 16
      %v1268 = vshrl.u32 %v1263, 16
      %vm1269 = vc.u32 %v1261, %v1265
      %v1270 = vsel %vm1269, 1, 0
      %v1271 = vadd.s32 %v1261, %v1265
      %v1272 = vadd.s32 %v1264, %v1270
      %vm1273 = vc.u32 %v1271, %v1267
      %v1274 = vsel %vm1273, 1, 0
      %v1275 = vadd.s32 %v1271, %v1267
      %v1276 = vadd.s32 %v1272, %v1274
      %v1277 = vadd.s32 %v1276, %v1266
      %v1278 = vadd.s32 %v1277, %v1268
      %v1279 = vand.u32 %v1256, 65535
      %v1280 = vshrl.u32 %v1256, 16
      %v1281 = vand.u32 %v1251, 65535
      %v1282 = vshrl.u32 %v1251, 16
      %v1283 = vmul.u32 %v1279, %v1281
      %v1284 = vmul.u32 %v1279, %v1282
      %v1285 = vmul.u32 %v1280, %v1281
      %v1286 = vmul.u32 %v1280, %v1282
      %v1287 = vshll.u32 %v1284, 16
      %v1288 = vshrl.u32 %v1284, 16
      %v1289 = vshll.u32 %v1285, 16
      %v1290 = vshrl.u32 %v1285, 16
      %vm1291 = vc.u32 %v1283, %v1287
      %v1292 = vsel %vm1291, 1, 0
      %v1293 = vadd.s32 %v1283, %v1287
      %v1294 = vadd.s32 %v1286, %v1292
      %vm1295 = vc.u32 %v1293, %v1289
      %v1296 = vsel %vm1295, 1, 0
      %v1297 = vadd.s32 %v1293, %v1289
      %v1298 = vadd.s32 %v1294, %v1296
      %v1299 = vadd.s32 %v1298, %v1288
      %v1300 = vadd.s32 %v1299, %v1290
      %v1301 = vmul.u32 %v1256, %v1247
      %v1302 = vadd.s32 %v1278, %v1297
      %vm1303 = vc.u32 %v1278, %v1297
      %v1304 = vadd.s32 %v1300, 1
      %v1305 = vsel %vm1303, %v1304, %v1300
      %v1306 = vadd.s32 %v1301, %v1305
      %v1307 = vadd.s32 %v1306, 536870912
      %v1308 = vshrl.u32 %v1307, 30
      %v1309 = vshll.u32 %v1308, 30
      %v1310 = vsub.s32 %v1306, %v1309
      %vm1311 = vcmp.lt.s32.totalorder %v1310, 0
      %v1312 = vsub.s32 0, %v1310
      %v1313 = vsel %vm1311, %v1312, %v1310
      %v1314 = vclz %v1313
      %v1315 = vsub.s32 %v1314, 2
      %vm1316 = vcmp.gt.s32.totalorder 0, %v1315
      %v1317 = vsel %vm1316, 0, %v1315
      %v1318 = vsub.s32 32, %v1317
      %v1319 = vshll.u32 %v1310, %v1317
      %v1320 = vshrl.u32 %v1302, %v1318
      %v1321 = vor.u32 %v1319, %v1320
      %v1322 = vsub.s32 4294967266, %v1317
      %v1323 = vadd.s32 %v1322, 127
      %v1324 = vshll.u32 %v1323, 23
      %v1325 = vor.u32 4788187, %v1324
      %v1326 = vand.u32 2147483647, %v1325
      %v1328 = vcvt.s32.f32 %v1321
      %v1329 = vmul.f32 %v1328, %v1326
      %v1330 = vxor.u32 %v1329, 2147483648
      %v1331 = vsel %vm1210, %v1330, %v1329
      %v1332 = vsub.s32 4, %v1308
      %v1333 = vsel %vm1210, %v1332, %v1308
      %v1334 = vsel %vm1209, %v886, %v1331
      %v1335 = vsel %vm1209, 0, %v1333
      %v1336 = vmul.f32 %v1334, %v1334
      %v1337 = vmul.f32 %v1336, -0.001358992
      %v1338 = vadd.f32 %v1337, 0.041655596
      %v1339 = vmul.f32 %v1336, %v1338
      %v1340 = vadd.f32 %v1339, -0.4999988
      %v1341 = vmul.f32 %v1336, %v1340
      %v1342 = vadd.f32 1.0, %v1341
      %v1343 = vmul.f32 %v1334, %v1334
      %v1344 = vmul.f32 %v1343, -0.00019511016
      %v1345 = vadd.f32 %v1344, 0.008332121
      %v1346 = vmul.f32 %v1343, %v1345
      %v1347 = vadd.f32 %v1346, -0.16666654
      %v1348 = vmul.f32 %v1343, %v1347
      %v1349 = vadd.f32 %v1348, 1.0
      %v1350 = vmul.f32 %v1349, %v1334
      %vm1351 = vweird.f32 %v886
      %v1352 = vand.u32 %v1335, 3
      %vm1353 = vcmp.lt.s32.totalorder %v1352, 2
      %vm1354 = vcmp.eq.s32.totalorder %v1352, 0
      %v1355 = vxor.u32 %v1350, 2147483648
      %v1356 = vsel %vm1354, %v1342, %v1355
      %vm1357 = vcmp.eq.s32.totalorder %v1352, 2
      %v1358 = vxor.u32 %v1342, 2147483648
      %v1359 = vsel %vm1357, %v1358, %v1350
      %v1360 = vsel %vm1353, %v1356, %v1359
      %v1361 = vsel %vm1351, nan, %v1360
      %v1362 = vand.u32 2147483647, %v887
      %vm1363 = vcmp.le.f32.partialorder %v1362, 0.7853982
      %vm1364 = vcmp.lt.s32.totalorder %v887, 0
      %v1365 = vand.u32 %v887, 2139095040
      %v1366 = vshrl.u32 %v1365, 23
      %v1367 = vsub.s32 %v1366, 127
      %v1368 = vand.u32 2147483647, %v887
      %v1369 = vand.u32 %v1368, 8388607
      %v1370 = vor.u32 %v1369, 8388608
      %v1371 = vsub.s32 0, %v1370
      %v1372 = vadd.s32 %v1367, 1
      %vm1373 = vcmp.gt.s32.totalorder %v1372, 0
      %v1374 = vsel %vm1373, %v1372, 0
      %v1375 = vshrl.u32 %v1374, 5
      %v1376 = vand.u32 %v1374, 31
      %v1377 = vsub.s32 32, %v1376
      %v1378 = vshrl.u32 683565275, %v1377
      %v1379 = vshll.u32 683565275, %v1376
      %v1380 = vshrl.u32 2475754826, %v1377
      %v1381 = vor.u32 %v1379, %v1380
      %v1382 = vshll.u32 2475754826, %v1376
      %v1383 = vshrl.u32 2131351028, %v1377
      %v1384 = vor.u32 %v1382, %v1383
      %v1385 = vshll.u32 2131351028, %v1376
      %v1386 = vshrl.u32 2102212464, %v1377
      %v1387 = vor.u32 %v1385, %v1386
      %v1388 = vshll.u32 2102212464, %v1376
      %v1389 = vshrl.u32 920167782, %v1377
      %v1390 = vor.u32 %v1388, %v1389
      %v1391 = vshll.u32 920167782, %v1376
      %v1392 = vshrl.u32 1326507024, %v1377
      %v1393 = vor.u32 %v1391, %v1392
      %vm1394 = vcmp.lt.s32.totalorder %v1375, 1
      %vm1395 = vcmp.lt.s32.totalorder %v1375, 2
      %vm1396 = vcmp.lt.s32.totalorder %v1375, 3
      %vm1397 = vcmp.lt.s32.totalorder %v1375, 4
      %v1398 = vsel %vm1394, %v1378, %v1381
      %v1399 = vsel %vm1397, %v1387, 2102212464
      %v1400 = vsel %vm1396, %v1384, %v1399
      %v1401 = vsel %vm1395, %v1398, %v1400
      %v1402 = vsel %vm1394, %v1381, %v1384
      %v1403 = vsel %vm1397, %v1390, 920167782
      %v1404 = vsel %vm1396, %v1387, %v1403
      %v1405 = vsel %vm1395, %v1402, %v1404
      %v1406 = vsel %vm1394, %v1384, %v1387
      %v1407 = vsel %vm1397, %v1393, 1326507024
      %v1408 = vsel %vm1396, %v1390, %v1407
      %v1409 = vsel %vm1395, %v1406, %v1408
      %v1410 = vshll.u32 %v1370, 8
      %v1411 = vand.u32 %v1410, 65535
      %v1412 = vshrl.u32 %v1410, 16
      %v1413 = vand.u32 %v1409, 65535
      %v1414 = vshrl.u32 %v1409, 16
      %v1415 = vmul.u32 %v1411, %v1413
      %v1416 = vmul.u32 %v1411, %v1414
      %v1417 = vmul.u32 %v1412, %v1413
      %v1418 = vmul.u32 %v1412, %v1414
      %v1419 = vshll.u32 %v1416, 16
      %v1420 = vshrl.u32 %v1416, 16
      %v1421 = vshll.u32 %v1417, 16
      %v1422 = vshrl.u32 %v1417, 16
      %vm1423 = vc.u32 %v1415, %v1419
      %v1424 = vsel %vm1423, 1, 0
      %v1425 = vadd.s32 %v1415, %v1419
      %v1426 = vadd.s32 %v1418, %v1424
      %vm1427 = vc.u32 %v1425, %v1421
      %v1428 = vsel %vm1427, 1, 0
      %v1429 = vadd.s32 %v1425, %v1421
      %v1430 = vadd.s32 %v1426, %v1428
      %v1431 = vadd.s32 %v1430, %v1420
      %v1432 = vadd.s32 %v1431, %v1422
      %v1433 = vand.u32 %v1410, 65535
      %v1434 = vshrl.u32 %v1410, 16
      %v1435 = vand.u32 %v1405, 65535
      %v1436 = vshrl.u32 %v1405, 16
      %v1437 = vmul.u32 %v1433, %v1435
      %v1438 = vmul.u32 %v1433, %v1436
      %v1439 = vmul.u32 %v1434, %v1435
      %v1440 = vmul.u32 %v1434, %v1436
      %v1441 = vshll.u32 %v1438, 16
      %v1442 = vshrl.u32 %v1438, 16
      %v1443 = vshll.u32 %v1439, 16
      %v1444 = vshrl.u32 %v1439, 16
      %vm1445 = vc.u32 %v1437, %v1441
      %v1446 = vsel %vm1445, 1, 0
      %v1447 = vadd.s32 %v1437, %v1441
      %v1448 = vadd.s32 %v1440, %v1446
      %vm1449 = vc.u32 %v1447, %v1443
      %v1450 = vsel %vm1449, 1, 0
      %v1451 = vadd.s32 %v1447, %v1443
      %v1452 = vadd.s32 %v1448, %v1450
      %v1453 = vadd.s32 %v1452, %v1442
      %v1454 = vadd.s32 %v1453, %v1444
      %v1455 = vmul.u32 %v1410, %v1401
      %v1456 = vadd.s32 %v1432, %v1451
      %vm1457 = vc.u32 %v1432, %v1451
      %v1458 = vadd.s32 %v1454, 1
      %v1459 = vsel %vm1457, %v1458, %v1454
      %v1460 = vadd.s32 %v1455, %v1459
      %v1461 = vadd.s32 %v1460, 536870912
      %v1462 = vshrl.u32 %v1461, 30
      %v1463 = vshll.u32 %v1462, 30
      %v1464 = vsub.s32 %v1460, %v1463
      %vm1465 = vcmp.lt.s32.totalorder %v1464, 0
      %v1466 = vsub.s32 0, %v1464
      %v1467 = vsel %vm1465, %v1466, %v1464
      %v1468 = vclz %v1467
      %v1469 = vsub.s32 %v1468, 2
      %vm1470 = vcmp.gt.s32.totalorder 0, %v1469
      %v1471 = vsel %vm1470, 0, %v1469
      %v1472 = vsub.s32 32, %v1471
      %v1473 = vshll.u32 %v1464, %v1471
      %v1474 = vshrl.u32 %v1456, %v1472
      %v1475 = vor.u32 %v1473, %v1474
      %v1476 = vsub.s32 4294967266, %v1471
      %v1477 = vadd.s32 %v1476, 127
      %v1478 = vshll.u32 %v1477, 23
      %v1479 = vor.u32 4788187, %v1478
      %v1480 = vand.u32 2147483647, %v1479
      %v1482 = vcvt.s32.f32 %v1475
      %v1483 = vmul.f32 %v1482, %v1480
      %v1484 = vxor.u32 %v1483, 2147483648
      %v1485 = vsel %vm1364, %v1484, %v1483
      %v1486 = vsub.s32 4, %v1462
      %v1487 = vsel %vm1364, %v1486, %v1462
      %v1488 = vsel %vm1363, %v887, %v1485
      %v1489 = vsel %vm1363, 0, %v1487
      %v1490 = vmul.f32 %v1488, %v1488
      %v1491 = vmul.f32 %v1490, -0.001358992
      %v1492 = vadd.f32 %v1491, 0.041655596
      %v1493 = vmul.f32 %v1490, %v1492
      %v1494 = vadd.f32 %v1493, -0.4999988
      %v1495 = vmul.f32 %v1490, %v1494
      %v1496 = vadd.f32 1.0, %v1495
      %v1497 = vmul.f32 %v1488, %v1488
      %v1498 = vmul.f32 %v1497, -0.00019511016
      %v1499 = vadd.f32 %v1498, 0.008332121
      %v1500 = vmul.f32 %v1497, %v1499
      %v1501 = vadd.f32 %v1500, -0.16666654
      %v1502 = vmul.f32 %v1497, %v1501
      %v1503 = vadd.f32 %v1502, 1.0
      %v1504 = vmul.f32 %v1503, %v1488
      %vm1505 = vweird.f32 %v887
      %v1506 = vand.u32 %v1489, 3
      %vm1507 = vcmp.lt.s32.totalorder %v1506, 2
      %vm1508 = vcmp.eq.s32.totalorder %v1506, 0
      %v1509 = vxor.u32 %v1504, 2147483648
      %v1510 = vsel %vm1508, %v1496, %v1509
      %vm1511 = vcmp.eq.s32.totalorder %v1506, 2
      %v1512 = vxor.u32 %v1496, 2147483648
      %v1513 = vsel %vm1511, %v1512, %v1504
      %v1514 = vsel %vm1507, %v1510, %v1513
      %v1515 = vsel %vm1505, nan, %v1514
      %v1516 = vand.u32 2147483647, %v888
      %vm1517 = vcmp.le.f32.partialorder %v1516, 0.7853982
      %vm1518 = vcmp.lt.s32.totalorder %v888, 0
      %v1519 = vand.u32 %v888, 2139095040
      %v1520 = vshrl.u32 %v1519, 23
      %v1521 = vsub.s32 %v1520, 127
      %v1522 = vand.u32 2147483647, %v888
      %v1523 = vand.u32 %v1522, 8388607
      %v1524 = vor.u32 %v1523, 8388608
      %v1525 = vsub.s32 0, %v1524
      %v1526 = vadd.s32 %v1521, 1
      %vm1527 = vcmp.gt.s32.totalorder %v1526, 0
      %v1528 = vsel %vm1527, %v1526, 0
      %v1529 = vshrl.u32 %v1528, 5
      %v1530 = vand.u32 %v1528, 31
      %v1531 = vsub.s32 32, %v1530
      %v1532 = vshrl.u32 683565275, %v1531
      %v1533 = vshll.u32 683565275, %v1530
      %v1534 = vshrl.u32 2475754826, %v1531
      %v1535 = vor.u32 %v1533, %v1534
      %v1536 = vshll.u32 2475754826, %v1530
      %v1537 = vshrl.u32 2131351028, %v1531
      %v1538 = vor.u32 %v1536, %v1537
      %v1539 = vshll.u32 2131351028, %v1530
      %v1540 = vshrl.u32 2102212464, %v1531
      %v1541 = vor.u32 %v1539, %v1540
      %v1542 = vshll.u32 2102212464, %v1530
      %v1543 = vshrl.u32 920167782, %v1531
      %v1544 = vor.u32 %v1542, %v1543
      %v1545 = vshll.u32 920167782, %v1530
      %v1546 = vshrl.u32 1326507024, %v1531
      %v1547 = vor.u32 %v1545, %v1546
      %vm1548 = vcmp.lt.s32.totalorder %v1529, 1
      %vm1549 = vcmp.lt.s32.totalorder %v1529, 2
      %vm1550 = vcmp.lt.s32.totalorder %v1529, 3
      %vm1551 = vcmp.lt.s32.totalorder %v1529, 4
      %v1552 = vsel %vm1548, %v1532, %v1535
      %v1553 = vsel %vm1551, %v1541, 2102212464
      %v1554 = vsel %vm1550, %v1538, %v1553
      %v1555 = vsel %vm1549, %v1552, %v1554
      %v1556 = vsel %vm1548, %v1535, %v1538
      %v1557 = vsel %vm1551, %v1544, 920167782
      %v1558 = vsel %vm1550, %v1541, %v1557
      %v1559 = vsel %vm1549, %v1556, %v1558
      %v1560 = vsel %vm1548, %v1538, %v1541
      %v1561 = vsel %vm1551, %v1547, 1326507024
      %v1562 = vsel %vm1550, %v1544, %v1561
      %v1563 = vsel %vm1549, %v1560, %v1562
      %v1564 = vshll.u32 %v1524, 8
      %v1565 = vand.u32 %v1564, 65535
      %v1566 = vshrl.u32 %v1564, 16
      %v1567 = vand.u32 %v1563, 65535
      %v1568 = vshrl.u32 %v1563, 16
      %v1569 = vmul.u32 %v1565, %v1567
      %v1570 = vmul.u32 %v1565, %v1568
      %v1571 = vmul.u32 %v1566, %v1567
      %v1572 = vmul.u32 %v1566, %v1568
      %v1573 = vshll.u32 %v1570, 16
      %v1574 = vshrl.u32 %v1570, 16
      %v1575 = vshll.u32 %v1571, 16
      %v1576 = vshrl.u32 %v1571, 16
      %vm1577 = vc.u32 %v1569, %v1573
      %v1578 = vsel %vm1577, 1, 0
      %v1579 = vadd.s32 %v1569, %v1573
      %v1580 = vadd.s32 %v1572, %v1578
      %vm1581 = vc.u32 %v1579, %v1575
      %v1582 = vsel %vm1581, 1, 0
      %v1583 = vadd.s32 %v1579, %v1575
      %v1584 = vadd.s32 %v1580, %v1582
      %v1585 = vadd.s32 %v1584, %v1574
      %v1586 = vadd.s32 %v1585, %v1576
      %v1587 = vand.u32 %v1564, 65535
      %v1588 = vshrl.u32 %v1564, 16
      %v1589 = vand.u32 %v1559, 65535
      %v1590 = vshrl.u32 %v1559, 16
      %v1591 = vmul.u32 %v1587, %v1589
      %v1592 = vmul.u32 %v1587, %v1590
      %v1593 = vmul.u32 %v1588, %v1589
      %v1594 = vmul.u32 %v1588, %v1590
      %v1595 = vshll.u32 %v1592, 16
      %v1596 = vshrl.u32 %v1592, 16
      %v1597 = vshll.u32 %v1593, 16
      %v1598 = vshrl.u32 %v1593, 16
      %vm1599 = vc.u32 %v1591, %v1595
      %v1600 = vsel %vm1599, 1, 0
      %v1601 = vadd.s32 %v1591, %v1595
      %v1602 = vadd.s32 %v1594, %v1600
      %vm1603 = vc.u32 %v1601, %v1597
      %v1604 = vsel %vm1603, 1, 0
      %v1605 = vadd.s32 %v1601, %v1597
      %v1606 = vadd.s32 %v1602, %v1604
      %v1607 = vadd.s32 %v1606, %v1596
      %v1608 = vadd.s32 %v1607, %v1598
      %v1609 = vmul.u32 %v1564, %v1555
      %v1610 = vadd.s32 %v1586, %v1605
      %vm1611 = vc.u32 %v1586, %v1605
      %v1612 = vadd.s32 %v1608, 1
      %v1613 = vsel %vm1611, %v1612, %v1608
      %v1614 = vadd.s32 %v1609, %v1613
      %v1615 = vadd.s32 %v1614, 536870912
      %v1616 = vshrl.u32 %v1615, 30
      %v1617 = vshll.u32 %v1616, 30
      %v1618 = vsub.s32 %v1614, %v1617
      %vm1619 = vcmp.lt.s32.totalorder %v1618, 0
      %v1620 = vsub.s32 0, %v1618
      %v1621 = vsel %vm1619, %v1620, %v1618
      %v1622 = vclz %v1621
      %v1623 = vsub.s32 %v1622, 2
      %vm1624 = vcmp.gt.s32.totalorder 0, %v1623
      %v1625 = vsel %vm1624, 0, %v1623
      %v1626 = vsub.s32 32, %v1625
      %v1627 = vshll.u32 %v1618, %v1625
      %v1628 = vshrl.u32 %v1610, %v1626
      %v1629 = vor.u32 %v1627, %v1628
      %v1630 = vsub.s32 4294967266, %v1625
      %v1631 = vadd.s32 %v1630, 127
      %v1632 = vshll.u32 %v1631, 23
      %v1633 = vor.u32 4788187, %v1632
      %v1634 = vand.u32 2147483647, %v1633
      %v1636 = vcvt.s32.f32 %v1629
      %v1637 = vmul.f32 %v1636, %v1634
      %v1638 = vxor.u32 %v1637, 2147483648
      %v1639 = vsel %vm1518, %v1638, %v1637
      %v1640 = vsub.s32 4, %v1616
      %v1641 = vsel %vm1518, %v1640, %v1616
      %v1642 = vsel %vm1517, %v888, %v1639
      %v1643 = vsel %vm1517, 0, %v1641
      %v1644 = vmul.f32 %v1642, %v1642
      %v1645 = vmul.f32 %v1644, -0.001358992
      %v1646 = vadd.f32 %v1645, 0.041655596
      %v1647 = vmul.f32 %v1644, %v1646
      %v1648 = vadd.f32 %v1647, -0.4999988
      %v1649 = vmul.f32 %v1644, %v1648
      %v1650 = vadd.f32 1.0, %v1649
      %v1651 = vmul.f32 %v1642, %v1642
      %v1652 = vmul.f32 %v1651, -0.00019511016
      %v1653 = vadd.f32 %v1652, 0.008332121
      %v1654 = vmul.f32 %v1651, %v1653
      %v1655 = vadd.f32 %v1654, -0.16666654
      %v1656 = vmul.f32 %v1651, %v1655
      %v1657 = vadd.f32 %v1656, 1.0
      %v1658 = vmul.f32 %v1657, %v1642
      %vm1659 = vweird.f32 %v888
      %v1660 = vand.u32 %v1643, 3
      %vm1661 = vcmp.lt.s32.totalorder %v1660, 2
      %vm1662 = vcmp.eq.s32.totalorder %v1660, 0
      %v1663 = vxor.u32 %v1658, 2147483648
      %v1664 = vsel %vm1662, %v1650, %v1663
      %vm1665 = vcmp.eq.s32.totalorder %v1660, 2
      %v1666 = vxor.u32 %v1650, 2147483648
      %v1667 = vsel %vm1665, %v1666, %v1658
      %v1668 = vsel %vm1661, %v1664, %v1667
      %v1669 = vsel %vm1659, nan, %v1668
      %v1670 = vand.u32 2147483647, %v889
      %vm1671 = vcmp.le.f32.partialorder %v1670, 0.7853982
      %vm1672 = vcmp.lt.s32.totalorder %v889, 0
      %v1673 = vand.u32 %v889, 2139095040
      %v1674 = vshrl.u32 %v1673, 23
      %v1675 = vsub.s32 %v1674, 127
      %v1676 = vand.u32 2147483647, %v889
      %v1677 = vand.u32 %v1676, 8388607
      %v1678 = vor.u32 %v1677, 8388608
      %v1679 = vsub.s32 0, %v1678
      %v1680 = vadd.s32 %v1675, 1
      %vm1681 = vcmp.gt.s32.totalorder %v1680, 0
      %v1682 = vsel %vm1681, %v1680, 0
      %v1683 = vshrl.u32 %v1682, 5
      %v1684 = vand.u32 %v1682, 31
      %v1685 = vsub.s32 32, %v1684
      %v1686 = vshrl.u32 683565275, %v1685
      %v1687 = vshll.u32 683565275, %v1684
      %v1688 = vshrl.u32 2475754826, %v1685
      %v1689 = vor.u32 %v1687, %v1688
      %v1690 = vshll.u32 2475754826, %v1684
      %v1691 = vshrl.u32 2131351028, %v1685
      %v1692 = vor.u32 %v1690, %v1691
      %v1693 = vshll.u32 2131351028, %v1684
      %v1694 = vshrl.u32 2102212464, %v1685
      %v1695 = vor.u32 %v1693, %v1694
      %v1696 = vshll.u32 2102212464, %v1684
      %v1697 = vshrl.u32 920167782, %v1685
      %v1698 = vor.u32 %v1696, %v1697
      %v1699 = vshll.u32 920167782, %v1684
      %v1700 = vshrl.u32 1326507024, %v1685
      %v1701 = vor.u32 %v1699, %v1700
      %vm1702 = vcmp.lt.s32.totalorder %v1683, 1
      %vm1703 = vcmp.lt.s32.totalorder %v1683, 2
      %vm1704 = vcmp.lt.s32.totalorder %v1683, 3
      %vm1705 = vcmp.lt.s32.totalorder %v1683, 4
      %v1706 = vsel %vm1702, %v1686, %v1689
      %v1707 = vsel %vm1705, %v1695, 2102212464
      %v1708 = vsel %vm1704, %v1692, %v1707
      %v1709 = vsel %vm1703, %v1706, %v1708
      %v1710 = vsel %vm1702, %v1689, %v1692
      %v1711 = vsel %vm1705, %v1698, 920167782
      %v1712 = vsel %vm1704, %v1695, %v1711
      %v1713 = vsel %vm1703, %v1710, %v1712
      %v1714 = vsel %vm1702, %v1692, %v1695
      %v1715 = vsel %vm1705, %v1701, 1326507024
      %v1716 = vsel %vm1704, %v1698, %v1715
      %v1717 = vsel %vm1703, %v1714, %v1716
      %v1718 = vshll.u32 %v1678, 8
      %v1719 = vand.u32 %v1718, 65535
      %v1720 = vshrl.u32 %v1718, 16
      %v1721 = vand.u32 %v1717, 65535
      %v1722 = vshrl.u32 %v1717, 16
      %v1723 = vmul.u32 %v1719, %v1721
      %v1724 = vmul.u32 %v1719, %v1722
      %v1725 = vmul.u32 %v1720, %v1721
      %v1726 = vmul.u32 %v1720, %v1722
      %v1727 = vshll.u32 %v1724, 16
      %v1728 = vshrl.u32 %v1724, 16
      %v1729 = vshll.u32 %v1725, 16
      %v1730 = vshrl.u32 %v1725, 16
      %vm1731 = vc.u32 %v1723, %v1727
      %v1732 = vsel %vm1731, 1, 0
      %v1733 = vadd.s32 %v1723, %v1727
      %v1734 = vadd.s32 %v1726, %v1732
      %vm1735 = vc.u32 %v1733, %v1729
      %v1736 = vsel %vm1735, 1, 0
      %v1737 = vadd.s32 %v1733, %v1729
      %v1738 = vadd.s32 %v1734, %v1736
      %v1739 = vadd.s32 %v1738, %v1728
      %v1740 = vadd.s32 %v1739, %v1730
      %v1741 = vand.u32 %v1718, 65535
      %v1742 = vshrl.u32 %v1718, 16
      %v1743 = vand.u32 %v1713, 65535
      %v1744 = vshrl.u32 %v1713, 16
      %v1745 = vmul.u32 %v1741, %v1743
      %v1746 = vmul.u32 %v1741, %v1744
      %v1747 = vmul.u32 %v1742, %v1743
      %v1748 = vmul.u32 %v1742, %v1744
      %v1749 = vshll.u32 %v1746, 16
      %v1750 = vshrl.u32 %v1746, 16
      %v1751 = vshll.u32 %v1747, 16
      %v1752 = vshrl.u32 %v1747, 16
      %vm1753 = vc.u32 %v1745, %v1749
      %v1754 = vsel %vm1753, 1, 0
      %v1755 = vadd.s32 %v1745, %v1749
      %v1756 = vadd.s32 %v1748, %v1754
      %vm1757 = vc.u32 %v1755, %v1751
      %v1758 = vsel %vm1757, 1, 0
      %v1759 = vadd.s32 %v1755, %v1751
      %v1760 = vadd.s32 %v1756, %v1758
      %v1761 = vadd.s32 %v1760, %v1750
      %v1762 = vadd.s32 %v1761, %v1752
      %v1763 = vmul.u32 %v1718, %v1709
      %v1764 = vadd.s32 %v1740, %v1759
      %vm1765 = vc.u32 %v1740, %v1759
      %v1766 = vadd.s32 %v1762, 1
      %v1767 = vsel %vm1765, %v1766, %v1762
      %v1768 = vadd.s32 %v1763, %v1767
      %v1769 = vadd.s32 %v1768, 536870912
      %v1770 = vshrl.u32 %v1769, 30
      %v1771 = vshll.u32 %v1770, 30
      %v1772 = vsub.s32 %v1768, %v1771
      %vm1773 = vcmp.lt.s32.totalorder %v1772, 0
      %v1774 = vsub.s32 0, %v1772
      %v1775 = vsel %vm1773, %v1774, %v1772
      %v1776 = vclz %v1775
      %v1777 = vsub.s32 %v1776, 2
      %vm1778 = vcmp.gt.s32.totalorder 0, %v1777
      %v1779 = vsel %vm1778, 0, %v1777
      %v1780 = vsub.s32 32, %v1779
      %v1781 = vshll.u32 %v1772, %v1779
      %v1782 = vshrl.u32 %v1764, %v1780
      %v1783 = vor.u32 %v1781, %v1782
      %v1784 = vsub.s32 4294967266, %v1779
      %v1785 = vadd.s32 %v1784, 127
      %v1786 = vshll.u32 %v1785, 23
      %v1787 = vor.u32 4788187, %v1786
      %v1788 = vand.u32 2147483647, %v1787
      %v1790 = vcvt.s32.f32 %v1783
      %v1791 = vmul.f32 %v1790, %v1788
      %v1792 = vxor.u32 %v1791, 2147483648
      %v1793 = vsel %vm1672, %v1792, %v1791
      %v1794 = vsub.s32 4, %v1770
      %v1795 = vsel %vm1672, %v1794, %v1770
      %v1796 = vsel %vm1671, %v889, %v1793
      %v1797 = vsel %vm1671, 0, %v1795
      %v1798 = vmul.f32 %v1796, %v1796
      %v1799 = vmul.f32 %v1798, -0.001358992
      %v1800 = vadd.f32 %v1799, 0.041655596
      %v1801 = vmul.f32 %v1798, %v1800
      %v1802 = vadd.f32 %v1801, -0.4999988
      %v1803 = vmul.f32 %v1798, %v1802
      %v1804 = vadd.f32 1.0, %v1803
      %v1805 = vmul.f32 %v1796, %v1796
      %v1806 = vmul.f32 %v1805, -0.00019511016
      %v1807 = vadd.f32 %v1806, 0.008332121
      %v1808 = vmul.f32 %v1805, %v1807
      %v1809 = vadd.f32 %v1808, -0.16666654
      %v1810 = vmul.f32 %v1805, %v1809
      %v1811 = vadd.f32 %v1810, 1.0
      %v1812 = vmul.f32 %v1811, %v1796
      %vm1813 = vweird.f32 %v889
      %v1814 = vand.u32 %v1797, 3
      %vm1815 = vcmp.lt.s32.totalorder %v1814, 2
      %vm1816 = vcmp.eq.s32.totalorder %v1814, 0
      %v1817 = vxor.u32 %v1812, 2147483648
      %v1818 = vsel %vm1816, %v1804, %v1817
      %vm1819 = vcmp.eq.s32.totalorder %v1814, 2
      %v1820 = vxor.u32 %v1804, 2147483648
      %v1821 = vsel %vm1819, %v1820, %v1812
      %v1822 = vsel %vm1815, %v1818, %v1821
      %v1823 = vsel %vm1813, nan, %v1822
      %v1824 = vand.u32 2147483647, %v890
      %vm1825 = vcmp.le.f32.partialorder %v1824, 0.7853982
      %vm1826 = vcmp.lt.s32.totalorder %v890, 0
      %v1827 = vand.u32 %v890, 2139095040
      %v1828 = vshrl.u32 %v1827, 23
      %v1829 = vsub.s32 %v1828, 127
      %v1830 = vand.u32 2147483647, %v890
      %v1831 = vand.u32 %v1830, 8388607
      %v1832 = vor.u32 %v1831, 8388608
      %v1833 = vsub.s32 0, %v1832
      %v1834 = vadd.s32 %v1829, 1
      %vm1835 = vcmp.gt.s32.totalorder %v1834, 0
      %v1836 = vsel %vm1835, %v1834, 0
      %v1837 = vshrl.u32 %v1836, 5
      %v1838 = vand.u32 %v1836, 31
      %v1839 = vsub.s32 32, %v1838
      %v1840 = vshrl.u32 683565275, %v1839
      %v1841 = vshll.u32 683565275, %v1838
      %v1842 = vshrl.u32 2475754826, %v1839
      %v1843 = vor.u32 %v1841, %v1842
      %v1844 = vshll.u32 2475754826, %v1838
      %v1845 = vshrl.u32 2131351028, %v1839
      %v1846 = vor.u32 %v1844, %v1845
      %v1847 = vshll.u32 2131351028, %v1838
      %v1848 = vshrl.u32 2102212464, %v1839
      %v1849 = vor.u32 %v1847, %v1848
      %v1850 = vshll.u32 2102212464, %v1838
      %v1851 = vshrl.u32 920167782, %v1839
      %v1852 = vor.u32 %v1850, %v1851
      %v1853 = vshll.u32 920167782, %v1838
      %v1854 = vshrl.u32 1326507024, %v1839
      %v1855 = vor.u32 %v1853, %v1854
      %vm1856 = vcmp.lt.s32.totalorder %v1837, 1
      %vm1857 = vcmp.lt.s32.totalorder %v1837, 2
      %vm1858 = vcmp.lt.s32.totalorder %v1837, 3
      %vm1859 = vcmp.lt.s32.totalorder %v1837, 4
      %v1860 = vsel %vm1856, %v1840, %v1843
      %v1861 = vsel %vm1859, %v1849, 2102212464
      %v1862 = vsel %vm1858, %v1846, %v1861
      %v1863 = vsel %vm1857, %v1860, %v1862
      %v1864 = vsel %vm1856, %v1843, %v1846
      %v1865 = vsel %vm1859, %v1852, 920167782
      %v1866 = vsel %vm1858, %v1849, %v1865
      %v1867 = vsel %vm1857, %v1864, %v1866
      %v1868 = vsel %vm1856, %v1846, %v1849
      %v1869 = vsel %vm1859, %v1855, 1326507024
      %v1870 = vsel %vm1858, %v1852, %v1869
      %v1871 = vsel %vm1857, %v1868, %v1870
      %v1872 = vshll.u32 %v1832, 8
      %v1873 = vand.u32 %v1872, 65535
      %v1874 = vshrl.u32 %v1872, 16
      %v1875 = vand.u32 %v1871, 65535
      %v1876 = vshrl.u32 %v1871, 16
      %v1877 = vmul.u32 %v1873, %v1875
      %v1878 = vmul.u32 %v1873, %v1876
      %v1879 = vmul.u32 %v1874, %v1875
      %v1880 = vmul.u32 %v1874, %v1876
      %v1881 = vshll.u32 %v1878, 16
      %v1882 = vshrl.u32 %v1878, 16
      %v1883 = vshll.u32 %v1879, 16
      %v1884 = vshrl.u32 %v1879, 16
      %vm1885 = vc.u32 %v1877, %v1881
      %v1886 = vsel %vm1885, 1, 0
      %v1887 = vadd.s32 %v1877, %v1881
      %v1888 = vadd.s32 %v1880, %v1886
      %vm1889 = vc.u32 %v1887, %v1883
      %v1890 = vsel %vm1889, 1, 0
      %v1891 = vadd.s32 %v1887, %v1883
      %v1892 = vadd.s32 %v1888, %v1890
      %v1893 = vadd.s32 %v1892, %v1882
      %v1894 = vadd.s32 %v1893, %v1884
      %v1895 = vand.u32 %v1872, 65535
      %v1896 = vshrl.u32 %v1872, 16
      %v1897 = vand.u32 %v1867, 65535
      %v1898 = vshrl.u32 %v1867, 16
      %v1899 = vmul.u32 %v1895, %v1897
      %v1900 = vmul.u32 %v1895, %v1898
      %v1901 = vmul.u32 %v1896, %v1897
      %v1902 = vmul.u32 %v1896, %v1898
      %v1903 = vshll.u32 %v1900, 16
      %v1904 = vshrl.u32 %v1900, 16
      %v1905 = vshll.u32 %v1901, 16
      %v1906 = vshrl.u32 %v1901, 16
      %vm1907 = vc.u32 %v1899, %v1903
      %v1908 = vsel %vm1907, 1, 0
      %v1909 = vadd.s32 %v1899, %v1903
      %v1910 = vadd.s32 %v1902, %v1908
      %vm1911 = vc.u32 %v1909, %v1905
      %v1912 = vsel %vm1911, 1, 0
      %v1913 = vadd.s32 %v1909, %v1905
      %v1914 = vadd.s32 %v1910, %v1912
      %v1915 = vadd.s32 %v1914, %v1904
      %v1916 = vadd.s32 %v1915, %v1906
      %v1917 = vmul.u32 %v1872, %v1863
      %v1918 = vadd.s32 %v1894, %v1913
      %vm1919 = vc.u32 %v1894, %v1913
      %v1920 = vadd.s32 %v1916, 1
      %v1921 = vsel %vm1919, %v1920, %v1916
      %v1922 = vadd.s32 %v1917, %v1921
      %v1923 = vadd.s32 %v1922, 536870912
      %v1924 = vshrl.u32 %v1923, 30
      %v1925 = vshll.u32 %v1924, 30
      %v1926 = vsub.s32 %v1922, %v1925
      %vm1927 = vcmp.lt.s32.totalorder %v1926, 0
      %v1928 = vsub.s32 0, %v1926
      %v1929 = vsel %vm1927, %v1928, %v1926
      %v1930 = vclz %v1929
      %v1931 = vsub.s32 %v1930, 2
      %vm1932 = vcmp.gt.s32.totalorder 0, %v1931
      %v1933 = vsel %vm1932, 0, %v1931
      %v1934 = vsub.s32 32, %v1933
      %v1935 = vshll.u32 %v1926, %v1933
      %v1936 = vshrl.u32 %v1918, %v1934
      %v1937 = vor.u32 %v1935, %v1936
      %v1938 = vsub.s32 4294967266, %v1933
      %v1939 = vadd.s32 %v1938, 127
      %v1940 = vshll.u32 %v1939, 23
      %v1941 = vor.u32 4788187, %v1940
      %v1942 = vand.u32 2147483647, %v1941
      %v1944 = vcvt.s32.f32 %v1937
      %v1945 = vmul.f32 %v1944, %v1942
      %v1946 = vxor.u32 %v1945, 2147483648
      %v1947 = vsel %vm1826, %v1946, %v1945
      %v1948 = vsub.s32 4, %v1924
      %v1949 = vsel %vm1826, %v1948, %v1924
      %v1950 = vsel %vm1825, %v890, %v1947
      %v1951 = vsel %vm1825, 0, %v1949
      %v1952 = vmul.f32 %v1950, %v1950
      %v1953 = vmul.f32 %v1952, -0.001358992
      %v1954 = vadd.f32 %v1953, 0.041655596
      %v1955 = vmul.f32 %v1952, %v1954
      %v1956 = vadd.f32 %v1955, -0.4999988
      %v1957 = vmul.f32 %v1952, %v1956
      %v1958 = vadd.f32 1.0, %v1957
      %v1959 = vmul.f32 %v1950, %v1950
      %v1960 = vmul.f32 %v1959, -0.00019511016
      %v1961 = vadd.f32 %v1960, 0.008332121
      %v1962 = vmul.f32 %v1959, %v1961
      %v1963 = vadd.f32 %v1962, -0.16666654
      %v1964 = vmul.f32 %v1959, %v1963
      %v1965 = vadd.f32 %v1964, 1.0
      %v1966 = vmul.f32 %v1965, %v1950
      %vm1967 = vweird.f32 %v890
      %v1968 = vand.u32 %v1951, 3
      %vm1969 = vcmp.lt.s32.totalorder %v1968, 2
      %vm1970 = vcmp.eq.s32.totalorder %v1968, 0
      %v1971 = vxor.u32 %v1966, 2147483648
      %v1972 = vsel %vm1970, %v1958, %v1971
      %vm1973 = vcmp.eq.s32.totalorder %v1968, 2
      %v1974 = vxor.u32 %v1958, 2147483648
      %v1975 = vsel %vm1973, %v1974, %v1966
      %v1976 = vsel %vm1969, %v1972, %v1975
      %v1977 = vsel %vm1967, nan, %v1976
      %v1978 = vand.u32 2147483647, %v891
      %vm1979 = vcmp.le.f32.partialorder %v1978, 0.7853982
      %vm1980 = vcmp.lt.s32.totalorder %v891, 0
      %v1981 = vand.u32 %v891, 2139095040
      %v1982 = vshrl.u32 %v1981, 23
      %v1983 = vsub.s32 %v1982, 127
      %v1984 = vand.u32 2147483647, %v891
      %v1985 = vand.u32 %v1984, 8388607
      %v1986 = vor.u32 %v1985, 8388608
      %v1987 = vsub.s32 0, %v1986
      %v1988 = vadd.s32 %v1983, 1
      %vm1989 = vcmp.gt.s32.totalorder %v1988, 0
      %v1990 = vsel %vm1989, %v1988, 0
      %v1991 = vshrl.u32 %v1990, 5
      %v1992 = vand.u32 %v1990, 31
      %v1993 = vsub.s32 32, %v1992
      %v1994 = vshrl.u32 683565275, %v1993
      %v1995 = vshll.u32 683565275, %v1992
      %v1996 = vshrl.u32 2475754826, %v1993
      %v1997 = vor.u32 %v1995, %v1996
      %v1998 = vshll.u32 2475754826, %v1992
      %v1999 = vshrl.u32 2131351028, %v1993
      %v2000 = vor.u32 %v1998, %v1999
      %v2001 = vshll.u32 2131351028, %v1992
      %v2002 = vshrl.u32 2102212464, %v1993
      %v2003 = vor.u32 %v2001, %v2002
      %v2004 = vshll.u32 2102212464, %v1992
      %v2005 = vshrl.u32 920167782, %v1993
      %v2006 = vor.u32 %v2004, %v2005
      %v2007 = vshll.u32 920167782, %v1992
      %v2008 = vshrl.u32 1326507024, %v1993
      %v2009 = vor.u32 %v2007, %v2008
      %vm2010 = vcmp.lt.s32.totalorder %v1991, 1
      %vm2011 = vcmp.lt.s32.totalorder %v1991, 2
      %vm2012 = vcmp.lt.s32.totalorder %v1991, 3
      %vm2013 = vcmp.lt.s32.totalorder %v1991, 4
      %v2014 = vsel %vm2010, %v1994, %v1997
      %v2015 = vsel %vm2013, %v2003, 2102212464
      %v2016 = vsel %vm2012, %v2000, %v2015
      %v2017 = vsel %vm2011, %v2014, %v2016
      %v2018 = vsel %vm2010, %v1997, %v2000
      %v2019 = vsel %vm2013, %v2006, 920167782
      %v2020 = vsel %vm2012, %v2003, %v2019
      %v2021 = vsel %vm2011, %v2018, %v2020
      %v2022 = vsel %vm2010, %v2000, %v2003
      %v2023 = vsel %vm2013, %v2009, 1326507024
      %v2024 = vsel %vm2012, %v2006, %v2023
      %v2025 = vsel %vm2011, %v2022, %v2024
      %v2026 = vshll.u32 %v1986, 8
      %v2027 = vand.u32 %v2026, 65535
      %v2028 = vshrl.u32 %v2026, 16
      %v2029 = vand.u32 %v2025, 65535
      %v2030 = vshrl.u32 %v2025, 16
      %v2031 = vmul.u32 %v2027, %v2029
      %v2032 = vmul.u32 %v2027, %v2030
      %v2033 = vmul.u32 %v2028, %v2029
      %v2034 = vmul.u32 %v2028, %v2030
      %v2035 = vshll.u32 %v2032, 16
      %v2036 = vshrl.u32 %v2032, 16
      %v2037 = vshll.u32 %v2033, 16
      %v2038 = vshrl.u32 %v2033, 16
      %vm2039 = vc.u32 %v2031, %v2035
      %v2040 = vsel %vm2039, 1, 0
      %v2041 = vadd.s32 %v2031, %v2035
      %v2042 = vadd.s32 %v2034, %v2040
      %vm2043 = vc.u32 %v2041, %v2037
      %v2044 = vsel %vm2043, 1, 0
      %v2045 = vadd.s32 %v2041, %v2037
      %v2046 = vadd.s32 %v2042, %v2044
      %v2047 = vadd.s32 %v2046, %v2036
      %v2048 = vadd.s32 %v2047, %v2038
      %v2049 = vand.u32 %v2026, 65535
      %v2050 = vshrl.u32 %v2026, 16
      %v2051 = vand.u32 %v2021, 65535
      %v2052 = vshrl.u32 %v2021, 16
      %v2053 = vmul.u32 %v2049, %v2051
      %v2054 = vmul.u32 %v2049, %v2052
      %v2055 = vmul.u32 %v2050, %v2051
      %v2056 = vmul.u32 %v2050, %v2052
      %v2057 = vshll.u32 %v2054, 16
      %v2058 = vshrl.u32 %v2054, 16
      %v2059 = vshll.u32 %v2055, 16
      %v2060 = vshrl.u32 %v2055, 16
      %vm2061 = vc.u32 %v2053, %v2057
      %v2062 = vsel %vm2061, 1, 0
      %v2063 = vadd.s32 %v2053, %v2057
      %v2064 = vadd.s32 %v2056, %v2062
      %vm2065 = vc.u32 %v2063, %v2059
      %v2066 = vsel %vm2065, 1, 0
      %v2067 = vadd.s32 %v2063, %v2059
      %v2068 = vadd.s32 %v2064, %v2066
      %v2069 = vadd.s32 %v2068, %v2058
      %v2070 = vadd.s32 %v2069, %v2060
      %v2071 = vmul.u32 %v2026, %v2017
      %v2072 = vadd.s32 %v2048, %v2067
      %vm2073 = vc.u32 %v2048, %v2067
      %v2074 = vadd.s32 %v2070, 1
      %v2075 = vsel %vm2073, %v2074, %v2070
      %v2076 = vadd.s32 %v2071, %v2075
      %v2077 = vadd.s32 %v2076, 536870912
      %v2078 = vshrl.u32 %v2077, 30
      %v2079 = vshll.u32 %v2078, 30
      %v2080 = vsub.s32 %v2076, %v2079
      %vm2081 = vcmp.lt.s32.totalorder %v2080, 0
      %v2082 = vsub.s32 0, %v2080
      %v2083 = vsel %vm2081, %v2082, %v2080
      %v2084 = vclz %v2083
      %v2085 = vsub.s32 %v2084, 2
      %vm2086 = vcmp.gt.s32.totalorder 0, %v2085
      %v2087 = vsel %vm2086, 0, %v2085
      %v2088 = vsub.s32 32, %v2087
      %v2089 = vshll.u32 %v2080, %v2087
      %v2090 = vshrl.u32 %v2072, %v2088
      %v2091 = vor.u32 %v2089, %v2090
      %v2092 = vsub.s32 4294967266, %v2087
      %v2093 = vadd.s32 %v2092, 127
      %v2094 = vshll.u32 %v2093, 23
      %v2095 = vor.u32 4788187, %v2094
      %v2096 = vand.u32 2147483647, %v2095
      %v2098 = vcvt.s32.f32 %v2091
      %v2099 = vmul.f32 %v2098, %v2096
      %v2100 = vxor.u32 %v2099, 2147483648
      %v2101 = vsel %vm1980, %v2100, %v2099
      %v2102 = vsub.s32 4, %v2078
      %v2103 = vsel %vm1980, %v2102, %v2078
      %v2104 = vsel %vm1979, %v891, %v2101
      %v2105 = vsel %vm1979, 0, %v2103
      %v2106 = vmul.f32 %v2104, %v2104
      %v2107 = vmul.f32 %v2106, -0.001358992
      %v2108 = vadd.f32 %v2107, 0.041655596
      %v2109 = vmul.f32 %v2106, %v2108
      %v2110 = vadd.f32 %v2109, -0.4999988
      %v2111 = vmul.f32 %v2106, %v2110
      %v2112 = vadd.f32 1.0, %v2111
      %v2113 = vmul.f32 %v2104, %v2104
      %v2114 = vmul.f32 %v2113, -0.00019511016
      %v2115 = vadd.f32 %v2114, 0.008332121
      %v2116 = vmul.f32 %v2113, %v2115
      %v2117 = vadd.f32 %v2116, -0.16666654
      %v2118 = vmul.f32 %v2113, %v2117
      %v2119 = vadd.f32 %v2118, 1.0
      %v2120 = vmul.f32 %v2119, %v2104
      %vm2121 = vweird.f32 %v891
      %v2122 = vand.u32 %v2105, 3
      %vm2123 = vcmp.lt.s32.totalorder %v2122, 2
      %vm2124 = vcmp.eq.s32.totalorder %v2122, 0
      %v2125 = vxor.u32 %v2120, 2147483648
      %v2126 = vsel %vm2124, %v2112, %v2125
      %vm2127 = vcmp.eq.s32.totalorder %v2122, 2
      %v2128 = vxor.u32 %v2112, 2147483648
      %v2129 = vsel %vm2127, %v2128, %v2120
      %v2130 = vsel %vm2123, %v2126, %v2129
      %v2131 = vsel %vm2121, nan, %v2130
      %v2132 = vand.u32 2147483647, %v892
      %vm2133 = vcmp.le.f32.partialorder %v2132, 0.7853982
      %vm2134 = vcmp.lt.s32.totalorder %v892, 0
      %v2135 = vand.u32 %v892, 2139095040
      %v2136 = vshrl.u32 %v2135, 23
      %v2137 = vsub.s32 %v2136, 127
      %v2138 = vand.u32 2147483647, %v892
      %v2139 = vand.u32 %v2138, 8388607
      %v2140 = vor.u32 %v2139, 8388608
      %v2141 = vsub.s32 0, %v2140
      %v2142 = vadd.s32 %v2137, 1
      %vm2143 = vcmp.gt.s32.totalorder %v2142, 0
      %v2144 = vsel %vm2143, %v2142, 0
      %v2145 = vshrl.u32 %v2144, 5
      %v2146 = vand.u32 %v2144, 31
      %v2147 = vsub.s32 32, %v2146
      %v2148 = vshrl.u32 683565275, %v2147
      %v2149 = vshll.u32 683565275, %v2146
      %v2150 = vshrl.u32 2475754826, %v2147
      %v2151 = vor.u32 %v2149, %v2150
      %v2152 = vshll.u32 2475754826, %v2146
      %v2153 = vshrl.u32 2131351028, %v2147
      %v2154 = vor.u32 %v2152, %v2153
      %v2155 = vshll.u32 2131351028, %v2146
      %v2156 = vshrl.u32 2102212464, %v2147
      %v2157 = vor.u32 %v2155, %v2156
      %v2158 = vshll.u32 2102212464, %v2146
      %v2159 = vshrl.u32 920167782, %v2147
      %v2160 = vor.u32 %v2158, %v2159
      %v2161 = vshll.u32 920167782, %v2146
      %v2162 = vshrl.u32 1326507024, %v2147
      %v2163 = vor.u32 %v2161, %v2162
      %vm2164 = vcmp.lt.s32.totalorder %v2145, 1
      %vm2165 = vcmp.lt.s32.totalorder %v2145, 2
      %vm2166 = vcmp.lt.s32.totalorder %v2145, 3
      %vm2167 = vcmp.lt.s32.totalorder %v2145, 4
      %v2168 = vsel %vm2164, %v2148, %v2151
      %v2169 = vsel %vm2167, %v2157, 2102212464
      %v2170 = vsel %vm2166, %v2154, %v2169
      %v2171 = vsel %vm2165, %v2168, %v2170
      %v2172 = vsel %vm2164, %v2151, %v2154
      %v2173 = vsel %vm2167, %v2160, 920167782
      %v2174 = vsel %vm2166, %v2157, %v2173
      %v2175 = vsel %vm2165, %v2172, %v2174
      %v2176 = vsel %vm2164, %v2154, %v2157
      %v2177 = vsel %vm2167, %v2163, 1326507024
      %v2178 = vsel %vm2166, %v2160, %v2177
      %v2179 = vsel %vm2165, %v2176, %v2178
      %v2180 = vshll.u32 %v2140, 8
      %v2181 = vand.u32 %v2180, 65535
      %v2182 = vshrl.u32 %v2180, 16
      %v2183 = vand.u32 %v2179, 65535
      %v2184 = vshrl.u32 %v2179, 16
      %v2185 = vmul.u32 %v2181, %v2183
      %v2186 = vmul.u32 %v2181, %v2184
      %v2187 = vmul.u32 %v2182, %v2183
      %v2188 = vmul.u32 %v2182, %v2184
      %v2189 = vshll.u32 %v2186, 16
      %v2190 = vshrl.u32 %v2186, 16
      %v2191 = vshll.u32 %v2187, 16
      %v2192 = vshrl.u32 %v2187, 16
      %vm2193 = vc.u32 %v2185, %v2189
      %v2194 = vsel %vm2193, 1, 0
      %v2195 = vadd.s32 %v2185, %v2189
      %v2196 = vadd.s32 %v2188, %v2194
      %vm2197 = vc.u32 %v2195, %v2191
      %v2198 = vsel %vm2197, 1, 0
      %v2199 = vadd.s32 %v2195, %v2191
      %v2200 = vadd.s32 %v2196, %v2198
      %v2201 = vadd.s32 %v2200, %v2190
      %v2202 = vadd.s32 %v2201, %v2192
      %v2203 = vand.u32 %v2180, 65535
      %v2204 = vshrl.u32 %v2180, 16
      %v2205 = vand.u32 %v2175, 65535
      %v2206 = vshrl.u32 %v2175, 16
      %v2207 = vmul.u32 %v2203, %v2205
      %v2208 = vmul.u32 %v2203, %v2206
      %v2209 = vmul.u32 %v2204, %v2205
      %v2210 = vmul.u32 %v2204, %v2206
      %v2211 = vshll.u32 %v2208, 16
      %v2212 = vshrl.u32 %v2208, 16
      %v2213 = vshll.u32 %v2209, 16
      %v2214 = vshrl.u32 %v2209, 16
      %vm2215 = vc.u32 %v2207, %v2211
      %v2216 = vsel %vm2215, 1, 0
      %v2217 = vadd.s32 %v2207, %v2211
      %v2218 = vadd.s32 %v2210, %v2216
      %vm2219 = vc.u32 %v2217, %v2213
      %v2220 = vsel %vm2219, 1, 0
      %v2221 = vadd.s32 %v2217, %v2213
      %v2222 = vadd.s32 %v2218, %v2220
      %v2223 = vadd.s32 %v2222, %v2212
      %v2224 = vadd.s32 %v2223, %v2214
      %v2225 = vmul.u32 %v2180, %v2171
      %v2226 = vadd.s32 %v2202, %v2221
      %vm2227 = vc.u32 %v2202, %v2221
      %v2228 = vadd.s32 %v2224, 1
      %v2229 = vsel %vm2227, %v2228, %v2224
      %v2230 = vadd.s32 %v2225, %v2229
      %v2231 = vadd.s32 %v2230, 536870912
      %v2232 = vshrl.u32 %v2231, 30
      %v2233 = vshll.u32 %v2232, 30
      %v2234 = vsub.s32 %v2230, %v2233
      %vm2235 = vcmp.lt.s32.totalorder %v2234, 0
      %v2236 = vsub.s32 0, %v2234
      %v2237 = vsel %vm2235, %v2236, %v2234
      %v2238 = vclz %v2237
      %v2239 = vsub.s32 %v2238, 2
      %vm2240 = vcmp.gt.s32.totalorder 0, %v2239
      %v2241 = vsel %vm2240, 0, %v2239
      %v2242 = vsub.s32 32, %v2241
      %v2243 = vshll.u32 %v2234, %v2241
      %v2244 = vshrl.u32 %v2226, %v2242
      %v2245 = vor.u32 %v2243, %v2244
      %v2246 = vsub.s32 4294967266, %v2241
      %v2247 = vadd.s32 %v2246, 127
      %v2248 = vshll.u32 %v2247, 23
      %v2249 = vor.u32 4788187, %v2248
      %v2250 = vand.u32 2147483647, %v2249
      %v2252 = vcvt.s32.f32 %v2245
      %v2253 = vmul.f32 %v2252, %v2250
      %v2254 = vxor.u32 %v2253, 2147483648
      %v2255 = vsel %vm2134, %v2254, %v2253
      %v2256 = vsub.s32 4, %v2232
      %v2257 = vsel %vm2134, %v2256, %v2232
      %v2258 = vsel %vm2133, %v892, %v2255
      %v2259 = vsel %vm2133, 0, %v2257
      %v2260 = vmul.f32 %v2258, %v2258
      %v2261 = vmul.f32 %v2260, -0.001358992
      %v2262 = vadd.f32 %v2261, 0.041655596
      %v2263 = vmul.f32 %v2260, %v2262
      %v2264 = vadd.f32 %v2263, -0.4999988
      %v2265 = vmul.f32 %v2260, %v2264
      %v2266 = vadd.f32 1.0, %v2265
      %v2267 = vmul.f32 %v2258, %v2258
      %v2268 = vmul.f32 %v2267, -0.00019511016
      %v2269 = vadd.f32 %v2268, 0.008332121
      %v2270 = vmul.f32 %v2267, %v2269
      %v2271 = vadd.f32 %v2270, -0.16666654
      %v2272 = vmul.f32 %v2267, %v2271
      %v2273 = vadd.f32 %v2272, 1.0
      %v2274 = vmul.f32 %v2273, %v2258
      %vm2275 = vweird.f32 %v892
      %v2276 = vand.u32 %v2259, 3
      %vm2277 = vcmp.lt.s32.totalorder %v2276, 2
      %vm2278 = vcmp.eq.s32.totalorder %v2276, 0
      %v2279 = vxor.u32 %v2274, 2147483648
      %v2280 = vsel %vm2278, %v2266, %v2279
      %vm2281 = vcmp.eq.s32.totalorder %v2276, 2
      %v2282 = vxor.u32 %v2266, 2147483648
      %v2283 = vsel %vm2281, %v2282, %v2274
      %v2284 = vsel %vm2277, %v2280, %v2283
      %v2285 = vsel %vm2275, nan, %v2284
      %v2286 = vand.u32 2147483647, %v893
      %vm2287 = vcmp.le.f32.partialorder %v2286, 0.7853982
      %vm2288 = vcmp.lt.s32.totalorder %v893, 0
      %v2289 = vand.u32 %v893, 2139095040
      %v2290 = vshrl.u32 %v2289, 23
      %v2291 = vsub.s32 %v2290, 127
      %v2292 = vand.u32 2147483647, %v893
      %v2293 = vand.u32 %v2292, 8388607
      %v2294 = vor.u32 %v2293, 8388608
      %v2295 = vsub.s32 0, %v2294
      %v2296 = vadd.s32 %v2291, 1
      %vm2297 = vcmp.gt.s32.totalorder %v2296, 0
      %v2298 = vsel %vm2297, %v2296, 0
      %v2299 = vshrl.u32 %v2298, 5
      %v2300 = vand.u32 %v2298, 31
      %v2301 = vsub.s32 32, %v2300
      %v2302 = vshrl.u32 683565275, %v2301
      %v2303 = vshll.u32 683565275, %v2300
      %v2304 = vshrl.u32 2475754826, %v2301
      %v2305 = vor.u32 %v2303, %v2304
      %v2306 = vshll.u32 2475754826, %v2300
      %v2307 = vshrl.u32 2131351028, %v2301
      %v2308 = vor.u32 %v2306, %v2307
      %v2309 = vshll.u32 2131351028, %v2300
      %v2310 = vshrl.u32 2102212464, %v2301
      %v2311 = vor.u32 %v2309, %v2310
      %v2312 = vshll.u32 2102212464, %v2300
      %v2313 = vshrl.u32 920167782, %v2301
      %v2314 = vor.u32 %v2312, %v2313
      %v2315 = vshll.u32 920167782, %v2300
      %v2316 = vshrl.u32 1326507024, %v2301
      %v2317 = vor.u32 %v2315, %v2316
      %vm2318 = vcmp.lt.s32.totalorder %v2299, 1
      %vm2319 = vcmp.lt.s32.totalorder %v2299, 2
      %vm2320 = vcmp.lt.s32.totalorder %v2299, 3
      %vm2321 = vcmp.lt.s32.totalorder %v2299, 4
      %v2322 = vsel %vm2318, %v2302, %v2305
      %v2323 = vsel %vm2321, %v2311, 2102212464
      %v2324 = vsel %vm2320, %v2308, %v2323
      %v2325 = vsel %vm2319, %v2322, %v2324
      %v2326 = vsel %vm2318, %v2305, %v2308
      %v2327 = vsel %vm2321, %v2314, 920167782
      %v2328 = vsel %vm2320, %v2311, %v2327
      %v2329 = vsel %vm2319, %v2326, %v2328
      %v2330 = vsel %vm2318, %v2308, %v2311
      %v2331 = vsel %vm2321, %v2317, 1326507024
      %v2332 = vsel %vm2320, %v2314, %v2331
      %v2333 = vsel %vm2319, %v2330, %v2332
      %v2334 = vshll.u32 %v2294, 8
      %v2335 = vand.u32 %v2334, 65535
      %v2336 = vshrl.u32 %v2334, 16
      %v2337 = vand.u32 %v2333, 65535
      %v2338 = vshrl.u32 %v2333, 16
      %v2339 = vmul.u32 %v2335, %v2337
      %v2340 = vmul.u32 %v2335, %v2338
      %v2341 = vmul.u32 %v2336, %v2337
      %v2342 = vmul.u32 %v2336, %v2338
      %v2343 = vshll.u32 %v2340, 16
      %v2344 = vshrl.u32 %v2340, 16
      %v2345 = vshll.u32 %v2341, 16
      %v2346 = vshrl.u32 %v2341, 16
      %vm2347 = vc.u32 %v2339, %v2343
      %v2348 = vsel %vm2347, 1, 0
      %v2349 = vadd.s32 %v2339, %v2343
      %v2350 = vadd.s32 %v2342, %v2348
      %vm2351 = vc.u32 %v2349, %v2345
      %v2352 = vsel %vm2351, 1, 0
      %v2353 = vadd.s32 %v2349, %v2345
      %v2354 = vadd.s32 %v2350, %v2352
      %v2355 = vadd.s32 %v2354, %v2344
      %v2356 = vadd.s32 %v2355, %v2346
      %v2357 = vand.u32 %v2334, 65535
      %v2358 = vshrl.u32 %v2334, 16
      %v2359 = vand.u32 %v2329, 65535
      %v2360 = vshrl.u32 %v2329, 16
      %v2361 = vmul.u32 %v2357, %v2359
      %v2362 = vmul.u32 %v2357, %v2360
      %v2363 = vmul.u32 %v2358, %v2359
      %v2364 = vmul.u32 %v2358, %v2360
      %v2365 = vshll.u32 %v2362, 16
      %v2366 = vshrl.u32 %v2362, 16
      %v2367 = vshll.u32 %v2363, 16
      %v2368 = vshrl.u32 %v2363, 16
      %vm2369 = vc.u32 %v2361, %v2365
      %v2370 = vsel %vm2369, 1, 0
      %v2371 = vadd.s32 %v2361, %v2365
      %v2372 = vadd.s32 %v2364, %v2370
      %vm2373 = vc.u32 %v2371, %v2367
      %v2374 = vsel %vm2373, 1, 0
      %v2375 = vadd.s32 %v2371, %v2367
      %v2376 = vadd.s32 %v2372, %v2374
      %v2377 = vadd.s32 %v2376, %v2366
      %v2378 = vadd.s32 %v2377, %v2368
      %v2379 = vmul.u32 %v2334, %v2325
      %v2380 = vadd.s32 %v2356, %v2375
      %vm2381 = vc.u32 %v2356, %v2375
      %v2382 = vadd.s32 %v2378, 1
      %v2383 = vsel %vm2381, %v2382, %v2378
      %v2384 = vadd.s32 %v2379, %v2383
      %v2385 = vadd.s32 %v2384, 536870912
      %v2386 = vshrl.u32 %v2385, 30
      %v2387 = vshll.u32 %v2386, 30
      %v2388 = vsub.s32 %v2384, %v2387
      %vm2389 = vcmp.lt.s32.totalorder %v2388, 0
      %v2390 = vsub.s32 0, %v2388
      %v2391 = vsel %vm2389, %v2390, %v2388
      %v2392 = vclz %v2391
      %v2393 = vsub.s32 %v2392, 2
      %vm2394 = vcmp.gt.s32.totalorder 0, %v2393
      %v2395 = vsel %vm2394, 0, %v2393
      %v2396 = vsub.s32 32, %v2395
      %v2397 = vshll.u32 %v2388, %v2395
      %v2398 = vshrl.u32 %v2380, %v2396
      %v2399 = vor.u32 %v2397, %v2398
      %v2400 = vsub.s32 4294967266, %v2395
      %v2401 = vadd.s32 %v2400, 127
      %v2402 = vshll.u32 %v2401, 23
      %v2403 = vor.u32 4788187, %v2402
      %v2404 = vand.u32 2147483647, %v2403
      %v2406 = vcvt.s32.f32 %v2399
      %v2407 = vmul.f32 %v2406, %v2404
      %v2408 = vxor.u32 %v2407, 2147483648
      %v2409 = vsel %vm2288, %v2408, %v2407
      %v2410 = vsub.s32 4, %v2386
      %v2411 = vsel %vm2288, %v2410, %v2386
      %v2412 = vsel %vm2287, %v893, %v2409
      %v2413 = vsel %vm2287, 0, %v2411
      %v2414 = vmul.f32 %v2412, %v2412
      %v2415 = vmul.f32 %v2414, -0.001358992
      %v2416 = vadd.f32 %v2415, 0.041655596
      %v2417 = vmul.f32 %v2414, %v2416
      %v2418 = vadd.f32 %v2417, -0.4999988
      %v2419 = vmul.f32 %v2414, %v2418
      %v2420 = vadd.f32 1.0, %v2419
      %v2421 = vmul.f32 %v2412, %v2412
      %v2422 = vmul.f32 %v2421, -0.00019511016
      %v2423 = vadd.f32 %v2422, 0.008332121
      %v2424 = vmul.f32 %v2421, %v2423
      %v2425 = vadd.f32 %v2424, -0.16666654
      %v2426 = vmul.f32 %v2421, %v2425
      %v2427 = vadd.f32 %v2426, 1.0
      %v2428 = vmul.f32 %v2427, %v2412
      %vm2429 = vweird.f32 %v893
      %v2430 = vand.u32 %v2413, 3
      %vm2431 = vcmp.lt.s32.totalorder %v2430, 2
      %vm2432 = vcmp.eq.s32.totalorder %v2430, 0
      %v2433 = vxor.u32 %v2428, 2147483648
      %v2434 = vsel %vm2432, %v2420, %v2433
      %vm2435 = vcmp.eq.s32.totalorder %v2430, 2
      %v2436 = vxor.u32 %v2420, 2147483648
      %v2437 = vsel %vm2435, %v2436, %v2428
      %v2438 = vsel %vm2431, %v2434, %v2437
      %v2439 = vsel %vm2429, nan, %v2438
      %v2440 = vand.u32 2147483647, %v894
      %vm2441 = vcmp.le.f32.partialorder %v2440, 0.7853982
      %vm2442 = vcmp.lt.s32.totalorder %v894, 0
      %v2443 = vand.u32 %v894, 2139095040
      %v2444 = vshrl.u32 %v2443, 23
      %v2445 = vsub.s32 %v2444, 127
      %v2446 = vand.u32 2147483647, %v894
      %v2447 = vand.u32 %v2446, 8388607
      %v2448 = vor.u32 %v2447, 8388608
      %v2449 = vsub.s32 0, %v2448
      %v2450 = vadd.s32 %v2445, 1
      %vm2451 = vcmp.gt.s32.totalorder %v2450, 0
      %v2452 = vsel %vm2451, %v2450, 0
      %v2453 = vshrl.u32 %v2452, 5
      %v2454 = vand.u32 %v2452, 31
      %v2455 = vsub.s32 32, %v2454
      %v2456 = vshrl.u32 683565275, %v2455
      %v2457 = vshll.u32 683565275, %v2454
      %v2458 = vshrl.u32 2475754826, %v2455
      %v2459 = vor.u32 %v2457, %v2458
      %v2460 = vshll.u32 2475754826, %v2454
      %v2461 = vshrl.u32 2131351028, %v2455
      %v2462 = vor.u32 %v2460, %v2461
      %v2463 = vshll.u32 2131351028, %v2454
      %v2464 = vshrl.u32 2102212464, %v2455
      %v2465 = vor.u32 %v2463, %v2464
      %v2466 = vshll.u32 2102212464, %v2454
      %v2467 = vshrl.u32 920167782, %v2455
      %v2468 = vor.u32 %v2466, %v2467
      %v2469 = vshll.u32 920167782, %v2454
      %v2470 = vshrl.u32 1326507024, %v2455
      %v2471 = vor.u32 %v2469, %v2470
      %vm2472 = vcmp.lt.s32.totalorder %v2453, 1
      %vm2473 = vcmp.lt.s32.totalorder %v2453, 2
      %vm2474 = vcmp.lt.s32.totalorder %v2453, 3
      %vm2475 = vcmp.lt.s32.totalorder %v2453, 4
      %v2476 = vsel %vm2472, %v2456, %v2459
      %v2477 = vsel %vm2475, %v2465, 2102212464
      %v2478 = vsel %vm2474, %v2462, %v2477
      %v2479 = vsel %vm2473, %v2476, %v2478
      %v2480 = vsel %vm2472, %v2459, %v2462
      %v2481 = vsel %vm2475, %v2468, 920167782
      %v2482 = vsel %vm2474, %v2465, %v2481
      %v2483 = vsel %vm2473, %v2480, %v2482
      %v2484 = vsel %vm2472, %v2462, %v2465
      %v2485 = vsel %vm2475, %v2471, 1326507024
      %v2486 = vsel %vm2474, %v2468, %v2485
      %v2487 = vsel %vm2473, %v2484, %v2486
      %v2488 = vshll.u32 %v2448, 8
      %v2489 = vand.u32 %v2488, 65535
      %v2490 = vshrl.u32 %v2488, 16
      %v2491 = vand.u32 %v2487, 65535
      %v2492 = vshrl.u32 %v2487, 16
      %v2493 = vmul.u32 %v2489, %v2491
      %v2494 = vmul.u32 %v2489, %v2492
      %v2495 = vmul.u32 %v2490, %v2491
      %v2496 = vmul.u32 %v2490, %v2492
      %v2497 = vshll.u32 %v2494, 16
      %v2498 = vshrl.u32 %v2494, 16
      %v2499 = vshll.u32 %v2495, 16
      %v2500 = vshrl.u32 %v2495, 16
      %vm2501 = vc.u32 %v2493, %v2497
      %v2502 = vsel %vm2501, 1, 0
      %v2503 = vadd.s32 %v2493, %v2497
      %v2504 = vadd.s32 %v2496, %v2502
      %vm2505 = vc.u32 %v2503, %v2499
      %v2506 = vsel %vm2505, 1, 0
      %v2507 = vadd.s32 %v2503, %v2499
      %v2508 = vadd.s32 %v2504, %v2506
      %v2509 = vadd.s32 %v2508, %v2498
      %v2510 = vadd.s32 %v2509, %v2500
      %v2511 = vand.u32 %v2488, 65535
      %v2512 = vshrl.u32 %v2488, 16
      %v2513 = vand.u32 %v2483, 65535
      %v2514 = vshrl.u32 %v2483, 16
      %v2515 = vmul.u32 %v2511, %v2513
      %v2516 = vmul.u32 %v2511, %v2514
      %v2517 = vmul.u32 %v2512, %v2513
      %v2518 = vmul.u32 %v2512, %v2514
      %v2519 = vshll.u32 %v2516, 16
      %v2520 = vshrl.u32 %v2516, 16
      %v2521 = vshll.u32 %v2517, 16
      %v2522 = vshrl.u32 %v2517, 16
      %vm2523 = vc.u32 %v2515, %v2519
      %v2524 = vsel %vm2523, 1, 0
      %v2525 = vadd.s32 %v2515, %v2519
      %v2526 = vadd.s32 %v2518, %v2524
      %vm2527 = vc.u32 %v2525, %v2521
      %v2528 = vsel %vm2527, 1, 0
      %v2529 = vadd.s32 %v2525, %v2521
      %v2530 = vadd.s32 %v2526, %v2528
      %v2531 = vadd.s32 %v2530, %v2520
      %v2532 = vadd.s32 %v2531, %v2522
      %v2533 = vmul.u32 %v2488, %v2479
      %v2534 = vadd.s32 %v2510, %v2529
      %vm2535 = vc.u32 %v2510, %v2529
      %v2536 = vadd.s32 %v2532, 1
      %v2537 = vsel %vm2535, %v2536, %v2532
      %v2538 = vadd.s32 %v2533, %v2537
      %v2539 = vadd.s32 %v2538, 536870912
      %v2540 = vshrl.u32 %v2539, 30
      %v2541 = vshll.u32 %v2540, 30
      %v2542 = vsub.s32 %v2538, %v2541
      %vm2543 = vcmp.lt.s32.totalorder %v2542, 0
      %v2544 = vsub.s32 0, %v2542
      %v2545 = vsel %vm2543, %v2544, %v2542
      %v2546 = vclz %v2545
      %v2547 = vsub.s32 %v2546, 2
      %vm2548 = vcmp.gt.s32.totalorder 0, %v2547
      %v2549 = vsel %vm2548, 0, %v2547
      %v2550 = vsub.s32 32, %v2549
      %v2551 = vshll.u32 %v2542, %v2549
      %v2552 = vshrl.u32 %v2534, %v2550
      %v2553 = vor.u32 %v2551, %v2552
      %v2554 = vsub.s32 4294967266, %v2549
      %v2555 = vadd.s32 %v2554, 127
      %v2556 = vshll.u32 %v2555, 23
      %v2557 = vor.u32 4788187, %v2556
      %v2558 = vand.u32 2147483647, %v2557
      %v2560 = vcvt.s32.f32 %v2553
      %v2561 = vmul.f32 %v2560, %v2558
      %v2562 = vxor.u32 %v2561, 2147483648
      %v2563 = vsel %vm2442, %v2562, %v2561
      %v2564 = vsub.s32 4, %v2540
      %v2565 = vsel %vm2442, %v2564, %v2540
      %v2566 = vsel %vm2441, %v894, %v2563
      %v2567 = vsel %vm2441, 0, %v2565
      %v2568 = vmul.f32 %v2566, %v2566
      %v2569 = vmul.f32 %v2568, -0.001358992
      %v2570 = vadd.f32 %v2569, 0.041655596
      %v2571 = vmul.f32 %v2568, %v2570
      %v2572 = vadd.f32 %v2571, -0.4999988
      %v2573 = vmul.f32 %v2568, %v2572
      %v2574 = vadd.f32 1.0, %v2573
      %v2575 = vmul.f32 %v2566, %v2566
      %v2576 = vmul.f32 %v2575, -0.00019511016
      %v2577 = vadd.f32 %v2576, 0.008332121
      %v2578 = vmul.f32 %v2575, %v2577
      %v2579 = vadd.f32 %v2578, -0.16666654
      %v2580 = vmul.f32 %v2575, %v2579
      %v2581 = vadd.f32 %v2580, 1.0
      %v2582 = vmul.f32 %v2581, %v2566
      %vm2583 = vweird.f32 %v894
      %v2584 = vand.u32 %v2567, 3
      %vm2585 = vcmp.lt.s32.totalorder %v2584, 2
      %vm2586 = vcmp.eq.s32.totalorder %v2584, 0
      %v2587 = vxor.u32 %v2582, 2147483648
      %v2588 = vsel %vm2586, %v2574, %v2587
      %vm2589 = vcmp.eq.s32.totalorder %v2584, 2
      %v2590 = vxor.u32 %v2574, 2147483648
      %v2591 = vsel %vm2589, %v2590, %v2582
      %v2592 = vsel %vm2585, %v2588, %v2591
      %v2593 = vsel %vm2583, nan, %v2592
      %v2594 = vand.u32 2147483647, %v895
      %vm2595 = vcmp.le.f32.partialorder %v2594, 0.7853982
      %vm2596 = vcmp.lt.s32.totalorder %v895, 0
      %v2597 = vand.u32 %v895, 2139095040
      %v2598 = vshrl.u32 %v2597, 23
      %v2599 = vsub.s32 %v2598, 127
      %v2600 = vand.u32 2147483647, %v895
      %v2601 = vand.u32 %v2600, 8388607
      %v2602 = vor.u32 %v2601, 8388608
      %v2603 = vsub.s32 0, %v2602
      %v2604 = vadd.s32 %v2599, 1
      %vm2605 = vcmp.gt.s32.totalorder %v2604, 0
      %v2606 = vsel %vm2605, %v2604, 0
      %v2607 = vshrl.u32 %v2606, 5
      %v2608 = vand.u32 %v2606, 31
      %v2609 = vsub.s32 32, %v2608
      %v2610 = vshrl.u32 683565275, %v2609
      %v2611 = vshll.u32 683565275, %v2608
      %v2612 = vshrl.u32 2475754826, %v2609
      %v2613 = vor.u32 %v2611, %v2612
      %v2614 = vshll.u32 2475754826, %v2608
      %v2615 = vshrl.u32 2131351028, %v2609
      %v2616 = vor.u32 %v2614, %v2615
      %v2617 = vshll.u32 2131351028, %v2608
      %v2618 = vshrl.u32 2102212464, %v2609
      %v2619 = vor.u32 %v2617, %v2618
      %v2620 = vshll.u32 2102212464, %v2608
      %v2621 = vshrl.u32 920167782, %v2609
      %v2622 = vor.u32 %v2620, %v2621
      %v2623 = vshll.u32 920167782, %v2608
      %v2624 = vshrl.u32 1326507024, %v2609
      %v2625 = vor.u32 %v2623, %v2624
      %vm2626 = vcmp.lt.s32.totalorder %v2607, 1
      %vm2627 = vcmp.lt.s32.totalorder %v2607, 2
      %vm2628 = vcmp.lt.s32.totalorder %v2607, 3
      %vm2629 = vcmp.lt.s32.totalorder %v2607, 4
      %v2630 = vsel %vm2626, %v2610, %v2613
      %v2631 = vsel %vm2629, %v2619, 2102212464
      %v2632 = vsel %vm2628, %v2616, %v2631
      %v2633 = vsel %vm2627, %v2630, %v2632
      %v2634 = vsel %vm2626, %v2613, %v2616
      %v2635 = vsel %vm2629, %v2622, 920167782
      %v2636 = vsel %vm2628, %v2619, %v2635
      %v2637 = vsel %vm2627, %v2634, %v2636
      %v2638 = vsel %vm2626, %v2616, %v2619
      %v2639 = vsel %vm2629, %v2625, 1326507024
      %v2640 = vsel %vm2628, %v2622, %v2639
      %v2641 = vsel %vm2627, %v2638, %v2640
      %v2642 = vshll.u32 %v2602, 8
      %v2643 = vand.u32 %v2642, 65535
      %v2644 = vshrl.u32 %v2642, 16
      %v2645 = vand.u32 %v2641, 65535
      %v2646 = vshrl.u32 %v2641, 16
      %v2647 = vmul.u32 %v2643, %v2645
      %v2648 = vmul.u32 %v2643, %v2646
      %v2649 = vmul.u32 %v2644, %v2645
      %v2650 = vmul.u32 %v2644, %v2646
      %v2651 = vshll.u32 %v2648, 16
      %v2652 = vshrl.u32 %v2648, 16
      %v2653 = vshll.u32 %v2649, 16
      %v2654 = vshrl.u32 %v2649, 16
      %vm2655 = vc.u32 %v2647, %v2651
      %v2656 = vsel %vm2655, 1, 0
      %v2657 = vadd.s32 %v2647, %v2651
      %v2658 = vadd.s32 %v2650, %v2656
      %vm2659 = vc.u32 %v2657, %v2653
      %v2660 = vsel %vm2659, 1, 0
      %v2661 = vadd.s32 %v2657, %v2653
      %v2662 = vadd.s32 %v2658, %v2660
      %v2663 = vadd.s32 %v2662, %v2652
      %v2664 = vadd.s32 %v2663, %v2654
      %v2665 = vand.u32 %v2642, 65535
      %v2666 = vshrl.u32 %v2642, 16
      %v2667 = vand.u32 %v2637, 65535
      %v2668 = vshrl.u32 %v2637, 16
      %v2669 = vmul.u32 %v2665, %v2667
      %v2670 = vmul.u32 %v2665, %v2668
      %v2671 = vmul.u32 %v2666, %v2667
      %v2672 = vmul.u32 %v2666, %v2668
      %v2673 = vshll.u32 %v2670, 16
      %v2674 = vshrl.u32 %v2670, 16
      %v2675 = vshll.u32 %v2671, 16
      %v2676 = vshrl.u32 %v2671, 16
      %vm2677 = vc.u32 %v2669, %v2673
      %v2678 = vsel %vm2677, 1, 0
      %v2679 = vadd.s32 %v2669, %v2673
      %v2680 = vadd.s32 %v2672, %v2678
      %vm2681 = vc.u32 %v2679, %v2675
      %v2682 = vsel %vm2681, 1, 0
      %v2683 = vadd.s32 %v2679, %v2675
      %v2684 = vadd.s32 %v2680, %v2682
      %v2685 = vadd.s32 %v2684, %v2674
      %v2686 = vadd.s32 %v2685, %v2676
      %v2687 = vmul.u32 %v2642, %v2633
      %v2688 = vadd.s32 %v2664, %v2683
      %vm2689 = vc.u32 %v2664, %v2683
      %v2690 = vadd.s32 %v2686, 1
      %v2691 = vsel %vm2689, %v2690, %v2686
      %v2692 = vadd.s32 %v2687, %v2691
      %v2693 = vadd.s32 %v2692, 536870912
      %v2694 = vshrl.u32 %v2693, 30
      %v2695 = vshll.u32 %v2694, 30
      %v2696 = vsub.s32 %v2692, %v2695
      %vm2697 = vcmp.lt.s32.totalorder %v2696, 0
      %v2698 = vsub.s32 0, %v2696
      %v2699 = vsel %vm2697, %v2698, %v2696
      %v2700 = vclz %v2699
      %v2701 = vsub.s32 %v2700, 2
      %vm2702 = vcmp.gt.s32.totalorder 0, %v2701
      %v2703 = vsel %vm2702, 0, %v2701
      %v2704 = vsub.s32 32, %v2703
      %v2705 = vshll.u32 %v2696, %v2703
      %v2706 = vshrl.u32 %v2688, %v2704
      %v2707 = vor.u32 %v2705, %v2706
      %v2708 = vsub.s32 4294967266, %v2703
      %v2709 = vadd.s32 %v2708, 127
      %v2710 = vshll.u32 %v2709, 23
      %v2711 = vor.u32 4788187, %v2710
      %v2712 = vand.u32 2147483647, %v2711
      %v2714 = vcvt.s32.f32 %v2707
      %v2715 = vmul.f32 %v2714, %v2712
      %v2716 = vxor.u32 %v2715, 2147483648
      %v2717 = vsel %vm2596, %v2716, %v2715
      %v2718 = vsub.s32 4, %v2694
      %v2719 = vsel %vm2596, %v2718, %v2694
      %v2720 = vsel %vm2595, %v895, %v2717
      %v2721 = vsel %vm2595, 0, %v2719
      %v2722 = vmul.f32 %v2720, %v2720
      %v2723 = vmul.f32 %v2722, -0.001358992
      %v2724 = vadd.f32 %v2723, 0.041655596
      %v2725 = vmul.f32 %v2722, %v2724
      %v2726 = vadd.f32 %v2725, -0.4999988
      %v2727 = vmul.f32 %v2722, %v2726
      %v2728 = vadd.f32 1.0, %v2727
      %v2729 = vmul.f32 %v2720, %v2720
      %v2730 = vmul.f32 %v2729, -0.00019511016
      %v2731 = vadd.f32 %v2730, 0.008332121
      %v2732 = vmul.f32 %v2729, %v2731
      %v2733 = vadd.f32 %v2732, -0.16666654
      %v2734 = vmul.f32 %v2729, %v2733
      %v2735 = vadd.f32 %v2734, 1.0
      %v2736 = vmul.f32 %v2735, %v2720
      %vm2737 = vweird.f32 %v895
      %v2738 = vand.u32 %v2721, 3
      %vm2739 = vcmp.lt.s32.totalorder %v2738, 2
      %vm2740 = vcmp.eq.s32.totalorder %v2738, 0
      %v2741 = vxor.u32 %v2736, 2147483648
      %v2742 = vsel %vm2740, %v2728, %v2741
      %vm2743 = vcmp.eq.s32.totalorder %v2738, 2
      %v2744 = vxor.u32 %v2728, 2147483648
      %v2745 = vsel %vm2743, %v2744, %v2736
      %v2746 = vsel %vm2739, %v2742, %v2745
      %v2747 = vsel %vm2737, nan, %v2746
      %v2748 = vand.u32 2147483647, %v896
      %vm2749 = vcmp.le.f32.partialorder %v2748, 0.7853982
      %vm2750 = vcmp.lt.s32.totalorder %v896, 0
      %v2751 = vand.u32 %v896, 2139095040
      %v2752 = vshrl.u32 %v2751, 23
      %v2753 = vsub.s32 %v2752, 127
      %v2754 = vand.u32 2147483647, %v896
      %v2755 = vand.u32 %v2754, 8388607
      %v2756 = vor.u32 %v2755, 8388608
      %v2757 = vsub.s32 0, %v2756
      %v2758 = vadd.s32 %v2753, 1
      %vm2759 = vcmp.gt.s32.totalorder %v2758, 0
      %v2760 = vsel %vm2759, %v2758, 0
      %v2761 = vshrl.u32 %v2760, 5
      %v2762 = vand.u32 %v2760, 31
      %v2763 = vsub.s32 32, %v2762
      %v2764 = vshrl.u32 683565275, %v2763
      %v2765 = vshll.u32 683565275, %v2762
      %v2766 = vshrl.u32 2475754826, %v2763
      %v2767 = vor.u32 %v2765, %v2766
      %v2768 = vshll.u32 2475754826, %v2762
      %v2769 = vshrl.u32 2131351028, %v2763
      %v2770 = vor.u32 %v2768, %v2769
      %v2771 = vshll.u32 2131351028, %v2762
      %v2772 = vshrl.u32 2102212464, %v2763
      %v2773 = vor.u32 %v2771, %v2772
      %v2774 = vshll.u32 2102212464, %v2762
      %v2775 = vshrl.u32 920167782, %v2763
      %v2776 = vor.u32 %v2774, %v2775
      %v2777 = vshll.u32 920167782, %v2762
      %v2778 = vshrl.u32 1326507024, %v2763
      %v2779 = vor.u32 %v2777, %v2778
      %vm2780 = vcmp.lt.s32.totalorder %v2761, 1
      %vm2781 = vcmp.lt.s32.totalorder %v2761, 2
      %vm2782 = vcmp.lt.s32.totalorder %v2761, 3
      %vm2783 = vcmp.lt.s32.totalorder %v2761, 4
      %v2784 = vsel %vm2780, %v2764, %v2767
      %v2785 = vsel %vm2783, %v2773, 2102212464
      %v2786 = vsel %vm2782, %v2770, %v2785
      %v2787 = vsel %vm2781, %v2784, %v2786
      %v2788 = vsel %vm2780, %v2767, %v2770
      %v2789 = vsel %vm2783, %v2776, 920167782
      %v2790 = vsel %vm2782, %v2773, %v2789
      %v2791 = vsel %vm2781, %v2788, %v2790
      %v2792 = vsel %vm2780, %v2770, %v2773
      %v2793 = vsel %vm2783, %v2779, 1326507024
      %v2794 = vsel %vm2782, %v2776, %v2793
      %v2795 = vsel %vm2781, %v2792, %v2794
      %v2796 = vshll.u32 %v2756, 8
      %v2797 = vand.u32 %v2796, 65535
      %v2798 = vshrl.u32 %v2796, 16
      %v2799 = vand.u32 %v2795, 65535
      %v2800 = vshrl.u32 %v2795, 16
      %v2801 = vmul.u32 %v2797, %v2799
      %v2802 = vmul.u32 %v2797, %v2800
      %v2803 = vmul.u32 %v2798, %v2799
      %v2804 = vmul.u32 %v2798, %v2800
      %v2805 = vshll.u32 %v2802, 16
      %v2806 = vshrl.u32 %v2802, 16
      %v2807 = vshll.u32 %v2803, 16
      %v2808 = vshrl.u32 %v2803, 16
      %vm2809 = vc.u32 %v2801, %v2805
      %v2810 = vsel %vm2809, 1, 0
      %v2811 = vadd.s32 %v2801, %v2805
      %v2812 = vadd.s32 %v2804, %v2810
      %vm2813 = vc.u32 %v2811, %v2807
      %v2814 = vsel %vm2813, 1, 0
      %v2815 = vadd.s32 %v2811, %v2807
      %v2816 = vadd.s32 %v2812, %v2814
      %v2817 = vadd.s32 %v2816, %v2806
      %v2818 = vadd.s32 %v2817, %v2808
      %v2819 = vand.u32 %v2796, 65535
      %v2820 = vshrl.u32 %v2796, 16
      %v2821 = vand.u32 %v2791, 65535
      %v2822 = vshrl.u32 %v2791, 16
      %v2823 = vmul.u32 %v2819, %v2821
      %v2824 = vmul.u32 %v2819, %v2822
      %v2825 = vmul.u32 %v2820, %v2821
      %v2826 = vmul.u32 %v2820, %v2822
      %v2827 = vshll.u32 %v2824, 16
      %v2828 = vshrl.u32 %v2824, 16
      %v2829 = vshll.u32 %v2825, 16
      %v2830 = vshrl.u32 %v2825, 16
      %vm2831 = vc.u32 %v2823, %v2827
      %v2832 = vsel %vm2831, 1, 0
      %v2833 = vadd.s32 %v2823, %v2827
      %v2834 = vadd.s32 %v2826, %v2832
      %vm2835 = vc.u32 %v2833, %v2829
      %v2836 = vsel %vm2835, 1, 0
      %v2837 = vadd.s32 %v2833, %v2829
      %v2838 = vadd.s32 %v2834, %v2836
      %v2839 = vadd.s32 %v2838, %v2828
      %v2840 = vadd.s32 %v2839, %v2830
      %v2841 = vmul.u32 %v2796, %v2787
      %v2842 = vadd.s32 %v2818, %v2837
      %vm2843 = vc.u32 %v2818, %v2837
      %v2844 = vadd.s32 %v2840, 1
      %v2845 = vsel %vm2843, %v2844, %v2840
      %v2846 = vadd.s32 %v2841, %v2845
      %v2847 = vadd.s32 %v2846, 536870912
      %v2848 = vshrl.u32 %v2847, 30
      %v2849 = vshll.u32 %v2848, 30
      %v2850 = vsub.s32 %v2846, %v2849
      %vm2851 = vcmp.lt.s32.totalorder %v2850, 0
      %v2852 = vsub.s32 0, %v2850
      %v2853 = vsel %vm2851, %v2852, %v2850
      %v2854 = vclz %v2853
      %v2855 = vsub.s32 %v2854, 2
      %vm2856 = vcmp.gt.s32.totalorder 0, %v2855
      %v2857 = vsel %vm2856, 0, %v2855
      %v2858 = vsub.s32 32, %v2857
      %v2859 = vshll.u32 %v2850, %v2857
      %v2860 = vshrl.u32 %v2842, %v2858
      %v2861 = vor.u32 %v2859, %v2860
      %v2862 = vsub.s32 4294967266, %v2857
      %v2863 = vadd.s32 %v2862, 127
      %v2864 = vshll.u32 %v2863, 23
      %v2865 = vor.u32 4788187, %v2864
      %v2866 = vand.u32 2147483647, %v2865
      %v2868 = vcvt.s32.f32 %v2861
      %v2869 = vmul.f32 %v2868, %v2866
      %v2870 = vxor.u32 %v2869, 2147483648
      %v2871 = vsel %vm2750, %v2870, %v2869
      %v2872 = vsub.s32 4, %v2848
      %v2873 = vsel %vm2750, %v2872, %v2848
      %v2874 = vsel %vm2749, %v896, %v2871
      %v2875 = vsel %vm2749, 0, %v2873
      %v2876 = vmul.f32 %v2874, %v2874
      %v2877 = vmul.f32 %v2876, -0.001358992
      %v2878 = vadd.f32 %v2877, 0.041655596
      %v2879 = vmul.f32 %v2876, %v2878
      %v2880 = vadd.f32 %v2879, -0.4999988
      %v2881 = vmul.f32 %v2876, %v2880
      %v2882 = vadd.f32 1.0, %v2881
      %v2883 = vmul.f32 %v2874, %v2874
      %v2884 = vmul.f32 %v2883, -0.00019511016
      %v2885 = vadd.f32 %v2884, 0.008332121
      %v2886 = vmul.f32 %v2883, %v2885
      %v2887 = vadd.f32 %v2886, -0.16666654
      %v2888 = vmul.f32 %v2883, %v2887
      %v2889 = vadd.f32 %v2888, 1.0
      %v2890 = vmul.f32 %v2889, %v2874
      %vm2891 = vweird.f32 %v896
      %v2892 = vand.u32 %v2875, 3
      %vm2893 = vcmp.lt.s32.totalorder %v2892, 2
      %vm2894 = vcmp.eq.s32.totalorder %v2892, 0
      %v2895 = vxor.u32 %v2890, 2147483648
      %v2896 = vsel %vm2894, %v2882, %v2895
      %vm2897 = vcmp.eq.s32.totalorder %v2892, 2
      %v2898 = vxor.u32 %v2882, 2147483648
      %v2899 = vsel %vm2897, %v2898, %v2890
      %v2900 = vsel %vm2893, %v2896, %v2899
      %v2901 = vsel %vm2891, nan, %v2900
      %v2902 = vand.u32 2147483647, %v897
      %vm2903 = vcmp.le.f32.partialorder %v2902, 0.7853982
      %vm2904 = vcmp.lt.s32.totalorder %v897, 0
      %v2905 = vand.u32 %v897, 2139095040
      %v2906 = vshrl.u32 %v2905, 23
      %v2907 = vsub.s32 %v2906, 127
      %v2908 = vand.u32 2147483647, %v897
      %v2909 = vand.u32 %v2908, 8388607
      %v2910 = vor.u32 %v2909, 8388608
      %v2911 = vsub.s32 0, %v2910
      %v2912 = vadd.s32 %v2907, 1
      %vm2913 = vcmp.gt.s32.totalorder %v2912, 0
      %v2914 = vsel %vm2913, %v2912, 0
      %v2915 = vshrl.u32 %v2914, 5
      %v2916 = vand.u32 %v2914, 31
      %v2917 = vsub.s32 32, %v2916
      %v2918 = vshrl.u32 683565275, %v2917
      %v2919 = vshll.u32 683565275, %v2916
      %v2920 = vshrl.u32 2475754826, %v2917
      %v2921 = vor.u32 %v2919, %v2920
      %v2922 = vshll.u32 2475754826, %v2916
      %v2923 = vshrl.u32 2131351028, %v2917
      %v2924 = vor.u32 %v2922, %v2923
      %v2925 = vshll.u32 2131351028, %v2916
      %v2926 = vshrl.u32 2102212464, %v2917
      %v2927 = vor.u32 %v2925, %v2926
      %v2928 = vshll.u32 2102212464, %v2916
      %v2929 = vshrl.u32 920167782, %v2917
      %v2930 = vor.u32 %v2928, %v2929
      %v2931 = vshll.u32 920167782, %v2916
      %v2932 = vshrl.u32 1326507024, %v2917
      %v2933 = vor.u32 %v2931, %v2932
      %vm2934 = vcmp.lt.s32.totalorder %v2915, 1
      %vm2935 = vcmp.lt.s32.totalorder %v2915, 2
      %vm2936 = vcmp.lt.s32.totalorder %v2915, 3
      %vm2937 = vcmp.lt.s32.totalorder %v2915, 4
      %v2938 = vsel %vm2934, %v2918, %v2921
      %v2939 = vsel %vm2937, %v2927, 2102212464
      %v2940 = vsel %vm2936, %v2924, %v2939
      %v2941 = vsel %vm2935, %v2938, %v2940
      %v2942 = vsel %vm2934, %v2921, %v2924
      %v2943 = vsel %vm2937, %v2930, 920167782
      %v2944 = vsel %vm2936, %v2927, %v2943
      %v2945 = vsel %vm2935, %v2942, %v2944
      %v2946 = vsel %vm2934, %v2924, %v2927
      %v2947 = vsel %vm2937, %v2933, 1326507024
      %v2948 = vsel %vm2936, %v2930, %v2947
      %v2949 = vsel %vm2935, %v2946, %v2948
      %v2950 = vshll.u32 %v2910, 8
      %v2951 = vand.u32 %v2950, 65535
      %v2952 = vshrl.u32 %v2950, 16
      %v2953 = vand.u32 %v2949, 65535
      %v2954 = vshrl.u32 %v2949, 16
      %v2955 = vmul.u32 %v2951, %v2953
      %v2956 = vmul.u32 %v2951, %v2954
      %v2957 = vmul.u32 %v2952, %v2953
      %v2958 = vmul.u32 %v2952, %v2954
      %v2959 = vshll.u32 %v2956, 16
      %v2960 = vshrl.u32 %v2956, 16
      %v2961 = vshll.u32 %v2957, 16
      %v2962 = vshrl.u32 %v2957, 16
      %vm2963 = vc.u32 %v2955, %v2959
      %v2964 = vsel %vm2963, 1, 0
      %v2965 = vadd.s32 %v2955, %v2959
      %v2966 = vadd.s32 %v2958, %v2964
      %vm2967 = vc.u32 %v2965, %v2961
      %v2968 = vsel %vm2967, 1, 0
      %v2969 = vadd.s32 %v2965, %v2961
      %v2970 = vadd.s32 %v2966, %v2968
      %v2971 = vadd.s32 %v2970, %v2960
      %v2972 = vadd.s32 %v2971, %v2962
      %v2973 = vand.u32 %v2950, 65535
      %v2974 = vshrl.u32 %v2950, 16
      %v2975 = vand.u32 %v2945, 65535
      %v2976 = vshrl.u32 %v2945, 16
      %v2977 = vmul.u32 %v2973, %v2975
      %v2978 = vmul.u32 %v2973, %v2976
      %v2979 = vmul.u32 %v2974, %v2975
      %v2980 = vmul.u32 %v2974, %v2976
      %v2981 = vshll.u32 %v2978, 16
      %v2982 = vshrl.u32 %v2978, 16
      %v2983 = vshll.u32 %v2979, 16
      %v2984 = vshrl.u32 %v2979, 16
      %vm2985 = vc.u32 %v2977, %v2981
      %v2986 = vsel %vm2985, 1, 0
      %v2987 = vadd.s32 %v2977, %v2981
      %v2988 = vadd.s32 %v2980, %v2986
      %vm2989 = vc.u32 %v2987, %v2983
      %v2990 = vsel %vm2989, 1, 0
      %v2991 = vadd.s32 %v2987, %v2983
      %v2992 = vadd.s32 %v2988, %v2990
      %v2993 = vadd.s32 %v2992, %v2982
      %v2994 = vadd.s32 %v2993, %v2984
      %v2995 = vmul.u32 %v2950, %v2941
      %v2996 = vadd.s32 %v2972, %v2991
      %vm2997 = vc.u32 %v2972, %v2991
      %v2998 = vadd.s32 %v2994, 1
      %v2999 = vsel %vm2997, %v2998, %v2994
      %v3000 = vadd.s32 %v2995, %v2999
      %v3001 = vadd.s32 %v3000, 536870912
      %v3002 = vshrl.u32 %v3001, 30
      %v3003 = vshll.u32 %v3002, 30
      %v3004 = vsub.s32 %v3000, %v3003
      %vm3005 = vcmp.lt.s32.totalorder %v3004, 0
      %v3006 = vsub.s32 0, %v3004
      %v3007 = vsel %vm3005, %v3006, %v3004
      %v3008 = vclz %v3007
      %v3009 = vsub.s32 %v3008, 2
      %vm3010 = vcmp.gt.s32.totalorder 0, %v3009
      %v3011 = vsel %vm3010, 0, %v3009
      %v3012 = vsub.s32 32, %v3011
      %v3013 = vshll.u32 %v3004, %v3011
      %v3014 = vshrl.u32 %v2996, %v3012
      %v3015 = vor.u32 %v3013, %v3014
      %v3016 = vsub.s32 4294967266, %v3011
      %v3017 = vadd.s32 %v3016, 127
      %v3018 = vshll.u32 %v3017, 23
      %v3019 = vor.u32 4788187, %v3018
      %v3020 = vand.u32 2147483647, %v3019
      %v3022 = vcvt.s32.f32 %v3015
      %v3023 = vmul.f32 %v3022, %v3020
      %v3024 = vxor.u32 %v3023, 2147483648
      %v3025 = vsel %vm2904, %v3024, %v3023
      %v3026 = vsub.s32 4, %v3002
      %v3027 = vsel %vm2904, %v3026, %v3002
      %v3028 = vsel %vm2903, %v897, %v3025
      %v3029 = vsel %vm2903, 0, %v3027
      %v3030 = vmul.f32 %v3028, %v3028
      %v3031 = vmul.f32 %v3030, -0.001358992
      %v3032 = vadd.f32 %v3031, 0.041655596
      %v3033 = vmul.f32 %v3030, %v3032
      %v3034 = vadd.f32 %v3033, -0.4999988
      %v3035 = vmul.f32 %v3030, %v3034
      %v3036 = vadd.f32 1.0, %v3035
      %v3037 = vmul.f32 %v3028, %v3028
      %v3038 = vmul.f32 %v3037, -0.00019511016
      %v3039 = vadd.f32 %v3038, 0.008332121
      %v3040 = vmul.f32 %v3037, %v3039
      %v3041 = vadd.f32 %v3040, -0.16666654
      %v3042 = vmul.f32 %v3037, %v3041
      %v3043 = vadd.f32 %v3042, 1.0
      %v3044 = vmul.f32 %v3043, %v3028
      %vm3045 = vweird.f32 %v897
      %v3046 = vand.u32 %v3029, 3
      %vm3047 = vcmp.lt.s32.totalorder %v3046, 2
      %vm3048 = vcmp.eq.s32.totalorder %v3046, 0
      %v3049 = vxor.u32 %v3044, 2147483648
      %v3050 = vsel %vm3048, %v3036, %v3049
      %vm3051 = vcmp.eq.s32.totalorder %v3046, 2
      %v3052 = vxor.u32 %v3036, 2147483648
      %v3053 = vsel %vm3051, %v3052, %v3044
      %v3054 = vsel %vm3047, %v3050, %v3053
      %v3055 = vsel %vm3045, nan, %v3054
      %v3056 = vand.u32 2147483647, %v898
      %vm3057 = vcmp.le.f32.partialorder %v3056, 0.7853982
      %vm3058 = vcmp.lt.s32.totalorder %v898, 0
      %v3059 = vand.u32 %v898, 2139095040
      %v3060 = vshrl.u32 %v3059, 23
      %v3061 = vsub.s32 %v3060, 127
      %v3062 = vand.u32 2147483647, %v898
      %v3063 = vand.u32 %v3062, 8388607
      %v3064 = vor.u32 %v3063, 8388608
      %v3065 = vsub.s32 0, %v3064
      %v3066 = vadd.s32 %v3061, 1
      %vm3067 = vcmp.gt.s32.totalorder %v3066, 0
      %v3068 = vsel %vm3067, %v3066, 0
      %v3069 = vshrl.u32 %v3068, 5
      %v3070 = vand.u32 %v3068, 31
      %v3071 = vsub.s32 32, %v3070
      %v3072 = vshrl.u32 683565275, %v3071
      %v3073 = vshll.u32 683565275, %v3070
      %v3074 = vshrl.u32 2475754826, %v3071
      %v3075 = vor.u32 %v3073, %v3074
      %v3076 = vshll.u32 2475754826, %v3070
      %v3077 = vshrl.u32 2131351028, %v3071
      %v3078 = vor.u32 %v3076, %v3077
      %v3079 = vshll.u32 2131351028, %v3070
      %v3080 = vshrl.u32 2102212464, %v3071
      %v3081 = vor.u32 %v3079, %v3080
      %v3082 = vshll.u32 2102212464, %v3070
      %v3083 = vshrl.u32 920167782, %v3071
      %v3084 = vor.u32 %v3082, %v3083
      %v3085 = vshll.u32 920167782, %v3070
      %v3086 = vshrl.u32 1326507024, %v3071
      %v3087 = vor.u32 %v3085, %v3086
      %vm3088 = vcmp.lt.s32.totalorder %v3069, 1
      %vm3089 = vcmp.lt.s32.totalorder %v3069, 2
      %vm3090 = vcmp.lt.s32.totalorder %v3069, 3
      %vm3091 = vcmp.lt.s32.totalorder %v3069, 4
      %v3092 = vsel %vm3088, %v3072, %v3075
      %v3093 = vsel %vm3091, %v3081, 2102212464
      %v3094 = vsel %vm3090, %v3078, %v3093
      %v3095 = vsel %vm3089, %v3092, %v3094
      %v3096 = vsel %vm3088, %v3075, %v3078
      %v3097 = vsel %vm3091, %v3084, 920167782
      %v3098 = vsel %vm3090, %v3081, %v3097
      %v3099 = vsel %vm3089, %v3096, %v3098
      %v3100 = vsel %vm3088, %v3078, %v3081
      %v3101 = vsel %vm3091, %v3087, 1326507024
      %v3102 = vsel %vm3090, %v3084, %v3101
      %v3103 = vsel %vm3089, %v3100, %v3102
      %v3104 = vshll.u32 %v3064, 8
      %v3105 = vand.u32 %v3104, 65535
      %v3106 = vshrl.u32 %v3104, 16
      %v3107 = vand.u32 %v3103, 65535
      %v3108 = vshrl.u32 %v3103, 16
      %v3109 = vmul.u32 %v3105, %v3107
      %v3110 = vmul.u32 %v3105, %v3108
      %v3111 = vmul.u32 %v3106, %v3107
      %v3112 = vmul.u32 %v3106, %v3108
      %v3113 = vshll.u32 %v3110, 16
      %v3114 = vshrl.u32 %v3110, 16
      %v3115 = vshll.u32 %v3111, 16
      %v3116 = vshrl.u32 %v3111, 16
      %vm3117 = vc.u32 %v3109, %v3113
      %v3118 = vsel %vm3117, 1, 0
      %v3119 = vadd.s32 %v3109, %v3113
      %v3120 = vadd.s32 %v3112, %v3118
      %vm3121 = vc.u32 %v3119, %v3115
      %v3122 = vsel %vm3121, 1, 0
      %v3123 = vadd.s32 %v3119, %v3115
      %v3124 = vadd.s32 %v3120, %v3122
      %v3125 = vadd.s32 %v3124, %v3114
      %v3126 = vadd.s32 %v3125, %v3116
      %v3127 = vand.u32 %v3104, 65535
      %v3128 = vshrl.u32 %v3104, 16
      %v3129 = vand.u32 %v3099, 65535
      %v3130 = vshrl.u32 %v3099, 16
      %v3131 = vmul.u32 %v3127, %v3129
      %v3132 = vmul.u32 %v3127, %v3130
      %v3133 = vmul.u32 %v3128, %v3129
      %v3134 = vmul.u32 %v3128, %v3130
      %v3135 = vshll.u32 %v3132, 16
      %v3136 = vshrl.u32 %v3132, 16
      %v3137 = vshll.u32 %v3133, 16
      %v3138 = vshrl.u32 %v3133, 16
      %vm3139 = vc.u32 %v3131, %v3135
      %v3140 = vsel %vm3139, 1, 0
      %v3141 = vadd.s32 %v3131, %v3135
      %v3142 = vadd.s32 %v3134, %v3140
      %vm3143 = vc.u32 %v3141, %v3137
      %v3144 = vsel %vm3143, 1, 0
      %v3145 = vadd.s32 %v3141, %v3137
      %v3146 = vadd.s32 %v3142, %v3144
      %v3147 = vadd.s32 %v3146, %v3136
      %v3148 = vadd.s32 %v3147, %v3138
      %v3149 = vmul.u32 %v3104, %v3095
      %v3150 = vadd.s32 %v3126, %v3145
      %vm3151 = vc.u32 %v3126, %v3145
      %v3152 = vadd.s32 %v3148, 1
      %v3153 = vsel %vm3151, %v3152, %v3148
      %v3154 = vadd.s32 %v3149, %v3153
      %v3155 = vadd.s32 %v3154, 536870912
      %v3156 = vshrl.u32 %v3155, 30
      %v3157 = vshll.u32 %v3156, 30
      %v3158 = vsub.s32 %v3154, %v3157
      %vm3159 = vcmp.lt.s32.totalorder %v3158, 0
      %v3160 = vsub.s32 0, %v3158
      %v3161 = vsel %vm3159, %v3160, %v3158
      %v3162 = vclz %v3161
      %v3163 = vsub.s32 %v3162, 2
      %vm3164 = vcmp.gt.s32.totalorder 0, %v3163
      %v3165 = vsel %vm3164, 0, %v3163
      %v3166 = vsub.s32 32, %v3165
      %v3167 = vshll.u32 %v3158, %v3165
      %v3168 = vshrl.u32 %v3150, %v3166
      %v3169 = vor.u32 %v3167, %v3168
      %v3170 = vsub.s32 4294967266, %v3165
      %v3171 = vadd.s32 %v3170, 127
      %v3172 = vshll.u32 %v3171, 23
      %v3173 = vor.u32 4788187, %v3172
      %v3174 = vand.u32 2147483647, %v3173
      %v3176 = vcvt.s32.f32 %v3169
      %v3177 = vmul.f32 %v3176, %v3174
      %v3178 = vxor.u32 %v3177, 2147483648
      %v3179 = vsel %vm3058, %v3178, %v3177
      %v3180 = vsub.s32 4, %v3156
      %v3181 = vsel %vm3058, %v3180, %v3156
      %v3182 = vsel %vm3057, %v898, %v3179
      %v3183 = vsel %vm3057, 0, %v3181
      %v3184 = vmul.f32 %v3182, %v3182
      %v3185 = vmul.f32 %v3184, -0.001358992
      %v3186 = vadd.f32 %v3185, 0.041655596
      %v3187 = vmul.f32 %v3184, %v3186
      %v3188 = vadd.f32 %v3187, -0.4999988
      %v3189 = vmul.f32 %v3184, %v3188
      %v3190 = vadd.f32 1.0, %v3189
      %v3191 = vmul.f32 %v3182, %v3182
      %v3192 = vmul.f32 %v3191, -0.00019511016
      %v3193 = vadd.f32 %v3192, 0.008332121
      %v3194 = vmul.f32 %v3191, %v3193
      %v3195 = vadd.f32 %v3194, -0.16666654
      %v3196 = vmul.f32 %v3191, %v3195
      %v3197 = vadd.f32 %v3196, 1.0
      %v3198 = vmul.f32 %v3197, %v3182
      %vm3199 = vweird.f32 %v898
      %v3200 = vand.u32 %v3183, 3
      %vm3201 = vcmp.lt.s32.totalorder %v3200, 2
      %vm3202 = vcmp.eq.s32.totalorder %v3200, 0
      %v3203 = vxor.u32 %v3198, 2147483648
      %v3204 = vsel %vm3202, %v3190, %v3203
      %vm3205 = vcmp.eq.s32.totalorder %v3200, 2
      %v3206 = vxor.u32 %v3190, 2147483648
      %v3207 = vsel %vm3205, %v3206, %v3198
      %v3208 = vsel %vm3201, %v3204, %v3207
      %v3209 = vsel %vm3199, nan, %v3208
      %v3210 = vand.u32 2147483647, %v899
      %vm3211 = vcmp.le.f32.partialorder %v3210, 0.7853982
      %vm3212 = vcmp.lt.s32.totalorder %v899, 0
      %v3213 = vand.u32 %v899, 2139095040
      %v3214 = vshrl.u32 %v3213, 23
      %v3215 = vsub.s32 %v3214, 127
      %v3216 = vand.u32 2147483647, %v899
      %v3217 = vand.u32 %v3216, 8388607
      %v3218 = vor.u32 %v3217, 8388608
      %v3219 = vsub.s32 0, %v3218
      %v3220 = vadd.s32 %v3215, 1
      %vm3221 = vcmp.gt.s32.totalorder %v3220, 0
      %v3222 = vsel %vm3221, %v3220, 0
      %v3223 = vshrl.u32 %v3222, 5
      %v3224 = vand.u32 %v3222, 31
      %v3225 = vsub.s32 32, %v3224
      %v3226 = vshrl.u32 683565275, %v3225
      %v3227 = vshll.u32 683565275, %v3224
      %v3228 = vshrl.u32 2475754826, %v3225
      %v3229 = vor.u32 %v3227, %v3228
      %v3230 = vshll.u32 2475754826, %v3224
      %v3231 = vshrl.u32 2131351028, %v3225
      %v3232 = vor.u32 %v3230, %v3231
      %v3233 = vshll.u32 2131351028, %v3224
      %v3234 = vshrl.u32 2102212464, %v3225
      %v3235 = vor.u32 %v3233, %v3234
      %v3236 = vshll.u32 2102212464, %v3224
      %v3237 = vshrl.u32 920167782, %v3225
      %v3238 = vor.u32 %v3236, %v3237
      %v3239 = vshll.u32 920167782, %v3224
      %v3240 = vshrl.u32 1326507024, %v3225
      %v3241 = vor.u32 %v3239, %v3240
      %vm3242 = vcmp.lt.s32.totalorder %v3223, 1
      %vm3243 = vcmp.lt.s32.totalorder %v3223, 2
      %vm3244 = vcmp.lt.s32.totalorder %v3223, 3
      %vm3245 = vcmp.lt.s32.totalorder %v3223, 4
      %v3246 = vsel %vm3242, %v3226, %v3229
      %v3247 = vsel %vm3245, %v3235, 2102212464
      %v3248 = vsel %vm3244, %v3232, %v3247
      %v3249 = vsel %vm3243, %v3246, %v3248
      %v3250 = vsel %vm3242, %v3229, %v3232
      %v3251 = vsel %vm3245, %v3238, 920167782
      %v3252 = vsel %vm3244, %v3235, %v3251
      %v3253 = vsel %vm3243, %v3250, %v3252
      %v3254 = vsel %vm3242, %v3232, %v3235
      %v3255 = vsel %vm3245, %v3241, 1326507024
      %v3256 = vsel %vm3244, %v3238, %v3255
      %v3257 = vsel %vm3243, %v3254, %v3256
      %v3258 = vshll.u32 %v3218, 8
      %v3259 = vand.u32 %v3258, 65535
      %v3260 = vshrl.u32 %v3258, 16
      %v3261 = vand.u32 %v3257, 65535
      %v3262 = vshrl.u32 %v3257, 16
      %v3263 = vmul.u32 %v3259, %v3261
      %v3264 = vmul.u32 %v3259, %v3262
      %v3265 = vmul.u32 %v3260, %v3261
      %v3266 = vmul.u32 %v3260, %v3262
      %v3267 = vshll.u32 %v3264, 16
      %v3268 = vshrl.u32 %v3264, 16
      %v3269 = vshll.u32 %v3265, 16
      %v3270 = vshrl.u32 %v3265, 16
      %vm3271 = vc.u32 %v3263, %v3267
      %v3272 = vsel %vm3271, 1, 0
      %v3273 = vadd.s32 %v3263, %v3267
      %v3274 = vadd.s32 %v3266, %v3272
      %vm3275 = vc.u32 %v3273, %v3269
      %v3276 = vsel %vm3275, 1, 0
      %v3277 = vadd.s32 %v3273, %v3269
      %v3278 = vadd.s32 %v3274, %v3276
      %v3279 = vadd.s32 %v3278, %v3268
      %v3280 = vadd.s32 %v3279, %v3270
      %v3281 = vand.u32 %v3258, 65535
      %v3282 = vshrl.u32 %v3258, 16
      %v3283 = vand.u32 %v3253, 65535
      %v3284 = vshrl.u32 %v3253, 16
      %v3285 = vmul.u32 %v3281, %v3283
      %v3286 = vmul.u32 %v3281, %v3284
      %v3287 = vmul.u32 %v3282, %v3283
      %v3288 = vmul.u32 %v3282, %v3284
      %v3289 = vshll.u32 %v3286, 16
      %v3290 = vshrl.u32 %v3286, 16
      %v3291 = vshll.u32 %v3287, 16
      %v3292 = vshrl.u32 %v3287, 16
      %vm3293 = vc.u32 %v3285, %v3289
      %v3294 = vsel %vm3293, 1, 0
      %v3295 = vadd.s32 %v3285, %v3289
      %v3296 = vadd.s32 %v3288, %v3294
      %vm3297 = vc.u32 %v3295, %v3291
      %v3298 = vsel %vm3297, 1, 0
      %v3299 = vadd.s32 %v3295, %v3291
      %v3300 = vadd.s32 %v3296, %v3298
      %v3301 = vadd.s32 %v3300, %v3290
      %v3302 = vadd.s32 %v3301, %v3292
      %v3303 = vmul.u32 %v3258, %v3249
      %v3304 = vadd.s32 %v3280, %v3299
      %vm3305 = vc.u32 %v3280, %v3299
      %v3306 = vadd.s32 %v3302, 1
      %v3307 = vsel %vm3305, %v3306, %v3302
      %v3308 = vadd.s32 %v3303, %v3307
      %v3309 = vadd.s32 %v3308, 536870912
      %v3310 = vshrl.u32 %v3309, 30
      %v3311 = vshll.u32 %v3310, 30
      %v3312 = vsub.s32 %v3308, %v3311
      %vm3313 = vcmp.lt.s32.totalorder %v3312, 0
      %v3314 = vsub.s32 0, %v3312
      %v3315 = vsel %vm3313, %v3314, %v3312
      %v3316 = vclz %v3315
      %v3317 = vsub.s32 %v3316, 2
      %vm3318 = vcmp.gt.s32.totalorder 0, %v3317
      %v3319 = vsel %vm3318, 0, %v3317
      %v3320 = vsub.s32 32, %v3319
      %v3321 = vshll.u32 %v3312, %v3319
      %v3322 = vshrl.u32 %v3304, %v3320
      %v3323 = vor.u32 %v3321, %v3322
      %v3324 = vsub.s32 4294967266, %v3319
      %v3325 = vadd.s32 %v3324, 127
      %v3326 = vshll.u32 %v3325, 23
      %v3327 = vor.u32 4788187, %v3326
      %v3328 = vand.u32 2147483647, %v3327
      %v3330 = vcvt.s32.f32 %v3323
      %v3331 = vmul.f32 %v3330, %v3328
      %v3332 = vxor.u32 %v3331, 2147483648
      %v3333 = vsel %vm3212, %v3332, %v3331
      %v3334 = vsub.s32 4, %v3310
      %v3335 = vsel %vm3212, %v3334, %v3310
      %v3336 = vsel %vm3211, %v899, %v3333
      %v3337 = vsel %vm3211, 0, %v3335
      %v3338 = vmul.f32 %v3336, %v3336
      %v3339 = vmul.f32 %v3338, -0.001358992
      %v3340 = vadd.f32 %v3339, 0.041655596
      %v3341 = vmul.f32 %v3338, %v3340
      %v3342 = vadd.f32 %v3341, -0.4999988
      %v3343 = vmul.f32 %v3338, %v3342
      %v3344 = vadd.f32 1.0, %v3343
      %v3345 = vmul.f32 %v3336, %v3336
      %v3346 = vmul.f32 %v3345, -0.00019511016
      %v3347 = vadd.f32 %v3346, 0.008332121
      %v3348 = vmul.f32 %v3345, %v3347
      %v3349 = vadd.f32 %v3348, -0.16666654
      %v3350 = vmul.f32 %v3345, %v3349
      %v3351 = vadd.f32 %v3350, 1.0
      %v3352 = vmul.f32 %v3351, %v3336
      %vm3353 = vweird.f32 %v899
      %v3354 = vand.u32 %v3337, 3
      %vm3355 = vcmp.lt.s32.totalorder %v3354, 2
      %vm3356 = vcmp.eq.s32.totalorder %v3354, 0
      %v3357 = vxor.u32 %v3352, 2147483648
      %v3358 = vsel %vm3356, %v3344, %v3357
      %vm3359 = vcmp.eq.s32.totalorder %v3354, 2
      %v3360 = vxor.u32 %v3344, 2147483648
      %v3361 = vsel %vm3359, %v3360, %v3352
      %v3362 = vsel %vm3355, %v3358, %v3361
      %v3363 = vsel %vm3353, nan, %v3362
      %v3364 = vsel %vm849, 1, 0
      %vm3365 = vcmp.eq.s32.totalorder %v3364, 1
      %v3366 = vsel %vm3365, %v884, %v1053
      %v3367 = vsel %vm3365, %v885, %v1207
      %v3368 = vsel %vm3365, %v886, %v1361
      %v3369 = vsel %vm3365, %v887, %v1515
      %v3370 = vsel %vm3365, %v888, %v1669
      %v3371 = vsel %vm3365, %v889, %v1823
      %v3372 = vsel %vm3365, %v890, %v1977
      %v3373 = vsel %vm3365, %v891, %v2131
      %v3374 = vsel %vm3365, %v892, %v2285
      %v3375 = vsel %vm3365, %v893, %v2439
      %v3376 = vsel %vm3365, %v894, %v2593
      %v3377 = vsel %vm3365, %v895, %v2747
      %v3378 = vsel %vm3365, %v896, %v2901
      %v3379 = vsel %vm3365, %v897, %v3055
      %v3380 = vsel %vm3365, %v898, %v3209
      %v3381 = vsel %vm3365, %v899, %v3363
      %v3382 = vperm.slane %v829, 2
      %v3383 = vmul.f32 %v518, %v3382
      %v3384 = vmul.f32 %v521, %v3382
      %v3385 = vmul.f32 %v524, %v3382
      %v3386 = vmul.f32 %v527, %v3382
      %v3387 = vmul.f32 %v530, %v3382
      %v3388 = vmul.f32 %v533, %v3382
      %v3389 = vmul.f32 %v536, %v3382
      %v3390 = vmul.f32 %v539, %v3382
      %v3391 = vmul.f32 %v542, %v3382
      %v3392 = vmul.f32 %v545, %v3382
      %v3393 = vmul.f32 %v548, %v3382
      %v3394 = vmul.f32 %v551, %v3382
      %v3395 = vmul.f32 %v554, %v3382
      %v3396 = vmul.f32 %v557, %v3382
      %v3397 = vmul.f32 %v560, %v3382
      %v3398 = vmul.f32 %v563, %v3382
      %v3399 = vperm.slane %v829, 3
      %v3400 = vadd.f32 %v3383, %v3399
      %v3401 = vadd.f32 %v3384, %v3399
      %v3402 = vadd.f32 %v3385, %v3399
      %v3403 = vadd.f32 %v3386, %v3399
      %v3404 = vadd.f32 %v3387, %v3399
      %v3405 = vadd.f32 %v3388, %v3399
      %v3406 = vadd.f32 %v3389, %v3399
      %v3407 = vadd.f32 %v3390, %v3399
      %v3408 = vadd.f32 %v3391, %v3399
      %v3409 = vadd.f32 %v3392, %v3399
      %v3410 = vadd.f32 %v3393, %v3399
      %v3411 = vadd.f32 %v3394, %v3399
      %v3412 = vadd.f32 %v3395, %v3399
      %v3413 = vadd.f32 %v3396, %v3399
      %v3414 = vadd.f32 %v3397, %v3399
      %v3415 = vadd.f32 %v3398, %v3399
      %v3416 = vadd.f32 %v3400, %v3366
      %v3417 = vadd.f32 %v3401, %v3367
      %v3418 = vadd.f32 %v3402, %v3368
      %v3419 = vadd.f32 %v3403, %v3369
      %v3420 = vadd.f32 %v3404, %v3370
      %v3421 = vadd.f32 %v3405, %v3371
      %v3422 = vadd.f32 %v3406, %v3372
      %v3423 = vadd.f32 %v3407, %v3373
      %v3424 = vadd.f32 %v3408, %v3374
      %v3425 = vadd.f32 %v3409, %v3375
      %v3426 = vadd.f32 %v3410, %v3376
      %v3427 = vadd.f32 %v3411, %v3377
      %v3428 = vadd.f32 %v3412, %v3378
      %v3429 = vadd.f32 %v3413, %v3379
      %v3430 = vadd.f32 %v3414, %v3380
      %v3431 = vadd.f32 %v3415, %v3381
      %v3432 = vmax.f32 %v3416, 0.0
      %v3433 = vmax.f32 %v3417, 0.0
      %v3434 = vmax.f32 %v3418, 0.0
      %v3435 = vmax.f32 %v3419, 0.0
      %v3436 = vmax.f32 %v3420, 0.0
      %v3437 = vmax.f32 %v3421, 0.0
      %v3438 = vmax.f32 %v3422, 0.0
      %v3439 = vmax.f32 %v3423, 0.0
      %v3440 = vmax.f32 %v3424, 0.0
      %v3441 = vmax.f32 %v3425, 0.0
      %v3442 = vmax.f32 %v3426, 0.0
      %v3443 = vmax.f32 %v3427, 0.0
      %v3444 = vmax.f32 %v3428, 0.0
      %v3445 = vmax.f32 %v3429, 0.0
      %v3446 = vmax.f32 %v3430, 0.0
      %v3447 = vmax.f32 %v3431, 0.0
      %v3448 = vmul.f32 %v3432, %v3432
      %v3449 = vmul.f32 %v3433, %v3433
      %v3450 = vmul.f32 %v3434, %v3434
      %v3451 = vmul.f32 %v3435, %v3435
      %v3452 = vmul.f32 %v3436, %v3436
      %v3453 = vmul.f32 %v3437, %v3437
      %v3454 = vmul.f32 %v3438, %v3438
      %v3455 = vmul.f32 %v3439, %v3439
      %v3456 = vmul.f32 %v3440, %v3440
      %v3457 = vmul.f32 %v3441, %v3441
      %v3458 = vmul.f32 %v3442, %v3442
      %v3459 = vmul.f32 %v3443, %v3443
      %v3460 = vmul.f32 %v3444, %v3444
      %v3461 = vmul.f32 %v3445, %v3445
      %v3462 = vmul.f32 %v3446, %v3446
      %v3463 = vmul.f32 %v3447, %v3447
      %v3464 = vpack.c.bf16 %v3449, %v3448
      %v3465 = vpack.c.bf16 %v3451, %v3450
      %v3466 = vpack.c.bf16 %v3453, %v3452
      %v3467 = vpack.c.bf16 %v3455, %v3454
      %v3468 = vpack.c.bf16 %v3457, %v3456
      %v3469 = vpack.c.bf16 %v3459, %v3458
      %v3470 = vpack.c.bf16 %v3461, %v3460
      %v3471 = vpack.c.bf16 %v3463, %v3462
      %v3488 = vunpack.c.l.b16 %v830
      %v3489 = vunpack.c.l.b16 %v831
      %v3490 = vunpack.c.l.b16 %v832
      %v3491 = vunpack.c.l.b16 %v833
      %v3492 = vunpack.c.l.b16 %v834
      %v3493 = vunpack.c.l.b16 %v835
      %v3494 = vunpack.c.l.b16 %v836
      %v3495 = vunpack.c.l.b16 %v837
      %v3496 = vunpack.c.l.b16 %v838
      %v3497 = vunpack.c.l.b16 %v839
      %v3498 = vunpack.c.l.b16 %v840
      %v3499 = vunpack.c.l.b16 %v841
      %v3500 = vunpack.c.l.b16 %v842
      %v3501 = vunpack.c.l.b16 %v843
      %v3502 = vunpack.c.l.b16 %v844
      %v3503 = vunpack.c.l.b16 %v845
      %v3504 = vpack.c.b16 %v3489, %v3488
      %v3505 = vpack.c.b16 %v3491, %v3490
      %v3506 = vpack.c.b16 %v3493, %v3492
      %v3507 = vpack.c.b16 %v3495, %v3494
      %v3508 = vpack.c.b16 %v3497, %v3496
      %v3509 = vpack.c.b16 %v3499, %v3498
      %v3510 = vpack.c.b16 %v3501, %v3500
      %v3511 = vpack.c.b16 %v3503, %v3502
      %3520 = vmatpush.bf16.msra.mxu0 %v3511
      %3521 = vmatpush.bf16.msra.mxu0 %v3510
      %3522 = vmatpush.bf16.msra.mxu0 %v3509
      %3523 = vmatpush.bf16.msra.mxu0 %v3508
      %3524 = vmatpush.bf16.msra.mxu0 %v3507
      %3525 = vmatpush.bf16.msra.mxu0 %v3506
      %3526 = vmatpush.bf16.msra.mxu0 %v3505
      %3527 = vmatpush.bf16.msra.mxu0 %v3504
      %3528 = vmatmul.bf16.gmra.mxu0 %v3464
      %v3529 = vpop.f32.mrf.mxu0
      %v3530 = vadd.f32 0.0, %v3529
      %v3531 = vpop.f32.mrf.mxu0
      %v3532 = vadd.f32 0.0, %v3531
      %3533 = vmatmul.bf16.gmra.mxu0 %v3465
      %v3534 = vpop.f32.mrf.mxu0
      %v3535 = vadd.f32 0.0, %v3534
      %v3536 = vpop.f32.mrf.mxu0
      %v3537 = vadd.f32 0.0, %v3536
      %3538 = vmatmul.bf16.gmra.mxu0 %v3466
      %v3539 = vpop.f32.mrf.mxu0
      %v3540 = vadd.f32 0.0, %v3539
      %v3541 = vpop.f32.mrf.mxu0
      %v3542 = vadd.f32 0.0, %v3541
      %3543 = vmatmul.bf16.gmra.mxu0 %v3467
      %v3544 = vpop.f32.mrf.mxu0
      %v3545 = vadd.f32 0.0, %v3544
      %v3546 = vpop.f32.mrf.mxu0
      %v3547 = vadd.f32 0.0, %v3546
      %3548 = vmatmul.bf16.gmra.mxu0 %v3468
      %v3549 = vpop.f32.mrf.mxu0
      %v3550 = vadd.f32 0.0, %v3549
      %v3551 = vpop.f32.mrf.mxu0
      %v3552 = vadd.f32 0.0, %v3551
      %3553 = vmatmul.bf16.gmra.mxu0 %v3469
      %v3554 = vpop.f32.mrf.mxu0
      %v3555 = vadd.f32 0.0, %v3554
      %v3556 = vpop.f32.mrf.mxu0
      %v3557 = vadd.f32 0.0, %v3556
      %3558 = vmatmul.bf16.gmra.mxu0 %v3470
      %v3559 = vpop.f32.mrf.mxu0
      %v3560 = vadd.f32 0.0, %v3559
      %v3561 = vpop.f32.mrf.mxu0
      %v3562 = vadd.f32 0.0, %v3561
      %3563 = vmatmul.bf16.gmra.mxu0 %v3471
      %v3564 = vpop.f32.mrf.mxu0
      %v3565 = vadd.f32 0.0, %v3564
      %v3566 = vpop.f32.mrf.mxu0
      %v3567 = vadd.f32 0.0, %v3566
      %3568 = vdwg.mxu0
      %v3569 = vmax.f32 %v3530, 1e-24
      %v3570 = vmax.f32 %v3532, 1e-24
      %v3571 = vmax.f32 %v3535, 1e-24
      %v3572 = vmax.f32 %v3537, 1e-24
      %v3573 = vmax.f32 %v3540, 1e-24
      %v3574 = vmax.f32 %v3542, 1e-24
      %v3575 = vmax.f32 %v3545, 1e-24
      %v3576 = vmax.f32 %v3547, 1e-24
      %v3577 = vmax.f32 %v3550, 1e-24
      %v3578 = vmax.f32 %v3552, 1e-24
      %v3579 = vmax.f32 %v3555, 1e-24
      %v3580 = vmax.f32 %v3557, 1e-24
      %v3581 = vmax.f32 %v3560, 1e-24
      %v3582 = vmax.f32 %v3562, 1e-24
      %v3583 = vmax.f32 %v3565, 1e-24
      %v3584 = vmax.f32 %v3567, 1e-24
      %v3585 = vrsqrt.pop %v3569
      %v3586 = vmul.f32 %v3585, %v3569
      %v3587 = vmul.f32 %v3586, %v3585
      %v3588 = vmul.f32 0.5, %v3587
      %v3589 = vsub.f32 1.5, %v3588
      %v3590 = vmul.f32 %v3585, %v3589
      %vm3591 = vweird.f32 %v3569
      %vm3592 = vweird.f32 %v3585
      %vm3593 = vmor %vm3591, %vm3592
      %v3594 = vsel %vm3593, %v3585, %v3590
      %v3595 = vrsqrt.pop %v3570
      %v3596 = vmul.f32 %v3595, %v3570
      %v3597 = vmul.f32 %v3596, %v3595
      %v3598 = vmul.f32 0.5, %v3597
      %v3599 = vsub.f32 1.5, %v3598
      %v3600 = vmul.f32 %v3595, %v3599
      %vm3601 = vweird.f32 %v3570
      %vm3602 = vweird.f32 %v3595
      %vm3603 = vmor %vm3601, %vm3602
      %v3604 = vsel %vm3603, %v3595, %v3600
      %v3605 = vrsqrt.pop %v3571
      %v3606 = vmul.f32 %v3605, %v3571
      %v3607 = vmul.f32 %v3606, %v3605
      %v3608 = vmul.f32 0.5, %v3607
      %v3609 = vsub.f32 1.5, %v3608
      %v3610 = vmul.f32 %v3605, %v3609
      %vm3611 = vweird.f32 %v3571
      %vm3612 = vweird.f32 %v3605
      %vm3613 = vmor %vm3611, %vm3612
      %v3614 = vsel %vm3613, %v3605, %v3610
      %v3615 = vrsqrt.pop %v3572
      %v3616 = vmul.f32 %v3615, %v3572
      %v3617 = vmul.f32 %v3616, %v3615
      %v3618 = vmul.f32 0.5, %v3617
      %v3619 = vsub.f32 1.5, %v3618
      %v3620 = vmul.f32 %v3615, %v3619
      %vm3621 = vweird.f32 %v3572
      %vm3622 = vweird.f32 %v3615
      %vm3623 = vmor %vm3621, %vm3622
      %v3624 = vsel %vm3623, %v3615, %v3620
      %v3625 = vrsqrt.pop %v3573
      %v3626 = vmul.f32 %v3625, %v3573
      %v3627 = vmul.f32 %v3626, %v3625
      %v3628 = vmul.f32 0.5, %v3627
      %v3629 = vsub.f32 1.5, %v3628
      %v3630 = vmul.f32 %v3625, %v3629
      %vm3631 = vweird.f32 %v3573
      %vm3632 = vweird.f32 %v3625
      %vm3633 = vmor %vm3631, %vm3632
      %v3634 = vsel %vm3633, %v3625, %v3630
      %v3635 = vrsqrt.pop %v3574
      %v3636 = vmul.f32 %v3635, %v3574
      %v3637 = vmul.f32 %v3636, %v3635
      %v3638 = vmul.f32 0.5, %v3637
      %v3639 = vsub.f32 1.5, %v3638
      %v3640 = vmul.f32 %v3635, %v3639
      %vm3641 = vweird.f32 %v3574
      %vm3642 = vweird.f32 %v3635
      %vm3643 = vmor %vm3641, %vm3642
      %v3644 = vsel %vm3643, %v3635, %v3640
      %v3645 = vrsqrt.pop %v3575
      %v3646 = vmul.f32 %v3645, %v3575
      %v3647 = vmul.f32 %v3646, %v3645
      %v3648 = vmul.f32 0.5, %v3647
      %v3649 = vsub.f32 1.5, %v3648
      %v3650 = vmul.f32 %v3645, %v3649
      %vm3651 = vweird.f32 %v3575
      %vm3652 = vweird.f32 %v3645
      %vm3653 = vmor %vm3651, %vm3652
      %v3654 = vsel %vm3653, %v3645, %v3650
      %v3655 = vrsqrt.pop %v3576
      %v3656 = vmul.f32 %v3655, %v3576
      %v3657 = vmul.f32 %v3656, %v3655
      %v3658 = vmul.f32 0.5, %v3657
      %v3659 = vsub.f32 1.5, %v3658
      %v3660 = vmul.f32 %v3655, %v3659
      %vm3661 = vweird.f32 %v3576
      %vm3662 = vweird.f32 %v3655
      %vm3663 = vmor %vm3661, %vm3662
      %v3664 = vsel %vm3663, %v3655, %v3660
      %v3665 = vrsqrt.pop %v3577
      %v3666 = vmul.f32 %v3665, %v3577
      %v3667 = vmul.f32 %v3666, %v3665
      %v3668 = vmul.f32 0.5, %v3667
      %v3669 = vsub.f32 1.5, %v3668
      %v3670 = vmul.f32 %v3665, %v3669
      %vm3671 = vweird.f32 %v3577
      %vm3672 = vweird.f32 %v3665
      %vm3673 = vmor %vm3671, %vm3672
      %v3674 = vsel %vm3673, %v3665, %v3670
      %v3675 = vrsqrt.pop %v3578
      %v3676 = vmul.f32 %v3675, %v3578
      %v3677 = vmul.f32 %v3676, %v3675
      %v3678 = vmul.f32 0.5, %v3677
      %v3679 = vsub.f32 1.5, %v3678
      %v3680 = vmul.f32 %v3675, %v3679
      %vm3681 = vweird.f32 %v3578
      %vm3682 = vweird.f32 %v3675
      %vm3683 = vmor %vm3681, %vm3682
      %v3684 = vsel %vm3683, %v3675, %v3680
      %v3685 = vrsqrt.pop %v3579
      %v3686 = vmul.f32 %v3685, %v3579
      %v3687 = vmul.f32 %v3686, %v3685
      %v3688 = vmul.f32 0.5, %v3687
      %v3689 = vsub.f32 1.5, %v3688
      %v3690 = vmul.f32 %v3685, %v3689
      %vm3691 = vweird.f32 %v3579
      %vm3692 = vweird.f32 %v3685
      %vm3693 = vmor %vm3691, %vm3692
      %v3694 = vsel %vm3693, %v3685, %v3690
      %v3695 = vrsqrt.pop %v3580
      %v3696 = vmul.f32 %v3695, %v3580
      %v3697 = vmul.f32 %v3696, %v3695
      %v3698 = vmul.f32 0.5, %v3697
      %v3699 = vsub.f32 1.5, %v3698
      %v3700 = vmul.f32 %v3695, %v3699
      %vm3701 = vweird.f32 %v3580
      %vm3702 = vweird.f32 %v3695
      %vm3703 = vmor %vm3701, %vm3702
      %v3704 = vsel %vm3703, %v3695, %v3700
      %v3705 = vrsqrt.pop %v3581
      %v3706 = vmul.f32 %v3705, %v3581
      %v3707 = vmul.f32 %v3706, %v3705
      %v3708 = vmul.f32 0.5, %v3707
      %v3709 = vsub.f32 1.5, %v3708
      %v3710 = vmul.f32 %v3705, %v3709
      %vm3711 = vweird.f32 %v3581
      %vm3712 = vweird.f32 %v3705
      %vm3713 = vmor %vm3711, %vm3712
      %v3714 = vsel %vm3713, %v3705, %v3710
      %v3715 = vrsqrt.pop %v3582
      %v3716 = vmul.f32 %v3715, %v3582
      %v3717 = vmul.f32 %v3716, %v3715
      %v3718 = vmul.f32 0.5, %v3717
      %v3719 = vsub.f32 1.5, %v3718
      %v3720 = vmul.f32 %v3715, %v3719
      %vm3721 = vweird.f32 %v3582
      %vm3722 = vweird.f32 %v3715
      %vm3723 = vmor %vm3721, %vm3722
      %v3724 = vsel %vm3723, %v3715, %v3720
      %v3725 = vrsqrt.pop %v3583
      %v3726 = vmul.f32 %v3725, %v3583
      %v3727 = vmul.f32 %v3726, %v3725
      %v3728 = vmul.f32 0.5, %v3727
      %v3729 = vsub.f32 1.5, %v3728
      %v3730 = vmul.f32 %v3725, %v3729
      %vm3731 = vweird.f32 %v3583
      %vm3732 = vweird.f32 %v3725
      %vm3733 = vmor %vm3731, %vm3732
      %v3734 = vsel %vm3733, %v3725, %v3730
      %v3735 = vrsqrt.pop %v3584
      %v3736 = vmul.f32 %v3735, %v3584
      %v3737 = vmul.f32 %v3736, %v3735
      %v3738 = vmul.f32 0.5, %v3737
      %v3739 = vsub.f32 1.5, %v3738
      %v3740 = vmul.f32 %v3735, %v3739
      %vm3741 = vweird.f32 %v3584
      %vm3742 = vweird.f32 %v3735
      %vm3743 = vmor %vm3741, %vm3742
      %v3744 = vsel %vm3743, %v3735, %v3740
      %v3745 = vmul.f32 %v3432, %v3594
      %v3746 = vmul.f32 %v3433, %v3604
      %v3747 = vmul.f32 %v3434, %v3614
      %v3748 = vmul.f32 %v3435, %v3624
      %v3749 = vmul.f32 %v3436, %v3634
      %v3750 = vmul.f32 %v3437, %v3644
      %v3751 = vmul.f32 %v3438, %v3654
      %v3752 = vmul.f32 %v3439, %v3664
      %v3753 = vmul.f32 %v3440, %v3674
      %v3754 = vmul.f32 %v3441, %v3684
      %v3755 = vmul.f32 %v3442, %v3694
      %v3756 = vmul.f32 %v3443, %v3704
      %v3757 = vmul.f32 %v3444, %v3714
      %v3758 = vmul.f32 %v3445, %v3724
      %v3759 = vmul.f32 %v3446, %v3734
      %v3760 = vmul.f32 %v3447, %v3744
      %v3761 = vand.u32 2147483647, %v583
      %v3762 = vand.u32 2147483647, %v586
      %v3763 = vand.u32 2147483647, %v589
      %v3764 = vand.u32 2147483647, %v592
      %v3765 = vand.u32 2147483647, %v595
      %v3766 = vand.u32 2147483647, %v598
      %v3767 = vand.u32 2147483647, %v601
      %v3768 = vand.u32 2147483647, %v604
      %v3769 = vand.u32 2147483647, %v607
      %v3770 = vand.u32 2147483647, %v610
      %v3771 = vand.u32 2147483647, %v613
      %v3772 = vand.u32 2147483647, %v616
      %v3773 = vand.u32 2147483647, %v619
      %v3774 = vand.u32 2147483647, %v622
      %v3775 = vand.u32 2147483647, %v625
      %v3776 = vand.u32 2147483647, %v628
      %v3777 = vmul.f32 %v3761, %v866
      %v3778 = vmul.f32 %v3762, %v866
      %v3779 = vmul.f32 %v3763, %v866
      %v3780 = vmul.f32 %v3764, %v866
      %v3781 = vmul.f32 %v3765, %v866
      %v3782 = vmul.f32 %v3766, %v866
      %v3783 = vmul.f32 %v3767, %v866
      %v3784 = vmul.f32 %v3768, %v866
      %v3785 = vmul.f32 %v3769, %v866
      %v3786 = vmul.f32 %v3770, %v866
      %v3787 = vmul.f32 %v3771, %v866
      %v3788 = vmul.f32 %v3772, %v866
      %v3789 = vmul.f32 %v3773, %v866
      %v3790 = vmul.f32 %v3774, %v866
      %v3791 = vmul.f32 %v3775, %v866
      %v3792 = vmul.f32 %v3776, %v866
      %v3793 = vadd.f32 %v3777, %v883
      %v3794 = vadd.f32 %v3778, %v883
      %v3795 = vadd.f32 %v3779, %v883
      %v3796 = vadd.f32 %v3780, %v883
      %v3797 = vadd.f32 %v3781, %v883
      %v3798 = vadd.f32 %v3782, %v883
      %v3799 = vadd.f32 %v3783, %v883
      %v3800 = vadd.f32 %v3784, %v883
      %v3801 = vadd.f32 %v3785, %v883
      %v3802 = vadd.f32 %v3786, %v883
      %v3803 = vadd.f32 %v3787, %v883
      %v3804 = vadd.f32 %v3788, %v883
      %v3805 = vadd.f32 %v3789, %v883
      %v3806 = vadd.f32 %v3790, %v883
      %v3807 = vadd.f32 %v3791, %v883
      %v3808 = vadd.f32 %v3792, %v883
      %v3809 = vand.u32 2147483647, %v3793
      %vm3810 = vcmp.le.f32.partialorder %v3809, 0.7853982
      %vm3811 = vcmp.lt.s32.totalorder %v3793, 0
      %v3812 = vand.u32 %v3793, 2139095040
      %v3813 = vshrl.u32 %v3812, 23
      %v3814 = vsub.s32 %v3813, 127
      %v3815 = vand.u32 2147483647, %v3793
      %v3816 = vand.u32 %v3815, 8388607
      %v3817 = vor.u32 %v3816, 8388608
      %v3818 = vsub.s32 0, %v3817
      %v3819 = vadd.s32 %v3814, 1
      %vm3820 = vcmp.gt.s32.totalorder %v3819, 0
      %v3821 = vsel %vm3820, %v3819, 0
      %v3822 = vshrl.u32 %v3821, 5
      %v3823 = vand.u32 %v3821, 31
      %v3824 = vsub.s32 32, %v3823
      %v3825 = vshrl.u32 683565275, %v3824
      %v3826 = vshll.u32 683565275, %v3823
      %v3827 = vshrl.u32 2475754826, %v3824
      %v3828 = vor.u32 %v3826, %v3827
      %v3829 = vshll.u32 2475754826, %v3823
      %v3830 = vshrl.u32 2131351028, %v3824
      %v3831 = vor.u32 %v3829, %v3830
      %v3832 = vshll.u32 2131351028, %v3823
      %v3833 = vshrl.u32 2102212464, %v3824
      %v3834 = vor.u32 %v3832, %v3833
      %v3835 = vshll.u32 2102212464, %v3823
      %v3836 = vshrl.u32 920167782, %v3824
      %v3837 = vor.u32 %v3835, %v3836
      %v3838 = vshll.u32 920167782, %v3823
      %v3839 = vshrl.u32 1326507024, %v3824
      %v3840 = vor.u32 %v3838, %v3839
      %vm3841 = vcmp.lt.s32.totalorder %v3822, 1
      %vm3842 = vcmp.lt.s32.totalorder %v3822, 2
      %vm3843 = vcmp.lt.s32.totalorder %v3822, 3
      %vm3844 = vcmp.lt.s32.totalorder %v3822, 4
      %v3845 = vsel %vm3841, %v3825, %v3828
      %v3846 = vsel %vm3844, %v3834, 2102212464
      %v3847 = vsel %vm3843, %v3831, %v3846
      %v3848 = vsel %vm3842, %v3845, %v3847
      %v3849 = vsel %vm3841, %v3828, %v3831
      %v3850 = vsel %vm3844, %v3837, 920167782
      %v3851 = vsel %vm3843, %v3834, %v3850
      %v3852 = vsel %vm3842, %v3849, %v3851
      %v3853 = vsel %vm3841, %v3831, %v3834
      %v3854 = vsel %vm3844, %v3840, 1326507024
      %v3855 = vsel %vm3843, %v3837, %v3854
      %v3856 = vsel %vm3842, %v3853, %v3855
      %v3857 = vshll.u32 %v3817, 8
      %v3858 = vand.u32 %v3857, 65535
      %v3859 = vshrl.u32 %v3857, 16
      %v3860 = vand.u32 %v3856, 65535
      %v3861 = vshrl.u32 %v3856, 16
      %v3862 = vmul.u32 %v3858, %v3860
      %v3863 = vmul.u32 %v3858, %v3861
      %v3864 = vmul.u32 %v3859, %v3860
      %v3865 = vmul.u32 %v3859, %v3861
      %v3866 = vshll.u32 %v3863, 16
      %v3867 = vshrl.u32 %v3863, 16
      %v3868 = vshll.u32 %v3864, 16
      %v3869 = vshrl.u32 %v3864, 16
      %vm3870 = vc.u32 %v3862, %v3866
      %v3871 = vsel %vm3870, 1, 0
      %v3872 = vadd.s32 %v3862, %v3866
      %v3873 = vadd.s32 %v3865, %v3871
      %vm3874 = vc.u32 %v3872, %v3868
      %v3875 = vsel %vm3874, 1, 0
      %v3876 = vadd.s32 %v3872, %v3868
      %v3877 = vadd.s32 %v3873, %v3875
      %v3878 = vadd.s32 %v3877, %v3867
      %v3879 = vadd.s32 %v3878, %v3869
      %v3880 = vand.u32 %v3857, 65535
      %v3881 = vshrl.u32 %v3857, 16
      %v3882 = vand.u32 %v3852, 65535
      %v3883 = vshrl.u32 %v3852, 16
      %v3884 = vmul.u32 %v3880, %v3882
      %v3885 = vmul.u32 %v3880, %v3883
      %v3886 = vmul.u32 %v3881, %v3882
      %v3887 = vmul.u32 %v3881, %v3883
      %v3888 = vshll.u32 %v3885, 16
      %v3889 = vshrl.u32 %v3885, 16
      %v3890 = vshll.u32 %v3886, 16
      %v3891 = vshrl.u32 %v3886, 16
      %vm3892 = vc.u32 %v3884, %v3888
      %v3893 = vsel %vm3892, 1, 0
      %v3894 = vadd.s32 %v3884, %v3888
      %v3895 = vadd.s32 %v3887, %v3893
      %vm3896 = vc.u32 %v3894, %v3890
      %v3897 = vsel %vm3896, 1, 0
      %v3898 = vadd.s32 %v3894, %v3890
      %v3899 = vadd.s32 %v3895, %v3897
      %v3900 = vadd.s32 %v3899, %v3889
      %v3901 = vadd.s32 %v3900, %v3891
      %v3902 = vmul.u32 %v3857, %v3848
      %v3903 = vadd.s32 %v3879, %v3898
      %vm3904 = vc.u32 %v3879, %v3898
      %v3905 = vadd.s32 %v3901, 1
      %v3906 = vsel %vm3904, %v3905, %v3901
      %v3907 = vadd.s32 %v3902, %v3906
      %v3908 = vadd.s32 %v3907, 536870912
      %v3909 = vshrl.u32 %v3908, 30
      %v3910 = vshll.u32 %v3909, 30
      %v3911 = vsub.s32 %v3907, %v3910
      %vm3912 = vcmp.lt.s32.totalorder %v3911, 0
      %v3913 = vsub.s32 0, %v3911
      %v3914 = vsel %vm3912, %v3913, %v3911
      %v3915 = vclz %v3914
      %v3916 = vsub.s32 %v3915, 2
      %vm3917 = vcmp.gt.s32.totalorder 0, %v3916
      %v3918 = vsel %vm3917, 0, %v3916
      %v3919 = vsub.s32 32, %v3918
      %v3920 = vshll.u32 %v3911, %v3918
      %v3921 = vshrl.u32 %v3903, %v3919
      %v3922 = vor.u32 %v3920, %v3921
      %v3923 = vsub.s32 4294967266, %v3918
      %v3924 = vadd.s32 %v3923, 127
      %v3925 = vshll.u32 %v3924, 23
      %v3926 = vor.u32 4788187, %v3925
      %v3927 = vand.u32 2147483647, %v3926
      %v3929 = vcvt.s32.f32 %v3922
      %v3930 = vmul.f32 %v3929, %v3927
      %v3931 = vxor.u32 %v3930, 2147483648
      %v3932 = vsel %vm3811, %v3931, %v3930
      %v3933 = vsub.s32 4, %v3909
      %v3934 = vsel %vm3811, %v3933, %v3909
      %v3935 = vsel %vm3810, %v3793, %v3932
      %v3936 = vsel %vm3810, 0, %v3934
      %v3937 = vmul.f32 %v3935, %v3935
      %v3938 = vmul.f32 %v3937, -0.001358992
      %v3939 = vadd.f32 %v3938, 0.041655596
      %v3940 = vmul.f32 %v3937, %v3939
      %v3941 = vadd.f32 %v3940, -0.4999988
      %v3942 = vmul.f32 %v3937, %v3941
      %v3943 = vadd.f32 1.0, %v3942
      %v3944 = vmul.f32 %v3935, %v3935
      %v3945 = vmul.f32 %v3944, -0.00019511016
      %v3946 = vadd.f32 %v3945, 0.008332121
      %v3947 = vmul.f32 %v3944, %v3946
      %v3948 = vadd.f32 %v3947, -0.16666654
      %v3949 = vmul.f32 %v3944, %v3948
      %v3950 = vadd.f32 %v3949, 1.0
      %v3951 = vmul.f32 %v3950, %v3935
      %vm3952 = vweird.f32 %v3793
      %v3953 = vand.u32 %v3936, 3
      %vm3954 = vcmp.lt.s32.totalorder %v3953, 2
      %vm3955 = vcmp.eq.s32.totalorder %v3953, 0
      %v3956 = vxor.u32 %v3951, 2147483648
      %v3957 = vsel %vm3955, %v3943, %v3956
      %vm3958 = vcmp.eq.s32.totalorder %v3953, 2
      %v3959 = vxor.u32 %v3943, 2147483648
      %v3960 = vsel %vm3958, %v3959, %v3951
      %v3961 = vsel %vm3954, %v3957, %v3960
      %v3962 = vsel %vm3952, nan, %v3961
      %v3963 = vand.u32 2147483647, %v3794
      %vm3964 = vcmp.le.f32.partialorder %v3963, 0.7853982
      %vm3965 = vcmp.lt.s32.totalorder %v3794, 0
      %v3966 = vand.u32 %v3794, 2139095040
      %v3967 = vshrl.u32 %v3966, 23
      %v3968 = vsub.s32 %v3967, 127
      %v3969 = vand.u32 2147483647, %v3794
      %v3970 = vand.u32 %v3969, 8388607
      %v3971 = vor.u32 %v3970, 8388608
      %v3972 = vsub.s32 0, %v3971
      %v3973 = vadd.s32 %v3968, 1
      %vm3974 = vcmp.gt.s32.totalorder %v3973, 0
      %v3975 = vsel %vm3974, %v3973, 0
      %v3976 = vshrl.u32 %v3975, 5
      %v3977 = vand.u32 %v3975, 31
      %v3978 = vsub.s32 32, %v3977
      %v3979 = vshrl.u32 683565275, %v3978
      %v3980 = vshll.u32 683565275, %v3977
      %v3981 = vshrl.u32 2475754826, %v3978
      %v3982 = vor.u32 %v3980, %v3981
      %v3983 = vshll.u32 2475754826, %v3977
      %v3984 = vshrl.u32 2131351028, %v3978
      %v3985 = vor.u32 %v3983, %v3984
      %v3986 = vshll.u32 2131351028, %v3977
      %v3987 = vshrl.u32 2102212464, %v3978
      %v3988 = vor.u32 %v3986, %v3987
      %v3989 = vshll.u32 2102212464, %v3977
      %v3990 = vshrl.u32 920167782, %v3978
      %v3991 = vor.u32 %v3989, %v3990
      %v3992 = vshll.u32 920167782, %v3977
      %v3993 = vshrl.u32 1326507024, %v3978
      %v3994 = vor.u32 %v3992, %v3993
      %vm3995 = vcmp.lt.s32.totalorder %v3976, 1
      %vm3996 = vcmp.lt.s32.totalorder %v3976, 2
      %vm3997 = vcmp.lt.s32.totalorder %v3976, 3
      %vm3998 = vcmp.lt.s32.totalorder %v3976, 4
      %v3999 = vsel %vm3995, %v3979, %v3982
      %v4000 = vsel %vm3998, %v3988, 2102212464
      %v4001 = vsel %vm3997, %v3985, %v4000
      %v4002 = vsel %vm3996, %v3999, %v4001
      %v4003 = vsel %vm3995, %v3982, %v3985
      %v4004 = vsel %vm3998, %v3991, 920167782
      %v4005 = vsel %vm3997, %v3988, %v4004
      %v4006 = vsel %vm3996, %v4003, %v4005
      %v4007 = vsel %vm3995, %v3985, %v3988
      %v4008 = vsel %vm3998, %v3994, 1326507024
      %v4009 = vsel %vm3997, %v3991, %v4008
      %v4010 = vsel %vm3996, %v4007, %v4009
      %v4011 = vshll.u32 %v3971, 8
      %v4012 = vand.u32 %v4011, 65535
      %v4013 = vshrl.u32 %v4011, 16
      %v4014 = vand.u32 %v4010, 65535
      %v4015 = vshrl.u32 %v4010, 16
      %v4016 = vmul.u32 %v4012, %v4014
      %v4017 = vmul.u32 %v4012, %v4015
      %v4018 = vmul.u32 %v4013, %v4014
      %v4019 = vmul.u32 %v4013, %v4015
      %v4020 = vshll.u32 %v4017, 16
      %v4021 = vshrl.u32 %v4017, 16
      %v4022 = vshll.u32 %v4018, 16
      %v4023 = vshrl.u32 %v4018, 16
      %vm4024 = vc.u32 %v4016, %v4020
      %v4025 = vsel %vm4024, 1, 0
      %v4026 = vadd.s32 %v4016, %v4020
      %v4027 = vadd.s32 %v4019, %v4025
      %vm4028 = vc.u32 %v4026, %v4022
      %v4029 = vsel %vm4028, 1, 0
      %v4030 = vadd.s32 %v4026, %v4022
      %v4031 = vadd.s32 %v4027, %v4029
      %v4032 = vadd.s32 %v4031, %v4021
      %v4033 = vadd.s32 %v4032, %v4023
      %v4034 = vand.u32 %v4011, 65535
      %v4035 = vshrl.u32 %v4011, 16
      %v4036 = vand.u32 %v4006, 65535
      %v4037 = vshrl.u32 %v4006, 16
      %v4038 = vmul.u32 %v4034, %v4036
      %v4039 = vmul.u32 %v4034, %v4037
      %v4040 = vmul.u32 %v4035, %v4036
      %v4041 = vmul.u32 %v4035, %v4037
      %v4042 = vshll.u32 %v4039, 16
      %v4043 = vshrl.u32 %v4039, 16
      %v4044 = vshll.u32 %v4040, 16
      %v4045 = vshrl.u32 %v4040, 16
      %vm4046 = vc.u32 %v4038, %v4042
      %v4047 = vsel %vm4046, 1, 0
      %v4048 = vadd.s32 %v4038, %v4042
      %v4049 = vadd.s32 %v4041, %v4047
      %vm4050 = vc.u32 %v4048, %v4044
      %v4051 = vsel %vm4050, 1, 0
      %v4052 = vadd.s32 %v4048, %v4044
      %v4053 = vadd.s32 %v4049, %v4051
      %v4054 = vadd.s32 %v4053, %v4043
      %v4055 = vadd.s32 %v4054, %v4045
      %v4056 = vmul.u32 %v4011, %v4002
      %v4057 = vadd.s32 %v4033, %v4052
      %vm4058 = vc.u32 %v4033, %v4052
      %v4059 = vadd.s32 %v4055, 1
      %v4060 = vsel %vm4058, %v4059, %v4055
      %v4061 = vadd.s32 %v4056, %v4060
      %v4062 = vadd.s32 %v4061, 536870912
      %v4063 = vshrl.u32 %v4062, 30
      %v4064 = vshll.u32 %v4063, 30
      %v4065 = vsub.s32 %v4061, %v4064
      %vm4066 = vcmp.lt.s32.totalorder %v4065, 0
      %v4067 = vsub.s32 0, %v4065
      %v4068 = vsel %vm4066, %v4067, %v4065
      %v4069 = vclz %v4068
      %v4070 = vsub.s32 %v4069, 2
      %vm4071 = vcmp.gt.s32.totalorder 0, %v4070
      %v4072 = vsel %vm4071, 0, %v4070
      %v4073 = vsub.s32 32, %v4072
      %v4074 = vshll.u32 %v4065, %v4072
      %v4075 = vshrl.u32 %v4057, %v4073
      %v4076 = vor.u32 %v4074, %v4075
      %v4077 = vsub.s32 4294967266, %v4072
      %v4078 = vadd.s32 %v4077, 127
      %v4079 = vshll.u32 %v4078, 23
      %v4080 = vor.u32 4788187, %v4079
      %v4081 = vand.u32 2147483647, %v4080
      %v4083 = vcvt.s32.f32 %v4076
      %v4084 = vmul.f32 %v4083, %v4081
      %v4085 = vxor.u32 %v4084, 2147483648
      %v4086 = vsel %vm3965, %v4085, %v4084
      %v4087 = vsub.s32 4, %v4063
      %v4088 = vsel %vm3965, %v4087, %v4063
      %v4089 = vsel %vm3964, %v3794, %v4086
      %v4090 = vsel %vm3964, 0, %v4088
      %v4091 = vmul.f32 %v4089, %v4089
      %v4092 = vmul.f32 %v4091, -0.001358992
      %v4093 = vadd.f32 %v4092, 0.041655596
      %v4094 = vmul.f32 %v4091, %v4093
      %v4095 = vadd.f32 %v4094, -0.4999988
      %v4096 = vmul.f32 %v4091, %v4095
      %v4097 = vadd.f32 1.0, %v4096
      %v4098 = vmul.f32 %v4089, %v4089
      %v4099 = vmul.f32 %v4098, -0.00019511016
      %v4100 = vadd.f32 %v4099, 0.008332121
      %v4101 = vmul.f32 %v4098, %v4100
      %v4102 = vadd.f32 %v4101, -0.16666654
      %v4103 = vmul.f32 %v4098, %v4102
      %v4104 = vadd.f32 %v4103, 1.0
      %v4105 = vmul.f32 %v4104, %v4089
      %vm4106 = vweird.f32 %v3794
      %v4107 = vand.u32 %v4090, 3
      %vm4108 = vcmp.lt.s32.totalorder %v4107, 2
      %vm4109 = vcmp.eq.s32.totalorder %v4107, 0
      %v4110 = vxor.u32 %v4105, 2147483648
      %v4111 = vsel %vm4109, %v4097, %v4110
      %vm4112 = vcmp.eq.s32.totalorder %v4107, 2
      %v4113 = vxor.u32 %v4097, 2147483648
      %v4114 = vsel %vm4112, %v4113, %v4105
      %v4115 = vsel %vm4108, %v4111, %v4114
      %v4116 = vsel %vm4106, nan, %v4115
      %v4117 = vand.u32 2147483647, %v3795
      %vm4118 = vcmp.le.f32.partialorder %v4117, 0.7853982
      %vm4119 = vcmp.lt.s32.totalorder %v3795, 0
      %v4120 = vand.u32 %v3795, 2139095040
      %v4121 = vshrl.u32 %v4120, 23
      %v4122 = vsub.s32 %v4121, 127
      %v4123 = vand.u32 2147483647, %v3795
      %v4124 = vand.u32 %v4123, 8388607
      %v4125 = vor.u32 %v4124, 8388608
      %v4126 = vsub.s32 0, %v4125
      %v4127 = vadd.s32 %v4122, 1
      %vm4128 = vcmp.gt.s32.totalorder %v4127, 0
      %v4129 = vsel %vm4128, %v4127, 0
      %v4130 = vshrl.u32 %v4129, 5
      %v4131 = vand.u32 %v4129, 31
      %v4132 = vsub.s32 32, %v4131
      %v4133 = vshrl.u32 683565275, %v4132
      %v4134 = vshll.u32 683565275, %v4131
      %v4135 = vshrl.u32 2475754826, %v4132
      %v4136 = vor.u32 %v4134, %v4135
      %v4137 = vshll.u32 2475754826, %v4131
      %v4138 = vshrl.u32 2131351028, %v4132
      %v4139 = vor.u32 %v4137, %v4138
      %v4140 = vshll.u32 2131351028, %v4131
      %v4141 = vshrl.u32 2102212464, %v4132
      %v4142 = vor.u32 %v4140, %v4141
      %v4143 = vshll.u32 2102212464, %v4131
      %v4144 = vshrl.u32 920167782, %v4132
      %v4145 = vor.u32 %v4143, %v4144
      %v4146 = vshll.u32 920167782, %v4131
      %v4147 = vshrl.u32 1326507024, %v4132
      %v4148 = vor.u32 %v4146, %v4147
      %vm4149 = vcmp.lt.s32.totalorder %v4130, 1
      %vm4150 = vcmp.lt.s32.totalorder %v4130, 2
      %vm4151 = vcmp.lt.s32.totalorder %v4130, 3
      %vm4152 = vcmp.lt.s32.totalorder %v4130, 4
      %v4153 = vsel %vm4149, %v4133, %v4136
      %v4154 = vsel %vm4152, %v4142, 2102212464
      %v4155 = vsel %vm4151, %v4139, %v4154
      %v4156 = vsel %vm4150, %v4153, %v4155
      %v4157 = vsel %vm4149, %v4136, %v4139
      %v4158 = vsel %vm4152, %v4145, 920167782
      %v4159 = vsel %vm4151, %v4142, %v4158
      %v4160 = vsel %vm4150, %v4157, %v4159
      %v4161 = vsel %vm4149, %v4139, %v4142
      %v4162 = vsel %vm4152, %v4148, 1326507024
      %v4163 = vsel %vm4151, %v4145, %v4162
      %v4164 = vsel %vm4150, %v4161, %v4163
      %v4165 = vshll.u32 %v4125, 8
      %v4166 = vand.u32 %v4165, 65535
      %v4167 = vshrl.u32 %v4165, 16
      %v4168 = vand.u32 %v4164, 65535
      %v4169 = vshrl.u32 %v4164, 16
      %v4170 = vmul.u32 %v4166, %v4168
      %v4171 = vmul.u32 %v4166, %v4169
      %v4172 = vmul.u32 %v4167, %v4168
      %v4173 = vmul.u32 %v4167, %v4169
      %v4174 = vshll.u32 %v4171, 16
      %v4175 = vshrl.u32 %v4171, 16
      %v4176 = vshll.u32 %v4172, 16
      %v4177 = vshrl.u32 %v4172, 16
      %vm4178 = vc.u32 %v4170, %v4174
      %v4179 = vsel %vm4178, 1, 0
      %v4180 = vadd.s32 %v4170, %v4174
      %v4181 = vadd.s32 %v4173, %v4179
      %vm4182 = vc.u32 %v4180, %v4176
      %v4183 = vsel %vm4182, 1, 0
      %v4184 = vadd.s32 %v4180, %v4176
      %v4185 = vadd.s32 %v4181, %v4183
      %v4186 = vadd.s32 %v4185, %v4175
      %v4187 = vadd.s32 %v4186, %v4177
      %v4188 = vand.u32 %v4165, 65535
      %v4189 = vshrl.u32 %v4165, 16
      %v4190 = vand.u32 %v4160, 65535
      %v4191 = vshrl.u32 %v4160, 16
      %v4192 = vmul.u32 %v4188, %v4190
      %v4193 = vmul.u32 %v4188, %v4191
      %v4194 = vmul.u32 %v4189, %v4190
      %v4195 = vmul.u32 %v4189, %v4191
      %v4196 = vshll.u32 %v4193, 16
      %v4197 = vshrl.u32 %v4193, 16
      %v4198 = vshll.u32 %v4194, 16
      %v4199 = vshrl.u32 %v4194, 16
      %vm4200 = vc.u32 %v4192, %v4196
      %v4201 = vsel %vm4200, 1, 0
      %v4202 = vadd.s32 %v4192, %v4196
      %v4203 = vadd.s32 %v4195, %v4201
      %vm4204 = vc.u32 %v4202, %v4198
      %v4205 = vsel %vm4204, 1, 0
      %v4206 = vadd.s32 %v4202, %v4198
      %v4207 = vadd.s32 %v4203, %v4205
      %v4208 = vadd.s32 %v4207, %v4197
      %v4209 = vadd.s32 %v4208, %v4199
      %v4210 = vmul.u32 %v4165, %v4156
      %v4211 = vadd.s32 %v4187, %v4206
      %vm4212 = vc.u32 %v4187, %v4206
      %v4213 = vadd.s32 %v4209, 1
      %v4214 = vsel %vm4212, %v4213, %v4209
      %v4215 = vadd.s32 %v4210, %v4214
      %v4216 = vadd.s32 %v4215, 536870912
      %v4217 = vshrl.u32 %v4216, 30
      %v4218 = vshll.u32 %v4217, 30
      %v4219 = vsub.s32 %v4215, %v4218
      %vm4220 = vcmp.lt.s32.totalorder %v4219, 0
      %v4221 = vsub.s32 0, %v4219
      %v4222 = vsel %vm4220, %v4221, %v4219
      %v4223 = vclz %v4222
      %v4224 = vsub.s32 %v4223, 2
      %vm4225 = vcmp.gt.s32.totalorder 0, %v4224
      %v4226 = vsel %vm4225, 0, %v4224
      %v4227 = vsub.s32 32, %v4226
      %v4228 = vshll.u32 %v4219, %v4226
      %v4229 = vshrl.u32 %v4211, %v4227
      %v4230 = vor.u32 %v4228, %v4229
      %v4231 = vsub.s32 4294967266, %v4226
      %v4232 = vadd.s32 %v4231, 127
      %v4233 = vshll.u32 %v4232, 23
      %v4234 = vor.u32 4788187, %v4233
      %v4235 = vand.u32 2147483647, %v4234
      %v4237 = vcvt.s32.f32 %v4230
      %v4238 = vmul.f32 %v4237, %v4235
      %v4239 = vxor.u32 %v4238, 2147483648
      %v4240 = vsel %vm4119, %v4239, %v4238
      %v4241 = vsub.s32 4, %v4217
      %v4242 = vsel %vm4119, %v4241, %v4217
      %v4243 = vsel %vm4118, %v3795, %v4240
      %v4244 = vsel %vm4118, 0, %v4242
      %v4245 = vmul.f32 %v4243, %v4243
      %v4246 = vmul.f32 %v4245, -0.001358992
      %v4247 = vadd.f32 %v4246, 0.041655596
      %v4248 = vmul.f32 %v4245, %v4247
      %v4249 = vadd.f32 %v4248, -0.4999988
      %v4250 = vmul.f32 %v4245, %v4249
      %v4251 = vadd.f32 1.0, %v4250
      %v4252 = vmul.f32 %v4243, %v4243
      %v4253 = vmul.f32 %v4252, -0.00019511016
      %v4254 = vadd.f32 %v4253, 0.008332121
      %v4255 = vmul.f32 %v4252, %v4254
      %v4256 = vadd.f32 %v4255, -0.16666654
      %v4257 = vmul.f32 %v4252, %v4256
      %v4258 = vadd.f32 %v4257, 1.0
      %v4259 = vmul.f32 %v4258, %v4243
      %vm4260 = vweird.f32 %v3795
      %v4261 = vand.u32 %v4244, 3
      %vm4262 = vcmp.lt.s32.totalorder %v4261, 2
      %vm4263 = vcmp.eq.s32.totalorder %v4261, 0
      %v4264 = vxor.u32 %v4259, 2147483648
      %v4265 = vsel %vm4263, %v4251, %v4264
      %vm4266 = vcmp.eq.s32.totalorder %v4261, 2
      %v4267 = vxor.u32 %v4251, 2147483648
      %v4268 = vsel %vm4266, %v4267, %v4259
      %v4269 = vsel %vm4262, %v4265, %v4268
      %v4270 = vsel %vm4260, nan, %v4269
      %v4271 = vand.u32 2147483647, %v3796
      %vm4272 = vcmp.le.f32.partialorder %v4271, 0.7853982
      %vm4273 = vcmp.lt.s32.totalorder %v3796, 0
      %v4274 = vand.u32 %v3796, 2139095040
      %v4275 = vshrl.u32 %v4274, 23
      %v4276 = vsub.s32 %v4275, 127
      %v4277 = vand.u32 2147483647, %v3796
      %v4278 = vand.u32 %v4277, 8388607
      %v4279 = vor.u32 %v4278, 8388608
      %v4280 = vsub.s32 0, %v4279
      %v4281 = vadd.s32 %v4276, 1
      %vm4282 = vcmp.gt.s32.totalorder %v4281, 0
      %v4283 = vsel %vm4282, %v4281, 0
      %v4284 = vshrl.u32 %v4283, 5
      %v4285 = vand.u32 %v4283, 31
      %v4286 = vsub.s32 32, %v4285
      %v4287 = vshrl.u32 683565275, %v4286
      %v4288 = vshll.u32 683565275, %v4285
      %v4289 = vshrl.u32 2475754826, %v4286
      %v4290 = vor.u32 %v4288, %v4289
      %v4291 = vshll.u32 2475754826, %v4285
      %v4292 = vshrl.u32 2131351028, %v4286
      %v4293 = vor.u32 %v4291, %v4292
      %v4294 = vshll.u32 2131351028, %v4285
      %v4295 = vshrl.u32 2102212464, %v4286
      %v4296 = vor.u32 %v4294, %v4295
      %v4297 = vshll.u32 2102212464, %v4285
      %v4298 = vshrl.u32 920167782, %v4286
      %v4299 = vor.u32 %v4297, %v4298
      %v4300 = vshll.u32 920167782, %v4285
      %v4301 = vshrl.u32 1326507024, %v4286
      %v4302 = vor.u32 %v4300, %v4301
      %vm4303 = vcmp.lt.s32.totalorder %v4284, 1
      %vm4304 = vcmp.lt.s32.totalorder %v4284, 2
      %vm4305 = vcmp.lt.s32.totalorder %v4284, 3
      %vm4306 = vcmp.lt.s32.totalorder %v4284, 4
      %v4307 = vsel %vm4303, %v4287, %v4290
      %v4308 = vsel %vm4306, %v4296, 2102212464
      %v4309 = vsel %vm4305, %v4293, %v4308
      %v4310 = vsel %vm4304, %v4307, %v4309
      %v4311 = vsel %vm4303, %v4290, %v4293
      %v4312 = vsel %vm4306, %v4299, 920167782
      %v4313 = vsel %vm4305, %v4296, %v4312
      %v4314 = vsel %vm4304, %v4311, %v4313
      %v4315 = vsel %vm4303, %v4293, %v4296
      %v4316 = vsel %vm4306, %v4302, 1326507024
      %v4317 = vsel %vm4305, %v4299, %v4316
      %v4318 = vsel %vm4304, %v4315, %v4317
      %v4319 = vshll.u32 %v4279, 8
      %v4320 = vand.u32 %v4319, 65535
      %v4321 = vshrl.u32 %v4319, 16
      %v4322 = vand.u32 %v4318, 65535
      %v4323 = vshrl.u32 %v4318, 16
      %v4324 = vmul.u32 %v4320, %v4322
      %v4325 = vmul.u32 %v4320, %v4323
      %v4326 = vmul.u32 %v4321, %v4322
      %v4327 = vmul.u32 %v4321, %v4323
      %v4328 = vshll.u32 %v4325, 16
      %v4329 = vshrl.u32 %v4325, 16
      %v4330 = vshll.u32 %v4326, 16
      %v4331 = vshrl.u32 %v4326, 16
      %vm4332 = vc.u32 %v4324, %v4328
      %v4333 = vsel %vm4332, 1, 0
      %v4334 = vadd.s32 %v4324, %v4328
      %v4335 = vadd.s32 %v4327, %v4333
      %vm4336 = vc.u32 %v4334, %v4330
      %v4337 = vsel %vm4336, 1, 0
      %v4338 = vadd.s32 %v4334, %v4330
      %v4339 = vadd.s32 %v4335, %v4337
      %v4340 = vadd.s32 %v4339, %v4329
      %v4341 = vadd.s32 %v4340, %v4331
      %v4342 = vand.u32 %v4319, 65535
      %v4343 = vshrl.u32 %v4319, 16
      %v4344 = vand.u32 %v4314, 65535
      %v4345 = vshrl.u32 %v4314, 16
      %v4346 = vmul.u32 %v4342, %v4344
      %v4347 = vmul.u32 %v4342, %v4345
      %v4348 = vmul.u32 %v4343, %v4344
      %v4349 = vmul.u32 %v4343, %v4345
      %v4350 = vshll.u32 %v4347, 16
      %v4351 = vshrl.u32 %v4347, 16
      %v4352 = vshll.u32 %v4348, 16
      %v4353 = vshrl.u32 %v4348, 16
      %vm4354 = vc.u32 %v4346, %v4350
      %v4355 = vsel %vm4354, 1, 0
      %v4356 = vadd.s32 %v4346, %v4350
      %v4357 = vadd.s32 %v4349, %v4355
      %vm4358 = vc.u32 %v4356, %v4352
      %v4359 = vsel %vm4358, 1, 0
      %v4360 = vadd.s32 %v4356, %v4352
      %v4361 = vadd.s32 %v4357, %v4359
      %v4362 = vadd.s32 %v4361, %v4351
      %v4363 = vadd.s32 %v4362, %v4353
      %v4364 = vmul.u32 %v4319, %v4310
      %v4365 = vadd.s32 %v4341, %v4360
      %vm4366 = vc.u32 %v4341, %v4360
      %v4367 = vadd.s32 %v4363, 1
      %v4368 = vsel %vm4366, %v4367, %v4363
      %v4369 = vadd.s32 %v4364, %v4368
      %v4370 = vadd.s32 %v4369, 536870912
      %v4371 = vshrl.u32 %v4370, 30
      %v4372 = vshll.u32 %v4371, 30
      %v4373 = vsub.s32 %v4369, %v4372
      %vm4374 = vcmp.lt.s32.totalorder %v4373, 0
      %v4375 = vsub.s32 0, %v4373
      %v4376 = vsel %vm4374, %v4375, %v4373
      %v4377 = vclz %v4376
      %v4378 = vsub.s32 %v4377, 2
      %vm4379 = vcmp.gt.s32.totalorder 0, %v4378
      %v4380 = vsel %vm4379, 0, %v4378
      %v4381 = vsub.s32 32, %v4380
      %v4382 = vshll.u32 %v4373, %v4380
      %v4383 = vshrl.u32 %v4365, %v4381
      %v4384 = vor.u32 %v4382, %v4383
      %v4385 = vsub.s32 4294967266, %v4380
      %v4386 = vadd.s32 %v4385, 127
      %v4387 = vshll.u32 %v4386, 23
      %v4388 = vor.u32 4788187, %v4387
      %v4389 = vand.u32 2147483647, %v4388
      %v4391 = vcvt.s32.f32 %v4384
      %v4392 = vmul.f32 %v4391, %v4389
      %v4393 = vxor.u32 %v4392, 2147483648
      %v4394 = vsel %vm4273, %v4393, %v4392
      %v4395 = vsub.s32 4, %v4371
      %v4396 = vsel %vm4273, %v4395, %v4371
      %v4397 = vsel %vm4272, %v3796, %v4394
      %v4398 = vsel %vm4272, 0, %v4396
      %v4399 = vmul.f32 %v4397, %v4397
      %v4400 = vmul.f32 %v4399, -0.001358992
      %v4401 = vadd.f32 %v4400, 0.041655596
      %v4402 = vmul.f32 %v4399, %v4401
      %v4403 = vadd.f32 %v4402, -0.4999988
      %v4404 = vmul.f32 %v4399, %v4403
      %v4405 = vadd.f32 1.0, %v4404
      %v4406 = vmul.f32 %v4397, %v4397
      %v4407 = vmul.f32 %v4406, -0.00019511016
      %v4408 = vadd.f32 %v4407, 0.008332121
      %v4409 = vmul.f32 %v4406, %v4408
      %v4410 = vadd.f32 %v4409, -0.16666654
      %v4411 = vmul.f32 %v4406, %v4410
      %v4412 = vadd.f32 %v4411, 1.0
      %v4413 = vmul.f32 %v4412, %v4397
      %vm4414 = vweird.f32 %v3796
      %v4415 = vand.u32 %v4398, 3
      %vm4416 = vcmp.lt.s32.totalorder %v4415, 2
      %vm4417 = vcmp.eq.s32.totalorder %v4415, 0
      %v4418 = vxor.u32 %v4413, 2147483648
      %v4419 = vsel %vm4417, %v4405, %v4418
      %vm4420 = vcmp.eq.s32.totalorder %v4415, 2
      %v4421 = vxor.u32 %v4405, 2147483648
      %v4422 = vsel %vm4420, %v4421, %v4413
      %v4423 = vsel %vm4416, %v4419, %v4422
      %v4424 = vsel %vm4414, nan, %v4423
      %v4425 = vand.u32 2147483647, %v3797
      %vm4426 = vcmp.le.f32.partialorder %v4425, 0.7853982
      %vm4427 = vcmp.lt.s32.totalorder %v3797, 0
      %v4428 = vand.u32 %v3797, 2139095040
      %v4429 = vshrl.u32 %v4428, 23
      %v4430 = vsub.s32 %v4429, 127
      %v4431 = vand.u32 2147483647, %v3797
      %v4432 = vand.u32 %v4431, 8388607
      %v4433 = vor.u32 %v4432, 8388608
      %v4434 = vsub.s32 0, %v4433
      %v4435 = vadd.s32 %v4430, 1
      %vm4436 = vcmp.gt.s32.totalorder %v4435, 0
      %v4437 = vsel %vm4436, %v4435, 0
      %v4438 = vshrl.u32 %v4437, 5
      %v4439 = vand.u32 %v4437, 31
      %v4440 = vsub.s32 32, %v4439
      %v4441 = vshrl.u32 683565275, %v4440
      %v4442 = vshll.u32 683565275, %v4439
      %v4443 = vshrl.u32 2475754826, %v4440
      %v4444 = vor.u32 %v4442, %v4443
      %v4445 = vshll.u32 2475754826, %v4439
      %v4446 = vshrl.u32 2131351028, %v4440
      %v4447 = vor.u32 %v4445, %v4446
      %v4448 = vshll.u32 2131351028, %v4439
      %v4449 = vshrl.u32 2102212464, %v4440
      %v4450 = vor.u32 %v4448, %v4449
      %v4451 = vshll.u32 2102212464, %v4439
      %v4452 = vshrl.u32 920167782, %v4440
      %v4453 = vor.u32 %v4451, %v4452
      %v4454 = vshll.u32 920167782, %v4439
      %v4455 = vshrl.u32 1326507024, %v4440
      %v4456 = vor.u32 %v4454, %v4455
      %vm4457 = vcmp.lt.s32.totalorder %v4438, 1
      %vm4458 = vcmp.lt.s32.totalorder %v4438, 2
      %vm4459 = vcmp.lt.s32.totalorder %v4438, 3
      %vm4460 = vcmp.lt.s32.totalorder %v4438, 4
      %v4461 = vsel %vm4457, %v4441, %v4444
      %v4462 = vsel %vm4460, %v4450, 2102212464
      %v4463 = vsel %vm4459, %v4447, %v4462
      %v4464 = vsel %vm4458, %v4461, %v4463
      %v4465 = vsel %vm4457, %v4444, %v4447
      %v4466 = vsel %vm4460, %v4453, 920167782
      %v4467 = vsel %vm4459, %v4450, %v4466
      %v4468 = vsel %vm4458, %v4465, %v4467
      %v4469 = vsel %vm4457, %v4447, %v4450
      %v4470 = vsel %vm4460, %v4456, 1326507024
      %v4471 = vsel %vm4459, %v4453, %v4470
      %v4472 = vsel %vm4458, %v4469, %v4471
      %v4473 = vshll.u32 %v4433, 8
      %v4474 = vand.u32 %v4473, 65535
      %v4475 = vshrl.u32 %v4473, 16
      %v4476 = vand.u32 %v4472, 65535
      %v4477 = vshrl.u32 %v4472, 16
      %v4478 = vmul.u32 %v4474, %v4476
      %v4479 = vmul.u32 %v4474, %v4477
      %v4480 = vmul.u32 %v4475, %v4476
      %v4481 = vmul.u32 %v4475, %v4477
      %v4482 = vshll.u32 %v4479, 16
      %v4483 = vshrl.u32 %v4479, 16
      %v4484 = vshll.u32 %v4480, 16
      %v4485 = vshrl.u32 %v4480, 16
      %vm4486 = vc.u32 %v4478, %v4482
      %v4487 = vsel %vm4486, 1, 0
      %v4488 = vadd.s32 %v4478, %v4482
      %v4489 = vadd.s32 %v4481, %v4487
      %vm4490 = vc.u32 %v4488, %v4484
      %v4491 = vsel %vm4490, 1, 0
      %v4492 = vadd.s32 %v4488, %v4484
      %v4493 = vadd.s32 %v4489, %v4491
      %v4494 = vadd.s32 %v4493, %v4483
      %v4495 = vadd.s32 %v4494, %v4485
      %v4496 = vand.u32 %v4473, 65535
      %v4497 = vshrl.u32 %v4473, 16
      %v4498 = vand.u32 %v4468, 65535
      %v4499 = vshrl.u32 %v4468, 16
      %v4500 = vmul.u32 %v4496, %v4498
      %v4501 = vmul.u32 %v4496, %v4499
      %v4502 = vmul.u32 %v4497, %v4498
      %v4503 = vmul.u32 %v4497, %v4499
      %v4504 = vshll.u32 %v4501, 16
      %v4505 = vshrl.u32 %v4501, 16
      %v4506 = vshll.u32 %v4502, 16
      %v4507 = vshrl.u32 %v4502, 16
      %vm4508 = vc.u32 %v4500, %v4504
      %v4509 = vsel %vm4508, 1, 0
      %v4510 = vadd.s32 %v4500, %v4504
      %v4511 = vadd.s32 %v4503, %v4509
      %vm4512 = vc.u32 %v4510, %v4506
      %v4513 = vsel %vm4512, 1, 0
      %v4514 = vadd.s32 %v4510, %v4506
      %v4515 = vadd.s32 %v4511, %v4513
      %v4516 = vadd.s32 %v4515, %v4505
      %v4517 = vadd.s32 %v4516, %v4507
      %v4518 = vmul.u32 %v4473, %v4464
      %v4519 = vadd.s32 %v4495, %v4514
      %vm4520 = vc.u32 %v4495, %v4514
      %v4521 = vadd.s32 %v4517, 1
      %v4522 = vsel %vm4520, %v4521, %v4517
      %v4523 = vadd.s32 %v4518, %v4522
      %v4524 = vadd.s32 %v4523, 536870912
      %v4525 = vshrl.u32 %v4524, 30
      %v4526 = vshll.u32 %v4525, 30
      %v4527 = vsub.s32 %v4523, %v4526
      %vm4528 = vcmp.lt.s32.totalorder %v4527, 0
      %v4529 = vsub.s32 0, %v4527
      %v4530 = vsel %vm4528, %v4529, %v4527
      %v4531 = vclz %v4530
      %v4532 = vsub.s32 %v4531, 2
      %vm4533 = vcmp.gt.s32.totalorder 0, %v4532
      %v4534 = vsel %vm4533, 0, %v4532
      %v4535 = vsub.s32 32, %v4534
      %v4536 = vshll.u32 %v4527, %v4534
      %v4537 = vshrl.u32 %v4519, %v4535
      %v4538 = vor.u32 %v4536, %v4537
      %v4539 = vsub.s32 4294967266, %v4534
      %v4540 = vadd.s32 %v4539, 127
      %v4541 = vshll.u32 %v4540, 23
      %v4542 = vor.u32 4788187, %v4541
      %v4543 = vand.u32 2147483647, %v4542
      %v4545 = vcvt.s32.f32 %v4538
      %v4546 = vmul.f32 %v4545, %v4543
      %v4547 = vxor.u32 %v4546, 2147483648
      %v4548 = vsel %vm4427, %v4547, %v4546
      %v4549 = vsub.s32 4, %v4525
      %v4550 = vsel %vm4427, %v4549, %v4525
      %v4551 = vsel %vm4426, %v3797, %v4548
      %v4552 = vsel %vm4426, 0, %v4550
      %v4553 = vmul.f32 %v4551, %v4551
      %v4554 = vmul.f32 %v4553, -0.001358992
      %v4555 = vadd.f32 %v4554, 0.041655596
      %v4556 = vmul.f32 %v4553, %v4555
      %v4557 = vadd.f32 %v4556, -0.4999988
      %v4558 = vmul.f32 %v4553, %v4557
      %v4559 = vadd.f32 1.0, %v4558
      %v4560 = vmul.f32 %v4551, %v4551
      %v4561 = vmul.f32 %v4560, -0.00019511016
      %v4562 = vadd.f32 %v4561, 0.008332121
      %v4563 = vmul.f32 %v4560, %v4562
      %v4564 = vadd.f32 %v4563, -0.16666654
      %v4565 = vmul.f32 %v4560, %v4564
      %v4566 = vadd.f32 %v4565, 1.0
      %v4567 = vmul.f32 %v4566, %v4551
      %vm4568 = vweird.f32 %v3797
      %v4569 = vand.u32 %v4552, 3
      %vm4570 = vcmp.lt.s32.totalorder %v4569, 2
      %vm4571 = vcmp.eq.s32.totalorder %v4569, 0
      %v4572 = vxor.u32 %v4567, 2147483648
      %v4573 = vsel %vm4571, %v4559, %v4572
      %vm4574 = vcmp.eq.s32.totalorder %v4569, 2
      %v4575 = vxor.u32 %v4559, 2147483648
      %v4576 = vsel %vm4574, %v4575, %v4567
      %v4577 = vsel %vm4570, %v4573, %v4576
      %v4578 = vsel %vm4568, nan, %v4577
      %v4579 = vand.u32 2147483647, %v3798
      %vm4580 = vcmp.le.f32.partialorder %v4579, 0.7853982
      %vm4581 = vcmp.lt.s32.totalorder %v3798, 0
      %v4582 = vand.u32 %v3798, 2139095040
      %v4583 = vshrl.u32 %v4582, 23
      %v4584 = vsub.s32 %v4583, 127
      %v4585 = vand.u32 2147483647, %v3798
      %v4586 = vand.u32 %v4585, 8388607
      %v4587 = vor.u32 %v4586, 8388608
      %v4588 = vsub.s32 0, %v4587
      %v4589 = vadd.s32 %v4584, 1
      %vm4590 = vcmp.gt.s32.totalorder %v4589, 0
      %v4591 = vsel %vm4590, %v4589, 0
      %v4592 = vshrl.u32 %v4591, 5
      %v4593 = vand.u32 %v4591, 31
      %v4594 = vsub.s32 32, %v4593
      %v4595 = vshrl.u32 683565275, %v4594
      %v4596 = vshll.u32 683565275, %v4593
      %v4597 = vshrl.u32 2475754826, %v4594
      %v4598 = vor.u32 %v4596, %v4597
      %v4599 = vshll.u32 2475754826, %v4593
      %v4600 = vshrl.u32 2131351028, %v4594
      %v4601 = vor.u32 %v4599, %v4600
      %v4602 = vshll.u32 2131351028, %v4593
      %v4603 = vshrl.u32 2102212464, %v4594
      %v4604 = vor.u32 %v4602, %v4603
      %v4605 = vshll.u32 2102212464, %v4593
      %v4606 = vshrl.u32 920167782, %v4594
      %v4607 = vor.u32 %v4605, %v4606
      %v4608 = vshll.u32 920167782, %v4593
      %v4609 = vshrl.u32 1326507024, %v4594
      %v4610 = vor.u32 %v4608, %v4609
      %vm4611 = vcmp.lt.s32.totalorder %v4592, 1
      %vm4612 = vcmp.lt.s32.totalorder %v4592, 2
      %vm4613 = vcmp.lt.s32.totalorder %v4592, 3
      %vm4614 = vcmp.lt.s32.totalorder %v4592, 4
      %v4615 = vsel %vm4611, %v4595, %v4598
      %v4616 = vsel %vm4614, %v4604, 2102212464
      %v4617 = vsel %vm4613, %v4601, %v4616
      %v4618 = vsel %vm4612, %v4615, %v4617
      %v4619 = vsel %vm4611, %v4598, %v4601
      %v4620 = vsel %vm4614, %v4607, 920167782
      %v4621 = vsel %vm4613, %v4604, %v4620
      %v4622 = vsel %vm4612, %v4619, %v4621
      %v4623 = vsel %vm4611, %v4601, %v4604
      %v4624 = vsel %vm4614, %v4610, 1326507024
      %v4625 = vsel %vm4613, %v4607, %v4624
      %v4626 = vsel %vm4612, %v4623, %v4625
      %v4627 = vshll.u32 %v4587, 8
      %v4628 = vand.u32 %v4627, 65535
      %v4629 = vshrl.u32 %v4627, 16
      %v4630 = vand.u32 %v4626, 65535
      %v4631 = vshrl.u32 %v4626, 16
      %v4632 = vmul.u32 %v4628, %v4630
      %v4633 = vmul.u32 %v4628, %v4631
      %v4634 = vmul.u32 %v4629, %v4630
      %v4635 = vmul.u32 %v4629, %v4631
      %v4636 = vshll.u32 %v4633, 16
      %v4637 = vshrl.u32 %v4633, 16
      %v4638 = vshll.u32 %v4634, 16
      %v4639 = vshrl.u32 %v4634, 16
      %vm4640 = vc.u32 %v4632, %v4636
      %v4641 = vsel %vm4640, 1, 0
      %v4642 = vadd.s32 %v4632, %v4636
      %v4643 = vadd.s32 %v4635, %v4641
      %vm4644 = vc.u32 %v4642, %v4638
      %v4645 = vsel %vm4644, 1, 0
      %v4646 = vadd.s32 %v4642, %v4638
      %v4647 = vadd.s32 %v4643, %v4645
      %v4648 = vadd.s32 %v4647, %v4637
      %v4649 = vadd.s32 %v4648, %v4639
      %v4650 = vand.u32 %v4627, 65535
      %v4651 = vshrl.u32 %v4627, 16
      %v4652 = vand.u32 %v4622, 65535
      %v4653 = vshrl.u32 %v4622, 16
      %v4654 = vmul.u32 %v4650, %v4652
      %v4655 = vmul.u32 %v4650, %v4653
      %v4656 = vmul.u32 %v4651, %v4652
      %v4657 = vmul.u32 %v4651, %v4653
      %v4658 = vshll.u32 %v4655, 16
      %v4659 = vshrl.u32 %v4655, 16
      %v4660 = vshll.u32 %v4656, 16
      %v4661 = vshrl.u32 %v4656, 16
      %vm4662 = vc.u32 %v4654, %v4658
      %v4663 = vsel %vm4662, 1, 0
      %v4664 = vadd.s32 %v4654, %v4658
      %v4665 = vadd.s32 %v4657, %v4663
      %vm4666 = vc.u32 %v4664, %v4660
      %v4667 = vsel %vm4666, 1, 0
      %v4668 = vadd.s32 %v4664, %v4660
      %v4669 = vadd.s32 %v4665, %v4667
      %v4670 = vadd.s32 %v4669, %v4659
      %v4671 = vadd.s32 %v4670, %v4661
      %v4672 = vmul.u32 %v4627, %v4618
      %v4673 = vadd.s32 %v4649, %v4668
      %vm4674 = vc.u32 %v4649, %v4668
      %v4675 = vadd.s32 %v4671, 1
      %v4676 = vsel %vm4674, %v4675, %v4671
      %v4677 = vadd.s32 %v4672, %v4676
      %v4678 = vadd.s32 %v4677, 536870912
      %v4679 = vshrl.u32 %v4678, 30
      %v4680 = vshll.u32 %v4679, 30
      %v4681 = vsub.s32 %v4677, %v4680
      %vm4682 = vcmp.lt.s32.totalorder %v4681, 0
      %v4683 = vsub.s32 0, %v4681
      %v4684 = vsel %vm4682, %v4683, %v4681
      %v4685 = vclz %v4684
      %v4686 = vsub.s32 %v4685, 2
      %vm4687 = vcmp.gt.s32.totalorder 0, %v4686
      %v4688 = vsel %vm4687, 0, %v4686
      %v4689 = vsub.s32 32, %v4688
      %v4690 = vshll.u32 %v4681, %v4688
      %v4691 = vshrl.u32 %v4673, %v4689
      %v4692 = vor.u32 %v4690, %v4691
      %v4693 = vsub.s32 4294967266, %v4688
      %v4694 = vadd.s32 %v4693, 127
      %v4695 = vshll.u32 %v4694, 23
      %v4696 = vor.u32 4788187, %v4695
      %v4697 = vand.u32 2147483647, %v4696
      %v4699 = vcvt.s32.f32 %v4692
      %v4700 = vmul.f32 %v4699, %v4697
      %v4701 = vxor.u32 %v4700, 2147483648
      %v4702 = vsel %vm4581, %v4701, %v4700
      %v4703 = vsub.s32 4, %v4679
      %v4704 = vsel %vm4581, %v4703, %v4679
      %v4705 = vsel %vm4580, %v3798, %v4702
      %v4706 = vsel %vm4580, 0, %v4704
      %v4707 = vmul.f32 %v4705, %v4705
      %v4708 = vmul.f32 %v4707, -0.001358992
      %v4709 = vadd.f32 %v4708, 0.041655596
      %v4710 = vmul.f32 %v4707, %v4709
      %v4711 = vadd.f32 %v4710, -0.4999988
      %v4712 = vmul.f32 %v4707, %v4711
      %v4713 = vadd.f32 1.0, %v4712
      %v4714 = vmul.f32 %v4705, %v4705
      %v4715 = vmul.f32 %v4714, -0.00019511016
      %v4716 = vadd.f32 %v4715, 0.008332121
      %v4717 = vmul.f32 %v4714, %v4716
      %v4718 = vadd.f32 %v4717, -0.16666654
      %v4719 = vmul.f32 %v4714, %v4718
      %v4720 = vadd.f32 %v4719, 1.0
      %v4721 = vmul.f32 %v4720, %v4705
      %vm4722 = vweird.f32 %v3798
      %v4723 = vand.u32 %v4706, 3
      %vm4724 = vcmp.lt.s32.totalorder %v4723, 2
      %vm4725 = vcmp.eq.s32.totalorder %v4723, 0
      %v4726 = vxor.u32 %v4721, 2147483648
      %v4727 = vsel %vm4725, %v4713, %v4726
      %vm4728 = vcmp.eq.s32.totalorder %v4723, 2
      %v4729 = vxor.u32 %v4713, 2147483648
      %v4730 = vsel %vm4728, %v4729, %v4721
      %v4731 = vsel %vm4724, %v4727, %v4730
      %v4732 = vsel %vm4722, nan, %v4731
      %v4733 = vand.u32 2147483647, %v3799
      %vm4734 = vcmp.le.f32.partialorder %v4733, 0.7853982
      %vm4735 = vcmp.lt.s32.totalorder %v3799, 0
      %v4736 = vand.u32 %v3799, 2139095040
      %v4737 = vshrl.u32 %v4736, 23
      %v4738 = vsub.s32 %v4737, 127
      %v4739 = vand.u32 2147483647, %v3799
      %v4740 = vand.u32 %v4739, 8388607
      %v4741 = vor.u32 %v4740, 8388608
      %v4742 = vsub.s32 0, %v4741
      %v4743 = vadd.s32 %v4738, 1
      %vm4744 = vcmp.gt.s32.totalorder %v4743, 0
      %v4745 = vsel %vm4744, %v4743, 0
      %v4746 = vshrl.u32 %v4745, 5
      %v4747 = vand.u32 %v4745, 31
      %v4748 = vsub.s32 32, %v4747
      %v4749 = vshrl.u32 683565275, %v4748
      %v4750 = vshll.u32 683565275, %v4747
      %v4751 = vshrl.u32 2475754826, %v4748
      %v4752 = vor.u32 %v4750, %v4751
      %v4753 = vshll.u32 2475754826, %v4747
      %v4754 = vshrl.u32 2131351028, %v4748
      %v4755 = vor.u32 %v4753, %v4754
      %v4756 = vshll.u32 2131351028, %v4747
      %v4757 = vshrl.u32 2102212464, %v4748
      %v4758 = vor.u32 %v4756, %v4757
      %v4759 = vshll.u32 2102212464, %v4747
      %v4760 = vshrl.u32 920167782, %v4748
      %v4761 = vor.u32 %v4759, %v4760
      %v4762 = vshll.u32 920167782, %v4747
      %v4763 = vshrl.u32 1326507024, %v4748
      %v4764 = vor.u32 %v4762, %v4763
      %vm4765 = vcmp.lt.s32.totalorder %v4746, 1
      %vm4766 = vcmp.lt.s32.totalorder %v4746, 2
      %vm4767 = vcmp.lt.s32.totalorder %v4746, 3
      %vm4768 = vcmp.lt.s32.totalorder %v4746, 4
      %v4769 = vsel %vm4765, %v4749, %v4752
      %v4770 = vsel %vm4768, %v4758, 2102212464
      %v4771 = vsel %vm4767, %v4755, %v4770
      %v4772 = vsel %vm4766, %v4769, %v4771
      %v4773 = vsel %vm4765, %v4752, %v4755
      %v4774 = vsel %vm4768, %v4761, 920167782
      %v4775 = vsel %vm4767, %v4758, %v4774
      %v4776 = vsel %vm4766, %v4773, %v4775
      %v4777 = vsel %vm4765, %v4755, %v4758
      %v4778 = vsel %vm4768, %v4764, 1326507024
      %v4779 = vsel %vm4767, %v4761, %v4778
      %v4780 = vsel %vm4766, %v4777, %v4779
      %v4781 = vshll.u32 %v4741, 8
      %v4782 = vand.u32 %v4781, 65535
      %v4783 = vshrl.u32 %v4781, 16
      %v4784 = vand.u32 %v4780, 65535
      %v4785 = vshrl.u32 %v4780, 16
      %v4786 = vmul.u32 %v4782, %v4784
      %v4787 = vmul.u32 %v4782, %v4785
      %v4788 = vmul.u32 %v4783, %v4784
      %v4789 = vmul.u32 %v4783, %v4785
      %v4790 = vshll.u32 %v4787, 16
      %v4791 = vshrl.u32 %v4787, 16
      %v4792 = vshll.u32 %v4788, 16
      %v4793 = vshrl.u32 %v4788, 16
      %vm4794 = vc.u32 %v4786, %v4790
      %v4795 = vsel %vm4794, 1, 0
      %v4796 = vadd.s32 %v4786, %v4790
      %v4797 = vadd.s32 %v4789, %v4795
      %vm4798 = vc.u32 %v4796, %v4792
      %v4799 = vsel %vm4798, 1, 0
      %v4800 = vadd.s32 %v4796, %v4792
      %v4801 = vadd.s32 %v4797, %v4799
      %v4802 = vadd.s32 %v4801, %v4791
      %v4803 = vadd.s32 %v4802, %v4793
      %v4804 = vand.u32 %v4781, 65535
      %v4805 = vshrl.u32 %v4781, 16
      %v4806 = vand.u32 %v4776, 65535
      %v4807 = vshrl.u32 %v4776, 16
      %v4808 = vmul.u32 %v4804, %v4806
      %v4809 = vmul.u32 %v4804, %v4807
      %v4810 = vmul.u32 %v4805, %v4806
      %v4811 = vmul.u32 %v4805, %v4807
      %v4812 = vshll.u32 %v4809, 16
      %v4813 = vshrl.u32 %v4809, 16
      %v4814 = vshll.u32 %v4810, 16
      %v4815 = vshrl.u32 %v4810, 16
      %vm4816 = vc.u32 %v4808, %v4812
      %v4817 = vsel %vm4816, 1, 0
      %v4818 = vadd.s32 %v4808, %v4812
      %v4819 = vadd.s32 %v4811, %v4817
      %vm4820 = vc.u32 %v4818, %v4814
      %v4821 = vsel %vm4820, 1, 0
      %v4822 = vadd.s32 %v4818, %v4814
      %v4823 = vadd.s32 %v4819, %v4821
      %v4824 = vadd.s32 %v4823, %v4813
      %v4825 = vadd.s32 %v4824, %v4815
      %v4826 = vmul.u32 %v4781, %v4772
      %v4827 = vadd.s32 %v4803, %v4822
      %vm4828 = vc.u32 %v4803, %v4822
      %v4829 = vadd.s32 %v4825, 1
      %v4830 = vsel %vm4828, %v4829, %v4825
      %v4831 = vadd.s32 %v4826, %v4830
      %v4832 = vadd.s32 %v4831, 536870912
      %v4833 = vshrl.u32 %v4832, 30
      %v4834 = vshll.u32 %v4833, 30
      %v4835 = vsub.s32 %v4831, %v4834
      %vm4836 = vcmp.lt.s32.totalorder %v4835, 0
      %v4837 = vsub.s32 0, %v4835
      %v4838 = vsel %vm4836, %v4837, %v4835
      %v4839 = vclz %v4838
      %v4840 = vsub.s32 %v4839, 2
      %vm4841 = vcmp.gt.s32.totalorder 0, %v4840
      %v4842 = vsel %vm4841, 0, %v4840
      %v4843 = vsub.s32 32, %v4842
      %v4844 = vshll.u32 %v4835, %v4842
      %v4845 = vshrl.u32 %v4827, %v4843
      %v4846 = vor.u32 %v4844, %v4845
      %v4847 = vsub.s32 4294967266, %v4842
      %v4848 = vadd.s32 %v4847, 127
      %v4849 = vshll.u32 %v4848, 23
      %v4850 = vor.u32 4788187, %v4849
      %v4851 = vand.u32 2147483647, %v4850
      %v4853 = vcvt.s32.f32 %v4846
      %v4854 = vmul.f32 %v4853, %v4851
      %v4855 = vxor.u32 %v4854, 2147483648
      %v4856 = vsel %vm4735, %v4855, %v4854
      %v4857 = vsub.s32 4, %v4833
      %v4858 = vsel %vm4735, %v4857, %v4833
      %v4859 = vsel %vm4734, %v3799, %v4856
      %v4860 = vsel %vm4734, 0, %v4858
      %v4861 = vmul.f32 %v4859, %v4859
      %v4862 = vmul.f32 %v4861, -0.001358992
      %v4863 = vadd.f32 %v4862, 0.041655596
      %v4864 = vmul.f32 %v4861, %v4863
      %v4865 = vadd.f32 %v4864, -0.4999988
      %v4866 = vmul.f32 %v4861, %v4865
      %v4867 = vadd.f32 1.0, %v4866
      %v4868 = vmul.f32 %v4859, %v4859
      %v4869 = vmul.f32 %v4868, -0.00019511016
      %v4870 = vadd.f32 %v4869, 0.008332121
      %v4871 = vmul.f32 %v4868, %v4870
      %v4872 = vadd.f32 %v4871, -0.16666654
      %v4873 = vmul.f32 %v4868, %v4872
      %v4874 = vadd.f32 %v4873, 1.0
      %v4875 = vmul.f32 %v4874, %v4859
      %vm4876 = vweird.f32 %v3799
      %v4877 = vand.u32 %v4860, 3
      %vm4878 = vcmp.lt.s32.totalorder %v4877, 2
      %vm4879 = vcmp.eq.s32.totalorder %v4877, 0
      %v4880 = vxor.u32 %v4875, 2147483648
      %v4881 = vsel %vm4879, %v4867, %v4880
      %vm4882 = vcmp.eq.s32.totalorder %v4877, 2
      %v4883 = vxor.u32 %v4867, 2147483648
      %v4884 = vsel %vm4882, %v4883, %v4875
      %v4885 = vsel %vm4878, %v4881, %v4884
      %v4886 = vsel %vm4876, nan, %v4885
      %v4887 = vand.u32 2147483647, %v3800
      %vm4888 = vcmp.le.f32.partialorder %v4887, 0.7853982
      %vm4889 = vcmp.lt.s32.totalorder %v3800, 0
      %v4890 = vand.u32 %v3800, 2139095040
      %v4891 = vshrl.u32 %v4890, 23
      %v4892 = vsub.s32 %v4891, 127
      %v4893 = vand.u32 2147483647, %v3800
      %v4894 = vand.u32 %v4893, 8388607
      %v4895 = vor.u32 %v4894, 8388608
      %v4896 = vsub.s32 0, %v4895
      %v4897 = vadd.s32 %v4892, 1
      %vm4898 = vcmp.gt.s32.totalorder %v4897, 0
      %v4899 = vsel %vm4898, %v4897, 0
      %v4900 = vshrl.u32 %v4899, 5
      %v4901 = vand.u32 %v4899, 31
      %v4902 = vsub.s32 32, %v4901
      %v4903 = vshrl.u32 683565275, %v4902
      %v4904 = vshll.u32 683565275, %v4901
      %v4905 = vshrl.u32 2475754826, %v4902
      %v4906 = vor.u32 %v4904, %v4905
      %v4907 = vshll.u32 2475754826, %v4901
      %v4908 = vshrl.u32 2131351028, %v4902
      %v4909 = vor.u32 %v4907, %v4908
      %v4910 = vshll.u32 2131351028, %v4901
      %v4911 = vshrl.u32 2102212464, %v4902
      %v4912 = vor.u32 %v4910, %v4911
      %v4913 = vshll.u32 2102212464, %v4901
      %v4914 = vshrl.u32 920167782, %v4902
      %v4915 = vor.u32 %v4913, %v4914
      %v4916 = vshll.u32 920167782, %v4901
      %v4917 = vshrl.u32 1326507024, %v4902
      %v4918 = vor.u32 %v4916, %v4917
      %vm4919 = vcmp.lt.s32.totalorder %v4900, 1
      %vm4920 = vcmp.lt.s32.totalorder %v4900, 2
      %vm4921 = vcmp.lt.s32.totalorder %v4900, 3
      %vm4922 = vcmp.lt.s32.totalorder %v4900, 4
      %v4923 = vsel %vm4919, %v4903, %v4906
      %v4924 = vsel %vm4922, %v4912, 2102212464
      %v4925 = vsel %vm4921, %v4909, %v4924
      %v4926 = vsel %vm4920, %v4923, %v4925
      %v4927 = vsel %vm4919, %v4906, %v4909
      %v4928 = vsel %vm4922, %v4915, 920167782
      %v4929 = vsel %vm4921, %v4912, %v4928
      %v4930 = vsel %vm4920, %v4927, %v4929
      %v4931 = vsel %vm4919, %v4909, %v4912
      %v4932 = vsel %vm4922, %v4918, 1326507024
      %v4933 = vsel %vm4921, %v4915, %v4932
      %v4934 = vsel %vm4920, %v4931, %v4933
      %v4935 = vshll.u32 %v4895, 8
      %v4936 = vand.u32 %v4935, 65535
      %v4937 = vshrl.u32 %v4935, 16
      %v4938 = vand.u32 %v4934, 65535
      %v4939 = vshrl.u32 %v4934, 16
      %v4940 = vmul.u32 %v4936, %v4938
      %v4941 = vmul.u32 %v4936, %v4939
      %v4942 = vmul.u32 %v4937, %v4938
      %v4943 = vmul.u32 %v4937, %v4939
      %v4944 = vshll.u32 %v4941, 16
      %v4945 = vshrl.u32 %v4941, 16
      %v4946 = vshll.u32 %v4942, 16
      %v4947 = vshrl.u32 %v4942, 16
      %vm4948 = vc.u32 %v4940, %v4944
      %v4949 = vsel %vm4948, 1, 0
      %v4950 = vadd.s32 %v4940, %v4944
      %v4951 = vadd.s32 %v4943, %v4949
      %vm4952 = vc.u32 %v4950, %v4946
      %v4953 = vsel %vm4952, 1, 0
      %v4954 = vadd.s32 %v4950, %v4946
      %v4955 = vadd.s32 %v4951, %v4953
      %v4956 = vadd.s32 %v4955, %v4945
      %v4957 = vadd.s32 %v4956, %v4947
      %v4958 = vand.u32 %v4935, 65535
      %v4959 = vshrl.u32 %v4935, 16
      %v4960 = vand.u32 %v4930, 65535
      %v4961 = vshrl.u32 %v4930, 16
      %v4962 = vmul.u32 %v4958, %v4960
      %v4963 = vmul.u32 %v4958, %v4961
      %v4964 = vmul.u32 %v4959, %v4960
      %v4965 = vmul.u32 %v4959, %v4961
      %v4966 = vshll.u32 %v4963, 16
      %v4967 = vshrl.u32 %v4963, 16
      %v4968 = vshll.u32 %v4964, 16
      %v4969 = vshrl.u32 %v4964, 16
      %vm4970 = vc.u32 %v4962, %v4966
      %v4971 = vsel %vm4970, 1, 0
      %v4972 = vadd.s32 %v4962, %v4966
      %v4973 = vadd.s32 %v4965, %v4971
      %vm4974 = vc.u32 %v4972, %v4968
      %v4975 = vsel %vm4974, 1, 0
      %v4976 = vadd.s32 %v4972, %v4968
      %v4977 = vadd.s32 %v4973, %v4975
      %v4978 = vadd.s32 %v4977, %v4967
      %v4979 = vadd.s32 %v4978, %v4969
      %v4980 = vmul.u32 %v4935, %v4926
      %v4981 = vadd.s32 %v4957, %v4976
      %vm4982 = vc.u32 %v4957, %v4976
      %v4983 = vadd.s32 %v4979, 1
      %v4984 = vsel %vm4982, %v4983, %v4979
      %v4985 = vadd.s32 %v4980, %v4984
      %v4986 = vadd.s32 %v4985, 536870912
      %v4987 = vshrl.u32 %v4986, 30
      %v4988 = vshll.u32 %v4987, 30
      %v4989 = vsub.s32 %v4985, %v4988
      %vm4990 = vcmp.lt.s32.totalorder %v4989, 0
      %v4991 = vsub.s32 0, %v4989
      %v4992 = vsel %vm4990, %v4991, %v4989
      %v4993 = vclz %v4992
      %v4994 = vsub.s32 %v4993, 2
      %vm4995 = vcmp.gt.s32.totalorder 0, %v4994
      %v4996 = vsel %vm4995, 0, %v4994
      %v4997 = vsub.s32 32, %v4996
      %v4998 = vshll.u32 %v4989, %v4996
      %v4999 = vshrl.u32 %v4981, %v4997
      %v5000 = vor.u32 %v4998, %v4999
      %v5001 = vsub.s32 4294967266, %v4996
      %v5002 = vadd.s32 %v5001, 127
      %v5003 = vshll.u32 %v5002, 23
      %v5004 = vor.u32 4788187, %v5003
      %v5005 = vand.u32 2147483647, %v5004
      %v5007 = vcvt.s32.f32 %v5000
      %v5008 = vmul.f32 %v5007, %v5005
      %v5009 = vxor.u32 %v5008, 2147483648
      %v5010 = vsel %vm4889, %v5009, %v5008
      %v5011 = vsub.s32 4, %v4987
      %v5012 = vsel %vm4889, %v5011, %v4987
      %v5013 = vsel %vm4888, %v3800, %v5010
      %v5014 = vsel %vm4888, 0, %v5012
      %v5015 = vmul.f32 %v5013, %v5013
      %v5016 = vmul.f32 %v5015, -0.001358992
      %v5017 = vadd.f32 %v5016, 0.041655596
      %v5018 = vmul.f32 %v5015, %v5017
      %v5019 = vadd.f32 %v5018, -0.4999988
      %v5020 = vmul.f32 %v5015, %v5019
      %v5021 = vadd.f32 1.0, %v5020
      %v5022 = vmul.f32 %v5013, %v5013
      %v5023 = vmul.f32 %v5022, -0.00019511016
      %v5024 = vadd.f32 %v5023, 0.008332121
      %v5025 = vmul.f32 %v5022, %v5024
      %v5026 = vadd.f32 %v5025, -0.16666654
      %v5027 = vmul.f32 %v5022, %v5026
      %v5028 = vadd.f32 %v5027, 1.0
      %v5029 = vmul.f32 %v5028, %v5013
      %vm5030 = vweird.f32 %v3800
      %v5031 = vand.u32 %v5014, 3
      %vm5032 = vcmp.lt.s32.totalorder %v5031, 2
      %vm5033 = vcmp.eq.s32.totalorder %v5031, 0
      %v5034 = vxor.u32 %v5029, 2147483648
      %v5035 = vsel %vm5033, %v5021, %v5034
      %vm5036 = vcmp.eq.s32.totalorder %v5031, 2
      %v5037 = vxor.u32 %v5021, 2147483648
      %v5038 = vsel %vm5036, %v5037, %v5029
      %v5039 = vsel %vm5032, %v5035, %v5038
      %v5040 = vsel %vm5030, nan, %v5039
      %v5041 = vand.u32 2147483647, %v3801
      %vm5042 = vcmp.le.f32.partialorder %v5041, 0.7853982
      %vm5043 = vcmp.lt.s32.totalorder %v3801, 0
      %v5044 = vand.u32 %v3801, 2139095040
      %v5045 = vshrl.u32 %v5044, 23
      %v5046 = vsub.s32 %v5045, 127
      %v5047 = vand.u32 2147483647, %v3801
      %v5048 = vand.u32 %v5047, 8388607
      %v5049 = vor.u32 %v5048, 8388608
      %v5050 = vsub.s32 0, %v5049
      %v5051 = vadd.s32 %v5046, 1
      %vm5052 = vcmp.gt.s32.totalorder %v5051, 0
      %v5053 = vsel %vm5052, %v5051, 0
      %v5054 = vshrl.u32 %v5053, 5
      %v5055 = vand.u32 %v5053, 31
      %v5056 = vsub.s32 32, %v5055
      %v5057 = vshrl.u32 683565275, %v5056
      %v5058 = vshll.u32 683565275, %v5055
      %v5059 = vshrl.u32 2475754826, %v5056
      %v5060 = vor.u32 %v5058, %v5059
      %v5061 = vshll.u32 2475754826, %v5055
      %v5062 = vshrl.u32 2131351028, %v5056
      %v5063 = vor.u32 %v5061, %v5062
      %v5064 = vshll.u32 2131351028, %v5055
      %v5065 = vshrl.u32 2102212464, %v5056
      %v5066 = vor.u32 %v5064, %v5065
      %v5067 = vshll.u32 2102212464, %v5055
      %v5068 = vshrl.u32 920167782, %v5056
      %v5069 = vor.u32 %v5067, %v5068
      %v5070 = vshll.u32 920167782, %v5055
      %v5071 = vshrl.u32 1326507024, %v5056
      %v5072 = vor.u32 %v5070, %v5071
      %vm5073 = vcmp.lt.s32.totalorder %v5054, 1
      %vm5074 = vcmp.lt.s32.totalorder %v5054, 2
      %vm5075 = vcmp.lt.s32.totalorder %v5054, 3
      %vm5076 = vcmp.lt.s32.totalorder %v5054, 4
      %v5077 = vsel %vm5073, %v5057, %v5060
      %v5078 = vsel %vm5076, %v5066, 2102212464
      %v5079 = vsel %vm5075, %v5063, %v5078
      %v5080 = vsel %vm5074, %v5077, %v5079
      %v5081 = vsel %vm5073, %v5060, %v5063
      %v5082 = vsel %vm5076, %v5069, 920167782
      %v5083 = vsel %vm5075, %v5066, %v5082
      %v5084 = vsel %vm5074, %v5081, %v5083
      %v5085 = vsel %vm5073, %v5063, %v5066
      %v5086 = vsel %vm5076, %v5072, 1326507024
      %v5087 = vsel %vm5075, %v5069, %v5086
      %v5088 = vsel %vm5074, %v5085, %v5087
      %v5089 = vshll.u32 %v5049, 8
      %v5090 = vand.u32 %v5089, 65535
      %v5091 = vshrl.u32 %v5089, 16
      %v5092 = vand.u32 %v5088, 65535
      %v5093 = vshrl.u32 %v5088, 16
      %v5094 = vmul.u32 %v5090, %v5092
      %v5095 = vmul.u32 %v5090, %v5093
      %v5096 = vmul.u32 %v5091, %v5092
      %v5097 = vmul.u32 %v5091, %v5093
      %v5098 = vshll.u32 %v5095, 16
      %v5099 = vshrl.u32 %v5095, 16
      %v5100 = vshll.u32 %v5096, 16
      %v5101 = vshrl.u32 %v5096, 16
      %vm5102 = vc.u32 %v5094, %v5098
      %v5103 = vsel %vm5102, 1, 0
      %v5104 = vadd.s32 %v5094, %v5098
      %v5105 = vadd.s32 %v5097, %v5103
      %vm5106 = vc.u32 %v5104, %v5100
      %v5107 = vsel %vm5106, 1, 0
      %v5108 = vadd.s32 %v5104, %v5100
      %v5109 = vadd.s32 %v5105, %v5107
      %v5110 = vadd.s32 %v5109, %v5099
      %v5111 = vadd.s32 %v5110, %v5101
      %v5112 = vand.u32 %v5089, 65535
      %v5113 = vshrl.u32 %v5089, 16
      %v5114 = vand.u32 %v5084, 65535
      %v5115 = vshrl.u32 %v5084, 16
      %v5116 = vmul.u32 %v5112, %v5114
      %v5117 = vmul.u32 %v5112, %v5115
      %v5118 = vmul.u32 %v5113, %v5114
      %v5119 = vmul.u32 %v5113, %v5115
      %v5120 = vshll.u32 %v5117, 16
      %v5121 = vshrl.u32 %v5117, 16
      %v5122 = vshll.u32 %v5118, 16
      %v5123 = vshrl.u32 %v5118, 16
      %vm5124 = vc.u32 %v5116, %v5120
      %v5125 = vsel %vm5124, 1, 0
      %v5126 = vadd.s32 %v5116, %v5120
      %v5127 = vadd.s32 %v5119, %v5125
      %vm5128 = vc.u32 %v5126, %v5122
      %v5129 = vsel %vm5128, 1, 0
      %v5130 = vadd.s32 %v5126, %v5122
      %v5131 = vadd.s32 %v5127, %v5129
      %v5132 = vadd.s32 %v5131, %v5121
      %v5133 = vadd.s32 %v5132, %v5123
      %v5134 = vmul.u32 %v5089, %v5080
      %v5135 = vadd.s32 %v5111, %v5130
      %vm5136 = vc.u32 %v5111, %v5130
      %v5137 = vadd.s32 %v5133, 1
      %v5138 = vsel %vm5136, %v5137, %v5133
      %v5139 = vadd.s32 %v5134, %v5138
      %v5140 = vadd.s32 %v5139, 536870912
      %v5141 = vshrl.u32 %v5140, 30
      %v5142 = vshll.u32 %v5141, 30
      %v5143 = vsub.s32 %v5139, %v5142
      %vm5144 = vcmp.lt.s32.totalorder %v5143, 0
      %v5145 = vsub.s32 0, %v5143
      %v5146 = vsel %vm5144, %v5145, %v5143
      %v5147 = vclz %v5146
      %v5148 = vsub.s32 %v5147, 2
      %vm5149 = vcmp.gt.s32.totalorder 0, %v5148
      %v5150 = vsel %vm5149, 0, %v5148
      %v5151 = vsub.s32 32, %v5150
      %v5152 = vshll.u32 %v5143, %v5150
      %v5153 = vshrl.u32 %v5135, %v5151
      %v5154 = vor.u32 %v5152, %v5153
      %v5155 = vsub.s32 4294967266, %v5150
      %v5156 = vadd.s32 %v5155, 127
      %v5157 = vshll.u32 %v5156, 23
      %v5158 = vor.u32 4788187, %v5157
      %v5159 = vand.u32 2147483647, %v5158
      %v5161 = vcvt.s32.f32 %v5154
      %v5162 = vmul.f32 %v5161, %v5159
      %v5163 = vxor.u32 %v5162, 2147483648
      %v5164 = vsel %vm5043, %v5163, %v5162
      %v5165 = vsub.s32 4, %v5141
      %v5166 = vsel %vm5043, %v5165, %v5141
      %v5167 = vsel %vm5042, %v3801, %v5164
      %v5168 = vsel %vm5042, 0, %v5166
      %v5169 = vmul.f32 %v5167, %v5167
      %v5170 = vmul.f32 %v5169, -0.001358992
      %v5171 = vadd.f32 %v5170, 0.041655596
      %v5172 = vmul.f32 %v5169, %v5171
      %v5173 = vadd.f32 %v5172, -0.4999988
      %v5174 = vmul.f32 %v5169, %v5173
      %v5175 = vadd.f32 1.0, %v5174
      %v5176 = vmul.f32 %v5167, %v5167
      %v5177 = vmul.f32 %v5176, -0.00019511016
      %v5178 = vadd.f32 %v5177, 0.008332121
      %v5179 = vmul.f32 %v5176, %v5178
      %v5180 = vadd.f32 %v5179, -0.16666654
      %v5181 = vmul.f32 %v5176, %v5180
      %v5182 = vadd.f32 %v5181, 1.0
      %v5183 = vmul.f32 %v5182, %v5167
      %vm5184 = vweird.f32 %v3801
      %v5185 = vand.u32 %v5168, 3
      %vm5186 = vcmp.lt.s32.totalorder %v5185, 2
      %vm5187 = vcmp.eq.s32.totalorder %v5185, 0
      %v5188 = vxor.u32 %v5183, 2147483648
      %v5189 = vsel %vm5187, %v5175, %v5188
      %vm5190 = vcmp.eq.s32.totalorder %v5185, 2
      %v5191 = vxor.u32 %v5175, 2147483648
      %v5192 = vsel %vm5190, %v5191, %v5183
      %v5193 = vsel %vm5186, %v5189, %v5192
      %v5194 = vsel %vm5184, nan, %v5193
      %v5195 = vand.u32 2147483647, %v3802
      %vm5196 = vcmp.le.f32.partialorder %v5195, 0.7853982
      %vm5197 = vcmp.lt.s32.totalorder %v3802, 0
      %v5198 = vand.u32 %v3802, 2139095040
      %v5199 = vshrl.u32 %v5198, 23
      %v5200 = vsub.s32 %v5199, 127
      %v5201 = vand.u32 2147483647, %v3802
      %v5202 = vand.u32 %v5201, 8388607
      %v5203 = vor.u32 %v5202, 8388608
      %v5204 = vsub.s32 0, %v5203
      %v5205 = vadd.s32 %v5200, 1
      %vm5206 = vcmp.gt.s32.totalorder %v5205, 0
      %v5207 = vsel %vm5206, %v5205, 0
      %v5208 = vshrl.u32 %v5207, 5
      %v5209 = vand.u32 %v5207, 31
      %v5210 = vsub.s32 32, %v5209
      %v5211 = vshrl.u32 683565275, %v5210
      %v5212 = vshll.u32 683565275, %v5209
      %v5213 = vshrl.u32 2475754826, %v5210
      %v5214 = vor.u32 %v5212, %v5213
      %v5215 = vshll.u32 2475754826, %v5209
      %v5216 = vshrl.u32 2131351028, %v5210
      %v5217 = vor.u32 %v5215, %v5216
      %v5218 = vshll.u32 2131351028, %v5209
      %v5219 = vshrl.u32 2102212464, %v5210
      %v5220 = vor.u32 %v5218, %v5219
      %v5221 = vshll.u32 2102212464, %v5209
      %v5222 = vshrl.u32 920167782, %v5210
      %v5223 = vor.u32 %v5221, %v5222
      %v5224 = vshll.u32 920167782, %v5209
      %v5225 = vshrl.u32 1326507024, %v5210
      %v5226 = vor.u32 %v5224, %v5225
      %vm5227 = vcmp.lt.s32.totalorder %v5208, 1
      %vm5228 = vcmp.lt.s32.totalorder %v5208, 2
      %vm5229 = vcmp.lt.s32.totalorder %v5208, 3
      %vm5230 = vcmp.lt.s32.totalorder %v5208, 4
      %v5231 = vsel %vm5227, %v5211, %v5214
      %v5232 = vsel %vm5230, %v5220, 2102212464
      %v5233 = vsel %vm5229, %v5217, %v5232
      %v5234 = vsel %vm5228, %v5231, %v5233
      %v5235 = vsel %vm5227, %v5214, %v5217
      %v5236 = vsel %vm5230, %v5223, 920167782
      %v5237 = vsel %vm5229, %v5220, %v5236
      %v5238 = vsel %vm5228, %v5235, %v5237
      %v5239 = vsel %vm5227, %v5217, %v5220
      %v5240 = vsel %vm5230, %v5226, 1326507024
      %v5241 = vsel %vm5229, %v5223, %v5240
      %v5242 = vsel %vm5228, %v5239, %v5241
      %v5243 = vshll.u32 %v5203, 8
      %v5244 = vand.u32 %v5243, 65535
      %v5245 = vshrl.u32 %v5243, 16
      %v5246 = vand.u32 %v5242, 65535
      %v5247 = vshrl.u32 %v5242, 16
      %v5248 = vmul.u32 %v5244, %v5246
      %v5249 = vmul.u32 %v5244, %v5247
      %v5250 = vmul.u32 %v5245, %v5246
      %v5251 = vmul.u32 %v5245, %v5247
      %v5252 = vshll.u32 %v5249, 16
      %v5253 = vshrl.u32 %v5249, 16
      %v5254 = vshll.u32 %v5250, 16
      %v5255 = vshrl.u32 %v5250, 16
      %vm5256 = vc.u32 %v5248, %v5252
      %v5257 = vsel %vm5256, 1, 0
      %v5258 = vadd.s32 %v5248, %v5252
      %v5259 = vadd.s32 %v5251, %v5257
      %vm5260 = vc.u32 %v5258, %v5254
      %v5261 = vsel %vm5260, 1, 0
      %v5262 = vadd.s32 %v5258, %v5254
      %v5263 = vadd.s32 %v5259, %v5261
      %v5264 = vadd.s32 %v5263, %v5253
      %v5265 = vadd.s32 %v5264, %v5255
      %v5266 = vand.u32 %v5243, 65535
      %v5267 = vshrl.u32 %v5243, 16
      %v5268 = vand.u32 %v5238, 65535
      %v5269 = vshrl.u32 %v5238, 16
      %v5270 = vmul.u32 %v5266, %v5268
      %v5271 = vmul.u32 %v5266, %v5269
      %v5272 = vmul.u32 %v5267, %v5268
      %v5273 = vmul.u32 %v5267, %v5269
      %v5274 = vshll.u32 %v5271, 16
      %v5275 = vshrl.u32 %v5271, 16
      %v5276 = vshll.u32 %v5272, 16
      %v5277 = vshrl.u32 %v5272, 16
      %vm5278 = vc.u32 %v5270, %v5274
      %v5279 = vsel %vm5278, 1, 0
      %v5280 = vadd.s32 %v5270, %v5274
      %v5281 = vadd.s32 %v5273, %v5279
      %vm5282 = vc.u32 %v5280, %v5276
      %v5283 = vsel %vm5282, 1, 0
      %v5284 = vadd.s32 %v5280, %v5276
      %v5285 = vadd.s32 %v5281, %v5283
      %v5286 = vadd.s32 %v5285, %v5275
      %v5287 = vadd.s32 %v5286, %v5277
      %v5288 = vmul.u32 %v5243, %v5234
      %v5289 = vadd.s32 %v5265, %v5284
      %vm5290 = vc.u32 %v5265, %v5284
      %v5291 = vadd.s32 %v5287, 1
      %v5292 = vsel %vm5290, %v5291, %v5287
      %v5293 = vadd.s32 %v5288, %v5292
      %v5294 = vadd.s32 %v5293, 536870912
      %v5295 = vshrl.u32 %v5294, 30
      %v5296 = vshll.u32 %v5295, 30
      %v5297 = vsub.s32 %v5293, %v5296
      %vm5298 = vcmp.lt.s32.totalorder %v5297, 0
      %v5299 = vsub.s32 0, %v5297
      %v5300 = vsel %vm5298, %v5299, %v5297
      %v5301 = vclz %v5300
      %v5302 = vsub.s32 %v5301, 2
      %vm5303 = vcmp.gt.s32.totalorder 0, %v5302
      %v5304 = vsel %vm5303, 0, %v5302
      %v5305 = vsub.s32 32, %v5304
      %v5306 = vshll.u32 %v5297, %v5304
      %v5307 = vshrl.u32 %v5289, %v5305
      %v5308 = vor.u32 %v5306, %v5307
      %v5309 = vsub.s32 4294967266, %v5304
      %v5310 = vadd.s32 %v5309, 127
      %v5311 = vshll.u32 %v5310, 23
      %v5312 = vor.u32 4788187, %v5311
      %v5313 = vand.u32 2147483647, %v5312
      %v5315 = vcvt.s32.f32 %v5308
      %v5316 = vmul.f32 %v5315, %v5313
      %v5317 = vxor.u32 %v5316, 2147483648
      %v5318 = vsel %vm5197, %v5317, %v5316
      %v5319 = vsub.s32 4, %v5295
      %v5320 = vsel %vm5197, %v5319, %v5295
      %v5321 = vsel %vm5196, %v3802, %v5318
      %v5322 = vsel %vm5196, 0, %v5320
      %v5323 = vmul.f32 %v5321, %v5321
      %v5324 = vmul.f32 %v5323, -0.001358992
      %v5325 = vadd.f32 %v5324, 0.041655596
      %v5326 = vmul.f32 %v5323, %v5325
      %v5327 = vadd.f32 %v5326, -0.4999988
      %v5328 = vmul.f32 %v5323, %v5327
      %v5329 = vadd.f32 1.0, %v5328
      %v5330 = vmul.f32 %v5321, %v5321
      %v5331 = vmul.f32 %v5330, -0.00019511016
      %v5332 = vadd.f32 %v5331, 0.008332121
      %v5333 = vmul.f32 %v5330, %v5332
      %v5334 = vadd.f32 %v5333, -0.16666654
      %v5335 = vmul.f32 %v5330, %v5334
      %v5336 = vadd.f32 %v5335, 1.0
      %v5337 = vmul.f32 %v5336, %v5321
      %vm5338 = vweird.f32 %v3802
      %v5339 = vand.u32 %v5322, 3
      %vm5340 = vcmp.lt.s32.totalorder %v5339, 2
      %vm5341 = vcmp.eq.s32.totalorder %v5339, 0
      %v5342 = vxor.u32 %v5337, 2147483648
      %v5343 = vsel %vm5341, %v5329, %v5342
      %vm5344 = vcmp.eq.s32.totalorder %v5339, 2
      %v5345 = vxor.u32 %v5329, 2147483648
      %v5346 = vsel %vm5344, %v5345, %v5337
      %v5347 = vsel %vm5340, %v5343, %v5346
      %v5348 = vsel %vm5338, nan, %v5347
      %v5349 = vand.u32 2147483647, %v3803
      %vm5350 = vcmp.le.f32.partialorder %v5349, 0.7853982
      %vm5351 = vcmp.lt.s32.totalorder %v3803, 0
      %v5352 = vand.u32 %v3803, 2139095040
      %v5353 = vshrl.u32 %v5352, 23
      %v5354 = vsub.s32 %v5353, 127
      %v5355 = vand.u32 2147483647, %v3803
      %v5356 = vand.u32 %v5355, 8388607
      %v5357 = vor.u32 %v5356, 8388608
      %v5358 = vsub.s32 0, %v5357
      %v5359 = vadd.s32 %v5354, 1
      %vm5360 = vcmp.gt.s32.totalorder %v5359, 0
      %v5361 = vsel %vm5360, %v5359, 0
      %v5362 = vshrl.u32 %v5361, 5
      %v5363 = vand.u32 %v5361, 31
      %v5364 = vsub.s32 32, %v5363
      %v5365 = vshrl.u32 683565275, %v5364
      %v5366 = vshll.u32 683565275, %v5363
      %v5367 = vshrl.u32 2475754826, %v5364
      %v5368 = vor.u32 %v5366, %v5367
      %v5369 = vshll.u32 2475754826, %v5363
      %v5370 = vshrl.u32 2131351028, %v5364
      %v5371 = vor.u32 %v5369, %v5370
      %v5372 = vshll.u32 2131351028, %v5363
      %v5373 = vshrl.u32 2102212464, %v5364
      %v5374 = vor.u32 %v5372, %v5373
      %v5375 = vshll.u32 2102212464, %v5363
      %v5376 = vshrl.u32 920167782, %v5364
      %v5377 = vor.u32 %v5375, %v5376
      %v5378 = vshll.u32 920167782, %v5363
      %v5379 = vshrl.u32 1326507024, %v5364
      %v5380 = vor.u32 %v5378, %v5379
      %vm5381 = vcmp.lt.s32.totalorder %v5362, 1
      %vm5382 = vcmp.lt.s32.totalorder %v5362, 2
      %vm5383 = vcmp.lt.s32.totalorder %v5362, 3
      %vm5384 = vcmp.lt.s32.totalorder %v5362, 4
      %v5385 = vsel %vm5381, %v5365, %v5368
      %v5386 = vsel %vm5384, %v5374, 2102212464
      %v5387 = vsel %vm5383, %v5371, %v5386
      %v5388 = vsel %vm5382, %v5385, %v5387
      %v5389 = vsel %vm5381, %v5368, %v5371
      %v5390 = vsel %vm5384, %v5377, 920167782
      %v5391 = vsel %vm5383, %v5374, %v5390
      %v5392 = vsel %vm5382, %v5389, %v5391
      %v5393 = vsel %vm5381, %v5371, %v5374
      %v5394 = vsel %vm5384, %v5380, 1326507024
      %v5395 = vsel %vm5383, %v5377, %v5394
      %v5396 = vsel %vm5382, %v5393, %v5395
      %v5397 = vshll.u32 %v5357, 8
      %v5398 = vand.u32 %v5397, 65535
      %v5399 = vshrl.u32 %v5397, 16
      %v5400 = vand.u32 %v5396, 65535
      %v5401 = vshrl.u32 %v5396, 16
      %v5402 = vmul.u32 %v5398, %v5400
      %v5403 = vmul.u32 %v5398, %v5401
      %v5404 = vmul.u32 %v5399, %v5400
      %v5405 = vmul.u32 %v5399, %v5401
      %v5406 = vshll.u32 %v5403, 16
      %v5407 = vshrl.u32 %v5403, 16
      %v5408 = vshll.u32 %v5404, 16
      %v5409 = vshrl.u32 %v5404, 16
      %vm5410 = vc.u32 %v5402, %v5406
      %v5411 = vsel %vm5410, 1, 0
      %v5412 = vadd.s32 %v5402, %v5406
      %v5413 = vadd.s32 %v5405, %v5411
      %vm5414 = vc.u32 %v5412, %v5408
      %v5415 = vsel %vm5414, 1, 0
      %v5416 = vadd.s32 %v5412, %v5408
      %v5417 = vadd.s32 %v5413, %v5415
      %v5418 = vadd.s32 %v5417, %v5407
      %v5419 = vadd.s32 %v5418, %v5409
      %v5420 = vand.u32 %v5397, 65535
      %v5421 = vshrl.u32 %v5397, 16
      %v5422 = vand.u32 %v5392, 65535
      %v5423 = vshrl.u32 %v5392, 16
      %v5424 = vmul.u32 %v5420, %v5422
      %v5425 = vmul.u32 %v5420, %v5423
      %v5426 = vmul.u32 %v5421, %v5422
      %v5427 = vmul.u32 %v5421, %v5423
      %v5428 = vshll.u32 %v5425, 16
      %v5429 = vshrl.u32 %v5425, 16
      %v5430 = vshll.u32 %v5426, 16
      %v5431 = vshrl.u32 %v5426, 16
      %vm5432 = vc.u32 %v5424, %v5428
      %v5433 = vsel %vm5432, 1, 0
      %v5434 = vadd.s32 %v5424, %v5428
      %v5435 = vadd.s32 %v5427, %v5433
      %vm5436 = vc.u32 %v5434, %v5430
      %v5437 = vsel %vm5436, 1, 0
      %v5438 = vadd.s32 %v5434, %v5430
      %v5439 = vadd.s32 %v5435, %v5437
      %v5440 = vadd.s32 %v5439, %v5429
      %v5441 = vadd.s32 %v5440, %v5431
      %v5442 = vmul.u32 %v5397, %v5388
      %v5443 = vadd.s32 %v5419, %v5438
      %vm5444 = vc.u32 %v5419, %v5438
      %v5445 = vadd.s32 %v5441, 1
      %v5446 = vsel %vm5444, %v5445, %v5441
      %v5447 = vadd.s32 %v5442, %v5446
      %v5448 = vadd.s32 %v5447, 536870912
      %v5449 = vshrl.u32 %v5448, 30
      %v5450 = vshll.u32 %v5449, 30
      %v5451 = vsub.s32 %v5447, %v5450
      %vm5452 = vcmp.lt.s32.totalorder %v5451, 0
      %v5453 = vsub.s32 0, %v5451
      %v5454 = vsel %vm5452, %v5453, %v5451
      %v5455 = vclz %v5454
      %v5456 = vsub.s32 %v5455, 2
      %vm5457 = vcmp.gt.s32.totalorder 0, %v5456
      %v5458 = vsel %vm5457, 0, %v5456
      %v5459 = vsub.s32 32, %v5458
      %v5460 = vshll.u32 %v5451, %v5458
      %v5461 = vshrl.u32 %v5443, %v5459
      %v5462 = vor.u32 %v5460, %v5461
      %v5463 = vsub.s32 4294967266, %v5458
      %v5464 = vadd.s32 %v5463, 127
      %v5465 = vshll.u32 %v5464, 23
      %v5466 = vor.u32 4788187, %v5465
      %v5467 = vand.u32 2147483647, %v5466
      %v5469 = vcvt.s32.f32 %v5462
      %v5470 = vmul.f32 %v5469, %v5467
      %v5471 = vxor.u32 %v5470, 2147483648
      %v5472 = vsel %vm5351, %v5471, %v5470
      %v5473 = vsub.s32 4, %v5449
      %v5474 = vsel %vm5351, %v5473, %v5449
      %v5475 = vsel %vm5350, %v3803, %v5472
      %v5476 = vsel %vm5350, 0, %v5474
      %v5477 = vmul.f32 %v5475, %v5475
      %v5478 = vmul.f32 %v5477, -0.001358992
      %v5479 = vadd.f32 %v5478, 0.041655596
      %v5480 = vmul.f32 %v5477, %v5479
      %v5481 = vadd.f32 %v5480, -0.4999988
      %v5482 = vmul.f32 %v5477, %v5481
      %v5483 = vadd.f32 1.0, %v5482
      %v5484 = vmul.f32 %v5475, %v5475
      %v5485 = vmul.f32 %v5484, -0.00019511016
      %v5486 = vadd.f32 %v5485, 0.008332121
      %v5487 = vmul.f32 %v5484, %v5486
      %v5488 = vadd.f32 %v5487, -0.16666654
      %v5489 = vmul.f32 %v5484, %v5488
      %v5490 = vadd.f32 %v5489, 1.0
      %v5491 = vmul.f32 %v5490, %v5475
      %vm5492 = vweird.f32 %v3803
      %v5493 = vand.u32 %v5476, 3
      %vm5494 = vcmp.lt.s32.totalorder %v5493, 2
      %vm5495 = vcmp.eq.s32.totalorder %v5493, 0
      %v5496 = vxor.u32 %v5491, 2147483648
      %v5497 = vsel %vm5495, %v5483, %v5496
      %vm5498 = vcmp.eq.s32.totalorder %v5493, 2
      %v5499 = vxor.u32 %v5483, 2147483648
      %v5500 = vsel %vm5498, %v5499, %v5491
      %v5501 = vsel %vm5494, %v5497, %v5500
      %v5502 = vsel %vm5492, nan, %v5501
      %v5503 = vand.u32 2147483647, %v3804
      %vm5504 = vcmp.le.f32.partialorder %v5503, 0.7853982
      %vm5505 = vcmp.lt.s32.totalorder %v3804, 0
      %v5506 = vand.u32 %v3804, 2139095040
      %v5507 = vshrl.u32 %v5506, 23
      %v5508 = vsub.s32 %v5507, 127
      %v5509 = vand.u32 2147483647, %v3804
      %v5510 = vand.u32 %v5509, 8388607
      %v5511 = vor.u32 %v5510, 8388608
      %v5512 = vsub.s32 0, %v5511
      %v5513 = vadd.s32 %v5508, 1
      %vm5514 = vcmp.gt.s32.totalorder %v5513, 0
      %v5515 = vsel %vm5514, %v5513, 0
      %v5516 = vshrl.u32 %v5515, 5
      %v5517 = vand.u32 %v5515, 31
      %v5518 = vsub.s32 32, %v5517
      %v5519 = vshrl.u32 683565275, %v5518
      %v5520 = vshll.u32 683565275, %v5517
      %v5521 = vshrl.u32 2475754826, %v5518
      %v5522 = vor.u32 %v5520, %v5521
      %v5523 = vshll.u32 2475754826, %v5517
      %v5524 = vshrl.u32 2131351028, %v5518
      %v5525 = vor.u32 %v5523, %v5524
      %v5526 = vshll.u32 2131351028, %v5517
      %v5527 = vshrl.u32 2102212464, %v5518
      %v5528 = vor.u32 %v5526, %v5527
      %v5529 = vshll.u32 2102212464, %v5517
      %v5530 = vshrl.u32 920167782, %v5518
      %v5531 = vor.u32 %v5529, %v5530
      %v5532 = vshll.u32 920167782, %v5517
      %v5533 = vshrl.u32 1326507024, %v5518
      %v5534 = vor.u32 %v5532, %v5533
      %vm5535 = vcmp.lt.s32.totalorder %v5516, 1
      %vm5536 = vcmp.lt.s32.totalorder %v5516, 2
      %vm5537 = vcmp.lt.s32.totalorder %v5516, 3
      %vm5538 = vcmp.lt.s32.totalorder %v5516, 4
      %v5539 = vsel %vm5535, %v5519, %v5522
      %v5540 = vsel %vm5538, %v5528, 2102212464
      %v5541 = vsel %vm5537, %v5525, %v5540
      %v5542 = vsel %vm5536, %v5539, %v5541
      %v5543 = vsel %vm5535, %v5522, %v5525
      %v5544 = vsel %vm5538, %v5531, 920167782
      %v5545 = vsel %vm5537, %v5528, %v5544
      %v5546 = vsel %vm5536, %v5543, %v5545
      %v5547 = vsel %vm5535, %v5525, %v5528
      %v5548 = vsel %vm5538, %v5534, 1326507024
      %v5549 = vsel %vm5537, %v5531, %v5548
      %v5550 = vsel %vm5536, %v5547, %v5549
      %v5551 = vshll.u32 %v5511, 8
      %v5552 = vand.u32 %v5551, 65535
      %v5553 = vshrl.u32 %v5551, 16
      %v5554 = vand.u32 %v5550, 65535
      %v5555 = vshrl.u32 %v5550, 16
      %v5556 = vmul.u32 %v5552, %v5554
      %v5557 = vmul.u32 %v5552, %v5555
      %v5558 = vmul.u32 %v5553, %v5554
      %v5559 = vmul.u32 %v5553, %v5555
      %v5560 = vshll.u32 %v5557, 16
      %v5561 = vshrl.u32 %v5557, 16
      %v5562 = vshll.u32 %v5558, 16
      %v5563 = vshrl.u32 %v5558, 16
      %vm5564 = vc.u32 %v5556, %v5560
      %v5565 = vsel %vm5564, 1, 0
      %v5566 = vadd.s32 %v5556, %v5560
      %v5567 = vadd.s32 %v5559, %v5565
      %vm5568 = vc.u32 %v5566, %v5562
      %v5569 = vsel %vm5568, 1, 0
      %v5570 = vadd.s32 %v5566, %v5562
      %v5571 = vadd.s32 %v5567, %v5569
      %v5572 = vadd.s32 %v5571, %v5561
      %v5573 = vadd.s32 %v5572, %v5563
      %v5574 = vand.u32 %v5551, 65535
      %v5575 = vshrl.u32 %v5551, 16
      %v5576 = vand.u32 %v5546, 65535
      %v5577 = vshrl.u32 %v5546, 16
      %v5578 = vmul.u32 %v5574, %v5576
      %v5579 = vmul.u32 %v5574, %v5577
      %v5580 = vmul.u32 %v5575, %v5576
      %v5581 = vmul.u32 %v5575, %v5577
      %v5582 = vshll.u32 %v5579, 16
      %v5583 = vshrl.u32 %v5579, 16
      %v5584 = vshll.u32 %v5580, 16
      %v5585 = vshrl.u32 %v5580, 16
      %vm5586 = vc.u32 %v5578, %v5582
      %v5587 = vsel %vm5586, 1, 0
      %v5588 = vadd.s32 %v5578, %v5582
      %v5589 = vadd.s32 %v5581, %v5587
      %vm5590 = vc.u32 %v5588, %v5584
      %v5591 = vsel %vm5590, 1, 0
      %v5592 = vadd.s32 %v5588, %v5584
      %v5593 = vadd.s32 %v5589, %v5591
      %v5594 = vadd.s32 %v5593, %v5583
      %v5595 = vadd.s32 %v5594, %v5585
      %v5596 = vmul.u32 %v5551, %v5542
      %v5597 = vadd.s32 %v5573, %v5592
      %vm5598 = vc.u32 %v5573, %v5592
      %v5599 = vadd.s32 %v5595, 1
      %v5600 = vsel %vm5598, %v5599, %v5595
      %v5601 = vadd.s32 %v5596, %v5600
      %v5602 = vadd.s32 %v5601, 536870912
      %v5603 = vshrl.u32 %v5602, 30
      %v5604 = vshll.u32 %v5603, 30
      %v5605 = vsub.s32 %v5601, %v5604
      %vm5606 = vcmp.lt.s32.totalorder %v5605, 0
      %v5607 = vsub.s32 0, %v5605
      %v5608 = vsel %vm5606, %v5607, %v5605
      %v5609 = vclz %v5608
      %v5610 = vsub.s32 %v5609, 2
      %vm5611 = vcmp.gt.s32.totalorder 0, %v5610
      %v5612 = vsel %vm5611, 0, %v5610
      %v5613 = vsub.s32 32, %v5612
      %v5614 = vshll.u32 %v5605, %v5612
      %v5615 = vshrl.u32 %v5597, %v5613
      %v5616 = vor.u32 %v5614, %v5615
      %v5617 = vsub.s32 4294967266, %v5612
      %v5618 = vadd.s32 %v5617, 127
      %v5619 = vshll.u32 %v5618, 23
      %v5620 = vor.u32 4788187, %v5619
      %v5621 = vand.u32 2147483647, %v5620
      %v5623 = vcvt.s32.f32 %v5616
      %v5624 = vmul.f32 %v5623, %v5621
      %v5625 = vxor.u32 %v5624, 2147483648
      %v5626 = vsel %vm5505, %v5625, %v5624
      %v5627 = vsub.s32 4, %v5603
      %v5628 = vsel %vm5505, %v5627, %v5603
      %v5629 = vsel %vm5504, %v3804, %v5626
      %v5630 = vsel %vm5504, 0, %v5628
      %v5631 = vmul.f32 %v5629, %v5629
      %v5632 = vmul.f32 %v5631, -0.001358992
      %v5633 = vadd.f32 %v5632, 0.041655596
      %v5634 = vmul.f32 %v5631, %v5633
      %v5635 = vadd.f32 %v5634, -0.4999988
      %v5636 = vmul.f32 %v5631, %v5635
      %v5637 = vadd.f32 1.0, %v5636
      %v5638 = vmul.f32 %v5629, %v5629
      %v5639 = vmul.f32 %v5638, -0.00019511016
      %v5640 = vadd.f32 %v5639, 0.008332121
      %v5641 = vmul.f32 %v5638, %v5640
      %v5642 = vadd.f32 %v5641, -0.16666654
      %v5643 = vmul.f32 %v5638, %v5642
      %v5644 = vadd.f32 %v5643, 1.0
      %v5645 = vmul.f32 %v5644, %v5629
      %vm5646 = vweird.f32 %v3804
      %v5647 = vand.u32 %v5630, 3
      %vm5648 = vcmp.lt.s32.totalorder %v5647, 2
      %vm5649 = vcmp.eq.s32.totalorder %v5647, 0
      %v5650 = vxor.u32 %v5645, 2147483648
      %v5651 = vsel %vm5649, %v5637, %v5650
      %vm5652 = vcmp.eq.s32.totalorder %v5647, 2
      %v5653 = vxor.u32 %v5637, 2147483648
      %v5654 = vsel %vm5652, %v5653, %v5645
      %v5655 = vsel %vm5648, %v5651, %v5654
      %v5656 = vsel %vm5646, nan, %v5655
      %v5657 = vand.u32 2147483647, %v3805
      %vm5658 = vcmp.le.f32.partialorder %v5657, 0.7853982
      %vm5659 = vcmp.lt.s32.totalorder %v3805, 0
      %v5660 = vand.u32 %v3805, 2139095040
      %v5661 = vshrl.u32 %v5660, 23
      %v5662 = vsub.s32 %v5661, 127
      %v5663 = vand.u32 2147483647, %v3805
      %v5664 = vand.u32 %v5663, 8388607
      %v5665 = vor.u32 %v5664, 8388608
      %v5666 = vsub.s32 0, %v5665
      %v5667 = vadd.s32 %v5662, 1
      %vm5668 = vcmp.gt.s32.totalorder %v5667, 0
      %v5669 = vsel %vm5668, %v5667, 0
      %v5670 = vshrl.u32 %v5669, 5
      %v5671 = vand.u32 %v5669, 31
      %v5672 = vsub.s32 32, %v5671
      %v5673 = vshrl.u32 683565275, %v5672
      %v5674 = vshll.u32 683565275, %v5671
      %v5675 = vshrl.u32 2475754826, %v5672
      %v5676 = vor.u32 %v5674, %v5675
      %v5677 = vshll.u32 2475754826, %v5671
      %v5678 = vshrl.u32 2131351028, %v5672
      %v5679 = vor.u32 %v5677, %v5678
      %v5680 = vshll.u32 2131351028, %v5671
      %v5681 = vshrl.u32 2102212464, %v5672
      %v5682 = vor.u32 %v5680, %v5681
      %v5683 = vshll.u32 2102212464, %v5671
      %v5684 = vshrl.u32 920167782, %v5672
      %v5685 = vor.u32 %v5683, %v5684
      %v5686 = vshll.u32 920167782, %v5671
      %v5687 = vshrl.u32 1326507024, %v5672
      %v5688 = vor.u32 %v5686, %v5687
      %vm5689 = vcmp.lt.s32.totalorder %v5670, 1
      %vm5690 = vcmp.lt.s32.totalorder %v5670, 2
      %vm5691 = vcmp.lt.s32.totalorder %v5670, 3
      %vm5692 = vcmp.lt.s32.totalorder %v5670, 4
      %v5693 = vsel %vm5689, %v5673, %v5676
      %v5694 = vsel %vm5692, %v5682, 2102212464
      %v5695 = vsel %vm5691, %v5679, %v5694
      %v5696 = vsel %vm5690, %v5693, %v5695
      %v5697 = vsel %vm5689, %v5676, %v5679
      %v5698 = vsel %vm5692, %v5685, 920167782
      %v5699 = vsel %vm5691, %v5682, %v5698
      %v5700 = vsel %vm5690, %v5697, %v5699
      %v5701 = vsel %vm5689, %v5679, %v5682
      %v5702 = vsel %vm5692, %v5688, 1326507024
      %v5703 = vsel %vm5691, %v5685, %v5702
      %v5704 = vsel %vm5690, %v5701, %v5703
      %v5705 = vshll.u32 %v5665, 8
      %v5706 = vand.u32 %v5705, 65535
      %v5707 = vshrl.u32 %v5705, 16
      %v5708 = vand.u32 %v5704, 65535
      %v5709 = vshrl.u32 %v5704, 16
      %v5710 = vmul.u32 %v5706, %v5708
      %v5711 = vmul.u32 %v5706, %v5709
      %v5712 = vmul.u32 %v5707, %v5708
      %v5713 = vmul.u32 %v5707, %v5709
      %v5714 = vshll.u32 %v5711, 16
      %v5715 = vshrl.u32 %v5711, 16
      %v5716 = vshll.u32 %v5712, 16
      %v5717 = vshrl.u32 %v5712, 16
      %vm5718 = vc.u32 %v5710, %v5714
      %v5719 = vsel %vm5718, 1, 0
      %v5720 = vadd.s32 %v5710, %v5714
      %v5721 = vadd.s32 %v5713, %v5719
      %vm5722 = vc.u32 %v5720, %v5716
      %v5723 = vsel %vm5722, 1, 0
      %v5724 = vadd.s32 %v5720, %v5716
      %v5725 = vadd.s32 %v5721, %v5723
      %v5726 = vadd.s32 %v5725, %v5715
      %v5727 = vadd.s32 %v5726, %v5717
      %v5728 = vand.u32 %v5705, 65535
      %v5729 = vshrl.u32 %v5705, 16
      %v5730 = vand.u32 %v5700, 65535
      %v5731 = vshrl.u32 %v5700, 16
      %v5732 = vmul.u32 %v5728, %v5730
      %v5733 = vmul.u32 %v5728, %v5731
      %v5734 = vmul.u32 %v5729, %v5730
      %v5735 = vmul.u32 %v5729, %v5731
      %v5736 = vshll.u32 %v5733, 16
      %v5737 = vshrl.u32 %v5733, 16
      %v5738 = vshll.u32 %v5734, 16
      %v5739 = vshrl.u32 %v5734, 16
      %vm5740 = vc.u32 %v5732, %v5736
      %v5741 = vsel %vm5740, 1, 0
      %v5742 = vadd.s32 %v5732, %v5736
      %v5743 = vadd.s32 %v5735, %v5741
      %vm5744 = vc.u32 %v5742, %v5738
      %v5745 = vsel %vm5744, 1, 0
      %v5746 = vadd.s32 %v5742, %v5738
      %v5747 = vadd.s32 %v5743, %v5745
      %v5748 = vadd.s32 %v5747, %v5737
      %v5749 = vadd.s32 %v5748, %v5739
      %v5750 = vmul.u32 %v5705, %v5696
      %v5751 = vadd.s32 %v5727, %v5746
      %vm5752 = vc.u32 %v5727, %v5746
      %v5753 = vadd.s32 %v5749, 1
      %v5754 = vsel %vm5752, %v5753, %v5749
      %v5755 = vadd.s32 %v5750, %v5754
      %v5756 = vadd.s32 %v5755, 536870912
      %v5757 = vshrl.u32 %v5756, 30
      %v5758 = vshll.u32 %v5757, 30
      %v5759 = vsub.s32 %v5755, %v5758
      %vm5760 = vcmp.lt.s32.totalorder %v5759, 0
      %v5761 = vsub.s32 0, %v5759
      %v5762 = vsel %vm5760, %v5761, %v5759
      %v5763 = vclz %v5762
      %v5764 = vsub.s32 %v5763, 2
      %vm5765 = vcmp.gt.s32.totalorder 0, %v5764
      %v5766 = vsel %vm5765, 0, %v5764
      %v5767 = vsub.s32 32, %v5766
      %v5768 = vshll.u32 %v5759, %v5766
      %v5769 = vshrl.u32 %v5751, %v5767
      %v5770 = vor.u32 %v5768, %v5769
      %v5771 = vsub.s32 4294967266, %v5766
      %v5772 = vadd.s32 %v5771, 127
      %v5773 = vshll.u32 %v5772, 23
      %v5774 = vor.u32 4788187, %v5773
      %v5775 = vand.u32 2147483647, %v5774
      %v5777 = vcvt.s32.f32 %v5770
      %v5778 = vmul.f32 %v5777, %v5775
      %v5779 = vxor.u32 %v5778, 2147483648
      %v5780 = vsel %vm5659, %v5779, %v5778
      %v5781 = vsub.s32 4, %v5757
      %v5782 = vsel %vm5659, %v5781, %v5757
      %v5783 = vsel %vm5658, %v3805, %v5780
      %v5784 = vsel %vm5658, 0, %v5782
      %v5785 = vmul.f32 %v5783, %v5783
      %v5786 = vmul.f32 %v5785, -0.001358992
      %v5787 = vadd.f32 %v5786, 0.041655596
      %v5788 = vmul.f32 %v5785, %v5787
      %v5789 = vadd.f32 %v5788, -0.4999988
      %v5790 = vmul.f32 %v5785, %v5789
      %v5791 = vadd.f32 1.0, %v5790
      %v5792 = vmul.f32 %v5783, %v5783
      %v5793 = vmul.f32 %v5792, -0.00019511016
      %v5794 = vadd.f32 %v5793, 0.008332121
      %v5795 = vmul.f32 %v5792, %v5794
      %v5796 = vadd.f32 %v5795, -0.16666654
      %v5797 = vmul.f32 %v5792, %v5796
      %v5798 = vadd.f32 %v5797, 1.0
      %v5799 = vmul.f32 %v5798, %v5783
      %vm5800 = vweird.f32 %v3805
      %v5801 = vand.u32 %v5784, 3
      %vm5802 = vcmp.lt.s32.totalorder %v5801, 2
      %vm5803 = vcmp.eq.s32.totalorder %v5801, 0
      %v5804 = vxor.u32 %v5799, 2147483648
      %v5805 = vsel %vm5803, %v5791, %v5804
      %vm5806 = vcmp.eq.s32.totalorder %v5801, 2
      %v5807 = vxor.u32 %v5791, 2147483648
      %v5808 = vsel %vm5806, %v5807, %v5799
      %v5809 = vsel %vm5802, %v5805, %v5808
      %v5810 = vsel %vm5800, nan, %v5809
      %v5811 = vand.u32 2147483647, %v3806
      %vm5812 = vcmp.le.f32.partialorder %v5811, 0.7853982
      %vm5813 = vcmp.lt.s32.totalorder %v3806, 0
      %v5814 = vand.u32 %v3806, 2139095040
      %v5815 = vshrl.u32 %v5814, 23
      %v5816 = vsub.s32 %v5815, 127
      %v5817 = vand.u32 2147483647, %v3806
      %v5818 = vand.u32 %v5817, 8388607
      %v5819 = vor.u32 %v5818, 8388608
      %v5820 = vsub.s32 0, %v5819
      %v5821 = vadd.s32 %v5816, 1
      %vm5822 = vcmp.gt.s32.totalorder %v5821, 0
      %v5823 = vsel %vm5822, %v5821, 0
      %v5824 = vshrl.u32 %v5823, 5
      %v5825 = vand.u32 %v5823, 31
      %v5826 = vsub.s32 32, %v5825
      %v5827 = vshrl.u32 683565275, %v5826
      %v5828 = vshll.u32 683565275, %v5825
      %v5829 = vshrl.u32 2475754826, %v5826
      %v5830 = vor.u32 %v5828, %v5829
      %v5831 = vshll.u32 2475754826, %v5825
      %v5832 = vshrl.u32 2131351028, %v5826
      %v5833 = vor.u32 %v5831, %v5832
      %v5834 = vshll.u32 2131351028, %v5825
      %v5835 = vshrl.u32 2102212464, %v5826
      %v5836 = vor.u32 %v5834, %v5835
      %v5837 = vshll.u32 2102212464, %v5825
      %v5838 = vshrl.u32 920167782, %v5826
      %v5839 = vor.u32 %v5837, %v5838
      %v5840 = vshll.u32 920167782, %v5825
      %v5841 = vshrl.u32 1326507024, %v5826
      %v5842 = vor.u32 %v5840, %v5841
      %vm5843 = vcmp.lt.s32.totalorder %v5824, 1
      %vm5844 = vcmp.lt.s32.totalorder %v5824, 2
      %vm5845 = vcmp.lt.s32.totalorder %v5824, 3
      %vm5846 = vcmp.lt.s32.totalorder %v5824, 4
      %v5847 = vsel %vm5843, %v5827, %v5830
      %v5848 = vsel %vm5846, %v5836, 2102212464
      %v5849 = vsel %vm5845, %v5833, %v5848
      %v5850 = vsel %vm5844, %v5847, %v5849
      %v5851 = vsel %vm5843, %v5830, %v5833
      %v5852 = vsel %vm5846, %v5839, 920167782
      %v5853 = vsel %vm5845, %v5836, %v5852
      %v5854 = vsel %vm5844, %v5851, %v5853
      %v5855 = vsel %vm5843, %v5833, %v5836
      %v5856 = vsel %vm5846, %v5842, 1326507024
      %v5857 = vsel %vm5845, %v5839, %v5856
      %v5858 = vsel %vm5844, %v5855, %v5857
      %v5859 = vshll.u32 %v5819, 8
      %v5860 = vand.u32 %v5859, 65535
      %v5861 = vshrl.u32 %v5859, 16
      %v5862 = vand.u32 %v5858, 65535
      %v5863 = vshrl.u32 %v5858, 16
      %v5864 = vmul.u32 %v5860, %v5862
      %v5865 = vmul.u32 %v5860, %v5863
      %v5866 = vmul.u32 %v5861, %v5862
      %v5867 = vmul.u32 %v5861, %v5863
      %v5868 = vshll.u32 %v5865, 16
      %v5869 = vshrl.u32 %v5865, 16
      %v5870 = vshll.u32 %v5866, 16
      %v5871 = vshrl.u32 %v5866, 16
      %vm5872 = vc.u32 %v5864, %v5868
      %v5873 = vsel %vm5872, 1, 0
      %v5874 = vadd.s32 %v5864, %v5868
      %v5875 = vadd.s32 %v5867, %v5873
      %vm5876 = vc.u32 %v5874, %v5870
      %v5877 = vsel %vm5876, 1, 0
      %v5878 = vadd.s32 %v5874, %v5870
      %v5879 = vadd.s32 %v5875, %v5877
      %v5880 = vadd.s32 %v5879, %v5869
      %v5881 = vadd.s32 %v5880, %v5871
      %v5882 = vand.u32 %v5859, 65535
      %v5883 = vshrl.u32 %v5859, 16
      %v5884 = vand.u32 %v5854, 65535
      %v5885 = vshrl.u32 %v5854, 16
      %v5886 = vmul.u32 %v5882, %v5884
      %v5887 = vmul.u32 %v5882, %v5885
      %v5888 = vmul.u32 %v5883, %v5884
      %v5889 = vmul.u32 %v5883, %v5885
      %v5890 = vshll.u32 %v5887, 16
      %v5891 = vshrl.u32 %v5887, 16
      %v5892 = vshll.u32 %v5888, 16
      %v5893 = vshrl.u32 %v5888, 16
      %vm5894 = vc.u32 %v5886, %v5890
      %v5895 = vsel %vm5894, 1, 0
      %v5896 = vadd.s32 %v5886, %v5890
      %v5897 = vadd.s32 %v5889, %v5895
      %vm5898 = vc.u32 %v5896, %v5892
      %v5899 = vsel %vm5898, 1, 0
      %v5900 = vadd.s32 %v5896, %v5892
      %v5901 = vadd.s32 %v5897, %v5899
      %v5902 = vadd.s32 %v5901, %v5891
      %v5903 = vadd.s32 %v5902, %v5893
      %v5904 = vmul.u32 %v5859, %v5850
      %v5905 = vadd.s32 %v5881, %v5900
      %vm5906 = vc.u32 %v5881, %v5900
      %v5907 = vadd.s32 %v5903, 1
      %v5908 = vsel %vm5906, %v5907, %v5903
      %v5909 = vadd.s32 %v5904, %v5908
      %v5910 = vadd.s32 %v5909, 536870912
      %v5911 = vshrl.u32 %v5910, 30
      %v5912 = vshll.u32 %v5911, 30
      %v5913 = vsub.s32 %v5909, %v5912
      %vm5914 = vcmp.lt.s32.totalorder %v5913, 0
      %v5915 = vsub.s32 0, %v5913
      %v5916 = vsel %vm5914, %v5915, %v5913
      %v5917 = vclz %v5916
      %v5918 = vsub.s32 %v5917, 2
      %vm5919 = vcmp.gt.s32.totalorder 0, %v5918
      %v5920 = vsel %vm5919, 0, %v5918
      %v5921 = vsub.s32 32, %v5920
      %v5922 = vshll.u32 %v5913, %v5920
      %v5923 = vshrl.u32 %v5905, %v5921
      %v5924 = vor.u32 %v5922, %v5923
      %v5925 = vsub.s32 4294967266, %v5920
      %v5926 = vadd.s32 %v5925, 127
      %v5927 = vshll.u32 %v5926, 23
      %v5928 = vor.u32 4788187, %v5927
      %v5929 = vand.u32 2147483647, %v5928
      %v5931 = vcvt.s32.f32 %v5924
      %v5932 = vmul.f32 %v5931, %v5929
      %v5933 = vxor.u32 %v5932, 2147483648
      %v5934 = vsel %vm5813, %v5933, %v5932
      %v5935 = vsub.s32 4, %v5911
      %v5936 = vsel %vm5813, %v5935, %v5911
      %v5937 = vsel %vm5812, %v3806, %v5934
      %v5938 = vsel %vm5812, 0, %v5936
      %v5939 = vmul.f32 %v5937, %v5937
      %v5940 = vmul.f32 %v5939, -0.001358992
      %v5941 = vadd.f32 %v5940, 0.041655596
      %v5942 = vmul.f32 %v5939, %v5941
      %v5943 = vadd.f32 %v5942, -0.4999988
      %v5944 = vmul.f32 %v5939, %v5943
      %v5945 = vadd.f32 1.0, %v5944
      %v5946 = vmul.f32 %v5937, %v5937
      %v5947 = vmul.f32 %v5946, -0.00019511016
      %v5948 = vadd.f32 %v5947, 0.008332121
      %v5949 = vmul.f32 %v5946, %v5948
      %v5950 = vadd.f32 %v5949, -0.16666654
      %v5951 = vmul.f32 %v5946, %v5950
      %v5952 = vadd.f32 %v5951, 1.0
      %v5953 = vmul.f32 %v5952, %v5937
      %vm5954 = vweird.f32 %v3806
      %v5955 = vand.u32 %v5938, 3
      %vm5956 = vcmp.lt.s32.totalorder %v5955, 2
      %vm5957 = vcmp.eq.s32.totalorder %v5955, 0
      %v5958 = vxor.u32 %v5953, 2147483648
      %v5959 = vsel %vm5957, %v5945, %v5958
      %vm5960 = vcmp.eq.s32.totalorder %v5955, 2
      %v5961 = vxor.u32 %v5945, 2147483648
      %v5962 = vsel %vm5960, %v5961, %v5953
      %v5963 = vsel %vm5956, %v5959, %v5962
      %v5964 = vsel %vm5954, nan, %v5963
      %v5965 = vand.u32 2147483647, %v3807
      %vm5966 = vcmp.le.f32.partialorder %v5965, 0.7853982
      %vm5967 = vcmp.lt.s32.totalorder %v3807, 0
      %v5968 = vand.u32 %v3807, 2139095040
      %v5969 = vshrl.u32 %v5968, 23
      %v5970 = vsub.s32 %v5969, 127
      %v5971 = vand.u32 2147483647, %v3807
      %v5972 = vand.u32 %v5971, 8388607
      %v5973 = vor.u32 %v5972, 8388608
      %v5974 = vsub.s32 0, %v5973
      %v5975 = vadd.s32 %v5970, 1
      %vm5976 = vcmp.gt.s32.totalorder %v5975, 0
      %v5977 = vsel %vm5976, %v5975, 0
      %v5978 = vshrl.u32 %v5977, 5
      %v5979 = vand.u32 %v5977, 31
      %v5980 = vsub.s32 32, %v5979
      %v5981 = vshrl.u32 683565275, %v5980
      %v5982 = vshll.u32 683565275, %v5979
      %v5983 = vshrl.u32 2475754826, %v5980
      %v5984 = vor.u32 %v5982, %v5983
      %v5985 = vshll.u32 2475754826, %v5979
      %v5986 = vshrl.u32 2131351028, %v5980
      %v5987 = vor.u32 %v5985, %v5986
      %v5988 = vshll.u32 2131351028, %v5979
      %v5989 = vshrl.u32 2102212464, %v5980
      %v5990 = vor.u32 %v5988, %v5989
      %v5991 = vshll.u32 2102212464, %v5979
      %v5992 = vshrl.u32 920167782, %v5980
      %v5993 = vor.u32 %v5991, %v5992
      %v5994 = vshll.u32 920167782, %v5979
      %v5995 = vshrl.u32 1326507024, %v5980
      %v5996 = vor.u32 %v5994, %v5995
      %vm5997 = vcmp.lt.s32.totalorder %v5978, 1
      %vm5998 = vcmp.lt.s32.totalorder %v5978, 2
      %vm5999 = vcmp.lt.s32.totalorder %v5978, 3
      %vm6000 = vcmp.lt.s32.totalorder %v5978, 4
      %v6001 = vsel %vm5997, %v5981, %v5984
      %v6002 = vsel %vm6000, %v5990, 2102212464
      %v6003 = vsel %vm5999, %v5987, %v6002
      %v6004 = vsel %vm5998, %v6001, %v6003
      %v6005 = vsel %vm5997, %v5984, %v5987
      %v6006 = vsel %vm6000, %v5993, 920167782
      %v6007 = vsel %vm5999, %v5990, %v6006
      %v6008 = vsel %vm5998, %v6005, %v6007
      %v6009 = vsel %vm5997, %v5987, %v5990
      %v6010 = vsel %vm6000, %v5996, 1326507024
      %v6011 = vsel %vm5999, %v5993, %v6010
      %v6012 = vsel %vm5998, %v6009, %v6011
      %v6013 = vshll.u32 %v5973, 8
      %v6014 = vand.u32 %v6013, 65535
      %v6015 = vshrl.u32 %v6013, 16
      %v6016 = vand.u32 %v6012, 65535
      %v6017 = vshrl.u32 %v6012, 16
      %v6018 = vmul.u32 %v6014, %v6016
      %v6019 = vmul.u32 %v6014, %v6017
      %v6020 = vmul.u32 %v6015, %v6016
      %v6021 = vmul.u32 %v6015, %v6017
      %v6022 = vshll.u32 %v6019, 16
      %v6023 = vshrl.u32 %v6019, 16
      %v6024 = vshll.u32 %v6020, 16
      %v6025 = vshrl.u32 %v6020, 16
      %vm6026 = vc.u32 %v6018, %v6022
      %v6027 = vsel %vm6026, 1, 0
      %v6028 = vadd.s32 %v6018, %v6022
      %v6029 = vadd.s32 %v6021, %v6027
      %vm6030 = vc.u32 %v6028, %v6024
      %v6031 = vsel %vm6030, 1, 0
      %v6032 = vadd.s32 %v6028, %v6024
      %v6033 = vadd.s32 %v6029, %v6031
      %v6034 = vadd.s32 %v6033, %v6023
      %v6035 = vadd.s32 %v6034, %v6025
      %v6036 = vand.u32 %v6013, 65535
      %v6037 = vshrl.u32 %v6013, 16
      %v6038 = vand.u32 %v6008, 65535
      %v6039 = vshrl.u32 %v6008, 16
      %v6040 = vmul.u32 %v6036, %v6038
      %v6041 = vmul.u32 %v6036, %v6039
      %v6042 = vmul.u32 %v6037, %v6038
      %v6043 = vmul.u32 %v6037, %v6039
      %v6044 = vshll.u32 %v6041, 16
      %v6045 = vshrl.u32 %v6041, 16
      %v6046 = vshll.u32 %v6042, 16
      %v6047 = vshrl.u32 %v6042, 16
      %vm6048 = vc.u32 %v6040, %v6044
      %v6049 = vsel %vm6048, 1, 0
      %v6050 = vadd.s32 %v6040, %v6044
      %v6051 = vadd.s32 %v6043, %v6049
      %vm6052 = vc.u32 %v6050, %v6046
      %v6053 = vsel %vm6052, 1, 0
      %v6054 = vadd.s32 %v6050, %v6046
      %v6055 = vadd.s32 %v6051, %v6053
      %v6056 = vadd.s32 %v6055, %v6045
      %v6057 = vadd.s32 %v6056, %v6047
      %v6058 = vmul.u32 %v6013, %v6004
      %v6059 = vadd.s32 %v6035, %v6054
      %vm6060 = vc.u32 %v6035, %v6054
      %v6061 = vadd.s32 %v6057, 1
      %v6062 = vsel %vm6060, %v6061, %v6057
      %v6063 = vadd.s32 %v6058, %v6062
      %v6064 = vadd.s32 %v6063, 536870912
      %v6065 = vshrl.u32 %v6064, 30
      %v6066 = vshll.u32 %v6065, 30
      %v6067 = vsub.s32 %v6063, %v6066
      %vm6068 = vcmp.lt.s32.totalorder %v6067, 0
      %v6069 = vsub.s32 0, %v6067
      %v6070 = vsel %vm6068, %v6069, %v6067
      %v6071 = vclz %v6070
      %v6072 = vsub.s32 %v6071, 2
      %vm6073 = vcmp.gt.s32.totalorder 0, %v6072
      %v6074 = vsel %vm6073, 0, %v6072
      %v6075 = vsub.s32 32, %v6074
      %v6076 = vshll.u32 %v6067, %v6074
      %v6077 = vshrl.u32 %v6059, %v6075
      %v6078 = vor.u32 %v6076, %v6077
      %v6079 = vsub.s32 4294967266, %v6074
      %v6080 = vadd.s32 %v6079, 127
      %v6081 = vshll.u32 %v6080, 23
      %v6082 = vor.u32 4788187, %v6081
      %v6083 = vand.u32 2147483647, %v6082
      %v6085 = vcvt.s32.f32 %v6078
      %v6086 = vmul.f32 %v6085, %v6083
      %v6087 = vxor.u32 %v6086, 2147483648
      %v6088 = vsel %vm5967, %v6087, %v6086
      %v6089 = vsub.s32 4, %v6065
      %v6090 = vsel %vm5967, %v6089, %v6065
      %v6091 = vsel %vm5966, %v3807, %v6088
      %v6092 = vsel %vm5966, 0, %v6090
      %v6093 = vmul.f32 %v6091, %v6091
      %v6094 = vmul.f32 %v6093, -0.001358992
      %v6095 = vadd.f32 %v6094, 0.041655596
      %v6096 = vmul.f32 %v6093, %v6095
      %v6097 = vadd.f32 %v6096, -0.4999988
      %v6098 = vmul.f32 %v6093, %v6097
      %v6099 = vadd.f32 1.0, %v6098
      %v6100 = vmul.f32 %v6091, %v6091
      %v6101 = vmul.f32 %v6100, -0.00019511016
      %v6102 = vadd.f32 %v6101, 0.008332121
      %v6103 = vmul.f32 %v6100, %v6102
      %v6104 = vadd.f32 %v6103, -0.16666654
      %v6105 = vmul.f32 %v6100, %v6104
      %v6106 = vadd.f32 %v6105, 1.0
      %v6107 = vmul.f32 %v6106, %v6091
      %vm6108 = vweird.f32 %v3807
      %v6109 = vand.u32 %v6092, 3
      %vm6110 = vcmp.lt.s32.totalorder %v6109, 2
      %vm6111 = vcmp.eq.s32.totalorder %v6109, 0
      %v6112 = vxor.u32 %v6107, 2147483648
      %v6113 = vsel %vm6111, %v6099, %v6112
      %vm6114 = vcmp.eq.s32.totalorder %v6109, 2
      %v6115 = vxor.u32 %v6099, 2147483648
      %v6116 = vsel %vm6114, %v6115, %v6107
      %v6117 = vsel %vm6110, %v6113, %v6116
      %v6118 = vsel %vm6108, nan, %v6117
      %v6119 = vand.u32 2147483647, %v3808
      %vm6120 = vcmp.le.f32.partialorder %v6119, 0.7853982
      %vm6121 = vcmp.lt.s32.totalorder %v3808, 0
      %v6122 = vand.u32 %v3808, 2139095040
      %v6123 = vshrl.u32 %v6122, 23
      %v6124 = vsub.s32 %v6123, 127
      %v6125 = vand.u32 2147483647, %v3808
      %v6126 = vand.u32 %v6125, 8388607
      %v6127 = vor.u32 %v6126, 8388608
      %v6128 = vsub.s32 0, %v6127
      %v6129 = vadd.s32 %v6124, 1
      %vm6130 = vcmp.gt.s32.totalorder %v6129, 0
      %v6131 = vsel %vm6130, %v6129, 0
      %v6132 = vshrl.u32 %v6131, 5
      %v6133 = vand.u32 %v6131, 31
      %v6134 = vsub.s32 32, %v6133
      %v6135 = vshrl.u32 683565275, %v6134
      %v6136 = vshll.u32 683565275, %v6133
      %v6137 = vshrl.u32 2475754826, %v6134
      %v6138 = vor.u32 %v6136, %v6137
      %v6139 = vshll.u32 2475754826, %v6133
      %v6140 = vshrl.u32 2131351028, %v6134
      %v6141 = vor.u32 %v6139, %v6140
      %v6142 = vshll.u32 2131351028, %v6133
      %v6143 = vshrl.u32 2102212464, %v6134
      %v6144 = vor.u32 %v6142, %v6143
      %v6145 = vshll.u32 2102212464, %v6133
      %v6146 = vshrl.u32 920167782, %v6134
      %v6147 = vor.u32 %v6145, %v6146
      %v6148 = vshll.u32 920167782, %v6133
      %v6149 = vshrl.u32 1326507024, %v6134
      %v6150 = vor.u32 %v6148, %v6149
      %vm6151 = vcmp.lt.s32.totalorder %v6132, 1
      %vm6152 = vcmp.lt.s32.totalorder %v6132, 2
      %vm6153 = vcmp.lt.s32.totalorder %v6132, 3
      %vm6154 = vcmp.lt.s32.totalorder %v6132, 4
      %v6155 = vsel %vm6151, %v6135, %v6138
      %v6156 = vsel %vm6154, %v6144, 2102212464
      %v6157 = vsel %vm6153, %v6141, %v6156
      %v6158 = vsel %vm6152, %v6155, %v6157
      %v6159 = vsel %vm6151, %v6138, %v6141
      %v6160 = vsel %vm6154, %v6147, 920167782
      %v6161 = vsel %vm6153, %v6144, %v6160
      %v6162 = vsel %vm6152, %v6159, %v6161
      %v6163 = vsel %vm6151, %v6141, %v6144
      %v6164 = vsel %vm6154, %v6150, 1326507024
      %v6165 = vsel %vm6153, %v6147, %v6164
      %v6166 = vsel %vm6152, %v6163, %v6165
      %v6167 = vshll.u32 %v6127, 8
      %v6168 = vand.u32 %v6167, 65535
      %v6169 = vshrl.u32 %v6167, 16
      %v6170 = vand.u32 %v6166, 65535
      %v6171 = vshrl.u32 %v6166, 16
      %v6172 = vmul.u32 %v6168, %v6170
      %v6173 = vmul.u32 %v6168, %v6171
      %v6174 = vmul.u32 %v6169, %v6170
      %v6175 = vmul.u32 %v6169, %v6171
      %v6176 = vshll.u32 %v6173, 16
      %v6177 = vshrl.u32 %v6173, 16
      %v6178 = vshll.u32 %v6174, 16
      %v6179 = vshrl.u32 %v6174, 16
      %vm6180 = vc.u32 %v6172, %v6176
      %v6181 = vsel %vm6180, 1, 0
      %v6182 = vadd.s32 %v6172, %v6176
      %v6183 = vadd.s32 %v6175, %v6181
      %vm6184 = vc.u32 %v6182, %v6178
      %v6185 = vsel %vm6184, 1, 0
      %v6186 = vadd.s32 %v6182, %v6178
      %v6187 = vadd.s32 %v6183, %v6185
      %v6188 = vadd.s32 %v6187, %v6177
      %v6189 = vadd.s32 %v6188, %v6179
      %v6190 = vand.u32 %v6167, 65535
      %v6191 = vshrl.u32 %v6167, 16
      %v6192 = vand.u32 %v6162, 65535
      %v6193 = vshrl.u32 %v6162, 16
      %v6194 = vmul.u32 %v6190, %v6192
      %v6195 = vmul.u32 %v6190, %v6193
      %v6196 = vmul.u32 %v6191, %v6192
      %v6197 = vmul.u32 %v6191, %v6193
      %v6198 = vshll.u32 %v6195, 16
      %v6199 = vshrl.u32 %v6195, 16
      %v6200 = vshll.u32 %v6196, 16
      %v6201 = vshrl.u32 %v6196, 16
      %vm6202 = vc.u32 %v6194, %v6198
      %v6203 = vsel %vm6202, 1, 0
      %v6204 = vadd.s32 %v6194, %v6198
      %v6205 = vadd.s32 %v6197, %v6203
      %vm6206 = vc.u32 %v6204, %v6200
      %v6207 = vsel %vm6206, 1, 0
      %v6208 = vadd.s32 %v6204, %v6200
      %v6209 = vadd.s32 %v6205, %v6207
      %v6210 = vadd.s32 %v6209, %v6199
      %v6211 = vadd.s32 %v6210, %v6201
      %v6212 = vmul.u32 %v6167, %v6158
      %v6213 = vadd.s32 %v6189, %v6208
      %vm6214 = vc.u32 %v6189, %v6208
      %v6215 = vadd.s32 %v6211, 1
      %v6216 = vsel %vm6214, %v6215, %v6211
      %v6217 = vadd.s32 %v6212, %v6216
      %v6218 = vadd.s32 %v6217, 536870912
      %v6219 = vshrl.u32 %v6218, 30
      %v6220 = vshll.u32 %v6219, 30
      %v6221 = vsub.s32 %v6217, %v6220
      %vm6222 = vcmp.lt.s32.totalorder %v6221, 0
      %v6223 = vsub.s32 0, %v6221
      %v6224 = vsel %vm6222, %v6223, %v6221
      %v6225 = vclz %v6224
      %v6226 = vsub.s32 %v6225, 2
      %vm6227 = vcmp.gt.s32.totalorder 0, %v6226
      %v6228 = vsel %vm6227, 0, %v6226
      %v6229 = vsub.s32 32, %v6228
      %v6230 = vshll.u32 %v6221, %v6228
      %v6231 = vshrl.u32 %v6213, %v6229
      %v6232 = vor.u32 %v6230, %v6231
      %v6233 = vsub.s32 4294967266, %v6228
      %v6234 = vadd.s32 %v6233, 127
      %v6235 = vshll.u32 %v6234, 23
      %v6236 = vor.u32 4788187, %v6235
      %v6237 = vand.u32 2147483647, %v6236
      %v6239 = vcvt.s32.f32 %v6232
      %v6240 = vmul.f32 %v6239, %v6237
      %v6241 = vxor.u32 %v6240, 2147483648
      %v6242 = vsel %vm6121, %v6241, %v6240
      %v6243 = vsub.s32 4, %v6219
      %v6244 = vsel %vm6121, %v6243, %v6219
      %v6245 = vsel %vm6120, %v3808, %v6242
      %v6246 = vsel %vm6120, 0, %v6244
      %v6247 = vmul.f32 %v6245, %v6245
      %v6248 = vmul.f32 %v6247, -0.001358992
      %v6249 = vadd.f32 %v6248, 0.041655596
      %v6250 = vmul.f32 %v6247, %v6249
      %v6251 = vadd.f32 %v6250, -0.4999988
      %v6252 = vmul.f32 %v6247, %v6251
      %v6253 = vadd.f32 1.0, %v6252
      %v6254 = vmul.f32 %v6245, %v6245
      %v6255 = vmul.f32 %v6254, -0.00019511016
      %v6256 = vadd.f32 %v6255, 0.008332121
      %v6257 = vmul.f32 %v6254, %v6256
      %v6258 = vadd.f32 %v6257, -0.16666654
      %v6259 = vmul.f32 %v6254, %v6258
      %v6260 = vadd.f32 %v6259, 1.0
      %v6261 = vmul.f32 %v6260, %v6245
      %vm6262 = vweird.f32 %v3808
      %v6263 = vand.u32 %v6246, 3
      %vm6264 = vcmp.lt.s32.totalorder %v6263, 2
      %vm6265 = vcmp.eq.s32.totalorder %v6263, 0
      %v6266 = vxor.u32 %v6261, 2147483648
      %v6267 = vsel %vm6265, %v6253, %v6266
      %vm6268 = vcmp.eq.s32.totalorder %v6263, 2
      %v6269 = vxor.u32 %v6253, 2147483648
      %v6270 = vsel %vm6268, %v6269, %v6261
      %v6271 = vsel %vm6264, %v6267, %v6270
      %v6272 = vsel %vm6262, nan, %v6271
      %v6273 = vsel %vm3365, %v3793, %v3962
      %v6274 = vsel %vm3365, %v3794, %v4116
      %v6275 = vsel %vm3365, %v3795, %v4270
      %v6276 = vsel %vm3365, %v3796, %v4424
      %v6277 = vsel %vm3365, %v3797, %v4578
      %v6278 = vsel %vm3365, %v3798, %v4732
      %v6279 = vsel %vm3365, %v3799, %v4886
      %v6280 = vsel %vm3365, %v3800, %v5040
      %v6281 = vsel %vm3365, %v3801, %v5194
      %v6282 = vsel %vm3365, %v3802, %v5348
      %v6283 = vsel %vm3365, %v3803, %v5502
      %v6284 = vsel %vm3365, %v3804, %v5656
      %v6285 = vsel %vm3365, %v3805, %v5810
      %v6286 = vsel %vm3365, %v3806, %v5964
      %v6287 = vsel %vm3365, %v3807, %v6118
      %v6288 = vsel %vm3365, %v3808, %v6272
      %v6289 = vmul.f32 %v648, %v3382
      %v6290 = vmul.f32 %v651, %v3382
      %v6291 = vmul.f32 %v654, %v3382
      %v6292 = vmul.f32 %v657, %v3382
      %v6293 = vmul.f32 %v660, %v3382
      %v6294 = vmul.f32 %v663, %v3382
      %v6295 = vmul.f32 %v666, %v3382
      %v6296 = vmul.f32 %v669, %v3382
      %v6297 = vmul.f32 %v672, %v3382
      %v6298 = vmul.f32 %v675, %v3382
      %v6299 = vmul.f32 %v678, %v3382
      %v6300 = vmul.f32 %v681, %v3382
      %v6301 = vmul.f32 %v684, %v3382
      %v6302 = vmul.f32 %v687, %v3382
      %v6303 = vmul.f32 %v690, %v3382
      %v6304 = vmul.f32 %v693, %v3382
      %v6305 = vadd.f32 %v6289, %v3399
      %v6306 = vadd.f32 %v6290, %v3399
      %v6307 = vadd.f32 %v6291, %v3399
      %v6308 = vadd.f32 %v6292, %v3399
      %v6309 = vadd.f32 %v6293, %v3399
      %v6310 = vadd.f32 %v6294, %v3399
      %v6311 = vadd.f32 %v6295, %v3399
      %v6312 = vadd.f32 %v6296, %v3399
      %v6313 = vadd.f32 %v6297, %v3399
      %v6314 = vadd.f32 %v6298, %v3399
      %v6315 = vadd.f32 %v6299, %v3399
      %v6316 = vadd.f32 %v6300, %v3399
      %v6317 = vadd.f32 %v6301, %v3399
      %v6318 = vadd.f32 %v6302, %v3399
      %v6319 = vadd.f32 %v6303, %v3399
      %v6320 = vadd.f32 %v6304, %v3399
      %v6321 = vadd.f32 %v6305, %v6273
      %v6322 = vadd.f32 %v6306, %v6274
      %v6323 = vadd.f32 %v6307, %v6275
      %v6324 = vadd.f32 %v6308, %v6276
      %v6325 = vadd.f32 %v6309, %v6277
      %v6326 = vadd.f32 %v6310, %v6278
      %v6327 = vadd.f32 %v6311, %v6279
      %v6328 = vadd.f32 %v6312, %v6280
      %v6329 = vadd.f32 %v6313, %v6281
      %v6330 = vadd.f32 %v6314, %v6282
      %v6331 = vadd.f32 %v6315, %v6283
      %v6332 = vadd.f32 %v6316, %v6284
      %v6333 = vadd.f32 %v6317, %v6285
      %v6334 = vadd.f32 %v6318, %v6286
      %v6335 = vadd.f32 %v6319, %v6287
      %v6336 = vadd.f32 %v6320, %v6288
      %v6337 = vmax.f32 %v6321, 0.0
      %v6338 = vmax.f32 %v6322, 0.0
      %v6339 = vmax.f32 %v6323, 0.0
      %v6340 = vmax.f32 %v6324, 0.0
      %v6341 = vmax.f32 %v6325, 0.0
      %v6342 = vmax.f32 %v6326, 0.0
      %v6343 = vmax.f32 %v6327, 0.0
      %v6344 = vmax.f32 %v6328, 0.0
      %v6345 = vmax.f32 %v6329, 0.0
      %v6346 = vmax.f32 %v6330, 0.0
      %v6347 = vmax.f32 %v6331, 0.0
      %v6348 = vmax.f32 %v6332, 0.0
      %v6349 = vmax.f32 %v6333, 0.0
      %v6350 = vmax.f32 %v6334, 0.0
      %v6351 = vmax.f32 %v6335, 0.0
      %v6352 = vmax.f32 %v6336, 0.0
      %v6353 = vmul.f32 %v6337, %v6337
      %v6354 = vmul.f32 %v6338, %v6338
      %v6355 = vmul.f32 %v6339, %v6339
      %v6356 = vmul.f32 %v6340, %v6340
      %v6357 = vmul.f32 %v6341, %v6341
      %v6358 = vmul.f32 %v6342, %v6342
      %v6359 = vmul.f32 %v6343, %v6343
      %v6360 = vmul.f32 %v6344, %v6344
      %v6361 = vmul.f32 %v6345, %v6345
      %v6362 = vmul.f32 %v6346, %v6346
      %v6363 = vmul.f32 %v6347, %v6347
      %v6364 = vmul.f32 %v6348, %v6348
      %v6365 = vmul.f32 %v6349, %v6349
      %v6366 = vmul.f32 %v6350, %v6350
      %v6367 = vmul.f32 %v6351, %v6351
      %v6368 = vmul.f32 %v6352, %v6352
      %v6369 = vpack.c.bf16 %v6354, %v6353
      %v6370 = vpack.c.bf16 %v6356, %v6355
      %v6371 = vpack.c.bf16 %v6358, %v6357
      %v6372 = vpack.c.bf16 %v6360, %v6359
      %v6373 = vpack.c.bf16 %v6362, %v6361
      %v6374 = vpack.c.bf16 %v6364, %v6363
      %v6375 = vpack.c.bf16 %v6366, %v6365
      %v6376 = vpack.c.bf16 %v6368, %v6367
      %6377 = vmatpush.bf16.msra.mxu0 %v3511
      %6378 = vmatpush.bf16.msra.mxu0 %v3510
      %6379 = vmatpush.bf16.msra.mxu0 %v3509
      %6380 = vmatpush.bf16.msra.mxu0 %v3508
      %6381 = vmatpush.bf16.msra.mxu0 %v3507
      %6382 = vmatpush.bf16.msra.mxu0 %v3506
      %6383 = vmatpush.bf16.msra.mxu0 %v3505
      %6384 = vmatpush.bf16.msra.mxu0 %v3504
      %6385 = vmatmul.bf16.gmra.mxu0 %v6369
      %v6386 = vpop.f32.mrf.mxu0
      %v6387 = vadd.f32 0.0, %v6386
      %v6388 = vpop.f32.mrf.mxu0
      %v6389 = vadd.f32 0.0, %v6388
      %6390 = vmatmul.bf16.gmra.mxu0 %v6370
      %v6391 = vpop.f32.mrf.mxu0
      %v6392 = vadd.f32 0.0, %v6391
      %v6393 = vpop.f32.mrf.mxu0
      %v6394 = vadd.f32 0.0, %v6393
      %6395 = vmatmul.bf16.gmra.mxu0 %v6371
      %v6396 = vpop.f32.mrf.mxu0
      %v6397 = vadd.f32 0.0, %v6396
      %v6398 = vpop.f32.mrf.mxu0
      %v6399 = vadd.f32 0.0, %v6398
      %6400 = vmatmul.bf16.gmra.mxu0 %v6372
      %v6401 = vpop.f32.mrf.mxu0
      %v6402 = vadd.f32 0.0, %v6401
      %v6403 = vpop.f32.mrf.mxu0
      %v6404 = vadd.f32 0.0, %v6403
      %6405 = vmatmul.bf16.gmra.mxu0 %v6373
      %v6406 = vpop.f32.mrf.mxu0
      %v6407 = vadd.f32 0.0, %v6406
      %v6408 = vpop.f32.mrf.mxu0
      %v6409 = vadd.f32 0.0, %v6408
      %6410 = vmatmul.bf16.gmra.mxu0 %v6374
      %v6411 = vpop.f32.mrf.mxu0
      %v6412 = vadd.f32 0.0, %v6411
      %v6413 = vpop.f32.mrf.mxu0
      %v6414 = vadd.f32 0.0, %v6413
      %6415 = vmatmul.bf16.gmra.mxu0 %v6375
      %v6416 = vpop.f32.mrf.mxu0
      %v6417 = vadd.f32 0.0, %v6416
      %v6418 = vpop.f32.mrf.mxu0
      %v6419 = vadd.f32 0.0, %v6418
      %6420 = vmatmul.bf16.gmra.mxu0 %v6376
      %v6421 = vpop.f32.mrf.mxu0
      %v6422 = vadd.f32 0.0, %v6421
      %v6423 = vpop.f32.mrf.mxu0
      %v6424 = vadd.f32 0.0, %v6423
      %6425 = vdwg.mxu0
      %v6426 = vmax.f32 %v6387, 1e-24
      %v6427 = vmax.f32 %v6389, 1e-24
      %v6428 = vmax.f32 %v6392, 1e-24
      %v6429 = vmax.f32 %v6394, 1e-24
      %v6430 = vmax.f32 %v6397, 1e-24
      %v6431 = vmax.f32 %v6399, 1e-24
      %v6432 = vmax.f32 %v6402, 1e-24
      %v6433 = vmax.f32 %v6404, 1e-24
      %v6434 = vmax.f32 %v6407, 1e-24
      %v6435 = vmax.f32 %v6409, 1e-24
      %v6436 = vmax.f32 %v6412, 1e-24
      %v6437 = vmax.f32 %v6414, 1e-24
      %v6438 = vmax.f32 %v6417, 1e-24
      %v6439 = vmax.f32 %v6419, 1e-24
      %v6440 = vmax.f32 %v6422, 1e-24
      %v6441 = vmax.f32 %v6424, 1e-24
      %v6442 = vrsqrt.pop %v6426
      %v6443 = vmul.f32 %v6442, %v6426
      %v6444 = vmul.f32 %v6443, %v6442
      %v6445 = vmul.f32 0.5, %v6444
      %v6446 = vsub.f32 1.5, %v6445
      %v6447 = vmul.f32 %v6442, %v6446
      %vm6448 = vweird.f32 %v6426
      %vm6449 = vweird.f32 %v6442
      %vm6450 = vmor %vm6448, %vm6449
      %v6451 = vsel %vm6450, %v6442, %v6447
      %v6452 = vrsqrt.pop %v6427
      %v6453 = vmul.f32 %v6452, %v6427
      %v6454 = vmul.f32 %v6453, %v6452
      %v6455 = vmul.f32 0.5, %v6454
      %v6456 = vsub.f32 1.5, %v6455
      %v6457 = vmul.f32 %v6452, %v6456
      %vm6458 = vweird.f32 %v6427
      %vm6459 = vweird.f32 %v6452
      %vm6460 = vmor %vm6458, %vm6459
      %v6461 = vsel %vm6460, %v6452, %v6457
      %v6462 = vrsqrt.pop %v6428
      %v6463 = vmul.f32 %v6462, %v6428
      %v6464 = vmul.f32 %v6463, %v6462
      %v6465 = vmul.f32 0.5, %v6464
      %v6466 = vsub.f32 1.5, %v6465
      %v6467 = vmul.f32 %v6462, %v6466
      %vm6468 = vweird.f32 %v6428
      %vm6469 = vweird.f32 %v6462
      %vm6470 = vmor %vm6468, %vm6469
      %v6471 = vsel %vm6470, %v6462, %v6467
      %v6472 = vrsqrt.pop %v6429
      %v6473 = vmul.f32 %v6472, %v6429
      %v6474 = vmul.f32 %v6473, %v6472
      %v6475 = vmul.f32 0.5, %v6474
      %v6476 = vsub.f32 1.5, %v6475
      %v6477 = vmul.f32 %v6472, %v6476
      %vm6478 = vweird.f32 %v6429
      %vm6479 = vweird.f32 %v6472
      %vm6480 = vmor %vm6478, %vm6479
      %v6481 = vsel %vm6480, %v6472, %v6477
      %v6482 = vrsqrt.pop %v6430
      %v6483 = vmul.f32 %v6482, %v6430
      %v6484 = vmul.f32 %v6483, %v6482
      %v6485 = vmul.f32 0.5, %v6484
      %v6486 = vsub.f32 1.5, %v6485
      %v6487 = vmul.f32 %v6482, %v6486
      %vm6488 = vweird.f32 %v6430
      %vm6489 = vweird.f32 %v6482
      %vm6490 = vmor %vm6488, %vm6489
      %v6491 = vsel %vm6490, %v6482, %v6487
      %v6492 = vrsqrt.pop %v6431
      %v6493 = vmul.f32 %v6492, %v6431
      %v6494 = vmul.f32 %v6493, %v6492
      %v6495 = vmul.f32 0.5, %v6494
      %v6496 = vsub.f32 1.5, %v6495
      %v6497 = vmul.f32 %v6492, %v6496
      %vm6498 = vweird.f32 %v6431
      %vm6499 = vweird.f32 %v6492
      %vm6500 = vmor %vm6498, %vm6499
      %v6501 = vsel %vm6500, %v6492, %v6497
      %v6502 = vrsqrt.pop %v6432
      %v6503 = vmul.f32 %v6502, %v6432
      %v6504 = vmul.f32 %v6503, %v6502
      %v6505 = vmul.f32 0.5, %v6504
      %v6506 = vsub.f32 1.5, %v6505
      %v6507 = vmul.f32 %v6502, %v6506
      %vm6508 = vweird.f32 %v6432
      %vm6509 = vweird.f32 %v6502
      %vm6510 = vmor %vm6508, %vm6509
      %v6511 = vsel %vm6510, %v6502, %v6507
      %v6512 = vrsqrt.pop %v6433
      %v6513 = vmul.f32 %v6512, %v6433
      %v6514 = vmul.f32 %v6513, %v6512
      %v6515 = vmul.f32 0.5, %v6514
      %v6516 = vsub.f32 1.5, %v6515
      %v6517 = vmul.f32 %v6512, %v6516
      %vm6518 = vweird.f32 %v6433
      %vm6519 = vweird.f32 %v6512
      %vm6520 = vmor %vm6518, %vm6519
      %v6521 = vsel %vm6520, %v6512, %v6517
      %v6522 = vrsqrt.pop %v6434
      %v6523 = vmul.f32 %v6522, %v6434
      %v6524 = vmul.f32 %v6523, %v6522
      %v6525 = vmul.f32 0.5, %v6524
      %v6526 = vsub.f32 1.5, %v6525
      %v6527 = vmul.f32 %v6522, %v6526
      %vm6528 = vweird.f32 %v6434
      %vm6529 = vweird.f32 %v6522
      %vm6530 = vmor %vm6528, %vm6529
      %v6531 = vsel %vm6530, %v6522, %v6527
      %v6532 = vrsqrt.pop %v6435
      %v6533 = vmul.f32 %v6532, %v6435
      %v6534 = vmul.f32 %v6533, %v6532
      %v6535 = vmul.f32 0.5, %v6534
      %v6536 = vsub.f32 1.5, %v6535
      %v6537 = vmul.f32 %v6532, %v6536
      %vm6538 = vweird.f32 %v6435
      %vm6539 = vweird.f32 %v6532
      %vm6540 = vmor %vm6538, %vm6539
      %v6541 = vsel %vm6540, %v6532, %v6537
      %v6542 = vrsqrt.pop %v6436
      %v6543 = vmul.f32 %v6542, %v6436
      %v6544 = vmul.f32 %v6543, %v6542
      %v6545 = vmul.f32 0.5, %v6544
      %v6546 = vsub.f32 1.5, %v6545
      %v6547 = vmul.f32 %v6542, %v6546
      %vm6548 = vweird.f32 %v6436
      %vm6549 = vweird.f32 %v6542
      %vm6550 = vmor %vm6548, %vm6549
      %v6551 = vsel %vm6550, %v6542, %v6547
      %v6552 = vrsqrt.pop %v6437
      %v6553 = vmul.f32 %v6552, %v6437
      %v6554 = vmul.f32 %v6553, %v6552
      %v6555 = vmul.f32 0.5, %v6554
      %v6556 = vsub.f32 1.5, %v6555
      %v6557 = vmul.f32 %v6552, %v6556
      %vm6558 = vweird.f32 %v6437
      %vm6559 = vweird.f32 %v6552
      %vm6560 = vmor %vm6558, %vm6559
      %v6561 = vsel %vm6560, %v6552, %v6557
      %v6562 = vrsqrt.pop %v6438
      %v6563 = vmul.f32 %v6562, %v6438
      %v6564 = vmul.f32 %v6563, %v6562
      %v6565 = vmul.f32 0.5, %v6564
      %v6566 = vsub.f32 1.5, %v6565
      %v6567 = vmul.f32 %v6562, %v6566
      %vm6568 = vweird.f32 %v6438
      %vm6569 = vweird.f32 %v6562
      %vm6570 = vmor %vm6568, %vm6569
      %v6571 = vsel %vm6570, %v6562, %v6567
      %v6572 = vrsqrt.pop %v6439
      %v6573 = vmul.f32 %v6572, %v6439
      %v6574 = vmul.f32 %v6573, %v6572
      %v6575 = vmul.f32 0.5, %v6574
      %v6576 = vsub.f32 1.5, %v6575
      %v6577 = vmul.f32 %v6572, %v6576
      %vm6578 = vweird.f32 %v6439
      %vm6579 = vweird.f32 %v6572
      %vm6580 = vmor %vm6578, %vm6579
      %v6581 = vsel %vm6580, %v6572, %v6577
      %v6582 = vrsqrt.pop %v6440
      %v6583 = vmul.f32 %v6582, %v6440
      %v6584 = vmul.f32 %v6583, %v6582
      %v6585 = vmul.f32 0.5, %v6584
      %v6586 = vsub.f32 1.5, %v6585
      %v6587 = vmul.f32 %v6582, %v6586
      %vm6588 = vweird.f32 %v6440
      %vm6589 = vweird.f32 %v6582
      %vm6590 = vmor %vm6588, %vm6589
      %v6591 = vsel %vm6590, %v6582, %v6587
      %v6592 = vrsqrt.pop %v6441
      %v6593 = vmul.f32 %v6592, %v6441
      %v6594 = vmul.f32 %v6593, %v6592
      %v6595 = vmul.f32 0.5, %v6594
      %v6596 = vsub.f32 1.5, %v6595
      %v6597 = vmul.f32 %v6592, %v6596
      %vm6598 = vweird.f32 %v6441
      %vm6599 = vweird.f32 %v6592
      %vm6600 = vmor %vm6598, %vm6599
      %v6601 = vsel %vm6600, %v6592, %v6597
      %v6602 = vmul.f32 %v6337, %v6451
      %v6603 = vmul.f32 %v6338, %v6461
      %v6604 = vmul.f32 %v6339, %v6471
      %v6605 = vmul.f32 %v6340, %v6481
      %v6606 = vmul.f32 %v6341, %v6491
      %v6607 = vmul.f32 %v6342, %v6501
      %v6608 = vmul.f32 %v6343, %v6511
      %v6609 = vmul.f32 %v6344, %v6521
      %v6610 = vmul.f32 %v6345, %v6531
      %v6611 = vmul.f32 %v6346, %v6541
      %v6612 = vmul.f32 %v6347, %v6551
      %v6613 = vmul.f32 %v6348, %v6561
      %v6614 = vmul.f32 %v6349, %v6571
      %v6615 = vmul.f32 %v6350, %v6581
      %v6616 = vmul.f32 %v6351, %v6591
      %v6617 = vmul.f32 %v6352, %v6601
      %v6618 = vpack.c.bf16 %v3746, %v3745
      %v6619 = vpack.c.bf16 %v3748, %v3747
      %v6620 = vpack.c.bf16 %v3750, %v3749
      %v6621 = vpack.c.bf16 %v3752, %v3751
      %v6622 = vpack.c.bf16 %v3754, %v3753
      %v6623 = vpack.c.bf16 %v3756, %v3755
      %v6624 = vpack.c.bf16 %v3758, %v3757
      %v6625 = vpack.c.bf16 %v3760, %v3759
      %v6626 = vld [vmem:[%s6] sm:$0xff]
      %v6627 = vld [vmem:[%s6 + $0x8] sm:$0xff]
      %v6628 = vld [vmem:[%s6 + $0x10] sm:$0xff]
      %v6629 = vld [vmem:[%s6 + $0x18] sm:$0xff]
      %v6630 = vld [vmem:[%s6 + $0x20] sm:$0xff]
      %v6631 = vld [vmem:[%s6 + $0x28] sm:$0xff]
      %v6632 = vld [vmem:[%s6 + $0x30] sm:$0xff]
      %v6633 = vld [vmem:[%s6 + $0x38] sm:$0xff]
      %v6634 = vld [vmem:[%s6 + $0x40] sm:$0xff]
      %v6635 = vld [vmem:[%s6 + $0x48] sm:$0xff]
      %v6636 = vld [vmem:[%s6 + $0x50] sm:$0xff]
      %v6637 = vld [vmem:[%s6 + $0x58] sm:$0xff]
      %v6638 = vld [vmem:[%s6 + $0x60] sm:$0xff]
      %v6639 = vld [vmem:[%s6 + $0x68] sm:$0xff]
      %v6640 = vld [vmem:[%s6 + $0x70] sm:$0xff]
      %v6641 = vld [vmem:[%s6 + $0x78] sm:$0xff]
      %v6658 = vunpack.c.l.b16 %v6626
      %v6659 = vunpack.c.h.b16 %v6626
      %v6660 = vunpack.c.l.b16 %v6627
      %v6661 = vunpack.c.h.b16 %v6627
      %v6662 = vunpack.c.l.b16 %v6628
      %v6663 = vunpack.c.h.b16 %v6628
      %v6664 = vunpack.c.l.b16 %v6629
      %v6665 = vunpack.c.h.b16 %v6629
      %v6666 = vunpack.c.l.b16 %v6630
      %v6667 = vunpack.c.h.b16 %v6630
      %v6668 = vunpack.c.l.b16 %v6631
      %v6669 = vunpack.c.h.b16 %v6631
      %v6670 = vunpack.c.l.b16 %v6632
      %v6671 = vunpack.c.h.b16 %v6632
      %v6672 = vunpack.c.l.b16 %v6633
      %v6673 = vunpack.c.h.b16 %v6633
      %v6674 = vunpack.c.l.b16 %v6634
      %v6675 = vunpack.c.h.b16 %v6634
      %v6676 = vunpack.c.l.b16 %v6635
      %v6677 = vunpack.c.h.b16 %v6635
      %v6678 = vunpack.c.l.b16 %v6636
      %v6679 = vunpack.c.h.b16 %v6636
      %v6680 = vunpack.c.l.b16 %v6637
      %v6681 = vunpack.c.h.b16 %v6637
      %v6682 = vunpack.c.l.b16 %v6638
      %v6683 = vunpack.c.h.b16 %v6638
      %v6684 = vunpack.c.l.b16 %v6639
      %v6685 = vunpack.c.h.b16 %v6639
      %v6686 = vunpack.c.l.b16 %v6640
      %v6687 = vunpack.c.h.b16 %v6640
      %v6688 = vunpack.c.l.b16 %v6641
      %v6689 = vunpack.c.h.b16 %v6641
      %v6690 = vpack.c.b16 %v6660, %v6658
      %v6691 = vpack.c.b16 %v6661, %v6659
      %v6692 = vpack.c.b16 %v6664, %v6662
      %v6693 = vpack.c.b16 %v6665, %v6663
      %v6694 = vpack.c.b16 %v6668, %v6666
      %v6695 = vpack.c.b16 %v6669, %v6667
      %v6696 = vpack.c.b16 %v6672, %v6670
      %v6697 = vpack.c.b16 %v6673, %v6671
      %v6698 = vpack.c.b16 %v6676, %v6674
      %v6699 = vpack.c.b16 %v6677, %v6675
      %v6700 = vpack.c.b16 %v6680, %v6678
      %v6701 = vpack.c.b16 %v6681, %v6679
      %v6702 = vpack.c.b16 %v6684, %v6682
      %v6703 = vpack.c.b16 %v6685, %v6683
      %v6704 = vpack.c.b16 %v6688, %v6686
      %v6705 = vpack.c.b16 %v6689, %v6687
      %6722 = vmatpush.bf16.msra.mxu0 %v6704
      %6723 = vmatpush.bf16.msra.mxu0 %v6702
      %6724 = vmatpush.bf16.msra.mxu0 %v6700
      %6725 = vmatpush.bf16.msra.mxu0 %v6698
      %6726 = vmatpush.bf16.msra.mxu0 %v6696
      %6727 = vmatpush.bf16.msra.mxu0 %v6694
      %6728 = vmatpush.bf16.msra.mxu0 %v6692
      %6729 = vmatpush.bf16.msra.mxu0 %v6690
      %6730 = vmatmul.bf16.gmra.mxu0 %v6618
      %v6731 = vpop.f32.mrf.mxu0
      %v6732 = vadd.f32 0.0, %v6731
      %v6733 = vpop.f32.mrf.mxu0
      %v6734 = vadd.f32 0.0, %v6733
      %6735 = vmatmul.bf16.gmra.mxu0 %v6619
      %v6736 = vpop.f32.mrf.mxu0
      %v6737 = vadd.f32 0.0, %v6736
      %v6738 = vpop.f32.mrf.mxu0
      %v6739 = vadd.f32 0.0, %v6738
      %6740 = vmatmul.bf16.gmra.mxu0 %v6620
      %v6741 = vpop.f32.mrf.mxu0
      %v6742 = vadd.f32 0.0, %v6741
      %v6743 = vpop.f32.mrf.mxu0
      %v6744 = vadd.f32 0.0, %v6743
      %6745 = vmatmul.bf16.gmra.mxu0 %v6621
      %v6746 = vpop.f32.mrf.mxu0
      %v6747 = vadd.f32 0.0, %v6746
      %v6748 = vpop.f32.mrf.mxu0
      %v6749 = vadd.f32 0.0, %v6748
      %6750 = vmatmul.bf16.gmra.mxu0 %v6622
      %v6751 = vpop.f32.mrf.mxu0
      %v6752 = vadd.f32 0.0, %v6751
      %v6753 = vpop.f32.mrf.mxu0
      %v6754 = vadd.f32 0.0, %v6753
      %6755 = vmatmul.bf16.gmra.mxu0 %v6623
      %v6756 = vpop.f32.mrf.mxu0
      %v6757 = vadd.f32 0.0, %v6756
      %v6758 = vpop.f32.mrf.mxu0
      %v6759 = vadd.f32 0.0, %v6758
      %6760 = vmatmul.bf16.gmra.mxu0 %v6624
      %v6761 = vpop.f32.mrf.mxu0
      %v6762 = vadd.f32 0.0, %v6761
      %v6763 = vpop.f32.mrf.mxu0
      %v6764 = vadd.f32 0.0, %v6763
      %6765 = vmatmul.bf16.gmra.mxu0 %v6625
      %v6766 = vpop.f32.mrf.mxu0
      %v6767 = vadd.f32 0.0, %v6766
      %v6768 = vpop.f32.mrf.mxu0
      %v6769 = vadd.f32 0.0, %v6768
      %6770 = vdwg.mxu0
      %6771 = vmatpush.bf16.msra.mxu0 %v6705
      %6772 = vmatpush.bf16.msra.mxu0 %v6703
      %6773 = vmatpush.bf16.msra.mxu0 %v6701
      %6774 = vmatpush.bf16.msra.mxu0 %v6699
      %6775 = vmatpush.bf16.msra.mxu0 %v6697
      %6776 = vmatpush.bf16.msra.mxu0 %v6695
      %6777 = vmatpush.bf16.msra.mxu0 %v6693
      %6778 = vmatpush.bf16.msra.mxu0 %v6691
      %6779 = vmatmul.bf16.gmra.mxu0 %v6618
      %v6780 = vpop.f32.mrf.mxu0
      %v6781 = vadd.f32 0.0, %v6780
      %v6782 = vpop.f32.mrf.mxu0
      %v6783 = vadd.f32 0.0, %v6782
      %6784 = vmatmul.bf16.gmra.mxu0 %v6619
      %v6785 = vpop.f32.mrf.mxu0
      %v6786 = vadd.f32 0.0, %v6785
      %v6787 = vpop.f32.mrf.mxu0
      %v6788 = vadd.f32 0.0, %v6787
      %6789 = vmatmul.bf16.gmra.mxu0 %v6620
      %v6790 = vpop.f32.mrf.mxu0
      %v6791 = vadd.f32 0.0, %v6790
      %v6792 = vpop.f32.mrf.mxu0
      %v6793 = vadd.f32 0.0, %v6792
      %6794 = vmatmul.bf16.gmra.mxu0 %v6621
      %v6795 = vpop.f32.mrf.mxu0
      %v6796 = vadd.f32 0.0, %v6795
      %v6797 = vpop.f32.mrf.mxu0
      %v6798 = vadd.f32 0.0, %v6797
      %6799 = vmatmul.bf16.gmra.mxu0 %v6622
      %v6800 = vpop.f32.mrf.mxu0
      %v6801 = vadd.f32 0.0, %v6800
      %v6802 = vpop.f32.mrf.mxu0
      %v6803 = vadd.f32 0.0, %v6802
      %6804 = vmatmul.bf16.gmra.mxu0 %v6623
      %v6805 = vpop.f32.mrf.mxu0
      %v6806 = vadd.f32 0.0, %v6805
      %v6807 = vpop.f32.mrf.mxu0
      %v6808 = vadd.f32 0.0, %v6807
      %6809 = vmatmul.bf16.gmra.mxu0 %v6624
      %v6810 = vpop.f32.mrf.mxu0
      %v6811 = vadd.f32 0.0, %v6810
      %v6812 = vpop.f32.mrf.mxu0
      %v6813 = vadd.f32 0.0, %v6812
      %6814 = vmatmul.bf16.gmra.mxu0 %v6625
      %v6815 = vpop.f32.mrf.mxu0
      %v6816 = vadd.f32 0.0, %v6815
      %v6817 = vpop.f32.mrf.mxu0
      %v6818 = vadd.f32 0.0, %v6817
      %6819 = vdwg.mxu0
      %v6820 = vmul.f32 %v6732, %v6602
      %v6821 = vmul.f32 %v6734, %v6603
      %v6822 = vmul.f32 %v6737, %v6604
      %v6823 = vmul.f32 %v6739, %v6605
      %v6824 = vmul.f32 %v6742, %v6606
      %v6825 = vmul.f32 %v6744, %v6607
      %v6826 = vmul.f32 %v6747, %v6608
      %v6827 = vmul.f32 %v6749, %v6609
      %v6828 = vmul.f32 %v6752, %v6610
      %v6829 = vmul.f32 %v6754, %v6611
      %v6830 = vmul.f32 %v6757, %v6612
      %v6831 = vmul.f32 %v6759, %v6613
      %v6832 = vmul.f32 %v6762, %v6614
      %v6833 = vmul.f32 %v6764, %v6615
      %v6834 = vmul.f32 %v6767, %v6616
      %v6835 = vmul.f32 %v6769, %v6617
      %v6836 = vpack.c.bf16 %v6821, %v6820
      %v6837 = vpack.c.bf16 %v6823, %v6822
      %v6838 = vpack.c.bf16 %v6825, %v6824
      %v6839 = vpack.c.bf16 %v6827, %v6826
      %v6840 = vpack.c.bf16 %v6829, %v6828
      %v6841 = vpack.c.bf16 %v6831, %v6830
      %v6842 = vpack.c.bf16 %v6833, %v6832
      %v6843 = vpack.c.bf16 %v6835, %v6834
      %6844 = vmatpush.bf16.msra.mxu0 %v3511
      %6845 = vmatpush.bf16.msra.mxu0 %v3510
      %6846 = vmatpush.bf16.msra.mxu0 %v3509
      %6847 = vmatpush.bf16.msra.mxu0 %v3508
      %6848 = vmatpush.bf16.msra.mxu0 %v3507
      %6849 = vmatpush.bf16.msra.mxu0 %v3506
      %6850 = vmatpush.bf16.msra.mxu0 %v3505
      %6851 = vmatpush.bf16.msra.mxu0 %v3504
      %6852 = vmatmul.bf16.gmra.mxu0 %v6836
      %v6853 = vpop.f32.mrf.mxu0
      %v6854 = vadd.f32 0.0, %v6853
      %v6855 = vpop.f32.mrf.mxu0
      %v6856 = vadd.f32 0.0, %v6855
      %6857 = vmatmul.bf16.gmra.mxu0 %v6837
      %v6858 = vpop.f32.mrf.mxu0
      %v6859 = vadd.f32 0.0, %v6858
      %v6860 = vpop.f32.mrf.mxu0
      %v6861 = vadd.f32 0.0, %v6860
      %6862 = vmatmul.bf16.gmra.mxu0 %v6838
      %v6863 = vpop.f32.mrf.mxu0
      %v6864 = vadd.f32 0.0, %v6863
      %v6865 = vpop.f32.mrf.mxu0
      %v6866 = vadd.f32 0.0, %v6865
      %6867 = vmatmul.bf16.gmra.mxu0 %v6839
      %v6868 = vpop.f32.mrf.mxu0
      %v6869 = vadd.f32 0.0, %v6868
      %v6870 = vpop.f32.mrf.mxu0
      %v6871 = vadd.f32 0.0, %v6870
      %6872 = vmatmul.bf16.gmra.mxu0 %v6840
      %v6873 = vpop.f32.mrf.mxu0
      %v6874 = vadd.f32 0.0, %v6873
      %v6875 = vpop.f32.mrf.mxu0
      %v6876 = vadd.f32 0.0, %v6875
      %6877 = vmatmul.bf16.gmra.mxu0 %v6841
      %v6878 = vpop.f32.mrf.mxu0
      %v6879 = vadd.f32 0.0, %v6878
      %v6880 = vpop.f32.mrf.mxu0
      %v6881 = vadd.f32 0.0, %v6880
      %6882 = vmatmul.bf16.gmra.mxu0 %v6842
      %v6883 = vpop.f32.mrf.mxu0
      %v6884 = vadd.f32 0.0, %v6883
      %v6885 = vpop.f32.mrf.mxu0
      %v6886 = vadd.f32 0.0, %v6885
      %6887 = vmatmul.bf16.gmra.mxu0 %v6843
      %v6888 = vpop.f32.mrf.mxu0
      %v6889 = vadd.f32 0.0, %v6888
      %v6890 = vpop.f32.mrf.mxu0
      %v6891 = vadd.f32 0.0, %v6890
      %6892 = vdwg.mxu0
      %v6893 = vmul.f32 %v583, 2.0
      %v6894 = vmul.f32 %v586, 2.0
      %v6895 = vmul.f32 %v589, 2.0
      %v6896 = vmul.f32 %v592, 2.0
      %v6897 = vmul.f32 %v595, 2.0
      %v6898 = vmul.f32 %v598, 2.0
      %v6899 = vmul.f32 %v601, 2.0
      %v6900 = vmul.f32 %v604, 2.0
      %v6901 = vmul.f32 %v607, 2.0
      %v6902 = vmul.f32 %v610, 2.0
      %v6903 = vmul.f32 %v613, 2.0
      %v6904 = vmul.f32 %v616, 2.0
      %v6905 = vmul.f32 %v619, 2.0
      %v6906 = vmul.f32 %v622, 2.0
      %v6907 = vmul.f32 %v625, 2.0
      %v6908 = vmul.f32 %v628, 2.0
      %v6909 = vadd.f32 %v6893, 2.7182817
      %v6910 = vadd.f32 %v6894, 2.7182817
      %v6911 = vadd.f32 %v6895, 2.7182817
      %v6912 = vadd.f32 %v6896, 2.7182817
      %v6913 = vadd.f32 %v6897, 2.7182817
      %v6914 = vadd.f32 %v6898, 2.7182817
      %v6915 = vadd.f32 %v6899, 2.7182817
      %v6916 = vadd.f32 %v6900, 2.7182817
      %v6917 = vadd.f32 %v6901, 2.7182817
      %v6918 = vadd.f32 %v6902, 2.7182817
      %v6919 = vadd.f32 %v6903, 2.7182817
      %v6920 = vadd.f32 %v6904, 2.7182817
      %v6921 = vadd.f32 %v6905, 2.7182817
      %v6922 = vadd.f32 %v6906, 2.7182817
      %v6923 = vadd.f32 %v6907, 2.7182817
      %v6924 = vadd.f32 %v6908, 2.7182817
      %v6925 = vlog2.pop %v6909
      %v6926 = vmul.f32 %v6925, 0.6931472
      %v6927 = vlog2.pop %v6910
      %v6928 = vmul.f32 %v6927, 0.6931472
      %v6929 = vlog2.pop %v6911
      %v6930 = vmul.f32 %v6929, 0.6931472
      %v6931 = vlog2.pop %v6912
      %v6932 = vmul.f32 %v6931, 0.6931472
      %v6933 = vlog2.pop %v6913
      %v6934 = vmul.f32 %v6933, 0.6931472
      %v6935 = vlog2.pop %v6914
      %v6936 = vmul.f32 %v6935, 0.6931472
      %v6937 = vlog2.pop %v6915
      %v6938 = vmul.f32 %v6937, 0.6931472
      %v6939 = vlog2.pop %v6916
      %v6940 = vmul.f32 %v6939, 0.6931472
      %v6941 = vlog2.pop %v6917
      %v6942 = vmul.f32 %v6941, 0.6931472
      %v6943 = vlog2.pop %v6918
      %v6944 = vmul.f32 %v6943, 0.6931472
      %v6945 = vlog2.pop %v6919
      %v6946 = vmul.f32 %v6945, 0.6931472
      %v6947 = vlog2.pop %v6920
      %v6948 = vmul.f32 %v6947, 0.6931472
      %v6949 = vlog2.pop %v6921
      %v6950 = vmul.f32 %v6949, 0.6931472
      %v6951 = vlog2.pop %v6922
      %v6952 = vmul.f32 %v6951, 0.6931472
      %v6953 = vlog2.pop %v6923
      %v6954 = vmul.f32 %v6953, 0.6931472
      %v6955 = vlog2.pop %v6924
      %v6956 = vmul.f32 %v6955, 0.6931472
      %v6957 = vrcp.pop %v6926
      %v6958 = vrcp.pop %v6928
      %v6959 = vrcp.pop %v6930
      %v6960 = vrcp.pop %v6932
      %v6961 = vrcp.pop %v6934
      %v6962 = vrcp.pop %v6936
      %v6963 = vrcp.pop %v6938
      %v6964 = vrcp.pop %v6940
      %v6965 = vrcp.pop %v6942
      %v6966 = vrcp.pop %v6944
      %v6967 = vrcp.pop %v6946
      %v6968 = vrcp.pop %v6948
      %v6969 = vrcp.pop %v6950
      %v6970 = vrcp.pop %v6952
      %v6971 = vrcp.pop %v6954
      %v6972 = vrcp.pop %v6956
      %v6973 = vadd.f32 %v6957, %v6854
      %v6974 = vadd.f32 %v6958, %v6856
      %v6975 = vadd.f32 %v6959, %v6859
      %v6976 = vadd.f32 %v6960, %v6861
      %v6977 = vadd.f32 %v6961, %v6864
      %v6978 = vadd.f32 %v6962, %v6866
      %v6979 = vadd.f32 %v6963, %v6869
      %v6980 = vadd.f32 %v6964, %v6871
      %v6981 = vadd.f32 %v6965, %v6874
      %v6982 = vadd.f32 %v6966, %v6876
      %v6983 = vadd.f32 %v6967, %v6879
      %v6984 = vadd.f32 %v6968, %v6881
      %v6985 = vadd.f32 %v6969, %v6884
      %v6986 = vadd.f32 %v6970, %v6886
      %v6987 = vadd.f32 %v6971, %v6889
      %v6988 = vadd.f32 %v6972, %v6891
      %vm6989 = vcmp.ge.f32.partialorder %v6973, 0.0
      %vm6990 = vcmp.ge.f32.partialorder %v6974, 0.0
      %vm6991 = vcmp.ge.f32.partialorder %v6975, 0.0
      %vm6992 = vcmp.ge.f32.partialorder %v6976, 0.0
      %vm6993 = vcmp.ge.f32.partialorder %v6977, 0.0
      %vm6994 = vcmp.ge.f32.partialorder %v6978, 0.0
      %vm6995 = vcmp.ge.f32.partialorder %v6979, 0.0
      %vm6996 = vcmp.ge.f32.partialorder %v6980, 0.0
      %vm6997 = vcmp.ge.f32.partialorder %v6981, 0.0
      %vm6998 = vcmp.ge.f32.partialorder %v6982, 0.0
      %vm6999 = vcmp.ge.f32.partialorder %v6983, 0.0
      %vm7000 = vcmp.ge.f32.partialorder %v6984, 0.0
      %vm7001 = vcmp.ge.f32.partialorder %v6985, 0.0
      %vm7002 = vcmp.ge.f32.partialorder %v6986, 0.0
      %vm7003 = vcmp.ge.f32.partialorder %v6987, 0.0
      %vm7004 = vcmp.ge.f32.partialorder %v6988, 0.0
      %v7005 = vmul.f32 %v6973, 0.01
      %v7006 = vmul.f32 %v6974, 0.01
      %v7007 = vmul.f32 %v6975, 0.01
      %v7008 = vmul.f32 %v6976, 0.01
      %v7009 = vmul.f32 %v6977, 0.01
      %v7010 = vmul.f32 %v6978, 0.01
      %v7011 = vmul.f32 %v6979, 0.01
      %v7012 = vmul.f32 %v6980, 0.01
      %v7013 = vmul.f32 %v6981, 0.01
      %v7014 = vmul.f32 %v6982, 0.01
      %v7015 = vmul.f32 %v6983, 0.01
      %v7016 = vmul.f32 %v6984, 0.01
      %v7017 = vmul.f32 %v6985, 0.01
      %v7018 = vmul.f32 %v6986, 0.01
      %v7019 = vmul.f32 %v6987, 0.01
      %v7020 = vmul.f32 %v6988, 0.01
      %v7021 = vsel %vm6989, %v6973, %v7005
      %v7022 = vsel %vm6990, %v6974, %v7006
      %v7023 = vsel %vm6991, %v6975, %v7007
      %v7024 = vsel %vm6992, %v6976, %v7008
      %v7025 = vsel %vm6993, %v6977, %v7009
      %v7026 = vsel %vm6994, %v6978, %v7010
      %v7027 = vsel %vm6995, %v6979, %v7011
      %v7028 = vsel %vm6996, %v6980, %v7012
      %v7029 = vsel %vm6997, %v6981, %v7013
      %v7030 = vsel %vm6998, %v6982, %v7014
      %v7031 = vsel %vm6999, %v6983, %v7015
      %v7032 = vsel %vm7000, %v6984, %v7016
      %v7033 = vsel %vm7001, %v6985, %v7017
      %v7034 = vsel %vm7002, %v6986, %v7018
      %v7035 = vsel %vm7003, %v6987, %v7019
      %v7036 = vsel %vm7004, %v6988, %v7020
      %v7037 = vmul.f32 %v7021, %v6602
      %v7038 = vmul.f32 %v7022, %v6603
      %v7039 = vmul.f32 %v7023, %v6604
      %v7040 = vmul.f32 %v7024, %v6605
      %v7041 = vmul.f32 %v7025, %v6606
      %v7042 = vmul.f32 %v7026, %v6607
      %v7043 = vmul.f32 %v7027, %v6608
      %v7044 = vmul.f32 %v7028, %v6609
      %v7045 = vmul.f32 %v7029, %v6610
      %v7046 = vmul.f32 %v7030, %v6611
      %v7047 = vmul.f32 %v7031, %v6612
      %v7048 = vmul.f32 %v7032, %v6613
      %v7049 = vmul.f32 %v7033, %v6614
      %v7050 = vmul.f32 %v7034, %v6615
      %v7051 = vmul.f32 %v7035, %v6616
      %v7052 = vmul.f32 %v7036, %v6617
      %v7053 = vmul.f32 %v717, 2.0
      %v7054 = vmul.f32 %v782, 2.0
      %v7055 = vmul.f32 %v720, 2.0
      %v7056 = vmul.f32 %v785, 2.0
      %v7057 = vmul.f32 %v723, 2.0
      %v7058 = vmul.f32 %v788, 2.0
      %v7059 = vmul.f32 %v726, 2.0
      %v7060 = vmul.f32 %v791, 2.0
      %v7061 = vmul.f32 %v729, 2.0
      %v7062 = vmul.f32 %v794, 2.0
      %v7063 = vmul.f32 %v732, 2.0
      %v7064 = vmul.f32 %v797, 2.0
      %v7065 = vmul.f32 %v735, 2.0
      %v7066 = vmul.f32 %v800, 2.0
      %v7067 = vmul.f32 %v738, 2.0
      %v7068 = vmul.f32 %v803, 2.0
      %v7069 = vmul.f32 %v741, 2.0
      %v7070 = vmul.f32 %v806, 2.0
      %v7071 = vmul.f32 %v744, 2.0
      %v7072 = vmul.f32 %v809, 2.0
      %v7073 = vmul.f32 %v747, 2.0
      %v7074 = vmul.f32 %v812, 2.0
      %v7075 = vmul.f32 %v750, 2.0
      %v7076 = vmul.f32 %v815, 2.0
      %v7077 = vmul.f32 %v753, 2.0
      %v7078 = vmul.f32 %v818, 2.0
      %v7079 = vmul.f32 %v756, 2.0
      %v7080 = vmul.f32 %v821, 2.0
      %v7081 = vmul.f32 %v759, 2.0
      %v7082 = vmul.f32 %v824, 2.0
      %v7083 = vmul.f32 %v762, 2.0
      %v7084 = vmul.f32 %v827, 2.0
      %v7085 = vadd.f32 %v7053, 1.0
      %v7086 = vadd.f32 %v7054, 1.0
      %v7087 = vadd.f32 %v7055, 1.0
      %v7088 = vadd.f32 %v7056, 1.0
      %v7089 = vadd.f32 %v7057, 1.0
      %v7090 = vadd.f32 %v7058, 1.0
      %v7091 = vadd.f32 %v7059, 1.0
      %v7092 = vadd.f32 %v7060, 1.0
      %v7093 = vadd.f32 %v7061, 1.0
      %v7094 = vadd.f32 %v7062, 1.0
      %v7095 = vadd.f32 %v7063, 1.0
      %v7096 = vadd.f32 %v7064, 1.0
      %v7097 = vadd.f32 %v7065, 1.0
      %v7098 = vadd.f32 %v7066, 1.0
      %v7099 = vadd.f32 %v7067, 1.0
      %v7100 = vadd.f32 %v7068, 1.0
      %v7101 = vadd.f32 %v7069, 1.0
      %v7102 = vadd.f32 %v7070, 1.0
      %v7103 = vadd.f32 %v7071, 1.0
      %v7104 = vadd.f32 %v7072, 1.0
      %v7105 = vadd.f32 %v7073, 1.0
      %v7106 = vadd.f32 %v7074, 1.0
      %v7107 = vadd.f32 %v7075, 1.0
      %v7108 = vadd.f32 %v7076, 1.0
      %v7109 = vadd.f32 %v7077, 1.0
      %v7110 = vadd.f32 %v7078, 1.0
      %v7111 = vadd.f32 %v7079, 1.0
      %v7112 = vadd.f32 %v7080, 1.0
      %v7113 = vadd.f32 %v7081, 1.0
      %v7114 = vadd.f32 %v7082, 1.0
      %v7115 = vadd.f32 %v7083, 1.0
      %v7116 = vadd.f32 %v7084, 1.0
      %v7117 = vrcp.pop %v7085
      %v7118 = vrcp.pop %v7086
      %v7119 = vrcp.pop %v7087
      %v7120 = vrcp.pop %v7088
      %v7121 = vrcp.pop %v7089
      %v7122 = vrcp.pop %v7090
      %v7123 = vrcp.pop %v7091
      %v7124 = vrcp.pop %v7092
      %v7125 = vrcp.pop %v7093
      %v7126 = vrcp.pop %v7094
      %v7127 = vrcp.pop %v7095
      %v7128 = vrcp.pop %v7096
      %v7129 = vrcp.pop %v7097
      %v7130 = vrcp.pop %v7098
      %v7131 = vrcp.pop %v7099
      %v7132 = vrcp.pop %v7100
      %v7133 = vrcp.pop %v7101
      %v7134 = vrcp.pop %v7102
      %v7135 = vrcp.pop %v7103
      %v7136 = vrcp.pop %v7104
      %v7137 = vrcp.pop %v7105
      %v7138 = vrcp.pop %v7106
      %v7139 = vrcp.pop %v7107
      %v7140 = vrcp.pop %v7108
      %v7141 = vrcp.pop %v7109
      %v7142 = vrcp.pop %v7110
      %v7143 = vrcp.pop %v7111
      %v7144 = vrcp.pop %v7112
      %v7145 = vrcp.pop %v7113
      %v7146 = vrcp.pop %v7114
      %v7147 = vrcp.pop %v7115
      %v7148 = vrcp.pop %v7116
      %v7149 = vld [vmem:[%s353] sm:$0xff]
      %v7150 = vld [vmem:[%s353 + $0x8] sm:$0xff]
      %v7151 = vld [vmem:[%s353 + $0x10] sm:$0xff]
      %v7152 = vld [vmem:[%s353 + $0x18] sm:$0xff]
      %v7153 = vld [vmem:[%s353 + $0x20] sm:$0xff]
      %v7154 = vld [vmem:[%s353 + $0x28] sm:$0xff]
      %v7155 = vld [vmem:[%s353 + $0x30] sm:$0xff]
      %v7156 = vld [vmem:[%s353 + $0x38] sm:$0xff]
      %v7157 = vld [vmem:[%s353 + $0x40] sm:$0xff]
      %v7158 = vld [vmem:[%s353 + $0x48] sm:$0xff]
      %v7159 = vld [vmem:[%s353 + $0x50] sm:$0xff]
      %v7160 = vld [vmem:[%s353 + $0x58] sm:$0xff]
      %v7161 = vld [vmem:[%s353 + $0x60] sm:$0xff]
      %v7162 = vld [vmem:[%s353 + $0x68] sm:$0xff]
      %v7163 = vld [vmem:[%s353 + $0x70] sm:$0xff]
      %v7164 = vld [vmem:[%s353 + $0x78] sm:$0xff]
      %v7165 = vunpack.c.l.bf16 %v7149
      %v7166 = vunpack.c.h.bf16 %v7149
      %v7167 = vunpack.c.l.bf16 %v7150
      %v7168 = vunpack.c.h.bf16 %v7150
      %v7169 = vunpack.c.l.bf16 %v7151
      %v7170 = vunpack.c.h.bf16 %v7151
      %v7171 = vunpack.c.l.bf16 %v7152
      %v7172 = vunpack.c.h.bf16 %v7152
      %v7173 = vunpack.c.l.bf16 %v7153
      %v7174 = vunpack.c.h.bf16 %v7153
      %v7175 = vunpack.c.l.bf16 %v7154
      %v7176 = vunpack.c.h.bf16 %v7154
      %v7177 = vunpack.c.l.bf16 %v7155
      %v7178 = vunpack.c.h.bf16 %v7155
      %v7179 = vunpack.c.l.bf16 %v7156
      %v7180 = vunpack.c.h.bf16 %v7156
      %v7181 = vunpack.c.l.bf16 %v7157
      %v7182 = vunpack.c.h.bf16 %v7157
      %v7183 = vunpack.c.l.bf16 %v7158
      %v7184 = vunpack.c.h.bf16 %v7158
      %v7185 = vunpack.c.l.bf16 %v7159
      %v7186 = vunpack.c.h.bf16 %v7159
      %v7187 = vunpack.c.l.bf16 %v7160
      %v7188 = vunpack.c.h.bf16 %v7160
      %v7189 = vunpack.c.l.bf16 %v7161
      %v7190 = vunpack.c.h.bf16 %v7161
      %v7191 = vunpack.c.l.bf16 %v7162
      %v7192 = vunpack.c.h.bf16 %v7162
      %v7193 = vunpack.c.l.bf16 %v7163
      %v7194 = vunpack.c.h.bf16 %v7163
      %v7195 = vunpack.c.l.bf16 %v7164
      %v7196 = vunpack.c.h.bf16 %v7164
      %v7197 = vmul.f32 %v7117, %v7165
      %v7198 = vmul.f32 %v7118, %v7166
      %v7199 = vmul.f32 %v7119, %v7167
      %v7200 = vmul.f32 %v7120, %v7168
      %v7201 = vmul.f32 %v7121, %v7169
      %v7202 = vmul.f32 %v7122, %v7170
      %v7203 = vmul.f32 %v7123, %v7171
      %v7204 = vmul.f32 %v7124, %v7172
      %v7205 = vmul.f32 %v7125, %v7173
      %v7206 = vmul.f32 %v7126, %v7174
      %v7207 = vmul.f32 %v7127, %v7175
      %v7208 = vmul.f32 %v7128, %v7176
      %v7209 = vmul.f32 %v7129, %v7177
      %v7210 = vmul.f32 %v7130, %v7178
      %v7211 = vmul.f32 %v7131, %v7179
      %v7212 = vmul.f32 %v7132, %v7180
      %v7213 = vmul.f32 %v7133, %v7181
      %v7214 = vmul.f32 %v7134, %v7182
      %v7215 = vmul.f32 %v7135, %v7183
      %v7216 = vmul.f32 %v7136, %v7184
      %v7217 = vmul.f32 %v7137, %v7185
      %v7218 = vmul.f32 %v7138, %v7186
      %v7219 = vmul.f32 %v7139, %v7187
      %v7220 = vmul.f32 %v7140, %v7188
      %v7221 = vmul.f32 %v7141, %v7189
      %v7222 = vmul.f32 %v7142, %v7190
      %v7223 = vmul.f32 %v7143, %v7191
      %v7224 = vmul.f32 %v7144, %v7192
      %v7225 = vmul.f32 %v7145, %v7193
      %v7226 = vmul.f32 %v7146, %v7194
      %v7227 = vmul.f32 %v7147, %v7195
      %v7228 = vmul.f32 %v7148, %v7196
      %v7229 = vpack.c.bf16 %v7038, %v7037
      %v7230 = vpack.c.bf16 %v7040, %v7039
      %v7231 = vpack.c.bf16 %v7042, %v7041
      %v7232 = vpack.c.bf16 %v7044, %v7043
      %v7233 = vpack.c.bf16 %v7046, %v7045
      %v7234 = vpack.c.bf16 %v7048, %v7047
      %v7235 = vpack.c.bf16 %v7050, %v7049
      %v7236 = vpack.c.bf16 %v7052, %v7051
      %v7237 = vld [vmem:[%s7] sm:$0xf]
      %v7238 = vld [vmem:[%s7 + $0x4] sm:$0xf]
      %v7239 = vld [vmem:[%s7 + $0x8] sm:$0xf]
      %v7240 = vld [vmem:[%s7 + $0xc] sm:$0xf]
      %v7241 = vld [vmem:[%s7 + $0x10] sm:$0xf]
      %v7242 = vld [vmem:[%s7 + $0x14] sm:$0xf]
      %v7243 = vld [vmem:[%s7 + $0x18] sm:$0xf]
      %v7244 = vld [vmem:[%s7 + $0x1c] sm:$0xf]
      %v7245 = vld [vmem:[%s7 + $0x20] sm:$0xf]
      %v7246 = vld [vmem:[%s7 + $0x24] sm:$0xf]
      %v7247 = vld [vmem:[%s7 + $0x28] sm:$0xf]
      %v7248 = vld [vmem:[%s7 + $0x2c] sm:$0xf]
      %v7249 = vld [vmem:[%s7 + $0x30] sm:$0xf]
      %v7250 = vld [vmem:[%s7 + $0x34] sm:$0xf]
      %v7251 = vld [vmem:[%s7 + $0x38] sm:$0xf]
      %v7252 = vld [vmem:[%s7 + $0x3c] sm:$0xf]
      %v7269 = vunpack.c.l.b16 %v7237
      %v7270 = vunpack.c.l.b16 %v7238
      %v7271 = vunpack.c.l.b16 %v7239
      %v7272 = vunpack.c.l.b16 %v7240
      %v7273 = vunpack.c.l.b16 %v7241
      %v7274 = vunpack.c.l.b16 %v7242
      %v7275 = vunpack.c.l.b16 %v7243
      %v7276 = vunpack.c.l.b16 %v7244
      %v7277 = vunpack.c.l.b16 %v7245
      %v7278 = vunpack.c.l.b16 %v7246
      %v7279 = vunpack.c.l.b16 %v7247
      %v7280 = vunpack.c.l.b16 %v7248
      %v7281 = vunpack.c.l.b16 %v7249
      %v7282 = vunpack.c.l.b16 %v7250
      %v7283 = vunpack.c.l.b16 %v7251
      %v7284 = vunpack.c.l.b16 %v7252
      %v7285 = vpack.c.b16 %v7270, %v7269
      %v7286 = vpack.c.b16 %v7272, %v7271
      %v7287 = vpack.c.b16 %v7274, %v7273
      %v7288 = vpack.c.b16 %v7276, %v7275
      %v7289 = vpack.c.b16 %v7278, %v7277
      %v7290 = vpack.c.b16 %v7280, %v7279
      %v7291 = vpack.c.b16 %v7282, %v7281
      %v7292 = vpack.c.b16 %v7284, %v7283
      %7301 = vmatpush.bf16.msra.mxu0 %v7292
      %7302 = vmatpush.bf16.msra.mxu0 %v7291
      %7303 = vmatpush.bf16.msra.mxu0 %v7290
      %7304 = vmatpush.bf16.msra.mxu0 %v7289
      %7305 = vmatpush.bf16.msra.mxu0 %v7288
      %7306 = vmatpush.bf16.msra.mxu0 %v7287
      %7307 = vmatpush.bf16.msra.mxu0 %v7286
      %7308 = vmatpush.bf16.msra.mxu0 %v7285
      %7309 = vmatmul.bf16.gmra.mxu0 %v7229
      %v7310 = vpop.f32.mrf.mxu0
      %v7311 = vadd.f32 0.0, %v7310
      %v7312 = vpop.f32.mrf.mxu0
      %v7313 = vadd.f32 0.0, %v7312
      %7314 = vmatmul.bf16.gmra.mxu0 %v7230
      %v7315 = vpop.f32.mrf.mxu0
      %v7316 = vadd.f32 0.0, %v7315
      %v7317 = vpop.f32.mrf.mxu0
      %v7318 = vadd.f32 0.0, %v7317
      %7319 = vmatmul.bf16.gmra.mxu0 %v7231
      %v7320 = vpop.f32.mrf.mxu0
      %v7321 = vadd.f32 0.0, %v7320
      %v7322 = vpop.f32.mrf.mxu0
      %v7323 = vadd.f32 0.0, %v7322
      %7324 = vmatmul.bf16.gmra.mxu0 %v7232
      %v7325 = vpop.f32.mrf.mxu0
      %v7326 = vadd.f32 0.0, %v7325
      %v7327 = vpop.f32.mrf.mxu0
      %v7328 = vadd.f32 0.0, %v7327
      %7329 = vmatmul.bf16.gmra.mxu0 %v7233
      %v7330 = vpop.f32.mrf.mxu0
      %v7331 = vadd.f32 0.0, %v7330
      %v7332 = vpop.f32.mrf.mxu0
      %v7333 = vadd.f32 0.0, %v7332
      %7334 = vmatmul.bf16.gmra.mxu0 %v7234
      %v7335 = vpop.f32.mrf.mxu0
      %v7336 = vadd.f32 0.0, %v7335
      %v7337 = vpop.f32.mrf.mxu0
      %v7338 = vadd.f32 0.0, %v7337
      %7339 = vmatmul.bf16.gmra.mxu0 %v7235
      %v7340 = vpop.f32.mrf.mxu0
      %v7341 = vadd.f32 0.0, %v7340
      %v7342 = vpop.f32.mrf.mxu0
      %v7343 = vadd.f32 0.0, %v7342
      %7344 = vmatmul.bf16.gmra.mxu0 %v7236
      %v7345 = vpop.f32.mrf.mxu0
      %v7346 = vadd.f32 0.0, %v7345
      %v7347 = vpop.f32.mrf.mxu0
      %v7348 = vadd.f32 0.0, %v7347
      %7349 = vdwg.mxu0
      %v7350 = vadd.f32 %v6781, %v7311
      %v7351 = vadd.f32 %v6783, %v7313
      %v7352 = vadd.f32 %v6786, %v7316
      %v7353 = vadd.f32 %v6788, %v7318
      %v7354 = vadd.f32 %v6791, %v7321
      %v7355 = vadd.f32 %v6793, %v7323
      %v7356 = vadd.f32 %v6796, %v7326
      %v7357 = vadd.f32 %v6798, %v7328
      %v7358 = vadd.f32 %v6801, %v7331
      %v7359 = vadd.f32 %v6803, %v7333
      %v7360 = vadd.f32 %v6806, %v7336
      %v7361 = vadd.f32 %v6808, %v7338
      %v7362 = vadd.f32 %v6811, %v7341
      %v7363 = vadd.f32 %v6813, %v7343
      %v7364 = vadd.f32 %v6816, %v7346
      %v7365 = vadd.f32 %v6818, %v7348
      %v7366 = vpack.c.bf16 %v7199, %v7197
      %v7367 = vpack.c.bf16 %v7200, %v7198
      %v7368 = vpack.c.bf16 %v7203, %v7201
      %v7369 = vpack.c.bf16 %v7204, %v7202
      %v7370 = vpack.c.bf16 %v7207, %v7205
      %v7371 = vpack.c.bf16 %v7208, %v7206
      %v7372 = vpack.c.bf16 %v7211, %v7209
      %v7373 = vpack.c.bf16 %v7212, %v7210
      %v7374 = vpack.c.bf16 %v7215, %v7213
      %v7375 = vpack.c.bf16 %v7216, %v7214
      %v7376 = vpack.c.bf16 %v7219, %v7217
      %v7377 = vpack.c.bf16 %v7220, %v7218
      %v7378 = vpack.c.bf16 %v7223, %v7221
      %v7379 = vpack.c.bf16 %v7224, %v7222
      %v7380 = vpack.c.bf16 %v7227, %v7225
      %v7381 = vpack.c.bf16 %v7228, %v7226
      %v7382 = vld [vmem:[%s8] sm:$0xf]
      %v7383 = vld [vmem:[%s8 + $0x4] sm:$0xf]
      %v7384 = vld [vmem:[%s8 + $0x8] sm:$0xf]
      %v7385 = vld [vmem:[%s8 + $0xc] sm:$0xf]
      %v7386 = vld [vmem:[%s8 + $0x10] sm:$0xf]
      %v7387 = vld [vmem:[%s8 + $0x14] sm:$0xf]
      %v7388 = vld [vmem:[%s8 + $0x18] sm:$0xf]
      %v7389 = vld [vmem:[%s8 + $0x1c] sm:$0xf]
      %v7390 = vld [vmem:[%s8 + $0x20] sm:$0xf]
      %v7391 = vld [vmem:[%s8 + $0x24] sm:$0xf]
      %v7392 = vld [vmem:[%s8 + $0x28] sm:$0xf]
      %v7393 = vld [vmem:[%s8 + $0x2c] sm:$0xf]
      %v7394 = vld [vmem:[%s8 + $0x30] sm:$0xf]
      %v7395 = vld [vmem:[%s8 + $0x34] sm:$0xf]
      %v7396 = vld [vmem:[%s8 + $0x38] sm:$0xf]
      %v7397 = vld [vmem:[%s8 + $0x3c] sm:$0xf]
      %v7398 = vld [vmem:[%s8 + $0x40] sm:$0xf]
      %v7399 = vld [vmem:[%s8 + $0x44] sm:$0xf]
      %v7400 = vld [vmem:[%s8 + $0x48] sm:$0xf]
      %v7401 = vld [vmem:[%s8 + $0x4c] sm:$0xf]
      %v7402 = vld [vmem:[%s8 + $0x50] sm:$0xf]
      %v7403 = vld [vmem:[%s8 + $0x54] sm:$0xf]
      %v7404 = vld [vmem:[%s8 + $0x58] sm:$0xf]
      %v7405 = vld [vmem:[%s8 + $0x5c] sm:$0xf]
      %v7430 = vunpack.c.l.b16 %v7382
      %v7431 = vunpack.c.l.b16 %v7383
      %v7432 = vunpack.c.l.b16 %v7384
      %v7433 = vunpack.c.l.b16 %v7385
      %v7434 = vunpack.c.l.b16 %v7386
      %v7435 = vunpack.c.l.b16 %v7387
      %v7436 = vunpack.c.l.b16 %v7388
      %v7437 = vunpack.c.l.b16 %v7389
      %v7438 = vunpack.c.l.b16 %v7390
      %v7439 = vunpack.c.l.b16 %v7391
      %v7440 = vunpack.c.l.b16 %v7392
      %v7441 = vunpack.c.l.b16 %v7393
      %v7442 = vunpack.c.l.b16 %v7394
      %v7443 = vunpack.c.l.b16 %v7395
      %v7444 = vunpack.c.l.b16 %v7396
      %v7445 = vunpack.c.l.b16 %v7397
      %v7446 = vunpack.c.l.b16 %v7398
      %v7447 = vunpack.c.l.b16 %v7399
      %v7448 = vunpack.c.l.b16 %v7400
      %v7449 = vunpack.c.l.b16 %v7401
      %v7450 = vunpack.c.l.b16 %v7402
      %v7451 = vunpack.c.l.b16 %v7403
      %v7452 = vunpack.c.l.b16 %v7404
      %v7453 = vunpack.c.l.b16 %v7405
      %v7454 = vpack.c.b16 %v7431, %v7430
      %v7455 = vpack.c.b16 %v7433, %v7432
      %v7456 = vpack.c.b16 %v7435, %v7434
      %v7457 = vpack.c.b16 %v7437, %v7436
      %v7458 = vpack.c.b16 %v7439, %v7438
      %v7459 = vpack.c.b16 %v7441, %v7440
      %v7460 = vpack.c.b16 %v7443, %v7442
      %v7461 = vpack.c.b16 %v7445, %v7444
      %v7462 = vpack.c.b16 %v7447, %v7446
      %v7463 = vpack.c.b16 %v7449, %v7448
      %v7464 = vpack.c.b16 %v7451, %v7450
      %v7465 = vpack.c.b16 %v7453, %v7452
      %vm7478 = vcmask 523264
      %v7480 = vsel %vm7478, %v7367, 0
      %v7483 = vsel %vm7478, %v7369, 0
      %v7486 = vsel %vm7478, %v7371, 0
      %v7489 = vsel %vm7478, %v7373, 0
      %v7492 = vsel %vm7478, %v7375, 0
      %v7495 = vsel %vm7478, %v7377, 0
      %v7498 = vsel %vm7478, %v7379, 0
      %v7501 = vsel %vm7478, %v7381, 0
      %7503 = vmatpush.bf16.msra.mxu0 %v7461
      %7504 = vmatpush.bf16.msra.mxu0 %v7460
      %7505 = vmatpush.bf16.msra.mxu0 %v7459
      %7506 = vmatpush.bf16.msra.mxu0 %v7458
      %7507 = vmatpush.bf16.msra.mxu0 %v7457
      %7508 = vmatpush.bf16.msra.mxu0 %v7456
      %7509 = vmatpush.bf16.msra.mxu0 %v7455
      %7510 = vmatpush.bf16.msra.mxu0 %v7454
      %7511 = vmatmul.bf16.gmra.mxu0 %v7366
      %v7512 = vpop.f32.mrf.mxu0
      %v7513 = vadd.f32 0.0, %v7512
      %v7514 = vpop.f32.mrf.mxu0
      %v7515 = vadd.f32 0.0, %v7514
      %7516 = vmatmul.bf16.gmra.mxu0 %v7368
      %v7517 = vpop.f32.mrf.mxu0
      %v7518 = vadd.f32 0.0, %v7517
      %v7519 = vpop.f32.mrf.mxu0
      %v7520 = vadd.f32 0.0, %v7519
      %7521 = vmatmul.bf16.gmra.mxu0 %v7370
      %v7522 = vpop.f32.mrf.mxu0
      %v7523 = vadd.f32 0.0, %v7522
      %v7524 = vpop.f32.mrf.mxu0
      %v7525 = vadd.f32 0.0, %v7524
      %7526 = vmatmul.bf16.gmra.mxu0 %v7372
      %v7527 = vpop.f32.mrf.mxu0
      %v7528 = vadd.f32 0.0, %v7527
      %v7529 = vpop.f32.mrf.mxu0
      %v7530 = vadd.f32 0.0, %v7529
      %7531 = vmatmul.bf16.gmra.mxu0 %v7374
      %v7532 = vpop.f32.mrf.mxu0
      %v7533 = vadd.f32 0.0, %v7532
      %v7534 = vpop.f32.mrf.mxu0
      %v7535 = vadd.f32 0.0, %v7534
      %7536 = vmatmul.bf16.gmra.mxu0 %v7376
      %v7537 = vpop.f32.mrf.mxu0
      %v7538 = vadd.f32 0.0, %v7537
      %v7539 = vpop.f32.mrf.mxu0
      %v7540 = vadd.f32 0.0, %v7539
      %7541 = vmatmul.bf16.gmra.mxu0 %v7378
      %v7542 = vpop.f32.mrf.mxu0
      %v7543 = vadd.f32 0.0, %v7542
      %v7544 = vpop.f32.mrf.mxu0
      %v7545 = vadd.f32 0.0, %v7544
      %7546 = vmatmul.bf16.gmra.mxu0 %v7380
      %v7547 = vpop.f32.mrf.mxu0
      %v7548 = vadd.f32 0.0, %v7547
      %v7549 = vpop.f32.mrf.mxu0
      %v7550 = vadd.f32 0.0, %v7549
      %7551 = vdwg.mxu0
      %7552 = vmatpush.bf16.msra.mxu0 0
      %7553 = vmatpush.bf16.msra.mxu0 0
      %7554 = vmatpush.bf16.msra.mxu0 0
      %7555 = vmatpush.bf16.msra.mxu0 0
      %7556 = vmatpush.bf16.msra.mxu0 %v7465
      %7557 = vmatpush.bf16.msra.mxu0 %v7464
      %7558 = vmatpush.bf16.msra.mxu0 %v7463
      %7559 = vmatpush.bf16.msra.mxu0 %v7462
      %7560 = vmatmul.bf16.gmra.mxu0 %v7480
      %v7561 = vpop.f32.mrf.mxu0
      %v7562 = vadd.f32 %v7513, %v7561
      %v7563 = vpop.f32.mrf.mxu0
      %v7564 = vadd.f32 %v7515, %v7563
      %7565 = vmatmul.bf16.gmra.mxu0 %v7483
      %v7566 = vpop.f32.mrf.mxu0
      %v7567 = vadd.f32 %v7518, %v7566
      %v7568 = vpop.f32.mrf.mxu0
      %v7569 = vadd.f32 %v7520, %v7568
      %7570 = vmatmul.bf16.gmra.mxu0 %v7486
      %v7571 = vpop.f32.mrf.mxu0
      %v7572 = vadd.f32 %v7523, %v7571
      %v7573 = vpop.f32.mrf.mxu0
      %v7574 = vadd.f32 %v7525, %v7573
      %7575 = vmatmul.bf16.gmra.mxu0 %v7489
      %v7576 = vpop.f32.mrf.mxu0
      %v7577 = vadd.f32 %v7528, %v7576
      %v7578 = vpop.f32.mrf.mxu0
      %v7579 = vadd.f32 %v7530, %v7578
      %7580 = vmatmul.bf16.gmra.mxu0 %v7492
      %v7581 = vpop.f32.mrf.mxu0
      %v7582 = vadd.f32 %v7533, %v7581
      %v7583 = vpop.f32.mrf.mxu0
      %v7584 = vadd.f32 %v7535, %v7583
      %7585 = vmatmul.bf16.gmra.mxu0 %v7495
      %v7586 = vpop.f32.mrf.mxu0
      %v7587 = vadd.f32 %v7538, %v7586
      %v7588 = vpop.f32.mrf.mxu0
      %v7589 = vadd.f32 %v7540, %v7588
      %7590 = vmatmul.bf16.gmra.mxu0 %v7498
      %v7591 = vpop.f32.mrf.mxu0
      %v7592 = vadd.f32 %v7543, %v7591
      %v7593 = vpop.f32.mrf.mxu0
      %v7594 = vadd.f32 %v7545, %v7593
      %7595 = vmatmul.bf16.gmra.mxu0 %v7501
      %v7596 = vpop.f32.mrf.mxu0
      %v7597 = vadd.f32 %v7548, %v7596
      %v7598 = vpop.f32.mrf.mxu0
      %v7599 = vadd.f32 %v7550, %v7598
      %7600 = vdwg.mxu0
      %v7601 = vadd.f32 %v7350, %v7562
      %v7602 = vadd.f32 %v7351, %v7564
      %v7603 = vadd.f32 %v7352, %v7567
      %v7604 = vadd.f32 %v7353, %v7569
      %v7605 = vadd.f32 %v7354, %v7572
      %v7606 = vadd.f32 %v7355, %v7574
      %v7607 = vadd.f32 %v7356, %v7577
      %v7608 = vadd.f32 %v7357, %v7579
      %v7609 = vadd.f32 %v7358, %v7582
      %v7610 = vadd.f32 %v7359, %v7584
      %v7611 = vadd.f32 %v7360, %v7587
      %v7612 = vadd.f32 %v7361, %v7589
      %v7613 = vadd.f32 %v7362, %v7592
      %v7614 = vadd.f32 %v7363, %v7594
      %v7615 = vadd.f32 %v7364, %v7597
      %v7616 = vadd.f32 %v7365, %v7599
      %v7617 = vmax.f32 %v7601, 0.0
      %v7618 = vmax.f32 %v7602, 0.0
      %v7619 = vmax.f32 %v7603, 0.0
      %v7620 = vmax.f32 %v7604, 0.0
      %v7621 = vmax.f32 %v7605, 0.0
      %v7622 = vmax.f32 %v7606, 0.0
      %v7623 = vmax.f32 %v7607, 0.0
      %v7624 = vmax.f32 %v7608, 0.0
      %v7625 = vmax.f32 %v7609, 0.0
      %v7626 = vmax.f32 %v7610, 0.0
      %v7627 = vmax.f32 %v7611, 0.0
      %v7628 = vmax.f32 %v7612, 0.0
      %v7629 = vmax.f32 %v7613, 0.0
      %v7630 = vmax.f32 %v7614, 0.0
      %v7631 = vmax.f32 %v7615, 0.0
      %v7632 = vmax.f32 %v7616, 0.0
      %v7633 = vpack.c.bf16 %v7617, %v7617
      %v7634 = vpack.c.bf16 %v7618, %v7618
      %v7635 = vpack.c.bf16 %v7619, %v7619
      %v7636 = vpack.c.bf16 %v7620, %v7620
      %v7637 = vpack.c.bf16 %v7621, %v7621
      %v7638 = vpack.c.bf16 %v7622, %v7622
      %v7639 = vpack.c.bf16 %v7623, %v7623
      %v7640 = vpack.c.bf16 %v7624, %v7624
      %v7641 = vpack.c.bf16 %v7625, %v7625
      %v7642 = vpack.c.bf16 %v7626, %v7626
      %v7643 = vpack.c.bf16 %v7627, %v7627
      %v7644 = vpack.c.bf16 %v7628, %v7628
      %v7645 = vpack.c.bf16 %v7629, %v7629
      %v7646 = vpack.c.bf16 %v7630, %v7630
      %v7647 = vpack.c.bf16 %v7631, %v7631
      %v7648 = vpack.c.bf16 %v7632, %v7632
      %7649 = vst [vmem:[%s359] sm:$0xf] %v7633
      %7650 = vst [vmem:[%s359 + $0x4] sm:$0xf] %v7634
      %7651 = vst [vmem:[%s359 + $0x8] sm:$0xf] %v7635
      %7652 = vst [vmem:[%s359 + $0xc] sm:$0xf] %v7636
      %7653 = vst [vmem:[%s359 + $0x10] sm:$0xf] %v7637
      %7654 = vst [vmem:[%s359 + $0x14] sm:$0xf] %v7638
      %7655 = vst [vmem:[%s359 + $0x18] sm:$0xf] %v7639
      %7656 = vst [vmem:[%s359 + $0x1c] sm:$0xf] %v7640
      %7657 = vst [vmem:[%s359 + $0x20] sm:$0xf] %v7641
      %7658 = vst [vmem:[%s359 + $0x24] sm:$0xf] %v7642
      %7659 = vst [vmem:[%s359 + $0x28] sm:$0xf] %v7643
      %7660 = vst [vmem:[%s359 + $0x2c] sm:$0xf] %v7644
      %7661 = vst [vmem:[%s359 + $0x30] sm:$0xf] %v7645
      %7662 = vst [vmem:[%s359 + $0x34] sm:$0xf] %v7646
      %7663 = vst [vmem:[%s359 + $0x38] sm:$0xf] %v7647
      %7664 = vst [vmem:[%s359 + $0x3c] sm:$0xf] %v7648
      %s7665 = smul.u32 16, %s20
      %p7666 = scmp.lt.s32.totalorder %s7665, 63
      %s7667 = scalar_select %p7666, %s7665, 63
      %s7668 = smul.addr %s7667, 4
      %s7669 = scalar_lea.vmem %s9, %s7668
      // Predicated region
      $region57: #{_forward.1} parent=55 // pred_check
        %p7670 = pneg %p237
      $region58: #{_forward.1} parent=55 // pred_check_branch
        %7672 = sbr.rel (%p7670) target = $region60
      $region59: #{_forward.1} parent=55 // pred_region
        %s7673 = smul.u32 16, %s20
      $region60: #{_forward.1} parent=55 // pred_fallthru
        _
    $region56: #{_forward.1} parent=5 // pred_fallthru
      _
    %p7674 = scmp.le.s32.totalorder 2, %s15
    // Predicated region
    $region61: #{_forward.1} parent=5 // pred_check
      %p7675 = pneg %p7674
    $region62: #{_forward.1} parent=5 // pred_check_branch
      %7677 = sbr.rel (%p7675) target = $region64
    $region63: #{_forward.1} parent=5 // pred_region
      %s7678 = ssub.s32 %s15, 2
      // Predicated region
      $region65: #{_forward.1} parent=63 // pred_check
        %p7679 = pneg %p243
      $region66: #{_forward.1} parent=63 // pred_check_branch
        %7681 = sbr.rel (%p7679) target = $region68
      $region67: #{_forward.1} parent=63 // pred_region
        %s7682 = smul.u32 16, %s21
        %p7683 = scmp.lt.s32.totalorder %s7682, 63
        %s7684 = scalar_select %p7683, %s7682, 63
        %s7685 = smul.addr %s7684, 4
        %s7686 = scalar_lea.vmem %s9, %s7685
      $region68: #{_forward.1} parent=63 // pred_fallthru
        _
    $region64: #{_forward.1} parent=5 // pred_fallthru
      _
  $region6: #{_forward.1} parent=0 // loop_footer
    %s19 = sadd.s32 1, %s15
  $region7: #{_forward.1} parent=0 // loop_footer_branch
    %14 = sbr.rel target = $region3
  $region8: #{_forward.1} parent=0 // loop_exit
    _

</llo_original>
